<compile_context>
chip_gen: v6e
topology: v6e:2x2x1
jax: 0.10.0
libtpu: 0.0.40
codegen_flags: <defaults>
</compile_context>

<pallas_src>
import functools

import jax
import jax.numpy as jnp
from jax import lax
from jax.experimental import pallas as pl
from jax.experimental.pallas import tpu as pltpu


_PAD_MODE = {"reflect": "reflect", "replicate": "edge", "zero": "constant"}


def _round_up(a, b):
    return -(-a // b) * b


def _pick_tile_h(h, wp, target_m=1024):
    """Rows per tile: th | h and th*wp (the GEMM M, always a multiple of 8) ~ target_m."""
    th = min(h, max(1, target_m // wp))
    while h % th:
        th -= 1
    return th


# ----------------------------------------------------------------------------
# Fused kernel: 3x3 conv (9 flat-offset taps) + folded BN shift [+ ReLU] [+ residual]
# ----------------------------------------------------------------------------
def _conv3x3_kernel(x_hbm, w_ref, t_ref, *rest,
                    nrb, tile_rows, slab_rows, res_rows, wp, relu, has_res):
    """x_hbm : (N, (H+3)*Wp, C) bf16, HBM (pl.ANY)  padded+flattened conv input
       w_ref : (9, C, C)        bf16  per-tap (Cin, Cout) weights, BN scale folded in
       t_ref : (1, C)           f32   folded conv-bias + BN shift
       [r_hbm: (N, (H+3)*Wp, C) bf16, HBM (pl.ANY)  residual source (= conv1 input)]
       o_ref : (tile_rows, C)         output row tile (bf16 or f32), lane dense
       slab  : (2, slab_rows, C) bf16 VMEM double buffer for the input window
       [rbuf : (2, res_rows, C)  bf16 VMEM double buffer for the residual tile]
       in_sem / res_sem : DMA semaphores, shape (2,)
    """
    if has_res:
        r_hbm, o_ref, slab, rbuf, in_sem, res_sem = rest
    else:
        o_ref, slab, in_sem = rest
        r_hbm = rbuf = res_sem = None

    n = pl.program_id(0)
    r = pl.program_id(1)
    slot = lax.rem(r, 2)

    def issue(rr, sl):
        start = pl.multiple_of(rr * tile_rows, 8)
        pltpu.make_async_copy(x_hbm.at[n, pl.ds(start, slab_rows)],
                              slab.at[sl], in_sem.at[sl]).start()
        if has_res:
            rstart = pl.multiple_of(rr * tile_rows + wp, 8)
            pltpu.make_async_copy(r_hbm.at[n, pl.ds(rstart, res_rows)],
                                  rbuf.at[sl], res_sem.at[sl]).start()

    @pl.when(r == 0)                      # prime the pipeline (once per image)
    def _():
        issue(r, slot)

    @pl.when(r + 1 < nrb)                 # prefetch next row tile behind this tile's MXU work
    def _():
        issue(r + 1, 1 - slot)

    pltpu.make_async_copy(x_hbm.at[n, pl.ds(r * tile_rows, slab_rows)],
                          slab.at[slot], in_sem.at[slot]).wait()

    # 9 taps = 9 contiguous flat row windows of the slab (no strided-slice/reshape copies).
    acc = None
    for kh in range(3):
        for kw in range(3):
            a = slab[slot, pl.ds(kh * wp + kw, tile_rows), :]
            d = jnp.dot(a, w_ref[kh * 3 + kw], preferred_element_type=jnp.float32)
            acc = d if acc is None else acc + d

    y = acc + t_ref[...]                  # folded bias + BN(eval) shift
    if relu:
        y = jnp.maximum(y, 0.0)
    if has_res:
        pltpu.make_async_copy(r_hbm.at[n, pl.ds(r * tile_rows + wp, res_rows)],
                              rbuf.at[slot], res_sem.at[slot]).wait()
        y = y + rbuf[slot, pl.ds(1, tile_rows), :].astype(jnp.float32)
    o_ref[...] = y.astype(o_ref.dtype)


def _fused_conv3x3(xf, w9, t, residual, *, n, h, w, wp, c, relu, out_dtype,
                   target_m=1024):
    """xf/residual: (N, (H+3)*Wp, C) bf16 flat padded arrays.  Returns (N, H*Wp, C)."""
    th = _pick_tile_h(h, wp, target_m)
    nrb = h // th
    tile_rows = th * wp                      # GEMM M (multiple of 8, Wp % 8 == 0)
    slab_rows = (th + 2) * wp + 8            # tile + 2-row halo + flat-slice overrun slack
    res_rows = tile_rows + 8
    has_res = residual is not None

    in_specs = [pl.BlockSpec(memory_space=pl.ANY),
                pl.BlockSpec((9, c, c), lambda i, j: (0, 0, 0)),
                pl.BlockSpec((1, c), lambda i, j: (0, 0))]
    args = [xf, w9, t]
    scratch = [pltpu.VMEM((2, slab_rows, c), jnp.bfloat16)]
    if has_res:
        in_specs.append(pl.BlockSpec(memory_space=pl.ANY))
        args.append(residual)
        scratch.append(pltpu.VMEM((2, res_rows, c), jnp.bfloat16))
    scratch.append(pltpu.SemaphoreType.DMA((2,)))
    if has_res:
        scratch.append(pltpu.SemaphoreType.DMA((2,)))

    out_bytes = jnp.dtype(out_dtype).itemsize
    vmem_bytes = (2 * slab_rows * c * 2
                  + (2 * res_rows * c * 2 if has_res else 0)
                  + 2 * tile_rows * c * out_bytes          # double-buffered output block
                  + 2 * 9 * c * c * 2 + 2 * c * 4          # weights + shift
                  + tile_rows * c * 4)                     # f32 accumulator values
    # explicit limit: > default scoped VMEM on v5e, safely below v7x's 64 MiB physical
    vmem_limit = min(max(int(vmem_bytes * 1.5) + (4 << 20), 24 << 20), 48 << 20)

    kernel = functools.partial(_conv3x3_kernel, nrb=nrb, tile_rows=tile_rows,
                               slab_rows=slab_rows, res_rows=res_rows, wp=wp,
                               relu=relu, has_res=has_res)
    flops = 2 * 9 * n * h * wp * c * c
    bytes_accessed = (n * nrb * slab_rows * c * 2 + 9 * c * c * 2
                      + (n * nrb * res_rows * c * 2 if has_res else 0)
                      + n * h * wp * c * out_bytes)

    return pl.pallas_call(
        kernel,
        out_shape=jax.ShapeDtypeStruct((n, h * wp, c), out_dtype),
        grid_spec=pltpu.PrefetchScalarGridSpec(
            num_scalar_prefetch=0,
            grid=(n, nrb),
            in_specs=in_specs,
            out_specs=pl.BlockSpec((None, tile_rows, c), lambda i, j: (i, j, 0)),
            scratch_shapes=scratch,
        ),
        compiler_params=pltpu.CompilerParams(
            dimension_semantics=("parallel", "arbitrary"),
            vmem_limit_bytes=vmem_limit),
        cost_estimate=pl.CostEstimate(flops=flops, transcendentals=0,
                                      bytes_accessed=bytes_accessed),
    )(*args)


def _pad_flatten_bf16(x_nhwc_bf16, padding_type, wp):
    """(N,H,W,C) bf16 -> (N,(H+3)*Wp,C) bf16: 1-pixel spatial pad (reflect/edge/zero),
    then junk pad (1 bottom row, right columns up to Wp) so every 3x3 tap is a single
    contiguous row window of the flattened slab."""
    if padding_type not in _PAD_MODE:
        raise NotImplementedError("padding [%s] is not implemented" % padding_type)
    n, h, w, c = x_nhwc_bf16.shape
    xp = jnp.pad(x_nhwc_bf16, ((0, 0), (1, 1), (1, 1), (0, 0)),
                 mode=_PAD_MODE[padding_type])
    xp = jnp.pad(xp, ((0, 0), (0, 1), (0, wp - (w + 2)), (0, 0)))
    return xp.reshape(n, (h + 3) * wp, c)


# ----------------------------------------------------------------------------
# ResnetBlock parameters + forward (NCHW boundary, NHWC/flat inside)
# ----------------------------------------------------------------------------
def init_resnet_block_params(key, dim):
    ks = jax.random.split(key, 12)

    def bn(kg, kb, km, kv):
        return {"gamma": 1.0 + 0.05 * jax.random.normal(kg, (dim,), jnp.float32),
                "beta": 0.05 * jax.random.normal(kb, (dim,), jnp.float32),
                "mean": 0.05 * jax.random.normal(km, (dim,), jnp.float32),
                "var": jax.random.uniform(kv, (dim,), jnp.float32, 0.5, 1.5)}

    return {"w1": 0.05 * jax.random.normal(ks[0], (dim, dim, 3, 3), jnp.float32),
            "b1": 0.05 * jax.random.normal(ks[1], (dim,), jnp.float32),
            "bn1": bn(ks[2], ks[3], ks[4], ks[5]),
            "w2": 0.05 * jax.random.normal(ks[6], (dim, dim, 3, 3), jnp.float32),
            "b2": 0.05 * jax.random.normal(ks[7], (dim,), jnp.float32),
            "bn2": bn(ks[8], ks[9], ks[10], ks[11])}


def resnet_block_forward(params, x_nchw, *, padding_type="reflect", eps=1e-5,
                         target_m=1024):
    """PyTorch-facing wrapper: NCHW in / NCHW out.  out = x + conv_block(x)."""
    x = jnp.transpose(x_nchw, (0, 2, 3, 1)).astype(jnp.float32)     # NCHW -> NHWC once
    n, h, w, c = x.shape
    cp = _round_up(c, 128)                  # lane-dense channel padding
    pc = cp - c
    wp = _round_up(w + 2, 8)                # flat width (real + 1+1 pad + junk), % 8 == 0

    def fold(wt, b, bn):
        # eval-mode BN folded into the conv: w' = w * scale(co), t' = beta + (b - mean)*scale
        scale = bn["gamma"] * lax.rsqrt(bn["var"] + eps)
        shift = bn["beta"] + (b - bn["mean"]) * scale
        wf = jnp.transpose(wt, (2, 3, 1, 0)) * scale                # (3,3,Cin,Cout) f32
        wf = jnp.pad(wf, ((0, 0), (0, 0), (0, pc), (0, pc)))
        tf = jnp.pad(shift, ((0, pc),))
        return (wf.reshape(9, cp, cp).astype(jnp.bfloat16),
                tf.reshape(1, cp).astype(jnp.float32))

    w1, t1 = fold(params["w1"], params["b1"], params["bn1"])
    w2, t2 = fold(params["w2"], params["b2"], params["bn2"])

    # cast to bf16 first, then pad (channels, then spatial+junk) and flatten
    xq = jnp.pad(x.astype(jnp.bfloat16), ((0, 0), (0, 0), (0, 0), (0, pc)))
    xf = _pad_flatten_bf16(xq, padding_type, wp)                    # (N,(H+3)Wp,Cp) bf16

    # conv1 -> BN1 -> ReLU, bf16 intermediate
    h1 = _fused_conv3x3(xf, w1, t1, None, n=n, h=h, w=w, wp=wp, c=cp,
                        relu=True, out_dtype=jnp.bfloat16, target_m=target_m)
    h1 = h1.reshape(n, h, wp, cp)[:, :, :w, :]                      # strip junk columns
    hf = _pad_flatten_bf16(h1, padding_type, wp)

    # conv2 -> BN2 -> + residual (residual read straight from the flat padded x)
    y = _fused_conv3x3(hf, w2, t2, xf, n=n, h=h, w=w, wp=wp, c=cp,
                       relu=False, out_dtype=jnp.float32, target_m=target_m)
    y = y.reshape(n, h, wp, cp)[:, :, :w, :c]
    return jnp.transpose(y, (0, 3, 1, 2))                           # NHWC -> NCHW once


def resnet_block_reference(params, x_nchw, *, padding_type="reflect", eps=1e-5):
    """Pure-JAX f32 reference (same math, no Pallas) used for validation."""
    x = jnp.transpose(x_nchw, (0, 2, 3, 1)).astype(jnp.float32)

    def conv(z, w, b):
        zp = jnp.pad(z, ((0, 0), (1, 1), (1, 1), (0, 0)), mode=_PAD_MODE[padding_type])
        y = jax.lax.conv_general_dilated(
            zp, jnp.transpose(w, (2, 3, 1, 0)), (1, 1), "VALID",
            dimension_numbers=("NHWC", "HWIO", "NHWC"),
            precision=jax.lax.Precision.HIGHEST)
        return y + b

    def bn(z, p):
        scale = p["gamma"] * lax.rsqrt(p["var"] + eps)
        return z * scale + (p["beta"] - p["mean"] * scale)

    hmid = jnp.maximum(bn(conv(x, params["w1"], params["b1"]), params["bn1"]), 0.0)
    y = bn(conv(hmid, params["w2"], params["b2"]), params["bn2"]) + x
    return jnp.transpose(y, (0, 3, 1, 2))


if __name__ == "__main__":
    key = jax.random.PRNGKey(0)
    dim, n, h, w = 128, 2, 16, 16            # ResnetBlock(dim=128) on a small image
    kp, kx = jax.random.split(key)
    params = init_resnet_block_params(kp, dim)
    x = jax.random.normal(kx, (n, dim, h, w), jnp.float32)

    out = jax.block_until_ready(jax.jit(resnet_block_forward)(params, x))
    assert out.shape == (n, dim, h, w), out.shape
    assert bool(jnp.all(jnp.isfinite(out)))

    ref = jax.block_until_ready(resnet_block_reference(params, x))
    max_err = float(jnp.max(jnp.abs(out - ref)))
    # bf16 MXU operands / bf16 intermediate+residual vs f32 HIGHEST reference
    assert max_err < 0.5, "max abs err vs reference: %g" % max_err
    print("KERNEL_OK")
</pallas_src>

<mosaic_0001>
module attributes {stable_mosaic.version = 11 : i64} {
  func.func @_conv3x3_kernel(%arg0: i32, %arg1: i32, %arg2: memref<2x456x128xbf16, #tpu.memory_space<any>>, %arg3: memref<9x128x128xbf16, #tpu.memory_space<vmem>>, %arg4: memref<1x128xf32, #tpu.memory_space<vmem>>, %arg5: memref<1x384x128xbf16, #tpu.memory_space<vmem>>, %arg6: memref<2x440x128xbf16, #tpu.memory_space<vmem>>, %arg7: memref<2x!tpu.dma_semaphore, #tpu.memory_space<semaphore_mem>>) attributes {dimension_semantics = [#tpu.dimension_semantics<parallel>, #tpu.dimension_semantics<arbitrary>], iteration_bounds = array<i64: 2, 1>, scalar_prefetch = 0 : i64, scratch_operands = 2 : i64, tpu.core_type = #tpu.core_type<tc>, window_params = [{}, {pipeline_mode = #tpu.pipeline_mode<synchronous>, transform_indices = @transform_1, window_bounds = array<i64: 9, 128, 128>}, {pipeline_mode = #tpu.pipeline_mode<synchronous>, transform_indices = @transform_2, window_bounds = array<i64: 1, 128>}, {transform_indices = @transform_3, window_bounds = array<i64: 1, 384, 128>}]} {
    %c2_i32 = arith.constant 2 : i32
    %0 = arith.remsi %arg1, %c2_i32 : i32
    %c0_i32 = arith.constant 0 : i32
    %1 = arith.cmpi eq, %arg1, %c0_i32 : i32
    %2 = arith.extui %1 : i1 to i32
    %c0_i32_0 = arith.constant 0 : i32
    %3 = arith.cmpi ne, %2, %c0_i32_0 : i32
    scf.if %3 {
      %c384_i32_50 = arith.constant 384 : i32
      %86 = arith.muli %arg1, %c384_i32_50 : i32
      %87 = tpu.assume_multiple %86, 8 : i32
      %c0_i32_51 = arith.constant 0 : i32
      %88 = tpu.memref_slice %arg2[%arg0, %87, %c0_i32_51] : memref<2x456x128xbf16, #tpu.memory_space<any>> -> memref<1x440x128xbf16, #tpu.memory_space<any>>
      %89 = tpu.memref_squeeze %88 : memref<1x440x128xbf16, #tpu.memory_space<any>> -> memref<440x128xbf16, #tpu.memory_space<any>>
      %c0_i32_52 = arith.constant 0 : i32
      %c0_i32_53 = arith.constant 0 : i32
      %90 = tpu.memref_slice %arg6[%0, %c0_i32_52, %c0_i32_53] : memref<2x440x128xbf16, #tpu.memory_space<vmem>> -> memref<1x440x128xbf16, #tpu.memory_space<vmem>>
      %91 = tpu.memref_squeeze %90 : memref<1x440x128xbf16, #tpu.memory_space<vmem>> -> memref<440x128xbf16, #tpu.memory_space<vmem>>
      %92 = tpu.memref_slice %arg7[%0] : memref<2x!tpu.dma_semaphore, #tpu.memory_space<semaphore_mem>> -> memref<1x!tpu.dma_semaphore, #tpu.memory_space<semaphore_mem>>
      %93 = tpu.memref_squeeze %92 : memref<1x!tpu.dma_semaphore, #tpu.memory_space<semaphore_mem>> -> memref<!tpu.dma_semaphore, #tpu.memory_space<semaphore_mem>>
      tpu.enqueue_dma source(%89 : memref<440x128xbf16, #tpu.memory_space<any>>) target(%91 : memref<440x128xbf16, #tpu.memory_space<vmem>>) target_semaphore(%93 : memref<!tpu.dma_semaphore, #tpu.memory_space<semaphore_mem>>)
    } else {
    }
    %c1_i32 = arith.constant 1 : i32
    %4 = arith.addi %arg1, %c1_i32 : i32
    %c1_i32_1 = arith.constant 1 : i32
    %5 = arith.cmpi slt, %4, %c1_i32_1 : i32
    %6 = arith.extui %5 : i1 to i32
    %c0_i32_2 = arith.constant 0 : i32
    %7 = arith.cmpi ne, %6, %c0_i32_2 : i32
    scf.if %7 {
      %c1_i32_50 = arith.constant 1 : i32
      %86 = arith.addi %arg1, %c1_i32_50 : i32
      %c1_i32_51 = arith.constant 1 : i32
      %87 = arith.subi %c1_i32_51, %0 : i32
      %c384_i32_52 = arith.constant 384 : i32
      %88 = arith.muli %86, %c384_i32_52 : i32
      %89 = tpu.assume_multiple %88, 8 : i32
      %c0_i32_53 = arith.constant 0 : i32
      %90 = tpu.memref_slice %arg2[%arg0, %89, %c0_i32_53] : memref<2x456x128xbf16, #tpu.memory_space<any>> -> memref<1x440x128xbf16, #tpu.memory_space<any>>
      %91 = tpu.memref_squeeze %90 : memref<1x440x128xbf16, #tpu.memory_space<any>> -> memref<440x128xbf16, #tpu.memory_space<any>>
      %c0_i32_54 = arith.constant 0 : i32
      %c0_i32_55 = arith.constant 0 : i32
      %92 = tpu.memref_slice %arg6[%87, %c0_i32_54, %c0_i32_55] : memref<2x440x128xbf16, #tpu.memory_space<vmem>> -> memref<1x440x128xbf16, #tpu.memory_space<vmem>>
      %93 = tpu.memref_squeeze %92 : memref<1x440x128xbf16, #tpu.memory_space<vmem>> -> memref<440x128xbf16, #tpu.memory_space<vmem>>
      %94 = tpu.memref_slice %arg7[%87] : memref<2x!tpu.dma_semaphore, #tpu.memory_space<semaphore_mem>> -> memref<1x!tpu.dma_semaphore, #tpu.memory_space<semaphore_mem>>
      %95 = tpu.memref_squeeze %94 : memref<1x!tpu.dma_semaphore, #tpu.memory_space<semaphore_mem>> -> memref<!tpu.dma_semaphore, #tpu.memory_space<semaphore_mem>>
      tpu.enqueue_dma source(%91 : memref<440x128xbf16, #tpu.memory_space<any>>) target(%93 : memref<440x128xbf16, #tpu.memory_space<vmem>>) target_semaphore(%95 : memref<!tpu.dma_semaphore, #tpu.memory_space<semaphore_mem>>)
    } else {
    }
    %c384_i32 = arith.constant 384 : i32
    %8 = arith.muli %arg1, %c384_i32 : i32
    %c0_i32_3 = arith.constant 0 : i32
    %9 = tpu.memref_slice %arg2[%arg0, %8, %c0_i32_3] : memref<2x456x128xbf16, #tpu.memory_space<any>> -> memref<1x440x128xbf16, #tpu.memory_space<any>>
    %10 = tpu.memref_squeeze %9 : memref<1x440x128xbf16, #tpu.memory_space<any>> -> memref<440x128xbf16, #tpu.memory_space<any>>
    %c0_i32_4 = arith.constant 0 : i32
    %c0_i32_5 = arith.constant 0 : i32
    %11 = tpu.memref_slice %arg6[%0, %c0_i32_4, %c0_i32_5] : memref<2x440x128xbf16, #tpu.memory_space<vmem>> -> memref<1x440x128xbf16, #tpu.memory_space<vmem>>
    %12 = tpu.memref_squeeze %11 : memref<1x440x128xbf16, #tpu.memory_space<vmem>> -> memref<440x128xbf16, #tpu.memory_space<vmem>>
    %13 = tpu.memref_slice %arg7[%0] : memref<2x!tpu.dma_semaphore, #tpu.memory_space<semaphore_mem>> -> memref<1x!tpu.dma_semaphore, #tpu.memory_space<semaphore_mem>>
    %14 = tpu.memref_squeeze %13 : memref<1x!tpu.dma_semaphore, #tpu.memory_space<semaphore_mem>> -> memref<!tpu.dma_semaphore, #tpu.memory_space<semaphore_mem>>
    tpu.wait_dma2 semaphore(%14 : memref<!tpu.dma_semaphore, #tpu.memory_space<semaphore_mem>>) src(%10 : memref<440x128xbf16, #tpu.memory_space<any>>) dst(%12 : memref<440x128xbf16, #tpu.memory_space<vmem>>)
    %15 = arith.index_cast %0 : i32 to index
    %c0 = arith.constant 0 : index
    %c0_6 = arith.constant 0 : index
    %16 = vector.load %arg6[%15, %c0, %c0_6] : memref<2x440x128xbf16, #tpu.memory_space<vmem>>, vector<1x384x128xbf16>
    %17 = vector.shape_cast %16 : vector<1x384x128xbf16> to vector<384x128xbf16>
    %c0_7 = arith.constant 0 : index
    %c0_8 = arith.constant 0 : index
    %c0_9 = arith.constant 0 : index
    %18 = vector.load %arg3[%c0_7, %c0_8, %c0_9] : memref<9x128x128xbf16, #tpu.memory_space<vmem>>, vector<1x128x128xbf16>
    %19 = vector.shape_cast %18 : vector<1x128x128xbf16> to vector<128x128xbf16>
    %cst = arith.constant dense<0.000000e+00> : vector<384x128xf32>
    %20 = tpu.matmul %17, %19, %cst {dimension_numbers = #tpu.dot_dimension_numbers<[1], [0], [0], [1], [0, 0, 1, 1], [], []>} : vector<384x128xbf16>, vector<128x128xbf16>, vector<384x128xf32> -> vector<384x128xf32>
    %21 = arith.index_cast %0 : i32 to index
    %c1 = arith.constant 1 : index
    %c0_10 = arith.constant 0 : index
    %22 = vector.load %arg6[%21, %c1, %c0_10] : memref<2x440x128xbf16, #tpu.memory_space<vmem>>, vector<1x384x128xbf16>
    %23 = vector.shape_cast %22 : vector<1x384x128xbf16> to vector<384x128xbf16>
    %c1_11 = arith.constant 1 : index
    %c0_12 = arith.constant 0 : index
    %c0_13 = arith.constant 0 : index
    %24 = vector.load %arg3[%c1_11, %c0_12, %c0_13] : memref<9x128x128xbf16, #tpu.memory_space<vmem>>, vector<1x128x128xbf16>
    %25 = vector.shape_cast %24 : vector<1x128x128xbf16> to vector<128x128xbf16>
    %cst_14 = arith.constant dense<0.000000e+00> : vector<384x128xf32>
    %26 = tpu.matmul %23, %25, %cst_14 {dimension_numbers = #tpu.dot_dimension_numbers<[1], [0], [0], [1], [0, 0, 1, 1], [], []>} : vector<384x128xbf16>, vector<128x128xbf16>, vector<384x128xf32> -> vector<384x128xf32>
    %27 = arith.addf %20, %26 : vector<384x128xf32>
    %28 = arith.index_cast %0 : i32 to index
    %c2 = arith.constant 2 : index
    %c0_15 = arith.constant 0 : index
    %29 = vector.load %arg6[%28, %c2, %c0_15] : memref<2x440x128xbf16, #tpu.memory_space<vmem>>, vector<1x384x128xbf16>
    %30 = vector.shape_cast %29 : vector<1x384x128xbf16> to vector<384x128xbf16>
    %c2_16 = arith.constant 2 : index
    %c0_17 = arith.constant 0 : index
    %c0_18 = arith.constant 0 : index
    %31 = vector.load %arg3[%c2_16, %c0_17, %c0_18] : memref<9x128x128xbf16, #tpu.memory_space<vmem>>, vector<1x128x128xbf16>
    %32 = vector.shape_cast %31 : vector<1x128x128xbf16> to vector<128x128xbf16>
    %cst_19 = arith.constant dense<0.000000e+00> : vector<384x128xf32>
    %33 = tpu.matmul %30, %32, %cst_19 {dimension_numbers = #tpu.dot_dimension_numbers<[1], [0], [0], [1], [0, 0, 1, 1], [], []>} : vector<384x128xbf16>, vector<128x128xbf16>, vector<384x128xf32> -> vector<384x128xf32>
    %34 = arith.addf %27, %33 : vector<384x128xf32>
    %35 = arith.index_cast %0 : i32 to index
    %c24 = arith.constant 24 : index
    %c0_20 = arith.constant 0 : index
    %36 = vector.load %arg6[%35, %c24, %c0_20] : memref<2x440x128xbf16, #tpu.memory_space<vmem>>, vector<1x384x128xbf16>
    %37 = vector.shape_cast %36 : vector<1x384x128xbf16> to vector<384x128xbf16>
    %c3 = arith.constant 3 : index
    %c0_21 = arith.constant 0 : index
    %c0_22 = arith.constant 0 : index
    %38 = vector.load %arg3[%c3, %c0_21, %c0_22] : memref<9x128x128xbf16, #tpu.memory_space<vmem>>, vector<1x128x128xbf16>
    %39 = vector.shape_cast %38 : vector<1x128x128xbf16> to vector<128x128xbf16>
    %cst_23 = arith.constant dense<0.000000e+00> : vector<384x128xf32>
    %40 = tpu.matmul %37, %39, %cst_23 {dimension_numbers = #tpu.dot_dimension_numbers<[1], [0], [0], [1], [0, 0, 1, 1], [], []>} : vector<384x128xbf16>, vector<128x128xbf16>, vector<384x128xf32> -> vector<384x128xf32>
    %41 = arith.addf %34, %40 : vector<384x128xf32>
    %42 = arith.index_cast %0 : i32 to index
    %c25 = arith.constant 25 : index
    %c0_24 = arith.constant 0 : index
    %43 = vector.load %arg6[%42, %c25, %c0_24] : memref<2x440x128xbf16, #tpu.memory_space<vmem>>, vector<1x384x128xbf16>
    %44 = vector.shape_cast %43 : vector<1x384x128xbf16> to vector<384x128xbf16>
    %c4 = arith.constant 4 : index
    %c0_25 = arith.constant 0 : index
    %c0_26 = arith.constant 0 : index
    %45 = vector.load %arg3[%c4, %c0_25, %c0_26] : memref<9x128x128xbf16, #tpu.memory_space<vmem>>, vector<1x128x128xbf16>
    %46 = vector.shape_cast %45 : vector<1x128x128xbf16> to vector<128x128xbf16>
    %cst_27 = arith.constant dense<0.000000e+00> : vector<384x128xf32>
    %47 = tpu.matmul %44, %46, %cst_27 {dimension_numbers = #tpu.dot_dimension_numbers<[1], [0], [0], [1], [0, 0, 1, 1], [], []>} : vector<384x128xbf16>, vector<128x128xbf16>, vector<384x128xf32> -> vector<384x128xf32>
    %48 = arith.addf %41, %47 : vector<384x128xf32>
    %49 = arith.index_cast %0 : i32 to index
    %c26 = arith.constant 26 : index
    %c0_28 = arith.constant 0 : index
    %50 = vector.load %arg6[%49, %c26, %c0_28] : memref<2x440x128xbf16, #tpu.memory_space<vmem>>, vector<1x384x128xbf16>
    %51 = vector.shape_cast %50 : vector<1x384x128xbf16> to vector<384x128xbf16>
    %c5 = arith.constant 5 : index
    %c0_29 = arith.constant 0 : index
    %c0_30 = arith.constant 0 : index
    %52 = vector.load %arg3[%c5, %c0_29, %c0_30] : memref<9x128x128xbf16, #tpu.memory_space<vmem>>, vector<1x128x128xbf16>
    %53 = vector.shape_cast %52 : vector<1x128x128xbf16> to vector<128x128xbf16>
    %cst_31 = arith.constant dense<0.000000e+00> : vector<384x128xf32>
    %54 = tpu.matmul %51, %53, %cst_31 {dimension_numbers = #tpu.dot_dimension_numbers<[1], [0], [0], [1], [0, 0, 1, 1], [], []>} : vector<384x128xbf16>, vector<128x128xbf16>, vector<384x128xf32> -> vector<384x128xf32>
    %55 = arith.addf %48, %54 : vector<384x128xf32>
    %56 = arith.index_cast %0 : i32 to index
    %c48 = arith.constant 48 : index
    %c0_32 = arith.constant 0 : index
    %57 = vector.load %arg6[%56, %c48, %c0_32] : memref<2x440x128xbf16, #tpu.memory_space<vmem>>, vector<1x384x128xbf16>
    %58 = vector.shape_cast %57 : vector<1x384x128xbf16> to vector<384x128xbf16>
    %c6 = arith.constant 6 : index
    %c0_33 = arith.constant 0 : index
    %c0_34 = arith.constant 0 : index
    %59 = vector.load %arg3[%c6, %c0_33, %c0_34] : memref<9x128x128xbf16, #tpu.memory_space<vmem>>, vector<1x128x128xbf16>
    %60 = vector.shape_cast %59 : vector<1x128x128xbf16> to vector<128x128xbf16>
    %cst_35 = arith.constant dense<0.000000e+00> : vector<384x128xf32>
    %61 = tpu.matmul %58, %60, %cst_35 {dimension_numbers = #tpu.dot_dimension_numbers<[1], [0], [0], [1], [0, 0, 1, 1], [], []>} : vector<384x128xbf16>, vector<128x128xbf16>, vector<384x128xf32> -> vector<384x128xf32>
    %62 = arith.addf %55, %61 : vector<384x128xf32>
    %63 = arith.index_cast %0 : i32 to index
    %c49 = arith.constant 49 : index
    %c0_36 = arith.constant 0 : index
    %64 = vector.load %arg6[%63, %c49, %c0_36] : memref<2x440x128xbf16, #tpu.memory_space<vmem>>, vector<1x384x128xbf16>
    %65 = vector.shape_cast %64 : vector<1x384x128xbf16> to vector<384x128xbf16>
    %c7 = arith.constant 7 : index
    %c0_37 = arith.constant 0 : index
    %c0_38 = arith.constant 0 : index
    %66 = vector.load %arg3[%c7, %c0_37, %c0_38] : memref<9x128x128xbf16, #tpu.memory_space<vmem>>, vector<1x128x128xbf16>
    %67 = vector.shape_cast %66 : vector<1x128x128xbf16> to vector<128x128xbf16>
    %cst_39 = arith.constant dense<0.000000e+00> : vector<384x128xf32>
    %68 = tpu.matmul %65, %67, %cst_39 {dimension_numbers = #tpu.dot_dimension_numbers<[1], [0], [0], [1], [0, 0, 1, 1], [], []>} : vector<384x128xbf16>, vector<128x128xbf16>, vector<384x128xf32> -> vector<384x128xf32>
    %69 = arith.addf %62, %68 : vector<384x128xf32>
    %70 = arith.index_cast %0 : i32 to index
    %c50 = arith.constant 50 : index
    %c0_40 = arith.constant 0 : index
    %71 = vector.load %arg6[%70, %c50, %c0_40] : memref<2x440x128xbf16, #tpu.memory_space<vmem>>, vector<1x384x128xbf16>
    %72 = vector.shape_cast %71 : vector<1x384x128xbf16> to vector<384x128xbf16>
    %c8 = arith.constant 8 : index
    %c0_41 = arith.constant 0 : index
    %c0_42 = arith.constant 0 : index
    %73 = vector.load %arg3[%c8, %c0_41, %c0_42] : memref<9x128x128xbf16, #tpu.memory_space<vmem>>, vector<1x128x128xbf16>
    %74 = vector.shape_cast %73 : vector<1x128x128xbf16> to vector<128x128xbf16>
    %cst_43 = arith.constant dense<0.000000e+00> : vector<384x128xf32>
    %75 = tpu.matmul %72, %74, %cst_43 {dimension_numbers = #tpu.dot_dimension_numbers<[1], [0], [0], [1], [0, 0, 1, 1], [], []>} : vector<384x128xbf16>, vector<128x128xbf16>, vector<384x128xf32> -> vector<384x128xf32>
    %76 = arith.addf %69, %75 : vector<384x128xf32>
    %c0_44 = arith.constant 0 : index
    %c0_45 = arith.constant 0 : index
    %77 = vector.load %arg4[%c0_44, %c0_45] : memref<1x128xf32, #tpu.memory_space<vmem>>, vector<1x128xf32>
    %78 = vector.broadcast %77 : vector<1x128xf32> to vector<384x128xf32>
    %79 = arith.addf %76, %78 : vector<384x128xf32>
    %cst_46 = arith.constant 0.000000e+00 : f32
    %80 = vector.broadcast %cst_46 : f32 to vector<384x128xf32>
    %81 = arith.maximumf %79, %80 : vector<384x128xf32>
    %82 = arith.truncf %81 : vector<384x128xf32> to vector<384x128xbf16>
    %c0_47 = arith.constant 0 : index
    %c0_48 = arith.constant 0 : index
    %c0_49 = arith.constant 0 : index
    %83 = vector.load %arg5[%c0_47, %c0_48, %c0_49] : memref<1x384x128xbf16, #tpu.memory_space<vmem>>, vector<1x384x128xbf16>
    %84 = vector.shape_cast %83 : vector<1x384x128xbf16> to vector<384x128xbf16>
    %85 = vector.shape_cast %82 : vector<384x128xbf16> to vector<1x384x128xbf16>
    tpu.vector_store %arg5[%c0_47, %c0_48, %c0_49], %85 {strides = array<i32>} : memref<1x384x128xbf16, #tpu.memory_space<vmem>>, vector<1x384x128xbf16>,
    return
  }
  func.func @transform_1(%arg0: i32, %arg1: i32) -> (i32, i32, i32) {
    %c0_i32 = arith.constant 0 : i32
    %c0_i32_0 = arith.constant 0 : i32
    %c0_i32_1 = arith.constant 0 : i32
    %c0_i32_2 = arith.constant 0 : i32
    return %c0_i32, %c0_i32_0, %c0_i32_1 : i32, i32, i32
  }
  func.func @transform_2(%arg0: i32, %arg1: i32) -> (i32, i32) {
    %c0_i32 = arith.constant 0 : i32
    %c0_i32_0 = arith.constant 0 : i32
    %c0_i32_1 = arith.constant 0 : i32
    return %c0_i32, %c0_i32_0 : i32, i32
  }
  func.func @transform_3(%arg0: i32, %arg1: i32) -> (i32, i32, i32) {
    %c0_i32 = arith.constant 0 : i32
    %c0_i32_0 = arith.constant 0 : i32
    return %arg0, %arg1, %c0_i32 : i32, i32, i32
  }
}

module attributes {stable_mosaic.version = 11 : i64} {
  func.func @_conv3x3_kernel(%arg0: i32, %arg1: i32, %arg2: memref<2x456x128xbf16, #tpu.memory_space<any>>, %arg3: memref<9x128x128xbf16, #tpu.memory_space<vmem>>, %arg4: memref<1x128xf32, #tpu.memory_space<vmem>>, %arg5: memref<2x456x128xbf16, #tpu.memory_space<any>>, %arg6: memref<1x384x128xf32, #tpu.memory_space<vmem>>, %arg7: memref<2x440x128xbf16, #tpu.memory_space<vmem>>, %arg8: memref<2x392x128xbf16, #tpu.memory_space<vmem>>, %arg9: memref<2x!tpu.dma_semaphore, #tpu.memory_space<semaphore_mem>>, %arg10: memref<2x!tpu.dma_semaphore, #tpu.memory_space<semaphore_mem>>) attributes {dimension_semantics = [#tpu.dimension_semantics<parallel>, #tpu.dimension_semantics<arbitrary>], iteration_bounds = array<i64: 2, 1>, scalar_prefetch = 0 : i64, scratch_operands = 4 : i64, tpu.core_type = #tpu.core_type<tc>, window_params = [{}, {pipeline_mode = #tpu.pipeline_mode<synchronous>, transform_indices = @transform_1, window_bounds = array<i64: 9, 128, 128>}, {pipeline_mode = #tpu.pipeline_mode<synchronous>, transform_indices = @transform_2, window_bounds = array<i64: 1, 128>}, {}, {transform_indices = @transform_4, window_bounds = array<i64: 1, 384, 128>}]} {
    %c2_i32 = arith.constant 2 : i32
    %0 = arith.remsi %arg1, %c2_i32 : i32
    %c0_i32 = arith.constant 0 : i32
    %1 = arith.cmpi eq, %arg1, %c0_i32 : i32
    %2 = arith.extui %1 : i1 to i32
    %c0_i32_0 = arith.constant 0 : i32
    %3 = arith.cmpi ne, %2, %c0_i32_0 : i32
    scf.if %3 {
      %c384_i32_55 = arith.constant 384 : i32
      %96 = arith.muli %arg1, %c384_i32_55 : i32
      %97 = tpu.assume_multiple %96, 8 : i32
      %c0_i32_56 = arith.constant 0 : i32
      %98 = tpu.memref_slice %arg2[%arg0, %97, %c0_i32_56] : memref<2x456x128xbf16, #tpu.memory_space<any>> -> memref<1x440x128xbf16, #tpu.memory_space<any>>
      %99 = tpu.memref_squeeze %98 : memref<1x440x128xbf16, #tpu.memory_space<any>> -> memref<440x128xbf16, #tpu.memory_space<any>>
      %c0_i32_57 = arith.constant 0 : i32
      %c0_i32_58 = arith.constant 0 : i32
      %100 = tpu.memref_slice %arg7[%0, %c0_i32_57, %c0_i32_58] : memref<2x440x128xbf16, #tpu.memory_space<vmem>> -> memref<1x440x128xbf16, #tpu.memory_space<vmem>>
      %101 = tpu.memref_squeeze %100 : memref<1x440x128xbf16, #tpu.memory_space<vmem>> -> memref<440x128xbf16, #tpu.memory_space<vmem>>
      %102 = tpu.memref_slice %arg9[%0] : memref<2x!tpu.dma_semaphore, #tpu.memory_space<semaphore_mem>> -> memref<1x!tpu.dma_semaphore, #tpu.memory_space<semaphore_mem>>
      %103 = tpu.memref_squeeze %102 : memref<1x!tpu.dma_semaphore, #tpu.memory_space<semaphore_mem>> -> memref<!tpu.dma_semaphore, #tpu.memory_space<semaphore_mem>>
      tpu.enqueue_dma source(%99 : memref<440x128xbf16, #tpu.memory_space<any>>) target(%101 : memref<440x128xbf16, #tpu.memory_space<vmem>>) target_semaphore(%103 : memref<!tpu.dma_semaphore, #tpu.memory_space<semaphore_mem>>)
      %c384_i32_59 = arith.constant 384 : i32
      %104 = arith.muli %arg1, %c384_i32_59 : i32
      %c24_i32_60 = arith.constant 24 : i32
      %105 = arith.addi %104, %c24_i32_60 : i32
      %106 = tpu.assume_multiple %105, 8 : i32
      %c0_i32_61 = arith.constant 0 : i32
      %107 = tpu.memref_slice %arg5[%arg0, %106, %c0_i32_61] : memref<2x456x128xbf16, #tpu.memory_space<any>> -> memref<1x392x128xbf16, #tpu.memory_space<any>>
      %108 = tpu.memref_squeeze %107 : memref<1x392x128xbf16, #tpu.memory_space<any>> -> memref<392x128xbf16, #tpu.memory_space<any>>
      %c0_i32_62 = arith.constant 0 : i32
      %c0_i32_63 = arith.constant 0 : i32
      %109 = tpu.memref_slice %arg8[%0, %c0_i32_62, %c0_i32_63] : memref<2x392x128xbf16, #tpu.memory_space<vmem>> -> memref<1x392x128xbf16, #tpu.memory_space<vmem>>
      %110 = tpu.memref_squeeze %109 : memref<1x392x128xbf16, #tpu.memory_space<vmem>> -> memref<392x128xbf16, #tpu.memory_space<vmem>>
      %111 = tpu.memref_slice %arg10[%0] : memref<2x!tpu.dma_semaphore, #tpu.memory_space<semaphore_mem>> -> memref<1x!tpu.dma_semaphore, #tpu.memory_space<semaphore_mem>>
      %112 = tpu.memref_squeeze %111 : memref<1x!tpu.dma_semaphore, #tpu.memory_space<semaphore_mem>> -> memref<!tpu.dma_semaphore, #tpu.memory_space<semaphore_mem>>
      tpu.enqueue_dma source(%108 : memref<392x128xbf16, #tpu.memory_space<any>>) target(%110 : memref<392x128xbf16, #tpu.memory_space<vmem>>) target_semaphore(%112 : memref<!tpu.dma_semaphore, #tpu.memory_space<semaphore_mem>>)
    } else {
    }
    %c1_i32 = arith.constant 1 : i32
    %4 = arith.addi %arg1, %c1_i32 : i32
    %c1_i32_1 = arith.constant 1 : i32
    %5 = arith.cmpi slt, %4, %c1_i32_1 : i32
    %6 = arith.extui %5 : i1 to i32
    %c0_i32_2 = arith.constant 0 : i32
    %7 = arith.cmpi ne, %6, %c0_i32_2 : i32
    scf.if %7 {
      %c1_i32_55 = arith.constant 1 : i32
      %96 = arith.addi %arg1, %c1_i32_55 : i32
      %c1_i32_56 = arith.constant 1 : i32
      %97 = arith.subi %c1_i32_56, %0 : i32
      %c384_i32_57 = arith.constant 384 : i32
      %98 = arith.muli %96, %c384_i32_57 : i32
      %99 = tpu.assume_multiple %98, 8 : i32
      %c0_i32_58 = arith.constant 0 : i32
      %100 = tpu.memref_slice %arg2[%arg0, %99, %c0_i32_58] : memref<2x456x128xbf16, #tpu.memory_space<any>> -> memref<1x440x128xbf16, #tpu.memory_space<any>>
      %101 = tpu.memref_squeeze %100 : memref<1x440x128xbf16, #tpu.memory_space<any>> -> memref<440x128xbf16, #tpu.memory_space<any>>
      %c0_i32_59 = arith.constant 0 : i32
      %c0_i32_60 = arith.constant 0 : i32
      %102 = tpu.memref_slice %arg7[%97, %c0_i32_59, %c0_i32_60] : memref<2x440x128xbf16, #tpu.memory_space<vmem>> -> memref<1x440x128xbf16, #tpu.memory_space<vmem>>
      %103 = tpu.memref_squeeze %102 : memref<1x440x128xbf16, #tpu.memory_space<vmem>> -> memref<440x128xbf16, #tpu.memory_space<vmem>>
      %104 = tpu.memref_slice %arg9[%97] : memref<2x!tpu.dma_semaphore, #tpu.memory_space<semaphore_mem>> -> memref<1x!tpu.dma_semaphore, #tpu.memory_space<semaphore_mem>>
      %105 = tpu.memref_squeeze %104 : memref<1x!tpu.dma_semaphore, #tpu.memory_space<semaphore_mem>> -> memref<!tpu.dma_semaphore, #tpu.memory_space<semaphore_mem>>
      tpu.enqueue_dma source(%101 : memref<440x128xbf16, #tpu.memory_space<any>>) target(%103 : memref<440x128xbf16, #tpu.memory_space<vmem>>) target_semaphore(%105 : memref<!tpu.dma_semaphore, #tpu.memory_space<semaphore_mem>>)
      %c384_i32_61 = arith.constant 384 : i32
      %106 = arith.muli %96, %c384_i32_61 : i32
      %c24_i32_62 = arith.constant 24 : i32
      %107 = arith.addi %106, %c24_i32_62 : i32
      %108 = tpu.assume_multiple %107, 8 : i32
      %c0_i32_63 = arith.constant 0 : i32
      %109 = tpu.memref_slice %arg5[%arg0, %108, %c0_i32_63] : memref<2x456x128xbf16, #tpu.memory_space<any>> -> memref<1x392x128xbf16, #tpu.memory_space<any>>
      %110 = tpu.memref_squeeze %109 : memref<1x392x128xbf16, #tpu.memory_space<any>> -> memref<392x128xbf16, #tpu.memory_space<any>>
      %c0_i32_64 = arith.constant 0 : i32
      %c0_i32_65 = arith.constant 0 : i32
      %111 = tpu.memref_slice %arg8[%97, %c0_i32_64, %c0_i32_65] : memref<2x392x128xbf16, #tpu.memory_space<vmem>> -> memref<1x392x128xbf16, #tpu.memory_space<vmem>>
      %112 = tpu.memref_squeeze %111 : memref<1x392x128xbf16, #tpu.memory_space<vmem>> -> memref<392x128xbf16, #tpu.memory_space<vmem>>
      %113 = tpu.memref_slice %arg10[%97] : memref<2x!tpu.dma_semaphore, #tpu.memory_space<semaphore_mem>> -> memref<1x!tpu.dma_semaphore, #tpu.memory_space<semaphore_mem>>
      %114 = tpu.memref_squeeze %113 : memref<1x!tpu.dma_semaphore, #tpu.memory_space<semaphore_mem>> -> memref<!tpu.dma_semaphore, #tpu.memory_space<semaphore_mem>>
      tpu.enqueue_dma source(%110 : memref<392x128xbf16, #tpu.memory_space<any>>) target(%112 : memref<392x128xbf16, #tpu.memory_space<vmem>>) target_semaphore(%114 : memref<!tpu.dma_semaphore, #tpu.memory_space<semaphore_mem>>)
    } else {
    }
    %c384_i32 = arith.constant 384 : i32
    %8 = arith.muli %arg1, %c384_i32 : i32
    %c0_i32_3 = arith.constant 0 : i32
    %9 = tpu.memref_slice %arg2[%arg0, %8, %c0_i32_3] : memref<2x456x128xbf16, #tpu.memory_space<any>> -> memref<1x440x128xbf16, #tpu.memory_space<any>>
    %10 = tpu.memref_squeeze %9 : memref<1x440x128xbf16, #tpu.memory_space<any>> -> memref<440x128xbf16, #tpu.memory_space<any>>
    %c0_i32_4 = arith.constant 0 : i32
    %c0_i32_5 = arith.constant 0 : i32
    %11 = tpu.memref_slice %arg7[%0, %c0_i32_4, %c0_i32_5] : memref<2x440x128xbf16, #tpu.memory_space<vmem>> -> memref<1x440x128xbf16, #tpu.memory_space<vmem>>
    %12 = tpu.memref_squeeze %11 : memref<1x440x128xbf16, #tpu.memory_space<vmem>> -> memref<440x128xbf16, #tpu.memory_space<vmem>>
    %13 = tpu.memref_slice %arg9[%0] : memref<2x!tpu.dma_semaphore, #tpu.memory_space<semaphore_mem>> -> memref<1x!tpu.dma_semaphore, #tpu.memory_space<semaphore_mem>>
    %14 = tpu.memref_squeeze %13 : memref<1x!tpu.dma_semaphore, #tpu.memory_space<semaphore_mem>> -> memref<!tpu.dma_semaphore, #tpu.memory_space<semaphore_mem>>
    tpu.wait_dma2 semaphore(%14 : memref<!tpu.dma_semaphore, #tpu.memory_space<semaphore_mem>>) src(%10 : memref<440x128xbf16, #tpu.memory_space<any>>) dst(%12 : memref<440x128xbf16, #tpu.memory_space<vmem>>)
    %15 = arith.index_cast %0 : i32 to index
    %c0 = arith.constant 0 : index
    %c0_6 = arith.constant 0 : index
    %16 = vector.load %arg7[%15, %c0, %c0_6] : memref<2x440x128xbf16, #tpu.memory_space<vmem>>, vector<1x384x128xbf16>
    %17 = vector.shape_cast %16 : vector<1x384x128xbf16> to vector<384x128xbf16>
    %c0_7 = arith.constant 0 : index
    %c0_8 = arith.constant 0 : index
    %c0_9 = arith.constant 0 : index
    %18 = vector.load %arg3[%c0_7, %c0_8, %c0_9] : memref<9x128x128xbf16, #tpu.memory_space<vmem>>, vector<1x128x128xbf16>
    %19 = vector.shape_cast %18 : vector<1x128x128xbf16> to vector<128x128xbf16>
    %cst = arith.constant dense<0.000000e+00> : vector<384x128xf32>
    %20 = tpu.matmul %17, %19, %cst {dimension_numbers = #tpu.dot_dimension_numbers<[1], [0], [0], [1], [0, 0, 1, 1], [], []>} : vector<384x128xbf16>, vector<128x128xbf16>, vector<384x128xf32> -> vector<384x128xf32>
    %21 = arith.index_cast %0 : i32 to index
    %c1 = arith.constant 1 : index
    %c0_10 = arith.constant 0 : index
    %22 = vector.load %arg7[%21, %c1, %c0_10] : memref<2x440x128xbf16, #tpu.memory_space<vmem>>, vector<1x384x128xbf16>
    %23 = vector.shape_cast %22 : vector<1x384x128xbf16> to vector<384x128xbf16>
    %c1_11 = arith.constant 1 : index
    %c0_12 = arith.constant 0 : index
    %c0_13 = arith.constant 0 : index
    %24 = vector.load %arg3[%c1_11, %c0_12, %c0_13] : memref<9x128x128xbf16, #tpu.memory_space<vmem>>, vector<1x128x128xbf16>
    %25 = vector.shape_cast %24 : vector<1x128x128xbf16> to vector<128x128xbf16>
    %cst_14 = arith.constant dense<0.000000e+00> : vector<384x128xf32>
    %26 = tpu.matmul %23, %25, %cst_14 {dimension_numbers = #tpu.dot_dimension_numbers<[1], [0], [0], [1], [0, 0, 1, 1], [], []>} : vector<384x128xbf16>, vector<128x128xbf16>, vector<384x128xf32> -> vector<384x128xf32>
    %27 = arith.addf %20, %26 : vector<384x128xf32>
    %28 = arith.index_cast %0 : i32 to index
    %c2 = arith.constant 2 : index
    %c0_15 = arith.constant 0 : index
    %29 = vector.load %arg7[%28, %c2, %c0_15] : memref<2x440x128xbf16, #tpu.memory_space<vmem>>, vector<1x384x128xbf16>
    %30 = vector.shape_cast %29 : vector<1x384x128xbf16> to vector<384x128xbf16>
    %c2_16 = arith.constant 2 : index
    %c0_17 = arith.constant 0 : index
    %c0_18 = arith.constant 0 : index
    %31 = vector.load %arg3[%c2_16, %c0_17, %c0_18] : memref<9x128x128xbf16, #tpu.memory_space<vmem>>, vector<1x128x128xbf16>
    %32 = vector.shape_cast %31 : vector<1x128x128xbf16> to vector<128x128xbf16>
    %cst_19 = arith.constant dense<0.000000e+00> : vector<384x128xf32>
    %33 = tpu.matmul %30, %32, %cst_19 {dimension_numbers = #tpu.dot_dimension_numbers<[1], [0], [0], [1], [0, 0, 1, 1], [], []>} : vector<384x128xbf16>, vector<128x128xbf16>, vector<384x128xf32> -> vector<384x128xf32>
    %34 = arith.addf %27, %33 : vector<384x128xf32>
    %35 = arith.index_cast %0 : i32 to index
    %c24 = arith.constant 24 : index
    %c0_20 = arith.constant 0 : index
    %36 = vector.load %arg7[%35, %c24, %c0_20] : memref<2x440x128xbf16, #tpu.memory_space<vmem>>, vector<1x384x128xbf16>
    %37 = vector.shape_cast %36 : vector<1x384x128xbf16> to vector<384x128xbf16>
    %c3 = arith.constant 3 : index
    %c0_21 = arith.constant 0 : index
    %c0_22 = arith.constant 0 : index
    %38 = vector.load %arg3[%c3, %c0_21, %c0_22] : memref<9x128x128xbf16, #tpu.memory_space<vmem>>, vector<1x128x128xbf16>
    %39 = vector.shape_cast %38 : vector<1x128x128xbf16> to vector<128x128xbf16>
    %cst_23 = arith.constant dense<0.000000e+00> : vector<384x128xf32>
    %40 = tpu.matmul %37, %39, %cst_23 {dimension_numbers = #tpu.dot_dimension_numbers<[1], [0], [0], [1], [0, 0, 1, 1], [], []>} : vector<384x128xbf16>, vector<128x128xbf16>, vector<384x128xf32> -> vector<384x128xf32>
    %41 = arith.addf %34, %40 : vector<384x128xf32>
    %42 = arith.index_cast %0 : i32 to index
    %c25 = arith.constant 25 : index
    %c0_24 = arith.constant 0 : index
    %43 = vector.load %arg7[%42, %c25, %c0_24] : memref<2x440x128xbf16, #tpu.memory_space<vmem>>, vector<1x384x128xbf16>
    %44 = vector.shape_cast %43 : vector<1x384x128xbf16> to vector<384x128xbf16>
    %c4 = arith.constant 4 : index
    %c0_25 = arith.constant 0 : index
    %c0_26 = arith.constant 0 : index
    %45 = vector.load %arg3[%c4, %c0_25, %c0_26] : memref<9x128x128xbf16, #tpu.memory_space<vmem>>, vector<1x128x128xbf16>
    %46 = vector.shape_cast %45 : vector<1x128x128xbf16> to vector<128x128xbf16>
    %cst_27 = arith.constant dense<0.000000e+00> : vector<384x128xf32>
    %47 = tpu.matmul %44, %46, %cst_27 {dimension_numbers = #tpu.dot_dimension_numbers<[1], [0], [0], [1], [0, 0, 1, 1], [], []>} : vector<384x128xbf16>, vector<128x128xbf16>, vector<384x128xf32> -> vector<384x128xf32>
    %48 = arith.addf %41, %47 : vector<384x128xf32>
    %49 = arith.index_cast %0 : i32 to index
    %c26 = arith.constant 26 : index
    %c0_28 = arith.constant 0 : index
    %50 = vector.load %arg7[%49, %c26, %c0_28] : memref<2x440x128xbf16, #tpu.memory_space<vmem>>, vector<1x384x128xbf16>
    %51 = vector.shape_cast %50 : vector<1x384x128xbf16> to vector<384x128xbf16>
    %c5 = arith.constant 5 : index
    %c0_29 = arith.constant 0 : index
    %c0_30 = arith.constant 0 : index
    %52 = vector.load %arg3[%c5, %c0_29, %c0_30] : memref<9x128x128xbf16, #tpu.memory_space<vmem>>, vector<1x128x128xbf16>
    %53 = vector.shape_cast %52 : vector<1x128x128xbf16> to vector<128x128xbf16>
    %cst_31 = arith.constant dense<0.000000e+00> : vector<384x128xf32>
    %54 = tpu.matmul %51, %53, %cst_31 {dimension_numbers = #tpu.dot_dimension_numbers<[1], [0], [0], [1], [0, 0, 1, 1], [], []>} : vector<384x128xbf16>, vector<128x128xbf16>, vector<384x128xf32> -> vector<384x128xf32>
    %55 = arith.addf %48, %54 : vector<384x128xf32>
    %56 = arith.index_cast %0 : i32 to index
    %c48 = arith.constant 48 : index
    %c0_32 = arith.constant 0 : index
    %57 = vector.load %arg7[%56, %c48, %c0_32] : memref<2x440x128xbf16, #tpu.memory_space<vmem>>, vector<1x384x128xbf16>
    %58 = vector.shape_cast %57 : vector<1x384x128xbf16> to vector<384x128xbf16>
    %c6 = arith.constant 6 : index
    %c0_33 = arith.constant 0 : index
    %c0_34 = arith.constant 0 : index
    %59 = vector.load %arg3[%c6, %c0_33, %c0_34] : memref<9x128x128xbf16, #tpu.memory_space<vmem>>, vector<1x128x128xbf16>
    %60 = vector.shape_cast %59 : vector<1x128x128xbf16> to vector<128x128xbf16>
    %cst_35 = arith.constant dense<0.000000e+00> : vector<384x128xf32>
    %61 = tpu.matmul %58, %60, %cst_35 {dimension_numbers = #tpu.dot_dimension_numbers<[1], [0], [0], [1], [0, 0, 1, 1], [], []>} : vector<384x128xbf16>, vector<128x128xbf16>, vector<384x128xf32> -> vector<384x128xf32>
    %62 = arith.addf %55, %61 : vector<384x128xf32>
    %63 = arith.index_cast %0 : i32 to index
    %c49 = arith.constant 49 : index
    %c0_36 = arith.constant 0 : index
    %64 = vector.load %arg7[%63, %c49, %c0_36] : memref<2x440x128xbf16, #tpu.memory_space<vmem>>, vector<1x384x128xbf16>
    %65 = vector.shape_cast %64 : vector<1x384x128xbf16> to vector<384x128xbf16>
    %c7 = arith.constant 7 : index
    %c0_37 = arith.constant 0 : index
    %c0_38 = arith.constant 0 : index
    %66 = vector.load %arg3[%c7, %c0_37, %c0_38] : memref<9x128x128xbf16, #tpu.memory_space<vmem>>, vector<1x128x128xbf16>
    %67 = vector.shape_cast %66 : vector<1x128x128xbf16> to vector<128x128xbf16>
    %cst_39 = arith.constant dense<0.000000e+00> : vector<384x128xf32>
    %68 = tpu.matmul %65, %67, %cst_39 {dimension_numbers = #tpu.dot_dimension_numbers<[1], [0], [0], [1], [0, 0, 1, 1], [], []>} : vector<384x128xbf16>, vector<128x128xbf16>, vector<384x128xf32> -> vector<384x128xf32>
    %69 = arith.addf %62, %68 : vector<384x128xf32>
    %70 = arith.index_cast %0 : i32 to index
    %c50 = arith.constant 50 : index
    %c0_40 = arith.constant 0 : index
    %71 = vector.load %arg7[%70, %c50, %c0_40] : memref<2x440x128xbf16, #tpu.memory_space<vmem>>, vector<1x384x128xbf16>
    %72 = vector.shape_cast %71 : vector<1x384x128xbf16> to vector<384x128xbf16>
    %c8 = arith.constant 8 : index
    %c0_41 = arith.constant 0 : index
    %c0_42 = arith.constant 0 : index
    %73 = vector.load %arg3[%c8, %c0_41, %c0_42] : memref<9x128x128xbf16, #tpu.memory_space<vmem>>, vector<1x128x128xbf16>
    %74 = vector.shape_cast %73 : vector<1x128x128xbf16> to vector<128x128xbf16>
    %cst_43 = arith.constant dense<0.000000e+00> : vector<384x128xf32>
    %75 = tpu.matmul %72, %74, %cst_43 {dimension_numbers = #tpu.dot_dimension_numbers<[1], [0], [0], [1], [0, 0, 1, 1], [], []>} : vector<384x128xbf16>, vector<128x128xbf16>, vector<384x128xf32> -> vector<384x128xf32>
    %76 = arith.addf %69, %75 : vector<384x128xf32>
    %c0_44 = arith.constant 0 : index
    %c0_45 = arith.constant 0 : index
    %77 = vector.load %arg4[%c0_44, %c0_45] : memref<1x128xf32, #tpu.memory_space<vmem>>, vector<1x128xf32>
    %78 = vector.broadcast %77 : vector<1x128xf32> to vector<384x128xf32>
    %79 = arith.addf %76, %78 : vector<384x128xf32>
    %c384_i32_46 = arith.constant 384 : i32
    %80 = arith.muli %arg1, %c384_i32_46 : i32
    %c24_i32 = arith.constant 24 : i32
    %81 = arith.addi %80, %c24_i32 : i32
    %c0_i32_47 = arith.constant 0 : i32
    %82 = tpu.memref_slice %arg5[%arg0, %81, %c0_i32_47] : memref<2x456x128xbf16, #tpu.memory_space<any>> -> memref<1x392x128xbf16, #tpu.memory_space<any>>
    %83 = tpu.memref_squeeze %82 : memref<1x392x128xbf16, #tpu.memory_space<any>> -> memref<392x128xbf16, #tpu.memory_space<any>>
    %c0_i32_48 = arith.constant 0 : i32
    %c0_i32_49 = arith.constant 0 : i32
    %84 = tpu.memref_slice %arg8[%0, %c0_i32_48, %c0_i32_49] : memref<2x392x128xbf16, #tpu.memory_space<vmem>> -> memref<1x392x128xbf16, #tpu.memory_space<vmem>>
    %85 = tpu.memref_squeeze %84 : memref<1x392x128xbf16, #tpu.memory_space<vmem>> -> memref<392x128xbf16, #tpu.memory_space<vmem>>
    %86 = tpu.memref_slice %arg10[%0] : memref<2x!tpu.dma_semaphore, #tpu.memory_space<semaphore_mem>> -> memref<1x!tpu.dma_semaphore, #tpu.memory_space<semaphore_mem>>
    %87 = tpu.memref_squeeze %86 : memref<1x!tpu.dma_semaphore, #tpu.memory_space<semaphore_mem>> -> memref<!tpu.dma_semaphore, #tpu.memory_space<semaphore_mem>>
    tpu.wait_dma2 semaphore(%87 : memref<!tpu.dma_semaphore, #tpu.memory_space<semaphore_mem>>) src(%83 : memref<392x128xbf16, #tpu.memory_space<any>>) dst(%85 : memref<392x128xbf16, #tpu.memory_space<vmem>>)
    %88 = arith.index_cast %0 : i32 to index
    %c1_50 = arith.constant 1 : index
    %c0_51 = arith.constant 0 : index
    %89 = vector.load %arg8[%88, %c1_50, %c0_51] : memref<2x392x128xbf16, #tpu.memory_space<vmem>>, vector<1x384x128xbf16>
    %90 = vector.shape_cast %89 : vector<1x384x128xbf16> to vector<384x128xbf16>
    %91 = arith.extf %90 : vector<384x128xbf16> to vector<384x128xf32>
    %92 = arith.addf %79, %91 : vector<384x128xf32>
    %c0_52 = arith.constant 0 : index
    %c0_53 = arith.constant 0 : index
    %c0_54 = arith.constant 0 : index
    %93 = vector.load %arg6[%c0_52, %c0_53, %c0_54] : memref<1x384x128xf32, #tpu.memory_space<vmem>>, vector<1x384x128xf32>
    %94 = vector.shape_cast %93 : vector<1x384x128xf32> to vector<384x128xf32>
    %95 = vector.shape_cast %92 : vector<384x128xf32> to vector<1x384x128xf32>
    tpu.vector_store %arg6[%c0_52, %c0_53, %c0_54], %95 {strides = array<i32>} : memref<1x384x128xf32, #tpu.memory_space<vmem>>, vector<1x384x128xf32>,
    return
  }
  func.func @transform_1(%arg0: i32, %arg1: i32) -> (i32, i32, i32) {
    %c0_i32 = arith.constant 0 : i32
    %c0_i32_0 = arith.constant 0 : i32
    %c0_i32_1 = arith.constant 0 : i32
    %c0_i32_2 = arith.constant 0 : i32
    return %c0_i32, %c0_i32_0, %c0_i32_1 : i32, i32, i32
  }
  func.func @transform_2(%arg0: i32, %arg1: i32) -> (i32, i32) {
    %c0_i32 = arith.constant 0 : i32
    %c0_i32_0 = arith.constant 0 : i32
    %c0_i32_1 = arith.constant 0 : i32
    return %c0_i32, %c0_i32_0 : i32, i32
  }
  func.func @transform_4(%arg0: i32, %arg1: i32) -> (i32, i32, i32) {
    %c0_i32 = arith.constant 0 : i32
    %c0_i32_0 = arith.constant 0 : i32
    return %arg0, %arg1, %c0_i32 : i32, i32, i32
  }
}

</mosaic_0001>

<llo_original>
// kernel: resnet_block_forward.2
$region0: #{resnet_block_forward.2}
  #allocation0 [shape = 'u32[]', space=smem, size = 0x4, offset = 0x4, fixed_abs, tag = 'smem constant byte address 0x4 - core index']
  #allocation1 [shape = 'u32[144,128]{1,0:T(1,128)}', space=vmem, size = 0x12000, scoped, tag = 'internal scratch']
  #allocation2 [shape = 'bf16[2,440,128]{2,1,0:T(8,128)(2,1)}', space=vmem, size = 0x37000, scoped, tag = 'scratch operand']
  #allocation3 [shape = 's32[2]{0}', space=sflag, size = 0x8, scoped, tag = 'scratch operand']
  #allocation4 [shape = 's32[]', space=sflag, size = 0x4, offset = 0, fixed_abs, tag = 'sflag constant byte address 0x0 - dummy sync flag']
  #allocation5 [shape = 's32[]', space=sflag, size = 0x4, offset = 0, fixed_abs, tag = 'sflag constant byte address 0x0 - dummy sync flag']
  %s0 = inlined_call_operand.vmem [shape: bf16[2,456,128], index: 0, kind: input, shape index: {}]
  %s1 = inlined_call_operand.vmem [shape: bf16[9,128,128], index: 1, kind: input, shape index: {}]
  %s2 = inlined_call_operand.vmem [shape: f32[1,128], index: 2, kind: input, shape index: {}]
  %s3 = inlined_call_operand.vmem [shape: bf16[2,384,128], index: 3, kind: output, shape index: {}]
  %s4 = sld [smem:[#allocation0]]
  $region123: #{resnet_block_forward.2} parent=0
    _
  %s6 = ssub.s32 1, %s4
  %s7 = scalar_select 0, %s6, %s4
  loop: start=0, step=1, limit=4
  $region2: #{resnet_block_forward.2} parent=0 // loop_pre_header
    _
  $region3: #{resnet_block_forward.2} parent=0 // loop_header
    %s9 = sphi 0, %s13
    %p10 = scmp.ge.s32.totalorder %s9, 4
    %s16 = sphi 0, %s28
    %s17 = sphi 0, %s24
    %s18 = sphi 0, %s16
    %s19 = sphi 0, %s17
    %s20 = sphi 0, %s18
    %s21 = sphi 0, %s19
    %s29 = sphi 0, %s29
    %s31 = sphi 0, %s29
    %s32 = sphi 0, %s31
    %s46 = sphi 0, %s32
    %s50 = sphi 0, %s50
    %s52 = sphi 0, %s50
    %s53 = sphi 0, %s52
    %s67 = sphi 0, %s53
    %s75 = sphi 0, %s77
    %s78 = sphi 0, %s75
    %s79 = sphi 0, %s78
    %s95 = sphi 0, %s79
  $region4: #{resnet_block_forward.2} parent=0 // loop_header_branch
    %12 = sbr.rel (%p10) target = $region8
  $region5: #{resnet_block_forward.2} parent=0 // loop_body
    %s14 = ssub.s32 %s9, 1
    %s15 = ssub.s32 %s9, 2
    %s22 = sadd.s32 1, %s17
    %p23 = scmp.ge.s32.totalorder %s22, 1
    %s24 = scalar_select %p23, 0, %s22
    %s25 = sadd.s32 1, %s16
    %s26 = scalar_select %p23, %s25, %s16
    %p27 = scmp.ge.s32.totalorder %s26, 2
    %s28 = scalar_select %p27, 0, %s26
    %s30 = sadd.s32 %s29, 1
    %p33 = scmp.eq.s32.totalorder %s9, 1
    %p34 = scmp.ne.s32.totalorder %s29, %s31
    %p35 = scmp.eq.s32.totalorder %s9, 0
    %p36 = por %p34, %p35
    %p37 = scmp.ne.s32.totalorder %s29, %s31
    %p38 = scmp.eq.s32.totalorder %s14, 1
    %p39 = por %p37, %p38
    %p40 = scmp.ne.s32.totalorder %s31, %s32
    %p41 = scmp.eq.s32.totalorder %s14, 0
    %p42 = por %p40, %p41
    %p43 = scmp.ne.s32.totalorder %s31, %s32
    %p44 = scmp.eq.s32.totalorder %s15, 1
    %p45 = por %p43, %p44
    %p47 = scmp.ne.s32.totalorder %s32, %s46
    %p48 = scmp.eq.s32.totalorder %s15, 0
    %p49 = por %p47, %p48
    %s51 = sadd.s32 %s50, 1
    %p54 = scmp.eq.s32.totalorder %s9, 1
    %p55 = scmp.ne.s32.totalorder %s50, %s52
    %p56 = scmp.eq.s32.totalorder %s9, 0
    %p57 = por %p55, %p56
    %p58 = scmp.ne.s32.totalorder %s50, %s52
    %p59 = scmp.eq.s32.totalorder %s14, 1
    %p60 = por %p58, %p59
    %p61 = scmp.ne.s32.totalorder %s52, %s53
    %p62 = scmp.eq.s32.totalorder %s14, 0
    %p63 = por %p61, %p62
    %p64 = scmp.ne.s32.totalorder %s52, %s53
    %p65 = scmp.eq.s32.totalorder %s15, 1
    %p66 = por %p64, %p65
    %p68 = scmp.ne.s32.totalorder %s53, %s67
    %p69 = scmp.eq.s32.totalorder %s15, 0
    %p70 = por %p68, %p69
    %s71 = ssub.s32 %s16, %s28
    %s72 = ssub.s32 %s17, %s24
    %s73 = sor.u32 %s71, %s72
    %p74 = scmp.eq.s32.totalorder %s73, 0
    %s76 = sadd.s32 %s75, 1
    %s77 = scalar_select %p74, %s75, %s76
    %p80 = pneg %p74
    %p81 = scmp.eq.s32.totalorder %s9, 1
    %p82 = por %p80, %p81
    %p83 = scmp.ne.s32.totalorder %s75, %s78
    %p84 = scmp.eq.s32.totalorder %s9, 0
    %p85 = por %p83, %p84
    %p86 = scmp.ne.s32.totalorder %s75, %s78
    %p87 = scmp.eq.s32.totalorder %s14, 1
    %p88 = por %p86, %p87
    %p89 = scmp.ne.s32.totalorder %s78, %s79
    %p90 = scmp.eq.s32.totalorder %s14, 0
    %p91 = por %p89, %p90
    %p92 = scmp.ne.s32.totalorder %s78, %s79
    %p93 = scmp.eq.s32.totalorder %s15, 1
    %p94 = por %p92, %p93
    %p96 = scmp.ne.s32.totalorder %s79, %s95
    %p97 = scmp.eq.s32.totalorder %s15, 0
    %p98 = por %p96, %p97
    %p99 = scmp.le.s32.totalorder 1, %s9
    %p100 = scmp.lt.s32.totalorder %s9, 3
    %p101 = pnand %p99, %p100
    %p102 = pneg %p101
    // Predicated region
    $region9: #{resnet_block_forward.2} parent=5 // pred_check
      _
    $region10: #{resnet_block_forward.2} parent=5 // pred_check_branch
      %104 = sbr.rel (%p101) target = $region12
    $region11: #{resnet_block_forward.2} parent=5 // pred_region
      %s105 = ssub.s32 %s9, 1
      // Predicated region
      $region13: #{resnet_block_forward.2} parent=11 // pred_check
        %p106 = pneg %p42
      $region14: #{resnet_block_forward.2} parent=11 // pred_check_branch
        %108 = sbr.rel (%p106) target = $region16
      $region15: #{resnet_block_forward.2} parent=11 // pred_region
        _
      $region16: #{resnet_block_forward.2} parent=11 // pred_fallthru
        _
      // Predicated region
      $region17: #{resnet_block_forward.2} parent=11 // pred_check
        %p109 = pneg %p63
      $region18: #{resnet_block_forward.2} parent=11 // pred_check_branch
        %111 = sbr.rel (%p109) target = $region20
      $region19: #{resnet_block_forward.2} parent=11 // pred_region
        _
      $region20: #{resnet_block_forward.2} parent=11 // pred_fallthru
        _
    $region12: #{resnet_block_forward.2} parent=5 // pred_fallthru
      _
    %p112 = scmp.lt.s32.totalorder %s9, 2
    // Predicated region
    $region21: #{resnet_block_forward.2} parent=5 // pred_check
      %p113 = pneg %p112
    $region22: #{resnet_block_forward.2} parent=5 // pred_check_branch
      %115 = sbr.rel (%p113) target = $region24
    $region23: #{resnet_block_forward.2} parent=5 // pred_region
      _
    $region24: #{resnet_block_forward.2} parent=5 // pred_fallthru
      _
    %p116 = scmp.le.s32.totalorder 1, %s9
    %p117 = scmp.lt.s32.totalorder %s9, 3
    %p118 = pnand %p116, %p117
    %p119 = pneg %p118
    // Predicated region
    $region25: #{resnet_block_forward.2} parent=5 // pred_check
      _
    $region26: #{resnet_block_forward.2} parent=5 // pred_check_branch
      %121 = sbr.rel (%p118) target = $region28
    $region27: #{resnet_block_forward.2} parent=5 // pred_region
      %s122 = ssub.s32 %s9, 1
      %p123 = pneg %p42
      %p124 = pneg %p39
      %p125 = pneg %p63
      %p126 = pneg %p60
      %p127 = pneg %p91
      %p128 = pneg %p88
      %s129 = smul.u32 48, %s19
      %p130 = scmp.lt.s32.totalorder %s18, 1
      %s131 = scalar_select %p130, %s18, 1
      %p132 = scmp.lt.s32.totalorder %s129, 47
      %s133 = scalar_select %p132, %s129, 47
      %s134 = smul.addr %s131, 48
      %s135 = sadd.s32 %s133, %s134
      %s136 = smul.addr %s135, 4
      %s137 = scalar_lea.vmem %s3, %s136
      %s138 = smul.u32 48, %s19
      %p139 = scmp.lt.s32.totalorder %s18, 1
      %s140 = scalar_select %p139, %s18, 1
      %p141 = scmp.lt.s32.totalorder %s138, 47
      %s142 = scalar_select %p141, %s138, 47
      %s143 = smul.addr %s140, 48
      %s144 = sadd.s32 %s142, %s143
      %s145 = smul.addr %s144, 4
      %s146 = scalar_lea.vmem %s3, %s145
      %s147 = smul.u32 48, %s19
      %p149 = scmp.lt.s32.totalorder %s19, 0
      %s150 = ssub.s32 0, %s19
      %s151 = scalar_select %p149, %s150, %s19
      %s152 = sand.u32 %s151, 1
      %s153 = ssub.s32 0, %s152
      %s154 = scalar_select %p149, %s153, %s152
      %p155 = scmp.eq.s32.totalorder %s19, 0
      // Predicated region
      $region29: #{resnet_block_forward.2} parent=27 // pred_check
        %p156 = pneg %p155
      $region30: #{resnet_block_forward.2} parent=27 // pred_check_branch
        %158 = sbr.rel (%p156) target = $region32
      $region31: #{resnet_block_forward.2} parent=27 // pred_region
        %s159 = smul.u32 %s19, 384
        %s160 = sshra.s32 %s159, 3
        %s161 = sand.u32 %s159, 7
        %s162 = smul.u32 %s18, 57
        %s163 = sadd.s32 %s160, %s162
        %s164 = smul.addr %s163, 4
        %s165 = scalar_lea.vmem %s0, %s164
        %s166 = smul.u32 %s154, 55
        %s167 = smul.addr %s166, 4
        %s168 = scalar_lea.vmem [#allocation2], %s167
        %s169 = scalar_lea.sflag [#allocation3], %s154
        %p171 = scmp.lt.u32.totalorder 220, 8
        %p172 = pneg %p171
        // Predicated region
        $region33: #{resnet_block_forward.2} parent=31 // pred_check
          _
        $region34: #{resnet_block_forward.2} parent=31 // pred_check_branch
          %174 = sbr.rel (%p171) target = $region36
        $region35: #{resnet_block_forward.2} parent=31 // pred_region
          %s190 = sand.u32 220, 7
          %p191 = scmp.eq.s32.totalorder %s190, 0
          %p192 = pneg %p191
          // Predicated region
          $region48: #{resnet_block_forward.2} parent=35 // pred_check
            _
          $region49: #{resnet_block_forward.2} parent=35 // pred_check_branch
            %194 = sbr.rel (%p191) target = $region51
          $region50: #{resnet_block_forward.2} parent=35 // pred_region
            %s195 = sand.u32 220, 7
            %s196 = ssub.s32 220, %s195
            %s197 = scalar_lea.vmem %s165, %s196
            %s198 = ssub.s32 220, %s195
            %s199 = scalar_lea.vmem %s168, %s198 [#allocation2]
            loop: start=0, step=1, limit=1
            $region52: #{resnet_block_forward.2} parent=50 // loop_pre_header
              _
            $region53: #{resnet_block_forward.2} parent=50 // loop_header
              %s201 = sphi 0, %s205
              %p202 = scmp.ge.s32.totalorder %s201, 1
              %s206 = sphi %s165, %s165
              %s207 = sphi %s168, %s168
            $region54: #{resnet_block_forward.2} parent=50 // loop_header_branch
              %204 = sbr.rel (%p202) target = $region58
            $region55: #{resnet_block_forward.2} parent=50 // loop_body
              %v208 = vld [vmem:[%s206] sm:$0xff]
              %209 = vst [vmem:[%s207] sm:$0xff] %v208
              %v210 = vld [vmem:[%s206 + $0x8] sm:$0xff]
              %211 = vst [vmem:[%s207 + $0x8] sm:$0xff] %v210
              %v212 = vld [vmem:[%s206 + $0x10] sm:$0xff]
              %213 = vst [vmem:[%s207 + $0x10] sm:$0xff] %v212
              %v214 = vld [vmem:[%s206 + $0x18] sm:$0xff]
              %215 = vst [vmem:[%s207 + $0x18] sm:$0xff] %v214
              %v216 = vld [vmem:[%s206 + $0x20] sm:$0xff]
              %217 = vst [vmem:[%s207 + $0x20] sm:$0xff] %v216
              %v218 = vld [vmem:[%s206 + $0x28] sm:$0xff]
              %219 = vst [vmem:[%s207 + $0x28] sm:$0xff] %v218
              %v220 = vld [vmem:[%s206 + $0x30] sm:$0xff]
              %221 = vst [vmem:[%s207 + $0x30] sm:$0xff] %v220
              %v222 = vld [vmem:[%s206 + $0x38] sm:$0xff]
              %223 = vst [vmem:[%s207 + $0x38] sm:$0xff] %v222
              %v224 = vld [vmem:[%s206 + $0x40] sm:$0xff]
              %225 = vst [vmem:[%s207 + $0x40] sm:$0xff] %v224
              %v226 = vld [vmem:[%s206 + $0x48] sm:$0xff]
              %227 = vst [vmem:[%s207 + $0x48] sm:$0xff] %v226
              %v228 = vld [vmem:[%s206 + $0x50] sm:$0xff]
              %229 = vst [vmem:[%s207 + $0x50] sm:$0xff] %v228
              %v230 = vld [vmem:[%s206 + $0x58] sm:$0xff]
              %231 = vst [vmem:[%s207 + $0x58] sm:$0xff] %v230
              %v232 = vld [vmem:[%s206 + $0x60] sm:$0xff]
              %233 = vst [vmem:[%s207 + $0x60] sm:$0xff] %v232
              %v234 = vld [vmem:[%s206 + $0x68] sm:$0xff]
              %235 = vst [vmem:[%s207 + $0x68] sm:$0xff] %v234
              %v236 = vld [vmem:[%s206 + $0x70] sm:$0xff]
              %237 = vst [vmem:[%s207 + $0x70] sm:$0xff] %v236
              %v238 = vld [vmem:[%s206 + $0x78] sm:$0xff]
              %239 = vst [vmem:[%s207 + $0x78] sm:$0xff] %v238
              %v240 = vld [vmem:[%s206 + $0x80] sm:$0xff]
              %241 = vst [vmem:[%s207 + $0x80] sm:$0xff] %v240
              %v242 = vld [vmem:[%s206 + $0x88] sm:$0xff]
              %243 = vst [vmem:[%s207 + $0x88] sm:$0xff] %v242
              %v244 = vld [vmem:[%s206 + $0x90] sm:$0xff]
              %245 = vst [vmem:[%s207 + $0x90] sm:$0xff] %v244
              %v246 = vld [vmem:[%s206 + $0x98] sm:$0xff]
              %247 = vst [vmem:[%s207 + $0x98] sm:$0xff] %v246
              %v248 = vld [vmem:[%s206 + $0xa0] sm:$0xff]
              %249 = vst [vmem:[%s207 + $0xa0] sm:$0xff] %v248
              %v250 = vld [vmem:[%s206 + $0xa8] sm:$0xff]
              %251 = vst [vmem:[%s207 + $0xa8] sm:$0xff] %v250
              %v252 = vld [vmem:[%s206 + $0xb0] sm:$0xff]
              %253 = vst [vmem:[%s207 + $0xb0] sm:$0xff] %v252
              %v254 = vld [vmem:[%s206 + $0xb8] sm:$0xff]
              %255 = vst [vmem:[%s207 + $0xb8] sm:$0xff] %v254
              %v256 = vld [vmem:[%s206 + $0xc0] sm:$0xff]
              %257 = vst [vmem:[%s207 + $0xc0] sm:$0xff] %v256
              %v258 = vld [vmem:[%s206 + $0xc8] sm:$0xff]
              %259 = vst [vmem:[%s207 + $0xc8] sm:$0xff] %v258
              %v260 = vld [vmem:[%s206 + $0xd0] sm:$0xff]
              %261 = vst [vmem:[%s207 + $0xd0] sm:$0xff] %v260
            $region56: #{resnet_block_forward.2} parent=50 // loop_footer
              %s205 = sadd.s32 1, %s201
            $region57: #{resnet_block_forward.2} parent=50 // loop_footer_branch
              %200 = sbr.rel target = $region53
            $region58: #{resnet_block_forward.2} parent=50 // loop_exit
              _
            %s262 = sshll.u32 1, %s195
            %s263 = ssub.s32 %s262, 1
            loop: start=0, step=1, limit=1
            $region59: #{resnet_block_forward.2} parent=50 // loop_pre_header
              _
            $region60: #{resnet_block_forward.2} parent=50 // loop_header
              %s265 = sphi 0, %s269
              %p266 = scmp.ge.s32.totalorder %s265, 1
              %s270 = sphi %s197, %s197
              %s271 = sphi %s199, %s199
            $region61: #{resnet_block_forward.2} parent=50 // loop_header_branch
              %268 = sbr.rel (%p266) target = $region65
            $region62: #{resnet_block_forward.2} parent=50 // loop_body
              %v272 = vld [vmem:[%s270] sm:%s263]
              %273 = vst [vmem:[%s271] sm:%s263] %v272
            $region63: #{resnet_block_forward.2} parent=50 // loop_footer
              %s269 = sadd.s32 1, %s265
            $region64: #{resnet_block_forward.2} parent=50 // loop_footer_branch
              %264 = sbr.rel target = $region60
            $region65: #{resnet_block_forward.2} parent=50 // loop_exit
              _
          $region51: #{resnet_block_forward.2} parent=35 // pred_fallthru
            _
        $region36: #{resnet_block_forward.2} parent=31 // pred_fallthru
          _
        // Predicated region
        $region37: #{resnet_block_forward.2} parent=31 // pred_check
          %p175 = pneg %p171
        $region38: #{resnet_block_forward.2} parent=31 // pred_check_branch
          %177 = sbr.rel (%p175) target = $region40
        $region39: #{resnet_block_forward.2} parent=31 // pred_region
          %s178 = sshll.u32 1, 220
          %s179 = ssub.s32 %s178, 1
          loop: start=0, step=1, limit=1
          $region41: #{resnet_block_forward.2} parent=39 // loop_pre_header
            _
          $region42: #{resnet_block_forward.2} parent=39 // loop_header
            %s181 = sphi 0, %s185
            %p182 = scmp.ge.s32.totalorder %s181, 1
            %s186 = sphi %s165, %s165
            %s187 = sphi %s168, %s168
          $region43: #{resnet_block_forward.2} parent=39 // loop_header_branch
            %184 = sbr.rel (%p182) target = $region47
          $region44: #{resnet_block_forward.2} parent=39 // loop_body
            %v188 = vld [vmem:[%s186] sm:%s179]
            %189 = vst [vmem:[%s187] sm:%s179] %v188
          $region45: #{resnet_block_forward.2} parent=39 // loop_footer
            %s185 = sadd.s32 1, %s181
          $region46: #{resnet_block_forward.2} parent=39 // loop_footer_branch
            %180 = sbr.rel target = $region42
          $region47: #{resnet_block_forward.2} parent=39 // loop_exit
            _
        $region40: #{resnet_block_forward.2} parent=31 // pred_fallthru
          _
        // Predicated region
        $region66: #{resnet_block_forward.2} parent=31 // pred_check
          _
        $region67: #{resnet_block_forward.2} parent=31 // pred_check_branch
          %276 = sbr.rel (0) target = $region69
        $region68: #{resnet_block_forward.2} parent=31 // pred_region
          %277 = vsyncadd %s169, 3520
        $region69: #{resnet_block_forward.2} parent=31 // pred_fallthru
          _
      $region32: #{resnet_block_forward.2} parent=27 // pred_fallthru
        _
      %s278 = sadd.s32 %s19, 1
      %p279 = scmp.lt.s32.totalorder %s278, 1
      // Predicated region
      $region70: #{resnet_block_forward.2} parent=27 // pred_check
        %p280 = pneg %p279
      $region71: #{resnet_block_forward.2} parent=27 // pred_check_branch
        %282 = sbr.rel (%p280) target = $region73
      $region72: #{resnet_block_forward.2} parent=27 // pred_region
        %s283 = ssub.s32 1, %s154
        %s284 = smul.u32 %s278, 384
        %s285 = sshra.s32 %s284, 3
        %s286 = sand.u32 %s284, 7
        %s287 = smul.u32 %s18, 57
        %s288 = sadd.s32 %s285, %s287
        %s289 = smul.addr %s288, 4
        %s290 = scalar_lea.vmem %s0, %s289
        %s291 = smul.u32 %s283, 55
        %s292 = smul.addr %s291, 4
        %s293 = scalar_lea.vmem [#allocation2], %s292
        %s294 = scalar_lea.sflag [#allocation3], %s283
        %p296 = scmp.lt.u32.totalorder 220, 8
        %p297 = pneg %p296
        // Predicated region
        $region74: #{resnet_block_forward.2} parent=72 // pred_check
          _
        $region75: #{resnet_block_forward.2} parent=72 // pred_check_branch
          %299 = sbr.rel (%p296) target = $region77
        $region76: #{resnet_block_forward.2} parent=72 // pred_region
          %s315 = sand.u32 220, 7
          %p316 = scmp.eq.s32.totalorder %s315, 0
          %p317 = pneg %p316
          // Predicated region
          $region89: #{resnet_block_forward.2} parent=76 // pred_check
            _
          $region90: #{resnet_block_forward.2} parent=76 // pred_check_branch
            %319 = sbr.rel (%p316) target = $region92
          $region91: #{resnet_block_forward.2} parent=76 // pred_region
            %s320 = sand.u32 220, 7
            %s321 = ssub.s32 220, %s320
            %s322 = scalar_lea.vmem %s290, %s321
            %s323 = ssub.s32 220, %s320
            %s324 = scalar_lea.vmem %s293, %s323 [#allocation2]
            loop: start=0, step=1, limit=1
            $region93: #{resnet_block_forward.2} parent=91 // loop_pre_header
              _
            $region94: #{resnet_block_forward.2} parent=91 // loop_header
              %s326 = sphi 0, %s330
              %p327 = scmp.ge.s32.totalorder %s326, 1
              %s331 = sphi %s290, %s290
              %s332 = sphi %s293, %s293
            $region95: #{resnet_block_forward.2} parent=91 // loop_header_branch
              %329 = sbr.rel (%p327) target = $region99
            $region96: #{resnet_block_forward.2} parent=91 // loop_body
              %v333 = vld [vmem:[%s331] sm:$0xff]
              %334 = vst [vmem:[%s332] sm:$0xff] %v333
              %v335 = vld [vmem:[%s331 + $0x8] sm:$0xff]
              %336 = vst [vmem:[%s332 + $0x8] sm:$0xff] %v335
              %v337 = vld [vmem:[%s331 + $0x10] sm:$0xff]
              %338 = vst [vmem:[%s332 + $0x10] sm:$0xff] %v337
              %v339 = vld [vmem:[%s331 + $0x18] sm:$0xff]
              %340 = vst [vmem:[%s332 + $0x18] sm:$0xff] %v339
              %v341 = vld [vmem:[%s331 + $0x20] sm:$0xff]
              %342 = vst [vmem:[%s332 + $0x20] sm:$0xff] %v341
              %v343 = vld [vmem:[%s331 + $0x28] sm:$0xff]
              %344 = vst [vmem:[%s332 + $0x28] sm:$0xff] %v343
              %v345 = vld [vmem:[%s331 + $0x30] sm:$0xff]
              %346 = vst [vmem:[%s332 + $0x30] sm:$0xff] %v345
              %v347 = vld [vmem:[%s331 + $0x38] sm:$0xff]
              %348 = vst [vmem:[%s332 + $0x38] sm:$0xff] %v347
              %v349 = vld [vmem:[%s331 + $0x40] sm:$0xff]
              %350 = vst [vmem:[%s332 + $0x40] sm:$0xff] %v349
              %v351 = vld [vmem:[%s331 + $0x48] sm:$0xff]
              %352 = vst [vmem:[%s332 + $0x48] sm:$0xff] %v351
              %v353 = vld [vmem:[%s331 + $0x50] sm:$0xff]
              %354 = vst [vmem:[%s332 + $0x50] sm:$0xff] %v353
              %v355 = vld [vmem:[%s331 + $0x58] sm:$0xff]
              %356 = vst [vmem:[%s332 + $0x58] sm:$0xff] %v355
              %v357 = vld [vmem:[%s331 + $0x60] sm:$0xff]
              %358 = vst [vmem:[%s332 + $0x60] sm:$0xff] %v357
              %v359 = vld [vmem:[%s331 + $0x68] sm:$0xff]
              %360 = vst [vmem:[%s332 + $0x68] sm:$0xff] %v359
              %v361 = vld [vmem:[%s331 + $0x70] sm:$0xff]
              %362 = vst [vmem:[%s332 + $0x70] sm:$0xff] %v361
              %v363 = vld [vmem:[%s331 + $0x78] sm:$0xff]
              %364 = vst [vmem:[%s332 + $0x78] sm:$0xff] %v363
              %v365 = vld [vmem:[%s331 + $0x80] sm:$0xff]
              %366 = vst [vmem:[%s332 + $0x80] sm:$0xff] %v365
              %v367 = vld [vmem:[%s331 + $0x88] sm:$0xff]
              %368 = vst [vmem:[%s332 + $0x88] sm:$0xff] %v367
              %v369 = vld [vmem:[%s331 + $0x90] sm:$0xff]
              %370 = vst [vmem:[%s332 + $0x90] sm:$0xff] %v369
              %v371 = vld [vmem:[%s331 + $0x98] sm:$0xff]
              %372 = vst [vmem:[%s332 + $0x98] sm:$0xff] %v371
              %v373 = vld [vmem:[%s331 + $0xa0] sm:$0xff]
              %374 = vst [vmem:[%s332 + $0xa0] sm:$0xff] %v373
              %v375 = vld [vmem:[%s331 + $0xa8] sm:$0xff]
              %376 = vst [vmem:[%s332 + $0xa8] sm:$0xff] %v375
              %v377 = vld [vmem:[%s331 + $0xb0] sm:$0xff]
              %378 = vst [vmem:[%s332 + $0xb0] sm:$0xff] %v377
              %v379 = vld [vmem:[%s331 + $0xb8] sm:$0xff]
              %380 = vst [vmem:[%s332 + $0xb8] sm:$0xff] %v379
              %v381 = vld [vmem:[%s331 + $0xc0] sm:$0xff]
              %382 = vst [vmem:[%s332 + $0xc0] sm:$0xff] %v381
              %v383 = vld [vmem:[%s331 + $0xc8] sm:$0xff]
              %384 = vst [vmem:[%s332 + $0xc8] sm:$0xff] %v383
              %v385 = vld [vmem:[%s331 + $0xd0] sm:$0xff]
              %386 = vst [vmem:[%s332 + $0xd0] sm:$0xff] %v385
            $region97: #{resnet_block_forward.2} parent=91 // loop_footer
              %s330 = sadd.s32 1, %s326
            $region98: #{resnet_block_forward.2} parent=91 // loop_footer_branch
              %325 = sbr.rel target = $region94
            $region99: #{resnet_block_forward.2} parent=91 // loop_exit
              _
            %s387 = sshll.u32 1, %s320
            %s388 = ssub.s32 %s387, 1
            loop: start=0, step=1, limit=1
            $region100: #{resnet_block_forward.2} parent=91 // loop_pre_header
              _
            $region101: #{resnet_block_forward.2} parent=91 // loop_header
              %s390 = sphi 0, %s394
              %p391 = scmp.ge.s32.totalorder %s390, 1
              %s395 = sphi %s322, %s322
              %s396 = sphi %s324, %s324
            $region102: #{resnet_block_forward.2} parent=91 // loop_header_branch
              %393 = sbr.rel (%p391) target = $region106
            $region103: #{resnet_block_forward.2} parent=91 // loop_body
              %v397 = vld [vmem:[%s395] sm:%s388]
              %398 = vst [vmem:[%s396] sm:%s388] %v397
            $region104: #{resnet_block_forward.2} parent=91 // loop_footer
              %s394 = sadd.s32 1, %s390
            $region105: #{resnet_block_forward.2} parent=91 // loop_footer_branch
              %389 = sbr.rel target = $region101
            $region106: #{resnet_block_forward.2} parent=91 // loop_exit
              _
          $region92: #{resnet_block_forward.2} parent=76 // pred_fallthru
            _
        $region77: #{resnet_block_forward.2} parent=72 // pred_fallthru
          _
        // Predicated region
        $region78: #{resnet_block_forward.2} parent=72 // pred_check
          %p300 = pneg %p296
        $region79: #{resnet_block_forward.2} parent=72 // pred_check_branch
          %302 = sbr.rel (%p300) target = $region81
        $region80: #{resnet_block_forward.2} parent=72 // pred_region
          %s303 = sshll.u32 1, 220
          %s304 = ssub.s32 %s303, 1
          loop: start=0, step=1, limit=1
          $region82: #{resnet_block_forward.2} parent=80 // loop_pre_header
            _
          $region83: #{resnet_block_forward.2} parent=80 // loop_header
            %s306 = sphi 0, %s310
            %p307 = scmp.ge.s32.totalorder %s306, 1
            %s311 = sphi %s290, %s290
            %s312 = sphi %s293, %s293
          $region84: #{resnet_block_forward.2} parent=80 // loop_header_branch
            %309 = sbr.rel (%p307) target = $region88
          $region85: #{resnet_block_forward.2} parent=80 // loop_body
            %v313 = vld [vmem:[%s311] sm:%s304]
            %314 = vst [vmem:[%s312] sm:%s304] %v313
          $region86: #{resnet_block_forward.2} parent=80 // loop_footer
            %s310 = sadd.s32 1, %s306
          $region87: #{resnet_block_forward.2} parent=80 // loop_footer_branch
            %305 = sbr.rel target = $region83
          $region88: #{resnet_block_forward.2} parent=80 // loop_exit
            _
        $region81: #{resnet_block_forward.2} parent=72 // pred_fallthru
          _
        // Predicated region
        $region107: #{resnet_block_forward.2} parent=72 // pred_check
          _
        $region108: #{resnet_block_forward.2} parent=72 // pred_check_branch
          %401 = sbr.rel (0) target = $region110
        $region109: #{resnet_block_forward.2} parent=72 // pred_region
          %402 = vsyncadd %s294, 3520
        $region110: #{resnet_block_forward.2} parent=72 // pred_fallthru
          _
      $region73: #{resnet_block_forward.2} parent=27 // pred_fallthru
        _
      %s403 = smul.u32 %s154, 55
      %s404 = smul.addr %s403, 4
      %s405 = scalar_lea.vmem [#allocation2], %s404
      %s406 = scalar_lea.sflag [#allocation3], %s154
      %s407 = smul.u32 4, 55
      %s408 = smul.u32 %s407, 1
      %s409 = sshll.u32 %s408, 4
      %410 = dma.done %s406, %s409
      %v411 = vld [vmem:[%s405] sm:$0xf]
      %v412 = vld [vmem:[%s405 + $0x4] sm:$0xf]
      %v413 = vld [vmem:[%s405 + $0x8] sm:$0xf]
      %v414 = vld [vmem:[%s405 + $0xc] sm:$0xf]
      %v415 = vld [vmem:[%s405 + $0x10] sm:$0xf]
      %v416 = vld [vmem:[%s405 + $0x14] sm:$0xf]
      %v417 = vld [vmem:[%s405 + $0x18] sm:$0xf]
      %v418 = vld [vmem:[%s405 + $0x1c] sm:$0xf]
      %v419 = vld [vmem:[%s405 + $0x20] sm:$0xf]
      %v420 = vld [vmem:[%s405 + $0x24] sm:$0xf]
      %v421 = vld [vmem:[%s405 + $0x28] sm:$0xf]
      %v422 = vld [vmem:[%s405 + $0x2c] sm:$0xf]
      %v423 = vld [vmem:[%s405 + $0x30] sm:$0xf]
      %v424 = vld [vmem:[%s405 + $0x34] sm:$0xf]
      %v425 = vld [vmem:[%s405 + $0x38] sm:$0xf]
      %v426 = vld [vmem:[%s405 + $0x3c] sm:$0xf]
      %v427 = vld [vmem:[%s405 + $0x40] sm:$0xf]
      %v428 = vld [vmem:[%s405 + $0x44] sm:$0xf]
      %v429 = vld [vmem:[%s405 + $0x48] sm:$0xf]
      %v430 = vld [vmem:[%s405 + $0x4c] sm:$0xf]
      %v431 = vld [vmem:[%s405 + $0x50] sm:$0xf]
      %v432 = vld [vmem:[%s405 + $0x54] sm:$0xf]
      %v433 = vld [vmem:[%s405 + $0x58] sm:$0xf]
      %v434 = vld [vmem:[%s405 + $0x5c] sm:$0xf]
      %v435 = vld [vmem:[%s405 + $0x60] sm:$0xf]
      %v436 = vld [vmem:[%s405 + $0x64] sm:$0xf]
      %v437 = vld [vmem:[%s405 + $0x68] sm:$0xf]
      %v438 = vld [vmem:[%s405 + $0x6c] sm:$0xf]
      %v439 = vld [vmem:[%s405 + $0x70] sm:$0xf]
      %v440 = vld [vmem:[%s405 + $0x74] sm:$0xf]
      %v441 = vld [vmem:[%s405 + $0x78] sm:$0xf]
      %v442 = vld [vmem:[%s405 + $0x7c] sm:$0xf]
      %v443 = vld [vmem:[%s405 + $0x80] sm:$0xf]
      %v444 = vld [vmem:[%s405 + $0x84] sm:$0xf]
      %v445 = vld [vmem:[%s405 + $0x88] sm:$0xf]
      %v446 = vld [vmem:[%s405 + $0x8c] sm:$0xf]
      %v447 = vld [vmem:[%s405 + $0x90] sm:$0xf]
      %v448 = vld [vmem:[%s405 + $0x94] sm:$0xf]
      %v449 = vld [vmem:[%s405 + $0x98] sm:$0xf]
      %v450 = vld [vmem:[%s405 + $0x9c] sm:$0xf]
      %v451 = vld [vmem:[%s405 + $0xa0] sm:$0xf]
      %v452 = vld [vmem:[%s405 + $0xa4] sm:$0xf]
      %v453 = vld [vmem:[%s405 + $0xa8] sm:$0xf]
      %v454 = vld [vmem:[%s405 + $0xac] sm:$0xf]
      %v455 = vld [vmem:[%s405 + $0xb0] sm:$0xf]
      %v456 = vld [vmem:[%s405 + $0xb4] sm:$0xf]
      %v457 = vld [vmem:[%s405 + $0xb8] sm:$0xf]
      %v458 = vld [vmem:[%s405 + $0xbc] sm:$0xf]
      %v459 = vld [vmem:[%s1] sm:$0xf]
      %v460 = vld [vmem:[%s1 + $0x4] sm:$0xf]
      %v461 = vld [vmem:[%s1 + $0x8] sm:$0xf]
      %v462 = vld [vmem:[%s1 + $0xc] sm:$0xf]
      %v463 = vld [vmem:[%s1 + $0x10] sm:$0xf]
      %v464 = vld [vmem:[%s1 + $0x14] sm:$0xf]
      %v465 = vld [vmem:[%s1 + $0x18] sm:$0xf]
      %v466 = vld [vmem:[%s1 + $0x1c] sm:$0xf]
      %v467 = vld [vmem:[%s1 + $0x20] sm:$0xf]
      %v468 = vld [vmem:[%s1 + $0x24] sm:$0xf]
      %v469 = vld [vmem:[%s1 + $0x28] sm:$0xf]
      %v470 = vld [vmem:[%s1 + $0x2c] sm:$0xf]
      %v471 = vld [vmem:[%s1 + $0x30] sm:$0xf]
      %v472 = vld [vmem:[%s1 + $0x34] sm:$0xf]
      %v473 = vld [vmem:[%s1 + $0x38] sm:$0xf]
      %v474 = vld [vmem:[%s1 + $0x3c] sm:$0xf]
      %v475 = vld [vmem:[%s405 + $0xc0] sm:$0x1]
      %s476 = scalar_lea.vmem %s1, 64
      %v477 = vld [vmem:[%s476] sm:$0xf]
      %v478 = vld [vmem:[%s476 + $0x4] sm:$0xf]
      %v479 = vld [vmem:[%s476 + $0x8] sm:$0xf]
      %v480 = vld [vmem:[%s476 + $0xc] sm:$0xf]
      %v481 = vld [vmem:[%s476 + $0x10] sm:$0xf]
      %v482 = vld [vmem:[%s476 + $0x14] sm:$0xf]
      %v483 = vld [vmem:[%s476 + $0x18] sm:$0xf]
      %v484 = vld [vmem:[%s476 + $0x1c] sm:$0xf]
      %v485 = vld [vmem:[%s476 + $0x20] sm:$0xf]
      %v486 = vld [vmem:[%s476 + $0x24] sm:$0xf]
      %v487 = vld [vmem:[%s476 + $0x28] sm:$0xf]
      %v488 = vld [vmem:[%s476 + $0x2c] sm:$0xf]
      %v489 = vld [vmem:[%s476 + $0x30] sm:$0xf]
      %v490 = vld [vmem:[%s476 + $0x34] sm:$0xf]
      %v491 = vld [vmem:[%s476 + $0x38] sm:$0xf]
      %v492 = vld [vmem:[%s476 + $0x3c] sm:$0xf]
      %v542 = vunpack.c.l.b16 %v411
      %v543 = vunpack.c.l.b16 %v412
      %v544 = vunpack.c.l.b16 %v413
      %v545 = vunpack.c.l.b16 %v414
      %v546 = vunpack.c.l.b16 %v415
      %v547 = vunpack.c.l.b16 %v416
      %v548 = vunpack.c.l.b16 %v417
      %v549 = vunpack.c.l.b16 %v418
      %v550 = vunpack.c.l.b16 %v419
      %v551 = vunpack.c.l.b16 %v420
      %v552 = vunpack.c.l.b16 %v421
      %v553 = vunpack.c.l.b16 %v422
      %v554 = vunpack.c.l.b16 %v423
      %v555 = vunpack.c.l.b16 %v424
      %v556 = vunpack.c.l.b16 %v425
      %v557 = vunpack.c.l.b16 %v426
      %v558 = vunpack.c.l.b16 %v427
      %v559 = vunpack.c.l.b16 %v428
      %v560 = vunpack.c.l.b16 %v429
      %v561 = vunpack.c.l.b16 %v430
      %v562 = vunpack.c.l.b16 %v431
      %v563 = vunpack.c.l.b16 %v432
      %v564 = vunpack.c.l.b16 %v433
      %v565 = vunpack.c.l.b16 %v434
      %v566 = vunpack.c.l.b16 %v435
      %v567 = vunpack.c.l.b16 %v436
      %v568 = vunpack.c.l.b16 %v437
      %v569 = vunpack.c.l.b16 %v438
      %v570 = vunpack.c.l.b16 %v439
      %v571 = vunpack.c.l.b16 %v440
      %v572 = vunpack.c.l.b16 %v441
      %v573 = vunpack.c.l.b16 %v442
      %v574 = vunpack.c.l.b16 %v443
      %v575 = vunpack.c.l.b16 %v444
      %v576 = vunpack.c.l.b16 %v445
      %v577 = vunpack.c.l.b16 %v446
      %v578 = vunpack.c.l.b16 %v447
      %v579 = vunpack.c.l.b16 %v448
      %v580 = vunpack.c.l.b16 %v449
      %v581 = vunpack.c.l.b16 %v450
      %v582 = vunpack.c.l.b16 %v451
      %v583 = vunpack.c.l.b16 %v452
      %v584 = vunpack.c.l.b16 %v453
      %v585 = vunpack.c.l.b16 %v454
      %v586 = vunpack.c.l.b16 %v455
      %v587 = vunpack.c.l.b16 %v456
      %v588 = vunpack.c.l.b16 %v457
      %v589 = vunpack.c.l.b16 %v458
      %v590 = vunpack.c.l.b16 %v475
      %v591 = vpack.c.b16 %v543, %v542
      %v592 = vpack.c.b16 %v545, %v544
      %v593 = vpack.c.b16 %v547, %v546
      %v594 = vpack.c.b16 %v549, %v548
      %v595 = vpack.c.b16 %v551, %v550
      %v596 = vpack.c.b16 %v553, %v552
      %v597 = vpack.c.b16 %v555, %v554
      %v598 = vpack.c.b16 %v557, %v556
      %v599 = vpack.c.b16 %v559, %v558
      %v600 = vpack.c.b16 %v561, %v560
      %v601 = vpack.c.b16 %v563, %v562
      %v602 = vpack.c.b16 %v565, %v564
      %v603 = vpack.c.b16 %v567, %v566
      %v604 = vpack.c.b16 %v569, %v568
      %v605 = vpack.c.b16 %v571, %v570
      %v606 = vpack.c.b16 %v573, %v572
      %v607 = vpack.c.b16 %v575, %v574
      %v608 = vpack.c.b16 %v577, %v576
      %v609 = vpack.c.b16 %v579, %v578
      %v610 = vpack.c.b16 %v581, %v580
      %v611 = vpack.c.b16 %v583, %v582
      %v612 = vpack.c.b16 %v585, %v584
      %v613 = vpack.c.b16 %v587, %v586
      %v614 = vpack.c.b16 %v589, %v588
      %v615 = vpack.c.b16 %v590, %v590
      %vm616 = vsmask.f32 7424
      %v618 = vshrl.u32 %v591, 16
      %v620 = vshll.u32 %v591, 16
      %v622 = vrot.slane %v620, 1
      %v623 = vor.u32 %v618, %v622
      %v625 = vshll.u32 %v592, 16
      %v627 = vrot.slane %v625, 1
      %v628 = vsel %vm616, %v623, %v627
      %v629 = vshrl.u32 %v592, 16
      %v631 = vor.u32 %v629, %v627
      %v633 = vshll.u32 %v593, 16
      %v635 = vrot.slane %v633, 1
      %v636 = vsel %vm616, %v631, %v635
      %v637 = vshrl.u32 %v593, 16
      %v639 = vor.u32 %v637, %v635
      %v641 = vshll.u32 %v594, 16
      %v643 = vrot.slane %v641, 1
      %v644 = vsel %vm616, %v639, %v643
      %v645 = vshrl.u32 %v594, 16
      %v647 = vor.u32 %v645, %v643
      %v649 = vshll.u32 %v595, 16
      %v651 = vrot.slane %v649, 1
      %v652 = vsel %vm616, %v647, %v651
      %v653 = vshrl.u32 %v595, 16
      %v655 = vor.u32 %v653, %v651
      %v657 = vshll.u32 %v596, 16
      %v659 = vrot.slane %v657, 1
      %v660 = vsel %vm616, %v655, %v659
      %v661 = vshrl.u32 %v596, 16
      %v663 = vor.u32 %v661, %v659
      %v665 = vshll.u32 %v597, 16
      %v667 = vrot.slane %v665, 1
      %v668 = vsel %vm616, %v663, %v667
      %v669 = vshrl.u32 %v597, 16
      %v671 = vor.u32 %v669, %v667
      %v673 = vshll.u32 %v598, 16
      %v675 = vrot.slane %v673, 1
      %v676 = vsel %vm616, %v671, %v675
      %v677 = vshrl.u32 %v598, 16
      %v679 = vor.u32 %v677, %v675
      %v681 = vshll.u32 %v599, 16
      %v683 = vrot.slane %v681, 1
      %v684 = vsel %vm616, %v679, %v683
      %v685 = vshrl.u32 %v599, 16
      %v687 = vor.u32 %v685, %v683
      %v689 = vshll.u32 %v600, 16
      %v691 = vrot.slane %v689, 1
      %v692 = vsel %vm616, %v687, %v691
      %v693 = vshrl.u32 %v600, 16
      %v695 = vor.u32 %v693, %v691
      %v697 = vshll.u32 %v601, 16
      %v699 = vrot.slane %v697, 1
      %v700 = vsel %vm616, %v695, %v699
      %v701 = vshrl.u32 %v601, 16
      %v703 = vor.u32 %v701, %v699
      %v705 = vshll.u32 %v602, 16
      %v707 = vrot.slane %v705, 1
      %v708 = vsel %vm616, %v703, %v707
      %v709 = vshrl.u32 %v602, 16
      %v711 = vor.u32 %v709, %v707
      %v713 = vshll.u32 %v603, 16
      %v715 = vrot.slane %v713, 1
      %v716 = vsel %vm616, %v711, %v715
      %v717 = vshrl.u32 %v603, 16
      %v719 = vor.u32 %v717, %v715
      %v721 = vshll.u32 %v604, 16
      %v723 = vrot.slane %v721, 1
      %v724 = vsel %vm616, %v719, %v723
      %v725 = vshrl.u32 %v604, 16
      %v727 = vor.u32 %v725, %v723
      %v729 = vshll.u32 %v605, 16
      %v731 = vrot.slane %v729, 1
      %v732 = vsel %vm616, %v727, %v731
      %v733 = vshrl.u32 %v605, 16
      %v735 = vor.u32 %v733, %v731
      %v737 = vshll.u32 %v606, 16
      %v739 = vrot.slane %v737, 1
      %v740 = vsel %vm616, %v735, %v739
      %v741 = vshrl.u32 %v606, 16
      %v743 = vor.u32 %v741, %v739
      %v745 = vshll.u32 %v607, 16
      %v747 = vrot.slane %v745, 1
      %v748 = vsel %vm616, %v743, %v747
      %v749 = vshrl.u32 %v607, 16
      %v751 = vor.u32 %v749, %v747
      %v753 = vshll.u32 %v608, 16
      %v755 = vrot.slane %v753, 1
      %v756 = vsel %vm616, %v751, %v755
      %v757 = vshrl.u32 %v608, 16
      %v759 = vor.u32 %v757, %v755
      %v761 = vshll.u32 %v609, 16
      %v763 = vrot.slane %v761, 1
      %v764 = vsel %vm616, %v759, %v763
      %v765 = vshrl.u32 %v609, 16
      %v767 = vor.u32 %v765, %v763
      %v769 = vshll.u32 %v610, 16
      %v771 = vrot.slane %v769, 1
      %v772 = vsel %vm616, %v767, %v771
      %v773 = vshrl.u32 %v610, 16
      %v775 = vor.u32 %v773, %v771
      %v777 = vshll.u32 %v611, 16
      %v779 = vrot.slane %v777, 1
      %v780 = vsel %vm616, %v775, %v779
      %v781 = vshrl.u32 %v611, 16
      %v783 = vor.u32 %v781, %v779
      %v785 = vshll.u32 %v612, 16
      %v787 = vrot.slane %v785, 1
      %v788 = vsel %vm616, %v783, %v787
      %v789 = vshrl.u32 %v612, 16
      %v791 = vor.u32 %v789, %v787
      %v793 = vshll.u32 %v613, 16
      %v795 = vrot.slane %v793, 1
      %v796 = vsel %vm616, %v791, %v795
      %v797 = vshrl.u32 %v613, 16
      %v799 = vor.u32 %v797, %v795
      %v801 = vshll.u32 %v614, 16
      %v803 = vrot.slane %v801, 1
      %v804 = vsel %vm616, %v799, %v803
      %v805 = vshrl.u32 %v614, 16
      %v807 = vor.u32 %v805, %v803
      %v809 = vshll.u32 %v615, 16
      %v811 = vrot.slane %v809, 1
      %v812 = vsel %vm616, %v807, %v811
      %v853 = vunpack.c.l.b16 %v477
      %v854 = vunpack.c.l.b16 %v478
      %v855 = vunpack.c.l.b16 %v479
      %v856 = vunpack.c.l.b16 %v480
      %v857 = vunpack.c.l.b16 %v481
      %v858 = vunpack.c.l.b16 %v482
      %v859 = vunpack.c.l.b16 %v483
      %v860 = vunpack.c.l.b16 %v484
      %v861 = vunpack.c.l.b16 %v485
      %v862 = vunpack.c.l.b16 %v486
      %v863 = vunpack.c.l.b16 %v487
      %v864 = vunpack.c.l.b16 %v488
      %v865 = vunpack.c.l.b16 %v489
      %v866 = vunpack.c.l.b16 %v490
      %v867 = vunpack.c.l.b16 %v491
      %v868 = vunpack.c.l.b16 %v492
      %v869 = vpack.c.b16 %v854, %v853
      %v870 = vpack.c.b16 %v856, %v855
      %v871 = vpack.c.b16 %v858, %v857
      %v872 = vpack.c.b16 %v860, %v859
      %v873 = vpack.c.b16 %v862, %v861
      %v874 = vpack.c.b16 %v864, %v863
      %v875 = vpack.c.b16 %v866, %v865
      %v876 = vpack.c.b16 %v868, %v867
      %885 = vmatprep.subr.bf16.mxu0 0
      %886 = vmatpush1.bf16.msra.mxu0 %v876
      %887 = vmatprep.subr.bf16.mxu0 0
      %888 = vmatpush1.bf16.msra.mxu0 %v875
      %889 = vmatprep.subr.bf16.mxu0 0
      %890 = vmatpush1.bf16.msra.mxu0 %v874
      %891 = vmatprep.subr.bf16.mxu0 0
      %892 = vmatpush1.bf16.msra.mxu0 %v873
      %893 = vmatprep.subr.bf16.mxu0 0
      %894 = vmatpush1.bf16.msra.mxu0 %v872
      %895 = vmatprep.subr.bf16.mxu0 0
      %896 = vmatpush1.bf16.msra.mxu0 %v871
      %897 = vmatprep.subr.bf16.mxu0 0
      %898 = vmatpush1.bf16.msra.mxu0 %v870
      %899 = vmatprep.subr.bf16.mxu0 0
      %900 = vmatpush1.bf16.msra.mxu0 %v869
      %901 = vmatprep.subr.bf16.mxu0 0
      %902 = vmatpush2.bf16.msra.mxu0 0
      %903 = vmatprep.subr.bf16.mxu0 0
      %904 = vmatpush2.bf16.msra.mxu0 0
      %905 = vmatprep.subr.bf16.mxu0 0
      %906 = vmatpush2.bf16.msra.mxu0 0
      %907 = vmatprep.subr.bf16.mxu0 0
      %908 = vmatpush2.bf16.msra.mxu0 0
      %909 = vmatprep.subr.bf16.mxu0 0
      %910 = vmatpush2.bf16.msra.mxu0 0
      %911 = vmatprep.subr.bf16.mxu0 0
      %912 = vmatpush2.bf16.msra.mxu0 0
      %913 = vmatprep.subr.bf16.mxu0 0
      %914 = vmatpush2.bf16.msra.mxu0 0
      %915 = vmatprep.subr.bf16.mxu0 0
      %916 = vmatpush2.bf16.msra.mxu0 0
      %917 = vmatprep.mubr.bf16.mxu0 0
      %918 = vmatmul.mubr.bf16.gmra.mxu0 %v628
      %v919 = vpop.f32.mrf.mxu0
      %v920 = vadd.f32 0.0, %v919
      %v921 = vpop.f32.mrf.mxu0
      %v922 = vpop.f32.mrf.mxu0
      %v923 = vadd.f32 0.0, %v922
      %v924 = vpop.f32.mrf.mxu0
      %925 = vmatprep.mubr.bf16.mxu0 0
      %926 = vmatmul.mubr.bf16.gmra.mxu0 %v636
      %v927 = vpop.f32.mrf.mxu0
      %v928 = vadd.f32 0.0, %v927
      %v929 = vpop.f32.mrf.mxu0
      %v930 = vpop.f32.mrf.mxu0
      %v931 = vadd.f32 0.0, %v930
      %v932 = vpop.f32.mrf.mxu0
      %933 = vmatprep.mubr.bf16.mxu0 0
      %934 = vmatmul.mubr.bf16.gmra.mxu0 %v644
      %v935 = vpop.f32.mrf.mxu0
      %v936 = vadd.f32 0.0, %v935
      %v937 = vpop.f32.mrf.mxu0
      %v938 = vpop.f32.mrf.mxu0
      %v939 = vadd.f32 0.0, %v938
      %v940 = vpop.f32.mrf.mxu0
      %941 = vmatprep.mubr.bf16.mxu0 0
      %942 = vmatmul.mubr.bf16.gmra.mxu0 %v652
      %v943 = vpop.f32.mrf.mxu0
      %v944 = vadd.f32 0.0, %v943
      %v945 = vpop.f32.mrf.mxu0
      %v946 = vpop.f32.mrf.mxu0
      %v947 = vadd.f32 0.0, %v946
      %v948 = vpop.f32.mrf.mxu0
      %949 = vmatprep.mubr.bf16.mxu0 0
      %950 = vmatmul.mubr.bf16.gmra.mxu0 %v660
      %v951 = vpop.f32.mrf.mxu0
      %v952 = vadd.f32 0.0, %v951
      %v953 = vpop.f32.mrf.mxu0
      %v954 = vpop.f32.mrf.mxu0
      %v955 = vadd.f32 0.0, %v954
      %v956 = vpop.f32.mrf.mxu0
      %957 = vmatprep.mubr.bf16.mxu0 0
      %958 = vmatmul.mubr.bf16.gmra.mxu0 %v668
      %v959 = vpop.f32.mrf.mxu0
      %v960 = vadd.f32 0.0, %v959
      %v961 = vpop.f32.mrf.mxu0
      %v962 = vpop.f32.mrf.mxu0
      %v963 = vadd.f32 0.0, %v962
      %v964 = vpop.f32.mrf.mxu0
      %965 = vmatprep.mubr.bf16.mxu0 0
      %966 = vmatmul.mubr.bf16.gmra.mxu0 %v676
      %v967 = vpop.f32.mrf.mxu0
      %v968 = vadd.f32 0.0, %v967
      %v969 = vpop.f32.mrf.mxu0
      %v970 = vpop.f32.mrf.mxu0
      %v971 = vadd.f32 0.0, %v970
      %v972 = vpop.f32.mrf.mxu0
      %973 = vmatprep.mubr.bf16.mxu0 0
      %974 = vmatmul.mubr.bf16.gmra.mxu0 %v684
      %v975 = vpop.f32.mrf.mxu0
      %v976 = vadd.f32 0.0, %v975
      %v977 = vpop.f32.mrf.mxu0
      %v978 = vpop.f32.mrf.mxu0
      %v979 = vadd.f32 0.0, %v978
      %v980 = vpop.f32.mrf.mxu0
      %981 = vmatprep.mubr.bf16.mxu0 0
      %982 = vmatmul.mubr.bf16.gmra.mxu0 %v692
      %v983 = vpop.f32.mrf.mxu0
      %v984 = vadd.f32 0.0, %v983
      %v985 = vpop.f32.mrf.mxu0
      %v986 = vpop.f32.mrf.mxu0
      %v987 = vadd.f32 0.0, %v986
      %v988 = vpop.f32.mrf.mxu0
      %989 = vmatprep.mubr.bf16.mxu0 0
      %990 = vmatmul.mubr.bf16.gmra.mxu0 %v700
      %v991 = vpop.f32.mrf.mxu0
      %v992 = vadd.f32 0.0, %v991
      %v993 = vpop.f32.mrf.mxu0
      %v994 = vpop.f32.mrf.mxu0
      %v995 = vadd.f32 0.0, %v994
      %v996 = vpop.f32.mrf.mxu0
      %997 = vmatprep.mubr.bf16.mxu0 0
      %998 = vmatmul.mubr.bf16.gmra.mxu0 %v708
      %v999 = vpop.f32.mrf.mxu0
      %v1000 = vadd.f32 0.0, %v999
      %v1001 = vpop.f32.mrf.mxu0
      %v1002 = vpop.f32.mrf.mxu0
      %v1003 = vadd.f32 0.0, %v1002
      %v1004 = vpop.f32.mrf.mxu0
      %1005 = vmatprep.mubr.bf16.mxu0 0
      %1006 = vmatmul.mubr.bf16.gmra.mxu0 %v716
      %v1007 = vpop.f32.mrf.mxu0
      %v1008 = vadd.f32 0.0, %v1007
      %v1009 = vpop.f32.mrf.mxu0
      %v1010 = vpop.f32.mrf.mxu0
      %v1011 = vadd.f32 0.0, %v1010
      %v1012 = vpop.f32.mrf.mxu0
      %1013 = vmatprep.mubr.bf16.mxu0 0
      %1014 = vmatmul.mubr.bf16.gmra.mxu0 %v724
      %v1015 = vpop.f32.mrf.mxu0
      %v1016 = vadd.f32 0.0, %v1015
      %v1017 = vpop.f32.mrf.mxu0
      %v1018 = vpop.f32.mrf.mxu0
      %v1019 = vadd.f32 0.0, %v1018
      %v1020 = vpop.f32.mrf.mxu0
      %1021 = vmatprep.mubr.bf16.mxu0 0
      %1022 = vmatmul.mubr.bf16.gmra.mxu0 %v732
      %v1023 = vpop.f32.mrf.mxu0
      %v1024 = vadd.f32 0.0, %v1023
      %v1025 = vpop.f32.mrf.mxu0
      %v1026 = vpop.f32.mrf.mxu0
      %v1027 = vadd.f32 0.0, %v1026
      %v1028 = vpop.f32.mrf.mxu0
      %1029 = vmatprep.mubr.bf16.mxu0 0
      %1030 = vmatmul.mubr.bf16.gmra.mxu0 %v740
      %v1031 = vpop.f32.mrf.mxu0
      %v1032 = vadd.f32 0.0, %v1031
      %v1033 = vpop.f32.mrf.mxu0
      %v1034 = vpop.f32.mrf.mxu0
      %v1035 = vadd.f32 0.0, %v1034
      %v1036 = vpop.f32.mrf.mxu0
      %1037 = vmatprep.mubr.bf16.mxu0 0
      %1038 = vmatmul.mubr.bf16.gmra.mxu0 %v748
      %v1039 = vpop.f32.mrf.mxu0
      %v1040 = vadd.f32 0.0, %v1039
      %v1041 = vpop.f32.mrf.mxu0
      %v1042 = vpop.f32.mrf.mxu0
      %v1043 = vadd.f32 0.0, %v1042
      %v1044 = vpop.f32.mrf.mxu0
      %1045 = vmatprep.mubr.bf16.mxu0 0
      %1046 = vmatmul.mubr.bf16.gmra.mxu0 %v756
      %v1047 = vpop.f32.mrf.mxu0
      %v1048 = vadd.f32 0.0, %v1047
      %v1049 = vpop.f32.mrf.mxu0
      %v1050 = vpop.f32.mrf.mxu0
      %v1051 = vadd.f32 0.0, %v1050
      %v1052 = vpop.f32.mrf.mxu0
      %1053 = vmatprep.mubr.bf16.mxu0 0
      %1054 = vmatmul.mubr.bf16.gmra.mxu0 %v764
      %v1055 = vpop.f32.mrf.mxu0
      %v1056 = vadd.f32 0.0, %v1055
      %v1057 = vpop.f32.mrf.mxu0
      %v1058 = vpop.f32.mrf.mxu0
      %v1059 = vadd.f32 0.0, %v1058
      %v1060 = vpop.f32.mrf.mxu0
      %1061 = vmatprep.mubr.bf16.mxu0 0
      %1062 = vmatmul.mubr.bf16.gmra.mxu0 %v772
      %v1063 = vpop.f32.mrf.mxu0
      %v1064 = vadd.f32 0.0, %v1063
      %v1065 = vpop.f32.mrf.mxu0
      %v1066 = vpop.f32.mrf.mxu0
      %v1067 = vadd.f32 0.0, %v1066
      %v1068 = vpop.f32.mrf.mxu0
      %1069 = vmatprep.mubr.bf16.mxu0 0
      %1070 = vmatmul.mubr.bf16.gmra.mxu0 %v780
      %v1071 = vpop.f32.mrf.mxu0
      %v1072 = vadd.f32 0.0, %v1071
      %v1073 = vpop.f32.mrf.mxu0
      %v1074 = vpop.f32.mrf.mxu0
      %v1075 = vadd.f32 0.0, %v1074
      %v1076 = vpop.f32.mrf.mxu0
      %1077 = vmatprep.mubr.bf16.mxu0 0
      %1078 = vmatmul.mubr.bf16.gmra.mxu0 %v788
      %v1079 = vpop.f32.mrf.mxu0
      %v1080 = vadd.f32 0.0, %v1079
      %v1081 = vpop.f32.mrf.mxu0
      %v1082 = vpop.f32.mrf.mxu0
      %v1083 = vadd.f32 0.0, %v1082
      %v1084 = vpop.f32.mrf.mxu0
      %1085 = vmatprep.mubr.bf16.mxu0 0
      %1086 = vmatmul.mubr.bf16.gmra.mxu0 %v796
      %v1087 = vpop.f32.mrf.mxu0
      %v1088 = vadd.f32 0.0, %v1087
      %v1089 = vpop.f32.mrf.mxu0
      %v1090 = vpop.f32.mrf.mxu0
      %v1091 = vadd.f32 0.0, %v1090
      %v1092 = vpop.f32.mrf.mxu0
      %1093 = vmatprep.mubr.bf16.mxu0 0
      %1094 = vmatmul.mubr.bf16.gmra.mxu0 %v804
      %v1095 = vpop.f32.mrf.mxu0
      %v1096 = vadd.f32 0.0, %v1095
      %v1097 = vpop.f32.mrf.mxu0
      %v1098 = vpop.f32.mrf.mxu0
      %v1099 = vadd.f32 0.0, %v1098
      %v1100 = vpop.f32.mrf.mxu0
      %1101 = vmatprep.mubr.bf16.mxu0 0
      %1102 = vmatmul.mubr.bf16.gmra.mxu0 %v812
      %v1103 = vpop.f32.mrf.mxu0
      %v1104 = vadd.f32 0.0, %v1103
      %v1105 = vpop.f32.mrf.mxu0
      %v1106 = vpop.f32.mrf.mxu0
      %v1107 = vadd.f32 0.0, %v1106
      %v1108 = vpop.f32.mrf.mxu0
      %1109 = vdwg.mxu0
      %v1150 = vunpack.c.l.b16 %v459
      %v1151 = vunpack.c.l.b16 %v460
      %v1152 = vunpack.c.l.b16 %v461
      %v1153 = vunpack.c.l.b16 %v462
      %v1154 = vunpack.c.l.b16 %v463
      %v1155 = vunpack.c.l.b16 %v464
      %v1156 = vunpack.c.l.b16 %v465
      %v1157 = vunpack.c.l.b16 %v466
      %v1158 = vunpack.c.l.b16 %v467
      %v1159 = vunpack.c.l.b16 %v468
      %v1160 = vunpack.c.l.b16 %v469
      %v1161 = vunpack.c.l.b16 %v470
      %v1162 = vunpack.c.l.b16 %v471
      %v1163 = vunpack.c.l.b16 %v472
      %v1164 = vunpack.c.l.b16 %v473
      %v1165 = vunpack.c.l.b16 %v474
      %v1166 = vpack.c.b16 %v1151, %v1150
      %v1167 = vpack.c.b16 %v1153, %v1152
      %v1168 = vpack.c.b16 %v1155, %v1154
      %v1169 = vpack.c.b16 %v1157, %v1156
      %v1170 = vpack.c.b16 %v1159, %v1158
      %v1171 = vpack.c.b16 %v1161, %v1160
      %v1172 = vpack.c.b16 %v1163, %v1162
      %v1173 = vpack.c.b16 %v1165, %v1164
      %1182 = vmatprep.subr.bf16.mxu0 0
      %1183 = vmatpush1.bf16.msra.mxu0 %v1173
      %1184 = vmatprep.subr.bf16.mxu0 0
      %1185 = vmatpush1.bf16.msra.mxu0 %v1172
      %1186 = vmatprep.subr.bf16.mxu0 0
      %1187 = vmatpush1.bf16.msra.mxu0 %v1171
      %1188 = vmatprep.subr.bf16.mxu0 0
      %1189 = vmatpush1.bf16.msra.mxu0 %v1170
      %1190 = vmatprep.subr.bf16.mxu0 0
      %1191 = vmatpush1.bf16.msra.mxu0 %v1169
      %1192 = vmatprep.subr.bf16.mxu0 0
      %1193 = vmatpush1.bf16.msra.mxu0 %v1168
      %1194 = vmatprep.subr.bf16.mxu0 0
      %1195 = vmatpush1.bf16.msra.mxu0 %v1167
      %1196 = vmatprep.subr.bf16.mxu0 0
      %1197 = vmatpush1.bf16.msra.mxu0 %v1166
      %1198 = vmatprep.subr.bf16.mxu0 0
      %1199 = vmatpush2.bf16.msra.mxu0 0
      %1200 = vmatprep.subr.bf16.mxu0 0
      %1201 = vmatpush2.bf16.msra.mxu0 0
      %1202 = vmatprep.subr.bf16.mxu0 0
      %1203 = vmatpush2.bf16.msra.mxu0 0
      %1204 = vmatprep.subr.bf16.mxu0 0
      %1205 = vmatpush2.bf16.msra.mxu0 0
      %1206 = vmatprep.subr.bf16.mxu0 0
      %1207 = vmatpush2.bf16.msra.mxu0 0
      %1208 = vmatprep.subr.bf16.mxu0 0
      %1209 = vmatpush2.bf16.msra.mxu0 0
      %1210 = vmatprep.subr.bf16.mxu0 0
      %1211 = vmatpush2.bf16.msra.mxu0 0
      %1212 = vmatprep.subr.bf16.mxu0 0
      %1213 = vmatpush2.bf16.msra.mxu0 0
      %1214 = vmatprep.mubr.bf16.mxu0 0
      %1215 = vmatmul.mubr.bf16.gmra.mxu0 %v591
      %v1216 = vpop.f32.mrf.mxu0
      %v1217 = vadd.f32 %v920, %v1216
      %v1218 = vpop.f32.mrf.mxu0
      %v1219 = vpop.f32.mrf.mxu0
      %v1220 = vadd.f32 %v923, %v1219
      %v1221 = vpop.f32.mrf.mxu0
      %1222 = vmatprep.mubr.bf16.mxu0 0
      %1223 = vmatmul.mubr.bf16.gmra.mxu0 %v592
      %v1224 = vpop.f32.mrf.mxu0
      %v1225 = vadd.f32 %v928, %v1224
      %v1226 = vpop.f32.mrf.mxu0
      %v1227 = vpop.f32.mrf.mxu0
      %v1228 = vadd.f32 %v931, %v1227
      %v1229 = vpop.f32.mrf.mxu0
      %1230 = vmatprep.mubr.bf16.mxu0 0
      %1231 = vmatmul.mubr.bf16.gmra.mxu0 %v593
      %v1232 = vpop.f32.mrf.mxu0
      %v1233 = vadd.f32 %v936, %v1232
      %v1234 = vpop.f32.mrf.mxu0
      %v1235 = vpop.f32.mrf.mxu0
      %v1236 = vadd.f32 %v939, %v1235
      %v1237 = vpop.f32.mrf.mxu0
      %1238 = vmatprep.mubr.bf16.mxu0 0
      %1239 = vmatmul.mubr.bf16.gmra.mxu0 %v594
      %v1240 = vpop.f32.mrf.mxu0
      %v1241 = vadd.f32 %v944, %v1240
      %v1242 = vpop.f32.mrf.mxu0
      %v1243 = vpop.f32.mrf.mxu0
      %v1244 = vadd.f32 %v947, %v1243
      %v1245 = vpop.f32.mrf.mxu0
      %1246 = vmatprep.mubr.bf16.mxu0 0
      %1247 = vmatmul.mubr.bf16.gmra.mxu0 %v595
      %v1248 = vpop.f32.mrf.mxu0
      %v1249 = vadd.f32 %v952, %v1248
      %v1250 = vpop.f32.mrf.mxu0
      %v1251 = vpop.f32.mrf.mxu0
      %v1252 = vadd.f32 %v955, %v1251
      %v1253 = vpop.f32.mrf.mxu0
      %1254 = vmatprep.mubr.bf16.mxu0 0
      %1255 = vmatmul.mubr.bf16.gmra.mxu0 %v596
      %v1256 = vpop.f32.mrf.mxu0
      %v1257 = vadd.f32 %v960, %v1256
      %v1258 = vpop.f32.mrf.mxu0
      %v1259 = vpop.f32.mrf.mxu0
      %v1260 = vadd.f32 %v963, %v1259
      %v1261 = vpop.f32.mrf.mxu0
      %1262 = vmatprep.mubr.bf16.mxu0 0
      %1263 = vmatmul.mubr.bf16.gmra.mxu0 %v597
      %v1264 = vpop.f32.mrf.mxu0
      %v1265 = vadd.f32 %v968, %v1264
      %v1266 = vpop.f32.mrf.mxu0
      %v1267 = vpop.f32.mrf.mxu0
      %v1268 = vadd.f32 %v971, %v1267
      %v1269 = vpop.f32.mrf.mxu0
      %1270 = vmatprep.mubr.bf16.mxu0 0
      %1271 = vmatmul.mubr.bf16.gmra.mxu0 %v598
      %v1272 = vpop.f32.mrf.mxu0
      %v1273 = vadd.f32 %v976, %v1272
      %v1274 = vpop.f32.mrf.mxu0
      %v1275 = vpop.f32.mrf.mxu0
      %v1276 = vadd.f32 %v979, %v1275
      %v1277 = vpop.f32.mrf.mxu0
      %1278 = vmatprep.mubr.bf16.mxu0 0
      %1279 = vmatmul.mubr.bf16.gmra.mxu0 %v599
      %v1280 = vpop.f32.mrf.mxu0
      %v1281 = vadd.f32 %v984, %v1280
      %v1282 = vpop.f32.mrf.mxu0
      %v1283 = vpop.f32.mrf.mxu0
      %v1284 = vadd.f32 %v987, %v1283
      %v1285 = vpop.f32.mrf.mxu0
      %1286 = vmatprep.mubr.bf16.mxu0 0
      %1287 = vmatmul.mubr.bf16.gmra.mxu0 %v600
      %v1288 = vpop.f32.mrf.mxu0
      %v1289 = vadd.f32 %v992, %v1288
      %v1290 = vpop.f32.mrf.mxu0
      %v1291 = vpop.f32.mrf.mxu0
      %v1292 = vadd.f32 %v995, %v1291
      %v1293 = vpop.f32.mrf.mxu0
      %1294 = vmatprep.mubr.bf16.mxu0 0
      %1295 = vmatmul.mubr.bf16.gmra.mxu0 %v601
      %v1296 = vpop.f32.mrf.mxu0
      %v1297 = vadd.f32 %v1000, %v1296
      %v1298 = vpop.f32.mrf.mxu0
      %v1299 = vpop.f32.mrf.mxu0
      %v1300 = vadd.f32 %v1003, %v1299
      %v1301 = vpop.f32.mrf.mxu0
      %1302 = vmatprep.mubr.bf16.mxu0 0
      %1303 = vmatmul.mubr.bf16.gmra.mxu0 %v602
      %v1304 = vpop.f32.mrf.mxu0
      %v1305 = vadd.f32 %v1008, %v1304
      %v1306 = vpop.f32.mrf.mxu0
      %v1307 = vpop.f32.mrf.mxu0
      %v1308 = vadd.f32 %v1011, %v1307
      %v1309 = vpop.f32.mrf.mxu0
      %1310 = vmatprep.mubr.bf16.mxu0 0
      %1311 = vmatmul.mubr.bf16.gmra.mxu0 %v603
      %v1312 = vpop.f32.mrf.mxu0
      %v1313 = vadd.f32 %v1016, %v1312
      %v1314 = vpop.f32.mrf.mxu0
      %v1315 = vpop.f32.mrf.mxu0
      %v1316 = vadd.f32 %v1019, %v1315
      %v1317 = vpop.f32.mrf.mxu0
      %1318 = vmatprep.mubr.bf16.mxu0 0
      %1319 = vmatmul.mubr.bf16.gmra.mxu0 %v604
      %v1320 = vpop.f32.mrf.mxu0
      %v1321 = vadd.f32 %v1024, %v1320
      %v1322 = vpop.f32.mrf.mxu0
      %v1323 = vpop.f32.mrf.mxu0
      %v1324 = vadd.f32 %v1027, %v1323
      %v1325 = vpop.f32.mrf.mxu0
      %1326 = vmatprep.mubr.bf16.mxu0 0
      %1327 = vmatmul.mubr.bf16.gmra.mxu0 %v605
      %v1328 = vpop.f32.mrf.mxu0
      %v1329 = vadd.f32 %v1032, %v1328
      %v1330 = vpop.f32.mrf.mxu0
      %v1331 = vpop.f32.mrf.mxu0
      %v1332 = vadd.f32 %v1035, %v1331
      %v1333 = vpop.f32.mrf.mxu0
      %1334 = vmatprep.mubr.bf16.mxu0 0
      %1335 = vmatmul.mubr.bf16.gmra.mxu0 %v606
      %v1336 = vpop.f32.mrf.mxu0
      %v1337 = vadd.f32 %v1040, %v1336
      %v1338 = vpop.f32.mrf.mxu0
      %v1339 = vpop.f32.mrf.mxu0
      %v1340 = vadd.f32 %v1043, %v1339
      %v1341 = vpop.f32.mrf.mxu0
      %1342 = vmatprep.mubr.bf16.mxu0 0
      %1343 = vmatmul.mubr.bf16.gmra.mxu0 %v607
      %v1344 = vpop.f32.mrf.mxu0
      %v1345 = vadd.f32 %v1048, %v1344
      %v1346 = vpop.f32.mrf.mxu0
      %v1347 = vpop.f32.mrf.mxu0
      %v1348 = vadd.f32 %v1051, %v1347
      %v1349 = vpop.f32.mrf.mxu0
      %1350 = vmatprep.mubr.bf16.mxu0 0
      %1351 = vmatmul.mubr.bf16.gmra.mxu0 %v608
      %v1352 = vpop.f32.mrf.mxu0
      %v1353 = vadd.f32 %v1056, %v1352
      %v1354 = vpop.f32.mrf.mxu0
      %v1355 = vpop.f32.mrf.mxu0
      %v1356 = vadd.f32 %v1059, %v1355
      %v1357 = vpop.f32.mrf.mxu0
      %1358 = vmatprep.mubr.bf16.mxu0 0
      %1359 = vmatmul.mubr.bf16.gmra.mxu0 %v609
      %v1360 = vpop.f32.mrf.mxu0
      %v1361 = vadd.f32 %v1064, %v1360
      %v1362 = vpop.f32.mrf.mxu0
      %v1363 = vpop.f32.mrf.mxu0
      %v1364 = vadd.f32 %v1067, %v1363
      %v1365 = vpop.f32.mrf.mxu0
      %1366 = vmatprep.mubr.bf16.mxu0 0
      %1367 = vmatmul.mubr.bf16.gmra.mxu0 %v610
      %v1368 = vpop.f32.mrf.mxu0
      %v1369 = vadd.f32 %v1072, %v1368
      %v1370 = vpop.f32.mrf.mxu0
      %v1371 = vpop.f32.mrf.mxu0
      %v1372 = vadd.f32 %v1075, %v1371
      %v1373 = vpop.f32.mrf.mxu0
      %1374 = vmatprep.mubr.bf16.mxu0 0
      %1375 = vmatmul.mubr.bf16.gmra.mxu0 %v611
      %v1376 = vpop.f32.mrf.mxu0
      %v1377 = vadd.f32 %v1080, %v1376
      %v1378 = vpop.f32.mrf.mxu0
      %v1379 = vpop.f32.mrf.mxu0
      %v1380 = vadd.f32 %v1083, %v1379
      %v1381 = vpop.f32.mrf.mxu0
      %1382 = vmatprep.mubr.bf16.mxu0 0
      %1383 = vmatmul.mubr.bf16.gmra.mxu0 %v612
      %v1384 = vpop.f32.mrf.mxu0
      %v1385 = vadd.f32 %v1088, %v1384
      %v1386 = vpop.f32.mrf.mxu0
      %v1387 = vpop.f32.mrf.mxu0
      %v1388 = vadd.f32 %v1091, %v1387
      %v1389 = vpop.f32.mrf.mxu0
      %1390 = vmatprep.mubr.bf16.mxu0 0
      %1391 = vmatmul.mubr.bf16.gmra.mxu0 %v613
      %v1392 = vpop.f32.mrf.mxu0
      %v1393 = vadd.f32 %v1096, %v1392
      %v1394 = vpop.f32.mrf.mxu0
      %v1395 = vpop.f32.mrf.mxu0
      %v1396 = vadd.f32 %v1099, %v1395
      %v1397 = vpop.f32.mrf.mxu0
      %1398 = vmatprep.mubr.bf16.mxu0 0
      %1399 = vmatmul.mubr.bf16.gmra.mxu0 %v614
      %v1400 = vpop.f32.mrf.mxu0
      %v1401 = vadd.f32 %v1104, %v1400
      %v1402 = vpop.f32.mrf.mxu0
      %v1403 = vpop.f32.mrf.mxu0
      %v1404 = vadd.f32 %v1107, %v1403
      %v1405 = vpop.f32.mrf.mxu0
      %1406 = vdwg.mxu0
      %v1407 = vld [vmem:[%s405] sm:$0xe]
      %s1408 = scalar_lea.vmem %s1, 128
      %v1409 = vld [vmem:[%s1408] sm:$0xf]
      %v1410 = vld [vmem:[%s1408 + $0x4] sm:$0xf]
      %v1411 = vld [vmem:[%s1408 + $0x8] sm:$0xf]
      %v1412 = vld [vmem:[%s1408 + $0xc] sm:$0xf]
      %v1413 = vld [vmem:[%s1408 + $0x10] sm:$0xf]
      %v1414 = vld [vmem:[%s1408 + $0x14] sm:$0xf]
      %v1415 = vld [vmem:[%s1408 + $0x18] sm:$0xf]
      %v1416 = vld [vmem:[%s1408 + $0x1c] sm:$0xf]
      %v1417 = vld [vmem:[%s1408 + $0x20] sm:$0xf]
      %v1418 = vld [vmem:[%s1408 + $0x24] sm:$0xf]
      %v1419 = vld [vmem:[%s1408 + $0x28] sm:$0xf]
      %v1420 = vld [vmem:[%s1408 + $0x2c] sm:$0xf]
      %v1421 = vld [vmem:[%s1408 + $0x30] sm:$0xf]
      %v1422 = vld [vmem:[%s1408 + $0x34] sm:$0xf]
      %v1423 = vld [vmem:[%s1408 + $0x38] sm:$0xf]
      %v1424 = vld [vmem:[%s1408 + $0x3c] sm:$0xf]
      %v1426 = vunpack.c.l.b16 %v1407
      %v1427 = vpack.c.b16 %v543, %v1426
      %vm1428 = vcmask 1046528
      %v1429 = vrot.slane %v1427, 1
      %v1430 = vrot.slane %v592, 1
      %v1431 = vsel %vm1428, %v1429, %v1430
      %v1432 = vrot.slane %v593, 1
      %v1433 = vsel %vm1428, %v1430, %v1432
      %v1434 = vrot.slane %v594, 1
      %v1435 = vsel %vm1428, %v1432, %v1434
      %v1436 = vrot.slane %v595, 1
      %v1437 = vsel %vm1428, %v1434, %v1436
      %v1438 = vrot.slane %v596, 1
      %v1439 = vsel %vm1428, %v1436, %v1438
      %v1440 = vrot.slane %v597, 1
      %v1441 = vsel %vm1428, %v1438, %v1440
      %v1442 = vrot.slane %v598, 1
      %v1443 = vsel %vm1428, %v1440, %v1442
      %v1444 = vrot.slane %v599, 1
      %v1445 = vsel %vm1428, %v1442, %v1444
      %v1446 = vrot.slane %v600, 1
      %v1447 = vsel %vm1428, %v1444, %v1446
      %v1448 = vrot.slane %v601, 1
      %v1449 = vsel %vm1428, %v1446, %v1448
      %v1450 = vrot.slane %v602, 1
      %v1451 = vsel %vm1428, %v1448, %v1450
      %v1452 = vrot.slane %v603, 1
      %v1453 = vsel %vm1428, %v1450, %v1452
      %v1454 = vrot.slane %v604, 1
      %v1455 = vsel %vm1428, %v1452, %v1454
      %v1456 = vrot.slane %v605, 1
      %v1457 = vsel %vm1428, %v1454, %v1456
      %v1458 = vrot.slane %v606, 1
      %v1459 = vsel %vm1428, %v1456, %v1458
      %v1460 = vrot.slane %v607, 1
      %v1461 = vsel %vm1428, %v1458, %v1460
      %v1462 = vrot.slane %v608, 1
      %v1463 = vsel %vm1428, %v1460, %v1462
      %v1464 = vrot.slane %v609, 1
      %v1465 = vsel %vm1428, %v1462, %v1464
      %v1466 = vrot.slane %v610, 1
      %v1467 = vsel %vm1428, %v1464, %v1466
      %v1468 = vrot.slane %v611, 1
      %v1469 = vsel %vm1428, %v1466, %v1468
      %v1470 = vrot.slane %v612, 1
      %v1471 = vsel %vm1428, %v1468, %v1470
      %v1472 = vrot.slane %v613, 1
      %v1473 = vsel %vm1428, %v1470, %v1472
      %v1474 = vrot.slane %v614, 1
      %v1475 = vsel %vm1428, %v1472, %v1474
      %v1476 = vrot.slane %v615, 1
      %v1477 = vsel %vm1428, %v1474, %v1476
      %v1518 = vunpack.c.l.b16 %v1409
      %v1519 = vunpack.c.l.b16 %v1410
      %v1520 = vunpack.c.l.b16 %v1411
      %v1521 = vunpack.c.l.b16 %v1412
      %v1522 = vunpack.c.l.b16 %v1413
      %v1523 = vunpack.c.l.b16 %v1414
      %v1524 = vunpack.c.l.b16 %v1415
      %v1525 = vunpack.c.l.b16 %v1416
      %v1526 = vunpack.c.l.b16 %v1417
      %v1527 = vunpack.c.l.b16 %v1418
      %v1528 = vunpack.c.l.b16 %v1419
      %v1529 = vunpack.c.l.b16 %v1420
      %v1530 = vunpack.c.l.b16 %v1421
      %v1531 = vunpack.c.l.b16 %v1422
      %v1532 = vunpack.c.l.b16 %v1423
      %v1533 = vunpack.c.l.b16 %v1424
      %v1534 = vpack.c.b16 %v1519, %v1518
      %v1535 = vpack.c.b16 %v1521, %v1520
      %v1536 = vpack.c.b16 %v1523, %v1522
      %v1537 = vpack.c.b16 %v1525, %v1524
      %v1538 = vpack.c.b16 %v1527, %v1526
      %v1539 = vpack.c.b16 %v1529, %v1528
      %v1540 = vpack.c.b16 %v1531, %v1530
      %v1541 = vpack.c.b16 %v1533, %v1532
      %1550 = vmatprep.subr.bf16.mxu0 0
      %1551 = vmatpush1.bf16.msra.mxu0 %v1541
      %1552 = vmatprep.subr.bf16.mxu0 0
      %1553 = vmatpush1.bf16.msra.mxu0 %v1540
      %1554 = vmatprep.subr.bf16.mxu0 0
      %1555 = vmatpush1.bf16.msra.mxu0 %v1539
      %1556 = vmatprep.subr.bf16.mxu0 0
      %1557 = vmatpush1.bf16.msra.mxu0 %v1538
      %1558 = vmatprep.subr.bf16.mxu0 0
      %1559 = vmatpush1.bf16.msra.mxu0 %v1537
      %1560 = vmatprep.subr.bf16.mxu0 0
      %1561 = vmatpush1.bf16.msra.mxu0 %v1536
      %1562 = vmatprep.subr.bf16.mxu0 0
      %1563 = vmatpush1.bf16.msra.mxu0 %v1535
      %1564 = vmatprep.subr.bf16.mxu0 0
      %1565 = vmatpush1.bf16.msra.mxu0 %v1534
      %1566 = vmatprep.subr.bf16.mxu0 0
      %1567 = vmatpush2.bf16.msra.mxu0 0
      %1568 = vmatprep.subr.bf16.mxu0 0
      %1569 = vmatpush2.bf16.msra.mxu0 0
      %1570 = vmatprep.subr.bf16.mxu0 0
      %1571 = vmatpush2.bf16.msra.mxu0 0
      %1572 = vmatprep.subr.bf16.mxu0 0
      %1573 = vmatpush2.bf16.msra.mxu0 0
      %1574 = vmatprep.subr.bf16.mxu0 0
      %1575 = vmatpush2.bf16.msra.mxu0 0
      %1576 = vmatprep.subr.bf16.mxu0 0
      %1577 = vmatpush2.bf16.msra.mxu0 0
      %1578 = vmatprep.subr.bf16.mxu0 0
      %1579 = vmatpush2.bf16.msra.mxu0 0
      %1580 = vmatprep.subr.bf16.mxu0 0
      %1581 = vmatpush2.bf16.msra.mxu0 0
      %1582 = vmatprep.mubr.bf16.mxu0 0
      %1583 = vmatmul.mubr.bf16.gmra.mxu0 %v1431
      %v1584 = vpop.f32.mrf.mxu0
      %v1585 = vadd.f32 0.0, %v1584
      %v1586 = vpop.f32.mrf.mxu0
      %v1587 = vpop.f32.mrf.mxu0
      %v1588 = vadd.f32 0.0, %v1587
      %v1589 = vpop.f32.mrf.mxu0
      %1590 = vmatprep.mubr.bf16.mxu0 0
      %1591 = vmatmul.mubr.bf16.gmra.mxu0 %v1433
      %v1592 = vpop.f32.mrf.mxu0
      %v1593 = vadd.f32 0.0, %v1592
      %v1594 = vpop.f32.mrf.mxu0
      %v1595 = vpop.f32.mrf.mxu0
      %v1596 = vadd.f32 0.0, %v1595
      %v1597 = vpop.f32.mrf.mxu0
      %1598 = vmatprep.mubr.bf16.mxu0 0
      %1599 = vmatmul.mubr.bf16.gmra.mxu0 %v1435
      %v1600 = vpop.f32.mrf.mxu0
      %v1601 = vadd.f32 0.0, %v1600
      %v1602 = vpop.f32.mrf.mxu0
      %v1603 = vpop.f32.mrf.mxu0
      %v1604 = vadd.f32 0.0, %v1603
      %v1605 = vpop.f32.mrf.mxu0
      %1606 = vmatprep.mubr.bf16.mxu0 0
      %1607 = vmatmul.mubr.bf16.gmra.mxu0 %v1437
      %v1608 = vpop.f32.mrf.mxu0
      %v1609 = vadd.f32 0.0, %v1608
      %v1610 = vpop.f32.mrf.mxu0
      %v1611 = vpop.f32.mrf.mxu0
      %v1612 = vadd.f32 0.0, %v1611
      %v1613 = vpop.f32.mrf.mxu0
      %1614 = vmatprep.mubr.bf16.mxu0 0
      %1615 = vmatmul.mubr.bf16.gmra.mxu0 %v1439
      %v1616 = vpop.f32.mrf.mxu0
      %v1617 = vadd.f32 0.0, %v1616
      %v1618 = vpop.f32.mrf.mxu0
      %v1619 = vpop.f32.mrf.mxu0
      %v1620 = vadd.f32 0.0, %v1619
      %v1621 = vpop.f32.mrf.mxu0
      %1622 = vmatprep.mubr.bf16.mxu0 0
      %1623 = vmatmul.mubr.bf16.gmra.mxu0 %v1441
      %v1624 = vpop.f32.mrf.mxu0
      %v1625 = vadd.f32 0.0, %v1624
      %v1626 = vpop.f32.mrf.mxu0
      %v1627 = vpop.f32.mrf.mxu0
      %v1628 = vadd.f32 0.0, %v1627
      %v1629 = vpop.f32.mrf.mxu0
      %1630 = vmatprep.mubr.bf16.mxu0 0
      %1631 = vmatmul.mubr.bf16.gmra.mxu0 %v1443
      %v1632 = vpop.f32.mrf.mxu0
      %v1633 = vadd.f32 0.0, %v1632
      %v1634 = vpop.f32.mrf.mxu0
      %v1635 = vpop.f32.mrf.mxu0
      %v1636 = vadd.f32 0.0, %v1635
      %v1637 = vpop.f32.mrf.mxu0
      %1638 = vmatprep.mubr.bf16.mxu0 0
      %1639 = vmatmul.mubr.bf16.gmra.mxu0 %v1445
      %v1640 = vpop.f32.mrf.mxu0
      %v1641 = vadd.f32 0.0, %v1640
      %v1642 = vpop.f32.mrf.mxu0
      %v1643 = vpop.f32.mrf.mxu0
      %v1644 = vadd.f32 0.0, %v1643
      %v1645 = vpop.f32.mrf.mxu0
      %1646 = vmatprep.mubr.bf16.mxu0 0
      %1647 = vmatmul.mubr.bf16.gmra.mxu0 %v1447
      %v1648 = vpop.f32.mrf.mxu0
      %v1649 = vadd.f32 0.0, %v1648
      %v1650 = vpop.f32.mrf.mxu0
      %v1651 = vpop.f32.mrf.mxu0
      %v1652 = vadd.f32 0.0, %v1651
      %v1653 = vpop.f32.mrf.mxu0
      %1654 = vmatprep.mubr.bf16.mxu0 0
      %1655 = vmatmul.mubr.bf16.gmra.mxu0 %v1449
      %v1656 = vpop.f32.mrf.mxu0
      %v1657 = vadd.f32 0.0, %v1656
      %v1658 = vpop.f32.mrf.mxu0
      %v1659 = vpop.f32.mrf.mxu0
      %v1660 = vadd.f32 0.0, %v1659
      %v1661 = vpop.f32.mrf.mxu0
      %1662 = vmatprep.mubr.bf16.mxu0 0
      %1663 = vmatmul.mubr.bf16.gmra.mxu0 %v1451
      %v1664 = vpop.f32.mrf.mxu0
      %v1665 = vadd.f32 0.0, %v1664
      %v1666 = vpop.f32.mrf.mxu0
      %v1667 = vpop.f32.mrf.mxu0
      %v1668 = vadd.f32 0.0, %v1667
      %v1669 = vpop.f32.mrf.mxu0
      %1670 = vmatprep.mubr.bf16.mxu0 0
      %1671 = vmatmul.mubr.bf16.gmra.mxu0 %v1453
      %v1672 = vpop.f32.mrf.mxu0
      %v1673 = vadd.f32 0.0, %v1672
      %v1674 = vpop.f32.mrf.mxu0
      %v1675 = vpop.f32.mrf.mxu0
      %v1676 = vadd.f32 0.0, %v1675
      %v1677 = vpop.f32.mrf.mxu0
      %1678 = vmatprep.mubr.bf16.mxu0 0
      %1679 = vmatmul.mubr.bf16.gmra.mxu0 %v1455
      %v1680 = vpop.f32.mrf.mxu0
      %v1681 = vadd.f32 0.0, %v1680
      %v1682 = vpop.f32.mrf.mxu0
      %v1683 = vpop.f32.mrf.mxu0
      %v1684 = vadd.f32 0.0, %v1683
      %v1685 = vpop.f32.mrf.mxu0
      %1686 = vmatprep.mubr.bf16.mxu0 0
      %1687 = vmatmul.mubr.bf16.gmra.mxu0 %v1457
      %v1688 = vpop.f32.mrf.mxu0
      %v1689 = vadd.f32 0.0, %v1688
      %v1690 = vpop.f32.mrf.mxu0
      %v1691 = vpop.f32.mrf.mxu0
      %v1692 = vadd.f32 0.0, %v1691
      %v1693 = vpop.f32.mrf.mxu0
      %1694 = vmatprep.mubr.bf16.mxu0 0
      %1695 = vmatmul.mubr.bf16.gmra.mxu0 %v1459
      %v1696 = vpop.f32.mrf.mxu0
      %v1697 = vadd.f32 0.0, %v1696
      %v1698 = vpop.f32.mrf.mxu0
      %v1699 = vpop.f32.mrf.mxu0
      %v1700 = vadd.f32 0.0, %v1699
      %v1701 = vpop.f32.mrf.mxu0
      %1702 = vmatprep.mubr.bf16.mxu0 0
      %1703 = vmatmul.mubr.bf16.gmra.mxu0 %v1461
      %v1704 = vpop.f32.mrf.mxu0
      %v1705 = vadd.f32 0.0, %v1704
      %v1706 = vpop.f32.mrf.mxu0
      %v1707 = vpop.f32.mrf.mxu0
      %v1708 = vadd.f32 0.0, %v1707
      %v1709 = vpop.f32.mrf.mxu0
      %1710 = vmatprep.mubr.bf16.mxu0 0
      %1711 = vmatmul.mubr.bf16.gmra.mxu0 %v1463
      %v1712 = vpop.f32.mrf.mxu0
      %v1713 = vadd.f32 0.0, %v1712
      %v1714 = vpop.f32.mrf.mxu0
      %v1715 = vpop.f32.mrf.mxu0
      %v1716 = vadd.f32 0.0, %v1715
      %v1717 = vpop.f32.mrf.mxu0
      %1718 = vmatprep.mubr.bf16.mxu0 0
      %1719 = vmatmul.mubr.bf16.gmra.mxu0 %v1465
      %v1720 = vpop.f32.mrf.mxu0
      %v1721 = vadd.f32 0.0, %v1720
      %v1722 = vpop.f32.mrf.mxu0
      %v1723 = vpop.f32.mrf.mxu0
      %v1724 = vadd.f32 0.0, %v1723
      %v1725 = vpop.f32.mrf.mxu0
      %1726 = vmatprep.mubr.bf16.mxu0 0
      %1727 = vmatmul.mubr.bf16.gmra.mxu0 %v1467
      %v1728 = vpop.f32.mrf.mxu0
      %v1729 = vadd.f32 0.0, %v1728
      %v1730 = vpop.f32.mrf.mxu0
      %v1731 = vpop.f32.mrf.mxu0
      %v1732 = vadd.f32 0.0, %v1731
      %v1733 = vpop.f32.mrf.mxu0
      %1734 = vmatprep.mubr.bf16.mxu0 0
      %1735 = vmatmul.mubr.bf16.gmra.mxu0 %v1469
      %v1736 = vpop.f32.mrf.mxu0
      %v1737 = vadd.f32 0.0, %v1736
      %v1738 = vpop.f32.mrf.mxu0
      %v1739 = vpop.f32.mrf.mxu0
      %v1740 = vadd.f32 0.0, %v1739
      %v1741 = vpop.f32.mrf.mxu0
      %1742 = vmatprep.mubr.bf16.mxu0 0
      %1743 = vmatmul.mubr.bf16.gmra.mxu0 %v1471
      %v1744 = vpop.f32.mrf.mxu0
      %v1745 = vadd.f32 0.0, %v1744
      %v1746 = vpop.f32.mrf.mxu0
      %v1747 = vpop.f32.mrf.mxu0
      %v1748 = vadd.f32 0.0, %v1747
      %v1749 = vpop.f32.mrf.mxu0
      %1750 = vmatprep.mubr.bf16.mxu0 0
      %1751 = vmatmul.mubr.bf16.gmra.mxu0 %v1473
      %v1752 = vpop.f32.mrf.mxu0
      %v1753 = vadd.f32 0.0, %v1752
      %v1754 = vpop.f32.mrf.mxu0
      %v1755 = vpop.f32.mrf.mxu0
      %v1756 = vadd.f32 0.0, %v1755
      %v1757 = vpop.f32.mrf.mxu0
      %1758 = vmatprep.mubr.bf16.mxu0 0
      %1759 = vmatmul.mubr.bf16.gmra.mxu0 %v1475
      %v1760 = vpop.f32.mrf.mxu0
      %v1761 = vadd.f32 0.0, %v1760
      %v1762 = vpop.f32.mrf.mxu0
      %v1763 = vpop.f32.mrf.mxu0
      %v1764 = vadd.f32 0.0, %v1763
      %v1765 = vpop.f32.mrf.mxu0
      %1766 = vmatprep.mubr.bf16.mxu0 0
      %1767 = vmatmul.mubr.bf16.gmra.mxu0 %v1477
      %v1768 = vpop.f32.mrf.mxu0
      %v1769 = vadd.f32 0.0, %v1768
      %v1770 = vpop.f32.mrf.mxu0
      %v1771 = vpop.f32.mrf.mxu0
      %v1772 = vadd.f32 0.0, %v1771
      %v1773 = vpop.f32.mrf.mxu0
      %1774 = vdwg.mxu0
      %v1775 = vadd.f32 %v1217, %v1585
      %v1776 = vadd.f32 %v1220, %v1588
      %v1777 = vadd.f32 %v1225, %v1593
      %v1778 = vadd.f32 %v1228, %v1596
      %v1779 = vadd.f32 %v1233, %v1601
      %v1780 = vadd.f32 %v1236, %v1604
      %v1781 = vadd.f32 %v1241, %v1609
      %v1782 = vadd.f32 %v1244, %v1612
      %v1783 = vadd.f32 %v1249, %v1617
      %v1784 = vadd.f32 %v1252, %v1620
      %v1785 = vadd.f32 %v1257, %v1625
      %v1786 = vadd.f32 %v1260, %v1628
      %v1787 = vadd.f32 %v1265, %v1633
      %v1788 = vadd.f32 %v1268, %v1636
      %v1789 = vadd.f32 %v1273, %v1641
      %v1790 = vadd.f32 %v1276, %v1644
      %v1791 = vadd.f32 %v1281, %v1649
      %v1792 = vadd.f32 %v1284, %v1652
      %v1793 = vadd.f32 %v1289, %v1657
      %v1794 = vadd.f32 %v1292, %v1660
      %v1795 = vadd.f32 %v1297, %v1665
      %v1796 = vadd.f32 %v1300, %v1668
      %v1797 = vadd.f32 %v1305, %v1673
      %v1798 = vadd.f32 %v1308, %v1676
      %v1799 = vadd.f32 %v1313, %v1681
      %v1800 = vadd.f32 %v1316, %v1684
      %v1801 = vadd.f32 %v1321, %v1689
      %v1802 = vadd.f32 %v1324, %v1692
      %v1803 = vadd.f32 %v1329, %v1697
      %v1804 = vadd.f32 %v1332, %v1700
      %v1805 = vadd.f32 %v1337, %v1705
      %v1806 = vadd.f32 %v1340, %v1708
      %v1807 = vadd.f32 %v1345, %v1713
      %v1808 = vadd.f32 %v1348, %v1716
      %v1809 = vadd.f32 %v1353, %v1721
      %v1810 = vadd.f32 %v1356, %v1724
      %v1811 = vadd.f32 %v1361, %v1729
      %v1812 = vadd.f32 %v1364, %v1732
      %v1813 = vadd.f32 %v1369, %v1737
      %v1814 = vadd.f32 %v1372, %v1740
      %v1815 = vadd.f32 %v1377, %v1745
      %v1816 = vadd.f32 %v1380, %v1748
      %v1817 = vadd.f32 %v1385, %v1753
      %v1818 = vadd.f32 %v1388, %v1756
      %v1819 = vadd.f32 %v1393, %v1761
      %v1820 = vadd.f32 %v1396, %v1764
      %v1821 = vadd.f32 %v1401, %v1769
      %v1822 = vadd.f32 %v1404, %v1772
      %v1823 = vld [vmem:[%s405 + $0xc] sm:$0xf]
      %v1824 = vld [vmem:[%s405 + $0x10] sm:$0xf]
      %v1825 = vld [vmem:[%s405 + $0x14] sm:$0xf]
      %v1826 = vld [vmem:[%s405 + $0x18] sm:$0xf]
      %v1827 = vld [vmem:[%s405 + $0x1c] sm:$0xf]
      %v1828 = vld [vmem:[%s405 + $0x20] sm:$0xf]
      %v1829 = vld [vmem:[%s405 + $0x24] sm:$0xf]
      %v1830 = vld [vmem:[%s405 + $0x28] sm:$0xf]
      %v1831 = vld [vmem:[%s405 + $0x2c] sm:$0xf]
      %v1832 = vld [vmem:[%s405 + $0x30] sm:$0xf]
      %v1833 = vld [vmem:[%s405 + $0x34] sm:$0xf]
      %v1834 = vld [vmem:[%s405 + $0x38] sm:$0xf]
      %v1835 = vld [vmem:[%s405 + $0x3c] sm:$0xf]
      %v1836 = vld [vmem:[%s405 + $0x40] sm:$0xf]
      %v1837 = vld [vmem:[%s405 + $0x44] sm:$0xf]
      %v1838 = vld [vmem:[%s405 + $0x48] sm:$0xf]
      %v1839 = vld [vmem:[%s405 + $0x4c] sm:$0xf]
      %v1840 = vld [vmem:[%s405 + $0x50] sm:$0xf]
      %v1841 = vld [vmem:[%s405 + $0x54] sm:$0xf]
      %v1842 = vld [vmem:[%s405 + $0x58] sm:$0xf]
      %v1843 = vld [vmem:[%s405 + $0x5c] sm:$0xf]
      %v1844 = vld [vmem:[%s405 + $0x60] sm:$0xf]
      %v1845 = vld [vmem:[%s405 + $0x64] sm:$0xf]
      %v1846 = vld [vmem:[%s405 + $0x68] sm:$0xf]
      %v1847 = vld [vmem:[%s405 + $0x6c] sm:$0xf]
      %v1848 = vld [vmem:[%s405 + $0x70] sm:$0xf]
      %v1849 = vld [vmem:[%s405 + $0x74] sm:$0xf]
      %v1850 = vld [vmem:[%s405 + $0x78] sm:$0xf]
      %v1851 = vld [vmem:[%s405 + $0x7c] sm:$0xf]
      %v1852 = vld [vmem:[%s405 + $0x80] sm:$0xf]
      %v1853 = vld [vmem:[%s405 + $0x84] sm:$0xf]
      %v1854 = vld [vmem:[%s405 + $0x88] sm:$0xf]
      %v1855 = vld [vmem:[%s405 + $0x8c] sm:$0xf]
      %v1856 = vld [vmem:[%s405 + $0x90] sm:$0xf]
      %v1857 = vld [vmem:[%s405 + $0x94] sm:$0xf]
      %v1858 = vld [vmem:[%s405 + $0x98] sm:$0xf]
      %v1859 = vld [vmem:[%s405 + $0x9c] sm:$0xf]
      %v1860 = vld [vmem:[%s405 + $0xa0] sm:$0xf]
      %v1861 = vld [vmem:[%s405 + $0xa4] sm:$0xf]
      %v1862 = vld [vmem:[%s405 + $0xa8] sm:$0xf]
      %v1863 = vld [vmem:[%s405 + $0xac] sm:$0xf]
      %v1864 = vld [vmem:[%s405 + $0xb0] sm:$0xf]
      %v1865 = vld [vmem:[%s405 + $0xb4] sm:$0xf]
      %v1866 = vld [vmem:[%s405 + $0xb8] sm:$0xf]
      %v1867 = vld [vmem:[%s405 + $0xbc] sm:$0xf]
      %v1868 = vld [vmem:[%s405 + $0xc0] sm:$0xf]
      %v1869 = vld [vmem:[%s405 + $0xc4] sm:$0xf]
      %v1870 = vld [vmem:[%s405 + $0xc8] sm:$0xf]
      %s1871 = scalar_lea.vmem %s1, 192
      %v1872 = vld [vmem:[%s1871] sm:$0xf]
      %v1873 = vld [vmem:[%s1871 + $0x4] sm:$0xf]
      %v1874 = vld [vmem:[%s1871 + $0x8] sm:$0xf]
      %v1875 = vld [vmem:[%s1871 + $0xc] sm:$0xf]
      %v1876 = vld [vmem:[%s1871 + $0x10] sm:$0xf]
      %v1877 = vld [vmem:[%s1871 + $0x14] sm:$0xf]
      %v1878 = vld [vmem:[%s1871 + $0x18] sm:$0xf]
      %v1879 = vld [vmem:[%s1871 + $0x1c] sm:$0xf]
      %v1880 = vld [vmem:[%s1871 + $0x20] sm:$0xf]
      %v1881 = vld [vmem:[%s1871 + $0x24] sm:$0xf]
      %v1882 = vld [vmem:[%s1871 + $0x28] sm:$0xf]
      %v1883 = vld [vmem:[%s1871 + $0x2c] sm:$0xf]
      %v1884 = vld [vmem:[%s1871 + $0x30] sm:$0xf]
      %v1885 = vld [vmem:[%s1871 + $0x34] sm:$0xf]
      %v1886 = vld [vmem:[%s1871 + $0x38] sm:$0xf]
      %v1887 = vld [vmem:[%s1871 + $0x3c] sm:$0xf]
      %v1936 = vunpack.c.l.b16 %v1823
      %v1937 = vunpack.c.l.b16 %v1824
      %v1938 = vunpack.c.l.b16 %v1825
      %v1939 = vunpack.c.l.b16 %v1826
      %v1940 = vunpack.c.l.b16 %v1827
      %v1941 = vunpack.c.l.b16 %v1828
      %v1942 = vunpack.c.l.b16 %v1829
      %v1943 = vunpack.c.l.b16 %v1830
      %v1944 = vunpack.c.l.b16 %v1831
      %v1945 = vunpack.c.l.b16 %v1832
      %v1946 = vunpack.c.l.b16 %v1833
      %v1947 = vunpack.c.l.b16 %v1834
      %v1948 = vunpack.c.l.b16 %v1835
      %v1949 = vunpack.c.l.b16 %v1836
      %v1950 = vunpack.c.l.b16 %v1837
      %v1951 = vunpack.c.l.b16 %v1838
      %v1952 = vunpack.c.l.b16 %v1839
      %v1953 = vunpack.c.l.b16 %v1840
      %v1954 = vunpack.c.l.b16 %v1841
      %v1955 = vunpack.c.l.b16 %v1842
      %v1956 = vunpack.c.l.b16 %v1843
      %v1957 = vunpack.c.l.b16 %v1844
      %v1958 = vunpack.c.l.b16 %v1845
      %v1959 = vunpack.c.l.b16 %v1846
      %v1960 = vunpack.c.l.b16 %v1847
      %v1961 = vunpack.c.l.b16 %v1848
      %v1962 = vunpack.c.l.b16 %v1849
      %v1963 = vunpack.c.l.b16 %v1850
      %v1964 = vunpack.c.l.b16 %v1851
      %v1965 = vunpack.c.l.b16 %v1852
      %v1966 = vunpack.c.l.b16 %v1853
      %v1967 = vunpack.c.l.b16 %v1854
      %v1968 = vunpack.c.l.b16 %v1855
      %v1969 = vunpack.c.l.b16 %v1856
      %v1970 = vunpack.c.l.b16 %v1857
      %v1971 = vunpack.c.l.b16 %v1858
      %v1972 = vunpack.c.l.b16 %v1859
      %v1973 = vunpack.c.l.b16 %v1860
      %v1974 = vunpack.c.l.b16 %v1861
      %v1975 = vunpack.c.l.b16 %v1862
      %v1976 = vunpack.c.l.b16 %v1863
      %v1977 = vunpack.c.l.b16 %v1864
      %v1978 = vunpack.c.l.b16 %v1865
      %v1979 = vunpack.c.l.b16 %v1866
      %v1980 = vunpack.c.l.b16 %v1867
      %v1981 = vunpack.c.l.b16 %v1868
      %v1982 = vunpack.c.l.b16 %v1869
      %v1983 = vunpack.c.l.b16 %v1870
      %v1984 = vpack.c.b16 %v1937, %v1936
      %v1985 = vpack.c.b16 %v1939, %v1938
      %v1986 = vpack.c.b16 %v1941, %v1940
      %v1987 = vpack.c.b16 %v1943, %v1942
      %v1988 = vpack.c.b16 %v1945, %v1944
      %v1989 = vpack.c.b16 %v1947, %v1946
      %v1990 = vpack.c.b16 %v1949, %v1948
      %v1991 = vpack.c.b16 %v1951, %v1950
      %v1992 = vpack.c.b16 %v1953, %v1952
      %v1993 = vpack.c.b16 %v1955, %v1954
      %v1994 = vpack.c.b16 %v1957, %v1956
      %v1995 = vpack.c.b16 %v1959, %v1958
      %v1996 = vpack.c.b16 %v1961, %v1960
      %v1997 = vpack.c.b16 %v1963, %v1962
      %v1998 = vpack.c.b16 %v1965, %v1964
      %v1999 = vpack.c.b16 %v1967, %v1966
      %v2000 = vpack.c.b16 %v1969, %v1968
      %v2001 = vpack.c.b16 %v1971, %v1970
      %v2002 = vpack.c.b16 %v1973, %v1972
      %v2003 = vpack.c.b16 %v1975, %v1974
      %v2004 = vpack.c.b16 %v1977, %v1976
      %v2005 = vpack.c.b16 %v1979, %v1978
      %v2006 = vpack.c.b16 %v1981, %v1980
      %v2007 = vpack.c.b16 %v1983, %v1982
      %v2048 = vunpack.c.l.b16 %v1872
      %v2049 = vunpack.c.l.b16 %v1873
      %v2050 = vunpack.c.l.b16 %v1874
      %v2051 = vunpack.c.l.b16 %v1875
      %v2052 = vunpack.c.l.b16 %v1876
      %v2053 = vunpack.c.l.b16 %v1877
      %v2054 = vunpack.c.l.b16 %v1878
      %v2055 = vunpack.c.l.b16 %v1879
      %v2056 = vunpack.c.l.b16 %v1880
      %v2057 = vunpack.c.l.b16 %v1881
      %v2058 = vunpack.c.l.b16 %v1882
      %v2059 = vunpack.c.l.b16 %v1883
      %v2060 = vunpack.c.l.b16 %v1884
      %v2061 = vunpack.c.l.b16 %v1885
      %v2062 = vunpack.c.l.b16 %v1886
      %v2063 = vunpack.c.l.b16 %v1887
      %v2064 = vpack.c.b16 %v2049, %v2048
      %v2065 = vpack.c.b16 %v2051, %v2050
      %v2066 = vpack.c.b16 %v2053, %v2052
      %v2067 = vpack.c.b16 %v2055, %v2054
      %v2068 = vpack.c.b16 %v2057, %v2056
      %v2069 = vpack.c.b16 %v2059, %v2058
      %v2070 = vpack.c.b16 %v2061, %v2060
      %v2071 = vpack.c.b16 %v2063, %v2062
      %2080 = vmatprep.subr.bf16.mxu0 0
      %2081 = vmatpush1.bf16.msra.mxu0 %v2071
      %2082 = vmatprep.subr.bf16.mxu0 0
      %2083 = vmatpush1.bf16.msra.mxu0 %v2070
      %2084 = vmatprep.subr.bf16.mxu0 0
      %2085 = vmatpush1.bf16.msra.mxu0 %v2069
      %2086 = vmatprep.subr.bf16.mxu0 0
      %2087 = vmatpush1.bf16.msra.mxu0 %v2068
      %2088 = vmatprep.subr.bf16.mxu0 0
      %2089 = vmatpush1.bf16.msra.mxu0 %v2067
      %2090 = vmatprep.subr.bf16.mxu0 0
      %2091 = vmatpush1.bf16.msra.mxu0 %v2066
      %2092 = vmatprep.subr.bf16.mxu0 0
      %2093 = vmatpush1.bf16.msra.mxu0 %v2065
      %2094 = vmatprep.subr.bf16.mxu0 0
      %2095 = vmatpush1.bf16.msra.mxu0 %v2064
      %2096 = vmatprep.subr.bf16.mxu0 0
      %2097 = vmatpush2.bf16.msra.mxu0 0
      %2098 = vmatprep.subr.bf16.mxu0 0
      %2099 = vmatpush2.bf16.msra.mxu0 0
      %2100 = vmatprep.subr.bf16.mxu0 0
      %2101 = vmatpush2.bf16.msra.mxu0 0
      %2102 = vmatprep.subr.bf16.mxu0 0
      %2103 = vmatpush2.bf16.msra.mxu0 0
      %2104 = vmatprep.subr.bf16.mxu0 0
      %2105 = vmatpush2.bf16.msra.mxu0 0
      %2106 = vmatprep.subr.bf16.mxu0 0
      %2107 = vmatpush2.bf16.msra.mxu0 0
      %2108 = vmatprep.subr.bf16.mxu0 0
      %2109 = vmatpush2.bf16.msra.mxu0 0
      %2110 = vmatprep.subr.bf16.mxu0 0
      %2111 = vmatpush2.bf16.msra.mxu0 0
      %2112 = vmatprep.mubr.bf16.mxu0 0
      %2113 = vmatmul.mubr.bf16.gmra.mxu0 %v1984
      %v2114 = vpop.f32.mrf.mxu0
      %v2115 = vadd.f32 0.0, %v2114
      %v2116 = vpop.f32.mrf.mxu0
      %v2117 = vpop.f32.mrf.mxu0
      %v2118 = vadd.f32 0.0, %v2117
      %v2119 = vpop.f32.mrf.mxu0
      %2120 = vmatprep.mubr.bf16.mxu0 0
      %2121 = vmatmul.mubr.bf16.gmra.mxu0 %v1985
      %v2122 = vpop.f32.mrf.mxu0
      %v2123 = vadd.f32 0.0, %v2122
      %v2124 = vpop.f32.mrf.mxu0
      %v2125 = vpop.f32.mrf.mxu0
      %v2126 = vadd.f32 0.0, %v2125
      %v2127 = vpop.f32.mrf.mxu0
      %2128 = vmatprep.mubr.bf16.mxu0 0
      %2129 = vmatmul.mubr.bf16.gmra.mxu0 %v1986
      %v2130 = vpop.f32.mrf.mxu0
      %v2131 = vadd.f32 0.0, %v2130
      %v2132 = vpop.f32.mrf.mxu0
      %v2133 = vpop.f32.mrf.mxu0
      %v2134 = vadd.f32 0.0, %v2133
      %v2135 = vpop.f32.mrf.mxu0
      %2136 = vmatprep.mubr.bf16.mxu0 0
      %2137 = vmatmul.mubr.bf16.gmra.mxu0 %v1987
      %v2138 = vpop.f32.mrf.mxu0
      %v2139 = vadd.f32 0.0, %v2138
      %v2140 = vpop.f32.mrf.mxu0
      %v2141 = vpop.f32.mrf.mxu0
      %v2142 = vadd.f32 0.0, %v2141
      %v2143 = vpop.f32.mrf.mxu0
      %2144 = vmatprep.mubr.bf16.mxu0 0
      %2145 = vmatmul.mubr.bf16.gmra.mxu0 %v1988
      %v2146 = vpop.f32.mrf.mxu0
      %v2147 = vadd.f32 0.0, %v2146
      %v2148 = vpop.f32.mrf.mxu0
      %v2149 = vpop.f32.mrf.mxu0
      %v2150 = vadd.f32 0.0, %v2149
      %v2151 = vpop.f32.mrf.mxu0
      %2152 = vmatprep.mubr.bf16.mxu0 0
      %2153 = vmatmul.mubr.bf16.gmra.mxu0 %v1989
      %v2154 = vpop.f32.mrf.mxu0
      %v2155 = vadd.f32 0.0, %v2154
      %v2156 = vpop.f32.mrf.mxu0
      %v2157 = vpop.f32.mrf.mxu0
      %v2158 = vadd.f32 0.0, %v2157
      %v2159 = vpop.f32.mrf.mxu0
      %2160 = vmatprep.mubr.bf16.mxu0 0
      %2161 = vmatmul.mubr.bf16.gmra.mxu0 %v1990
      %v2162 = vpop.f32.mrf.mxu0
      %v2163 = vadd.f32 0.0, %v2162
      %v2164 = vpop.f32.mrf.mxu0
      %v2165 = vpop.f32.mrf.mxu0
      %v2166 = vadd.f32 0.0, %v2165
      %v2167 = vpop.f32.mrf.mxu0
      %2168 = vmatprep.mubr.bf16.mxu0 0
      %2169 = vmatmul.mubr.bf16.gmra.mxu0 %v1991
      %v2170 = vpop.f32.mrf.mxu0
      %v2171 = vadd.f32 0.0, %v2170
      %v2172 = vpop.f32.mrf.mxu0
      %v2173 = vpop.f32.mrf.mxu0
      %v2174 = vadd.f32 0.0, %v2173
      %v2175 = vpop.f32.mrf.mxu0
      %2176 = vmatprep.mubr.bf16.mxu0 0
      %2177 = vmatmul.mubr.bf16.gmra.mxu0 %v1992
      %v2178 = vpop.f32.mrf.mxu0
      %v2179 = vadd.f32 0.0, %v2178
      %v2180 = vpop.f32.mrf.mxu0
      %v2181 = vpop.f32.mrf.mxu0
      %v2182 = vadd.f32 0.0, %v2181
      %v2183 = vpop.f32.mrf.mxu0
      %2184 = vmatprep.mubr.bf16.mxu0 0
      %2185 = vmatmul.mubr.bf16.gmra.mxu0 %v1993
      %v2186 = vpop.f32.mrf.mxu0
      %v2187 = vadd.f32 0.0, %v2186
      %v2188 = vpop.f32.mrf.mxu0
      %v2189 = vpop.f32.mrf.mxu0
      %v2190 = vadd.f32 0.0, %v2189
      %v2191 = vpop.f32.mrf.mxu0
      %2192 = vmatprep.mubr.bf16.mxu0 0
      %2193 = vmatmul.mubr.bf16.gmra.mxu0 %v1994
      %v2194 = vpop.f32.mrf.mxu0
      %v2195 = vadd.f32 0.0, %v2194
      %v2196 = vpop.f32.mrf.mxu0
      %v2197 = vpop.f32.mrf.mxu0
      %v2198 = vadd.f32 0.0, %v2197
      %v2199 = vpop.f32.mrf.mxu0
      %2200 = vmatprep.mubr.bf16.mxu0 0
      %2201 = vmatmul.mubr.bf16.gmra.mxu0 %v1995
      %v2202 = vpop.f32.mrf.mxu0
      %v2203 = vadd.f32 0.0, %v2202
      %v2204 = vpop.f32.mrf.mxu0
      %v2205 = vpop.f32.mrf.mxu0
      %v2206 = vadd.f32 0.0, %v2205
      %v2207 = vpop.f32.mrf.mxu0
      %2208 = vmatprep.mubr.bf16.mxu0 0
      %2209 = vmatmul.mubr.bf16.gmra.mxu0 %v1996
      %v2210 = vpop.f32.mrf.mxu0
      %v2211 = vadd.f32 0.0, %v2210
      %v2212 = vpop.f32.mrf.mxu0
      %v2213 = vpop.f32.mrf.mxu0
      %v2214 = vadd.f32 0.0, %v2213
      %v2215 = vpop.f32.mrf.mxu0
      %2216 = vmatprep.mubr.bf16.mxu0 0
      %2217 = vmatmul.mubr.bf16.gmra.mxu0 %v1997
      %v2218 = vpop.f32.mrf.mxu0
      %v2219 = vadd.f32 0.0, %v2218
      %v2220 = vpop.f32.mrf.mxu0
      %v2221 = vpop.f32.mrf.mxu0
      %v2222 = vadd.f32 0.0, %v2221
      %v2223 = vpop.f32.mrf.mxu0
      %2224 = vmatprep.mubr.bf16.mxu0 0
      %2225 = vmatmul.mubr.bf16.gmra.mxu0 %v1998
      %v2226 = vpop.f32.mrf.mxu0
      %v2227 = vadd.f32 0.0, %v2226
      %v2228 = vpop.f32.mrf.mxu0
      %v2229 = vpop.f32.mrf.mxu0
      %v2230 = vadd.f32 0.0, %v2229
      %v2231 = vpop.f32.mrf.mxu0
      %2232 = vmatprep.mubr.bf16.mxu0 0
      %2233 = vmatmul.mubr.bf16.gmra.mxu0 %v1999
      %v2234 = vpop.f32.mrf.mxu0
      %v2235 = vadd.f32 0.0, %v2234
      %v2236 = vpop.f32.mrf.mxu0
      %v2237 = vpop.f32.mrf.mxu0
      %v2238 = vadd.f32 0.0, %v2237
      %v2239 = vpop.f32.mrf.mxu0
      %2240 = vmatprep.mubr.bf16.mxu0 0
      %2241 = vmatmul.mubr.bf16.gmra.mxu0 %v2000
      %v2242 = vpop.f32.mrf.mxu0
      %v2243 = vadd.f32 0.0, %v2242
      %v2244 = vpop.f32.mrf.mxu0
      %v2245 = vpop.f32.mrf.mxu0
      %v2246 = vadd.f32 0.0, %v2245
      %v2247 = vpop.f32.mrf.mxu0
      %2248 = vmatprep.mubr.bf16.mxu0 0
      %2249 = vmatmul.mubr.bf16.gmra.mxu0 %v2001
      %v2250 = vpop.f32.mrf.mxu0
      %v2251 = vadd.f32 0.0, %v2250
      %v2252 = vpop.f32.mrf.mxu0
      %v2253 = vpop.f32.mrf.mxu0
      %v2254 = vadd.f32 0.0, %v2253
      %v2255 = vpop.f32.mrf.mxu0
      %2256 = vmatprep.mubr.bf16.mxu0 0
      %2257 = vmatmul.mubr.bf16.gmra.mxu0 %v2002
      %v2258 = vpop.f32.mrf.mxu0
      %v2259 = vadd.f32 0.0, %v2258
      %v2260 = vpop.f32.mrf.mxu0
      %v2261 = vpop.f32.mrf.mxu0
      %v2262 = vadd.f32 0.0, %v2261
      %v2263 = vpop.f32.mrf.mxu0
      %2264 = vmatprep.mubr.bf16.mxu0 0
      %2265 = vmatmul.mubr.bf16.gmra.mxu0 %v2003
      %v2266 = vpop.f32.mrf.mxu0
      %v2267 = vadd.f32 0.0, %v2266
      %v2268 = vpop.f32.mrf.mxu0
      %v2269 = vpop.f32.mrf.mxu0
      %v2270 = vadd.f32 0.0, %v2269
      %v2271 = vpop.f32.mrf.mxu0
      %2272 = vmatprep.mubr.bf16.mxu0 0
      %2273 = vmatmul.mubr.bf16.gmra.mxu0 %v2004
      %v2274 = vpop.f32.mrf.mxu0
      %v2275 = vadd.f32 0.0, %v2274
      %v2276 = vpop.f32.mrf.mxu0
      %v2277 = vpop.f32.mrf.mxu0
      %v2278 = vadd.f32 0.0, %v2277
      %v2279 = vpop.f32.mrf.mxu0
      %2280 = vmatprep.mubr.bf16.mxu0 0
      %2281 = vmatmul.mubr.bf16.gmra.mxu0 %v2005
      %v2282 = vpop.f32.mrf.mxu0
      %v2283 = vadd.f32 0.0, %v2282
      %v2284 = vpop.f32.mrf.mxu0
      %v2285 = vpop.f32.mrf.mxu0
      %v2286 = vadd.f32 0.0, %v2285
      %v2287 = vpop.f32.mrf.mxu0
      %2288 = vmatprep.mubr.bf16.mxu0 0
      %2289 = vmatmul.mubr.bf16.gmra.mxu0 %v2006
      %v2290 = vpop.f32.mrf.mxu0
      %v2291 = vadd.f32 0.0, %v2290
      %v2292 = vpop.f32.mrf.mxu0
      %v2293 = vpop.f32.mrf.mxu0
      %v2294 = vadd.f32 0.0, %v2293
      %v2295 = vpop.f32.mrf.mxu0
      %2296 = vmatprep.mubr.bf16.mxu0 0
      %2297 = vmatmul.mubr.bf16.gmra.mxu0 %v2007
      %v2298 = vpop.f32.mrf.mxu0
      %v2299 = vadd.f32 0.0, %v2298
      %v2300 = vpop.f32.mrf.mxu0
      %v2301 = vpop.f32.mrf.mxu0
      %v2302 = vadd.f32 0.0, %v2301
      %v2303 = vpop.f32.mrf.mxu0
      %2304 = vdwg.mxu0
      %v2305 = vadd.f32 %v1775, %v2115
      %v2306 = vadd.f32 %v1776, %v2118
      %v2307 = vadd.f32 %v1777, %v2123
      %v2308 = vadd.f32 %v1778, %v2126
      %v2309 = vadd.f32 %v1779, %v2131
      %v2310 = vadd.f32 %v1780, %v2134
      %v2311 = vadd.f32 %v1781, %v2139
      %v2312 = vadd.f32 %v1782, %v2142
      %v2313 = vadd.f32 %v1783, %v2147
      %v2314 = vadd.f32 %v1784, %v2150
      %v2315 = vadd.f32 %v1785, %v2155
      %v2316 = vadd.f32 %v1786, %v2158
      %v2317 = vadd.f32 %v1787, %v2163
      %v2318 = vadd.f32 %v1788, %v2166
      %v2319 = vadd.f32 %v1789, %v2171
      %v2320 = vadd.f32 %v1790, %v2174
      %v2321 = vadd.f32 %v1791, %v2179
      %v2322 = vadd.f32 %v1792, %v2182
      %v2323 = vadd.f32 %v1793, %v2187
      %v2324 = vadd.f32 %v1794, %v2190
      %v2325 = vadd.f32 %v1795, %v2195
      %v2326 = vadd.f32 %v1796, %v2198
      %v2327 = vadd.f32 %v1797, %v2203
      %v2328 = vadd.f32 %v1798, %v2206
      %v2329 = vadd.f32 %v1799, %v2211
      %v2330 = vadd.f32 %v1800, %v2214
      %v2331 = vadd.f32 %v1801, %v2219
      %v2332 = vadd.f32 %v1802, %v2222
      %v2333 = vadd.f32 %v1803, %v2227
      %v2334 = vadd.f32 %v1804, %v2230
      %v2335 = vadd.f32 %v1805, %v2235
      %v2336 = vadd.f32 %v1806, %v2238
      %v2337 = vadd.f32 %v1807, %v2243
      %v2338 = vadd.f32 %v1808, %v2246
      %v2339 = vadd.f32 %v1809, %v2251
      %v2340 = vadd.f32 %v1810, %v2254
      %v2341 = vadd.f32 %v1811, %v2259
      %v2342 = vadd.f32 %v1812, %v2262
      %v2343 = vadd.f32 %v1813, %v2267
      %v2344 = vadd.f32 %v1814, %v2270
      %v2345 = vadd.f32 %v1815, %v2275
      %v2346 = vadd.f32 %v1816, %v2278
      %v2347 = vadd.f32 %v1817, %v2283
      %v2348 = vadd.f32 %v1818, %v2286
      %v2349 = vadd.f32 %v1819, %v2291
      %v2350 = vadd.f32 %v1820, %v2294
      %v2351 = vadd.f32 %v1821, %v2299
      %v2352 = vadd.f32 %v1822, %v2302
      %v2353 = vld [vmem:[%s405 + $0xc] sm:$0xf]
      %v2354 = vld [vmem:[%s405 + $0x10] sm:$0xf]
      %v2355 = vld [vmem:[%s405 + $0x14] sm:$0xf]
      %v2356 = vld [vmem:[%s405 + $0x18] sm:$0xf]
      %v2357 = vld [vmem:[%s405 + $0x1c] sm:$0xf]
      %v2358 = vld [vmem:[%s405 + $0x20] sm:$0xf]
      %v2359 = vld [vmem:[%s405 + $0x24] sm:$0xf]
      %v2360 = vld [vmem:[%s405 + $0x28] sm:$0xf]
      %v2361 = vld [vmem:[%s405 + $0x2c] sm:$0xf]
      %v2362 = vld [vmem:[%s405 + $0x30] sm:$0xf]
      %v2363 = vld [vmem:[%s405 + $0x34] sm:$0xf]
      %v2364 = vld [vmem:[%s405 + $0x38] sm:$0xf]
      %v2365 = vld [vmem:[%s405 + $0x3c] sm:$0xf]
      %v2366 = vld [vmem:[%s405 + $0x40] sm:$0xf]
      %v2367 = vld [vmem:[%s405 + $0x44] sm:$0xf]
      %v2368 = vld [vmem:[%s405 + $0x48] sm:$0xf]
      %v2369 = vld [vmem:[%s405 + $0x4c] sm:$0xf]
      %v2370 = vld [vmem:[%s405 + $0x50] sm:$0xf]
      %v2371 = vld [vmem:[%s405 + $0x54] sm:$0xf]
      %v2372 = vld [vmem:[%s405 + $0x58] sm:$0xf]
      %v2373 = vld [vmem:[%s405 + $0x5c] sm:$0xf]
      %v2374 = vld [vmem:[%s405 + $0x60] sm:$0xf]
      %v2375 = vld [vmem:[%s405 + $0x64] sm:$0xf]
      %v2376 = vld [vmem:[%s405 + $0x68] sm:$0xf]
      %v2377 = vld [vmem:[%s405 + $0x6c] sm:$0xf]
      %v2378 = vld [vmem:[%s405 + $0x70] sm:$0xf]
      %v2379 = vld [vmem:[%s405 + $0x74] sm:$0xf]
      %v2380 = vld [vmem:[%s405 + $0x78] sm:$0xf]
      %v2381 = vld [vmem:[%s405 + $0x7c] sm:$0xf]
      %v2382 = vld [vmem:[%s405 + $0x80] sm:$0xf]
      %v2383 = vld [vmem:[%s405 + $0x84] sm:$0xf]
      %v2384 = vld [vmem:[%s405 + $0x88] sm:$0xf]
      %v2385 = vld [vmem:[%s405 + $0x8c] sm:$0xf]
      %v2386 = vld [vmem:[%s405 + $0x90] sm:$0xf]
      %v2387 = vld [vmem:[%s405 + $0x94] sm:$0xf]
      %v2388 = vld [vmem:[%s405 + $0x98] sm:$0xf]
      %v2389 = vld [vmem:[%s405 + $0x9c] sm:$0xf]
      %v2390 = vld [vmem:[%s405 + $0xa0] sm:$0xf]
      %v2391 = vld [vmem:[%s405 + $0xa4] sm:$0xf]
      %v2392 = vld [vmem:[%s405 + $0xa8] sm:$0xf]
      %v2393 = vld [vmem:[%s405 + $0xac] sm:$0xf]
      %v2394 = vld [vmem:[%s405 + $0xb0] sm:$0xf]
      %v2395 = vld [vmem:[%s405 + $0xb4] sm:$0xf]
      %v2396 = vld [vmem:[%s405 + $0xb8] sm:$0xf]
      %v2397 = vld [vmem:[%s405 + $0xbc] sm:$0xf]
      %v2398 = vld [vmem:[%s405 + $0xc0] sm:$0xf]
      %v2399 = vld [vmem:[%s405 + $0xc4] sm:$0xf]
      %v2400 = vld [vmem:[%s405 + $0xc8] sm:$0xf]
      %v2401 = vld [vmem:[%s405 + $0xcc] sm:$0x1]
      %s2402 = scalar_lea.vmem %s1, 256
      %v2403 = vld [vmem:[%s2402] sm:$0xf]
      %v2404 = vld [vmem:[%s2402 + $0x4] sm:$0xf]
      %v2405 = vld [vmem:[%s2402 + $0x8] sm:$0xf]
      %v2406 = vld [vmem:[%s2402 + $0xc] sm:$0xf]
      %v2407 = vld [vmem:[%s2402 + $0x10] sm:$0xf]
      %v2408 = vld [vmem:[%s2402 + $0x14] sm:$0xf]
      %v2409 = vld [vmem:[%s2402 + $0x18] sm:$0xf]
      %v2410 = vld [vmem:[%s2402 + $0x1c] sm:$0xf]
      %v2411 = vld [vmem:[%s2402 + $0x20] sm:$0xf]
      %v2412 = vld [vmem:[%s2402 + $0x24] sm:$0xf]
      %v2413 = vld [vmem:[%s2402 + $0x28] sm:$0xf]
      %v2414 = vld [vmem:[%s2402 + $0x2c] sm:$0xf]
      %v2415 = vld [vmem:[%s2402 + $0x30] sm:$0xf]
      %v2416 = vld [vmem:[%s2402 + $0x34] sm:$0xf]
      %v2417 = vld [vmem:[%s2402 + $0x38] sm:$0xf]
      %v2418 = vld [vmem:[%s2402 + $0x3c] sm:$0xf]
      %v2468 = vunpack.c.l.b16 %v2353
      %v2469 = vunpack.c.l.b16 %v2354
      %v2470 = vunpack.c.l.b16 %v2355
      %v2471 = vunpack.c.l.b16 %v2356
      %v2472 = vunpack.c.l.b16 %v2357
      %v2473 = vunpack.c.l.b16 %v2358
      %v2474 = vunpack.c.l.b16 %v2359
      %v2475 = vunpack.c.l.b16 %v2360
      %v2476 = vunpack.c.l.b16 %v2361
      %v2477 = vunpack.c.l.b16 %v2362
      %v2478 = vunpack.c.l.b16 %v2363
      %v2479 = vunpack.c.l.b16 %v2364
      %v2480 = vunpack.c.l.b16 %v2365
      %v2481 = vunpack.c.l.b16 %v2366
      %v2482 = vunpack.c.l.b16 %v2367
      %v2483 = vunpack.c.l.b16 %v2368
      %v2484 = vunpack.c.l.b16 %v2369
      %v2485 = vunpack.c.l.b16 %v2370
      %v2486 = vunpack.c.l.b16 %v2371
      %v2487 = vunpack.c.l.b16 %v2372
      %v2488 = vunpack.c.l.b16 %v2373
      %v2489 = vunpack.c.l.b16 %v2374
      %v2490 = vunpack.c.l.b16 %v2375
      %v2491 = vunpack.c.l.b16 %v2376
      %v2492 = vunpack.c.l.b16 %v2377
      %v2493 = vunpack.c.l.b16 %v2378
      %v2494 = vunpack.c.l.b16 %v2379
      %v2495 = vunpack.c.l.b16 %v2380
      %v2496 = vunpack.c.l.b16 %v2381
      %v2497 = vunpack.c.l.b16 %v2382
      %v2498 = vunpack.c.l.b16 %v2383
      %v2499 = vunpack.c.l.b16 %v2384
      %v2500 = vunpack.c.l.b16 %v2385
      %v2501 = vunpack.c.l.b16 %v2386
      %v2502 = vunpack.c.l.b16 %v2387
      %v2503 = vunpack.c.l.b16 %v2388
      %v2504 = vunpack.c.l.b16 %v2389
      %v2505 = vunpack.c.l.b16 %v2390
      %v2506 = vunpack.c.l.b16 %v2391
      %v2507 = vunpack.c.l.b16 %v2392
      %v2508 = vunpack.c.l.b16 %v2393
      %v2509 = vunpack.c.l.b16 %v2394
      %v2510 = vunpack.c.l.b16 %v2395
      %v2511 = vunpack.c.l.b16 %v2396
      %v2512 = vunpack.c.l.b16 %v2397
      %v2513 = vunpack.c.l.b16 %v2398
      %v2514 = vunpack.c.l.b16 %v2399
      %v2515 = vunpack.c.l.b16 %v2400
      %v2516 = vunpack.c.l.b16 %v2401
      %v2517 = vpack.c.b16 %v2469, %v2468
      %v2518 = vpack.c.b16 %v2471, %v2470
      %v2519 = vpack.c.b16 %v2473, %v2472
      %v2520 = vpack.c.b16 %v2475, %v2474
      %v2521 = vpack.c.b16 %v2477, %v2476
      %v2522 = vpack.c.b16 %v2479, %v2478
      %v2523 = vpack.c.b16 %v2481, %v2480
      %v2524 = vpack.c.b16 %v2483, %v2482
      %v2525 = vpack.c.b16 %v2485, %v2484
      %v2526 = vpack.c.b16 %v2487, %v2486
      %v2527 = vpack.c.b16 %v2489, %v2488
      %v2528 = vpack.c.b16 %v2491, %v2490
      %v2529 = vpack.c.b16 %v2493, %v2492
      %v2530 = vpack.c.b16 %v2495, %v2494
      %v2531 = vpack.c.b16 %v2497, %v2496
      %v2532 = vpack.c.b16 %v2499, %v2498
      %v2533 = vpack.c.b16 %v2501, %v2500
      %v2534 = vpack.c.b16 %v2503, %v2502
      %v2535 = vpack.c.b16 %v2505, %v2504
      %v2536 = vpack.c.b16 %v2507, %v2506
      %v2537 = vpack.c.b16 %v2509, %v2508
      %v2538 = vpack.c.b16 %v2511, %v2510
      %v2539 = vpack.c.b16 %v2513, %v2512
      %v2540 = vpack.c.b16 %v2515, %v2514
      %v2541 = vpack.c.b16 %v2516, %v2516
      %v2543 = vshrl.u32 %v2517, 16
      %v2545 = vshll.u32 %v2517, 16
      %v2547 = vrot.slane %v2545, 1
      %v2548 = vor.u32 %v2543, %v2547
      %v2550 = vshll.u32 %v2518, 16
      %v2552 = vrot.slane %v2550, 1
      %v2553 = vsel %vm616, %v2548, %v2552
      %v2554 = vshrl.u32 %v2518, 16
      %v2556 = vor.u32 %v2554, %v2552
      %v2558 = vshll.u32 %v2519, 16
      %v2560 = vrot.slane %v2558, 1
      %v2561 = vsel %vm616, %v2556, %v2560
      %v2562 = vshrl.u32 %v2519, 16
      %v2564 = vor.u32 %v2562, %v2560
      %v2566 = vshll.u32 %v2520, 16
      %v2568 = vrot.slane %v2566, 1
      %v2569 = vsel %vm616, %v2564, %v2568
      %v2570 = vshrl.u32 %v2520, 16
      %v2572 = vor.u32 %v2570, %v2568
      %v2574 = vshll.u32 %v2521, 16
      %v2576 = vrot.slane %v2574, 1
      %v2577 = vsel %vm616, %v2572, %v2576
      %v2578 = vshrl.u32 %v2521, 16
      %v2580 = vor.u32 %v2578, %v2576
      %v2582 = vshll.u32 %v2522, 16
      %v2584 = vrot.slane %v2582, 1
      %v2585 = vsel %vm616, %v2580, %v2584
      %v2586 = vshrl.u32 %v2522, 16
      %v2588 = vor.u32 %v2586, %v2584
      %v2590 = vshll.u32 %v2523, 16
      %v2592 = vrot.slane %v2590, 1
      %v2593 = vsel %vm616, %v2588, %v2592
      %v2594 = vshrl.u32 %v2523, 16
      %v2596 = vor.u32 %v2594, %v2592
      %v2598 = vshll.u32 %v2524, 16
      %v2600 = vrot.slane %v2598, 1
      %v2601 = vsel %vm616, %v2596, %v2600
      %v2602 = vshrl.u32 %v2524, 16
      %v2604 = vor.u32 %v2602, %v2600
      %v2606 = vshll.u32 %v2525, 16
      %v2608 = vrot.slane %v2606, 1
      %v2609 = vsel %vm616, %v2604, %v2608
      %v2610 = vshrl.u32 %v2525, 16
      %v2612 = vor.u32 %v2610, %v2608
      %v2614 = vshll.u32 %v2526, 16
      %v2616 = vrot.slane %v2614, 1
      %v2617 = vsel %vm616, %v2612, %v2616
      %v2618 = vshrl.u32 %v2526, 16
      %v2620 = vor.u32 %v2618, %v2616
      %v2622 = vshll.u32 %v2527, 16
      %v2624 = vrot.slane %v2622, 1
      %v2625 = vsel %vm616, %v2620, %v2624
      %v2626 = vshrl.u32 %v2527, 16
      %v2628 = vor.u32 %v2626, %v2624
      %v2630 = vshll.u32 %v2528, 16
      %v2632 = vrot.slane %v2630, 1
      %v2633 = vsel %vm616, %v2628, %v2632
      %v2634 = vshrl.u32 %v2528, 16
      %v2636 = vor.u32 %v2634, %v2632
      %v2638 = vshll.u32 %v2529, 16
      %v2640 = vrot.slane %v2638, 1
      %v2641 = vsel %vm616, %v2636, %v2640
      %v2642 = vshrl.u32 %v2529, 16
      %v2644 = vor.u32 %v2642, %v2640
      %v2646 = vshll.u32 %v2530, 16
      %v2648 = vrot.slane %v2646, 1
      %v2649 = vsel %vm616, %v2644, %v2648
      %v2650 = vshrl.u32 %v2530, 16
      %v2652 = vor.u32 %v2650, %v2648
      %v2654 = vshll.u32 %v2531, 16
      %v2656 = vrot.slane %v2654, 1
      %v2657 = vsel %vm616, %v2652, %v2656
      %v2658 = vshrl.u32 %v2531, 16
      %v2660 = vor.u32 %v2658, %v2656
      %v2662 = vshll.u32 %v2532, 16
      %v2664 = vrot.slane %v2662, 1
      %v2665 = vsel %vm616, %v2660, %v2664
      %v2666 = vshrl.u32 %v2532, 16
      %v2668 = vor.u32 %v2666, %v2664
      %v2670 = vshll.u32 %v2533, 16
      %v2672 = vrot.slane %v2670, 1
      %v2673 = vsel %vm616, %v2668, %v2672
      %v2674 = vshrl.u32 %v2533, 16
      %v2676 = vor.u32 %v2674, %v2672
      %v2678 = vshll.u32 %v2534, 16
      %v2680 = vrot.slane %v2678, 1
      %v2681 = vsel %vm616, %v2676, %v2680
      %v2682 = vshrl.u32 %v2534, 16
      %v2684 = vor.u32 %v2682, %v2680
      %v2686 = vshll.u32 %v2535, 16
      %v2688 = vrot.slane %v2686, 1
      %v2689 = vsel %vm616, %v2684, %v2688
      %v2690 = vshrl.u32 %v2535, 16
      %v2692 = vor.u32 %v2690, %v2688
      %v2694 = vshll.u32 %v2536, 16
      %v2696 = vrot.slane %v2694, 1
      %v2697 = vsel %vm616, %v2692, %v2696
      %v2698 = vshrl.u32 %v2536, 16
      %v2700 = vor.u32 %v2698, %v2696
      %v2702 = vshll.u32 %v2537, 16
      %v2704 = vrot.slane %v2702, 1
      %v2705 = vsel %vm616, %v2700, %v2704
      %v2706 = vshrl.u32 %v2537, 16
      %v2708 = vor.u32 %v2706, %v2704
      %v2710 = vshll.u32 %v2538, 16
      %v2712 = vrot.slane %v2710, 1
      %v2713 = vsel %vm616, %v2708, %v2712
      %v2714 = vshrl.u32 %v2538, 16
      %v2716 = vor.u32 %v2714, %v2712
      %v2718 = vshll.u32 %v2539, 16
      %v2720 = vrot.slane %v2718, 1
      %v2721 = vsel %vm616, %v2716, %v2720
      %v2722 = vshrl.u32 %v2539, 16
      %v2724 = vor.u32 %v2722, %v2720
      %v2726 = vshll.u32 %v2540, 16
      %v2728 = vrot.slane %v2726, 1
      %v2729 = vsel %vm616, %v2724, %v2728
      %v2730 = vshrl.u32 %v2540, 16
      %v2732 = vor.u32 %v2730, %v2728
      %v2734 = vshll.u32 %v2541, 16
      %v2736 = vrot.slane %v2734, 1
      %v2737 = vsel %vm616, %v2732, %v2736
      %v2778 = vunpack.c.l.b16 %v2403
      %v2779 = vunpack.c.l.b16 %v2404
      %v2780 = vunpack.c.l.b16 %v2405
      %v2781 = vunpack.c.l.b16 %v2406
      %v2782 = vunpack.c.l.b16 %v2407
      %v2783 = vunpack.c.l.b16 %v2408
      %v2784 = vunpack.c.l.b16 %v2409
      %v2785 = vunpack.c.l.b16 %v2410
      %v2786 = vunpack.c.l.b16 %v2411
      %v2787 = vunpack.c.l.b16 %v2412
      %v2788 = vunpack.c.l.b16 %v2413
      %v2789 = vunpack.c.l.b16 %v2414
      %v2790 = vunpack.c.l.b16 %v2415
      %v2791 = vunpack.c.l.b16 %v2416
      %v2792 = vunpack.c.l.b16 %v2417
      %v2793 = vunpack.c.l.b16 %v2418
      %v2794 = vpack.c.b16 %v2779, %v2778
      %v2795 = vpack.c.b16 %v2781, %v2780
      %v2796 = vpack.c.b16 %v2783, %v2782
      %v2797 = vpack.c.b16 %v2785, %v2784
      %v2798 = vpack.c.b16 %v2787, %v2786
      %v2799 = vpack.c.b16 %v2789, %v2788
      %v2800 = vpack.c.b16 %v2791, %v2790
      %v2801 = vpack.c.b16 %v2793, %v2792
      %2810 = vmatprep.subr.bf16.mxu0 0
      %2811 = vmatpush1.bf16.msra.mxu0 %v2801
      %2812 = vmatprep.subr.bf16.mxu0 0
      %2813 = vmatpush1.bf16.msra.mxu0 %v2800
      %2814 = vmatprep.subr.bf16.mxu0 0
      %2815 = vmatpush1.bf16.msra.mxu0 %v2799
      %2816 = vmatprep.subr.bf16.mxu0 0
      %2817 = vmatpush1.bf16.msra.mxu0 %v2798
      %2818 = vmatprep.subr.bf16.mxu0 0
      %2819 = vmatpush1.bf16.msra.mxu0 %v2797
      %2820 = vmatprep.subr.bf16.mxu0 0
      %2821 = vmatpush1.bf16.msra.mxu0 %v2796
      %2822 = vmatprep.subr.bf16.mxu0 0
      %2823 = vmatpush1.bf16.msra.mxu0 %v2795
      %2824 = vmatprep.subr.bf16.mxu0 0
      %2825 = vmatpush1.bf16.msra.mxu0 %v2794
      %2826 = vmatprep.subr.bf16.mxu0 0
      %2827 = vmatpush2.bf16.msra.mxu0 0
      %2828 = vmatprep.subr.bf16.mxu0 0
      %2829 = vmatpush2.bf16.msra.mxu0 0
      %2830 = vmatprep.subr.bf16.mxu0 0
      %2831 = vmatpush2.bf16.msra.mxu0 0
      %2832 = vmatprep.subr.bf16.mxu0 0
      %2833 = vmatpush2.bf16.msra.mxu0 0
      %2834 = vmatprep.subr.bf16.mxu0 0
      %2835 = vmatpush2.bf16.msra.mxu0 0
      %2836 = vmatprep.subr.bf16.mxu0 0
      %2837 = vmatpush2.bf16.msra.mxu0 0
      %2838 = vmatprep.subr.bf16.mxu0 0
      %2839 = vmatpush2.bf16.msra.mxu0 0
      %2840 = vmatprep.subr.bf16.mxu0 0
      %2841 = vmatpush2.bf16.msra.mxu0 0
      %2842 = vmatprep.mubr.bf16.mxu0 0
      %2843 = vmatmul.mubr.bf16.gmra.mxu0 %v2553
      %v2844 = vpop.f32.mrf.mxu0
      %v2845 = vadd.f32 0.0, %v2844
      %v2846 = vpop.f32.mrf.mxu0
      %v2847 = vpop.f32.mrf.mxu0
      %v2848 = vadd.f32 0.0, %v2847
      %v2849 = vpop.f32.mrf.mxu0
      %2850 = vmatprep.mubr.bf16.mxu0 0
      %2851 = vmatmul.mubr.bf16.gmra.mxu0 %v2561
      %v2852 = vpop.f32.mrf.mxu0
      %v2853 = vadd.f32 0.0, %v2852
      %v2854 = vpop.f32.mrf.mxu0
      %v2855 = vpop.f32.mrf.mxu0
      %v2856 = vadd.f32 0.0, %v2855
      %v2857 = vpop.f32.mrf.mxu0
      %2858 = vmatprep.mubr.bf16.mxu0 0
      %2859 = vmatmul.mubr.bf16.gmra.mxu0 %v2569
      %v2860 = vpop.f32.mrf.mxu0
      %v2861 = vadd.f32 0.0, %v2860
      %v2862 = vpop.f32.mrf.mxu0
      %v2863 = vpop.f32.mrf.mxu0
      %v2864 = vadd.f32 0.0, %v2863
      %v2865 = vpop.f32.mrf.mxu0
      %2866 = vmatprep.mubr.bf16.mxu0 0
      %2867 = vmatmul.mubr.bf16.gmra.mxu0 %v2577
      %v2868 = vpop.f32.mrf.mxu0
      %v2869 = vadd.f32 0.0, %v2868
      %v2870 = vpop.f32.mrf.mxu0
      %v2871 = vpop.f32.mrf.mxu0
      %v2872 = vadd.f32 0.0, %v2871
      %v2873 = vpop.f32.mrf.mxu0
      %2874 = vmatprep.mubr.bf16.mxu0 0
      %2875 = vmatmul.mubr.bf16.gmra.mxu0 %v2585
      %v2876 = vpop.f32.mrf.mxu0
      %v2877 = vadd.f32 0.0, %v2876
      %v2878 = vpop.f32.mrf.mxu0
      %v2879 = vpop.f32.mrf.mxu0
      %v2880 = vadd.f32 0.0, %v2879
      %v2881 = vpop.f32.mrf.mxu0
      %2882 = vmatprep.mubr.bf16.mxu0 0
      %2883 = vmatmul.mubr.bf16.gmra.mxu0 %v2593
      %v2884 = vpop.f32.mrf.mxu0
      %v2885 = vadd.f32 0.0, %v2884
      %v2886 = vpop.f32.mrf.mxu0
      %v2887 = vpop.f32.mrf.mxu0
      %v2888 = vadd.f32 0.0, %v2887
      %v2889 = vpop.f32.mrf.mxu0
      %2890 = vmatprep.mubr.bf16.mxu0 0
      %2891 = vmatmul.mubr.bf16.gmra.mxu0 %v2601
      %v2892 = vpop.f32.mrf.mxu0
      %v2893 = vadd.f32 0.0, %v2892
      %v2894 = vpop.f32.mrf.mxu0
      %v2895 = vpop.f32.mrf.mxu0
      %v2896 = vadd.f32 0.0, %v2895
      %v2897 = vpop.f32.mrf.mxu0
      %2898 = vmatprep.mubr.bf16.mxu0 0
      %2899 = vmatmul.mubr.bf16.gmra.mxu0 %v2609
      %v2900 = vpop.f32.mrf.mxu0
      %v2901 = vadd.f32 0.0, %v2900
      %v2902 = vpop.f32.mrf.mxu0
      %v2903 = vpop.f32.mrf.mxu0
      %v2904 = vadd.f32 0.0, %v2903
      %v2905 = vpop.f32.mrf.mxu0
      %2906 = vmatprep.mubr.bf16.mxu0 0
      %2907 = vmatmul.mubr.bf16.gmra.mxu0 %v2617
      %v2908 = vpop.f32.mrf.mxu0
      %v2909 = vadd.f32 0.0, %v2908
      %v2910 = vpop.f32.mrf.mxu0
      %v2911 = vpop.f32.mrf.mxu0
      %v2912 = vadd.f32 0.0, %v2911
      %v2913 = vpop.f32.mrf.mxu0
      %2914 = vmatprep.mubr.bf16.mxu0 0
      %2915 = vmatmul.mubr.bf16.gmra.mxu0 %v2625
      %v2916 = vpop.f32.mrf.mxu0
      %v2917 = vadd.f32 0.0, %v2916
      %v2918 = vpop.f32.mrf.mxu0
      %v2919 = vpop.f32.mrf.mxu0
      %v2920 = vadd.f32 0.0, %v2919
      %v2921 = vpop.f32.mrf.mxu0
      %2922 = vmatprep.mubr.bf16.mxu0 0
      %2923 = vmatmul.mubr.bf16.gmra.mxu0 %v2633
      %v2924 = vpop.f32.mrf.mxu0
      %v2925 = vadd.f32 0.0, %v2924
      %v2926 = vpop.f32.mrf.mxu0
      %v2927 = vpop.f32.mrf.mxu0
      %v2928 = vadd.f32 0.0, %v2927
      %v2929 = vpop.f32.mrf.mxu0
      %2930 = vmatprep.mubr.bf16.mxu0 0
      %2931 = vmatmul.mubr.bf16.gmra.mxu0 %v2641
      %v2932 = vpop.f32.mrf.mxu0
      %v2933 = vadd.f32 0.0, %v2932
      %v2934 = vpop.f32.mrf.mxu0
      %v2935 = vpop.f32.mrf.mxu0
      %v2936 = vadd.f32 0.0, %v2935
      %v2937 = vpop.f32.mrf.mxu0
      %2938 = vmatprep.mubr.bf16.mxu0 0
      %2939 = vmatmul.mubr.bf16.gmra.mxu0 %v2649
      %v2940 = vpop.f32.mrf.mxu0
      %v2941 = vadd.f32 0.0, %v2940
      %v2942 = vpop.f32.mrf.mxu0
      %v2943 = vpop.f32.mrf.mxu0
      %v2944 = vadd.f32 0.0, %v2943
      %v2945 = vpop.f32.mrf.mxu0
      %2946 = vmatprep.mubr.bf16.mxu0 0
      %2947 = vmatmul.mubr.bf16.gmra.mxu0 %v2657
      %v2948 = vpop.f32.mrf.mxu0
      %v2949 = vadd.f32 0.0, %v2948
      %v2950 = vpop.f32.mrf.mxu0
      %v2951 = vpop.f32.mrf.mxu0
      %v2952 = vadd.f32 0.0, %v2951
      %v2953 = vpop.f32.mrf.mxu0
      %2954 = vmatprep.mubr.bf16.mxu0 0
      %2955 = vmatmul.mubr.bf16.gmra.mxu0 %v2665
      %v2956 = vpop.f32.mrf.mxu0
      %v2957 = vadd.f32 0.0, %v2956
      %v2958 = vpop.f32.mrf.mxu0
      %v2959 = vpop.f32.mrf.mxu0
      %v2960 = vadd.f32 0.0, %v2959
      %v2961 = vpop.f32.mrf.mxu0
      %2962 = vmatprep.mubr.bf16.mxu0 0
      %2963 = vmatmul.mubr.bf16.gmra.mxu0 %v2673
      %v2964 = vpop.f32.mrf.mxu0
      %v2965 = vadd.f32 0.0, %v2964
      %v2966 = vpop.f32.mrf.mxu0
      %v2967 = vpop.f32.mrf.mxu0
      %v2968 = vadd.f32 0.0, %v2967
      %v2969 = vpop.f32.mrf.mxu0
      %2970 = vmatprep.mubr.bf16.mxu0 0
      %2971 = vmatmul.mubr.bf16.gmra.mxu0 %v2681
      %v2972 = vpop.f32.mrf.mxu0
      %v2973 = vadd.f32 0.0, %v2972
      %v2974 = vpop.f32.mrf.mxu0
      %v2975 = vpop.f32.mrf.mxu0
      %v2976 = vadd.f32 0.0, %v2975
      %v2977 = vpop.f32.mrf.mxu0
      %2978 = vmatprep.mubr.bf16.mxu0 0
      %2979 = vmatmul.mubr.bf16.gmra.mxu0 %v2689
      %v2980 = vpop.f32.mrf.mxu0
      %v2981 = vadd.f32 0.0, %v2980
      %v2982 = vpop.f32.mrf.mxu0
      %v2983 = vpop.f32.mrf.mxu0
      %v2984 = vadd.f32 0.0, %v2983
      %v2985 = vpop.f32.mrf.mxu0
      %2986 = vmatprep.mubr.bf16.mxu0 0
      %2987 = vmatmul.mubr.bf16.gmra.mxu0 %v2697
      %v2988 = vpop.f32.mrf.mxu0
      %v2989 = vadd.f32 0.0, %v2988
      %v2990 = vpop.f32.mrf.mxu0
      %v2991 = vpop.f32.mrf.mxu0
      %v2992 = vadd.f32 0.0, %v2991
      %v2993 = vpop.f32.mrf.mxu0
      %2994 = vmatprep.mubr.bf16.mxu0 0
      %2995 = vmatmul.mubr.bf16.gmra.mxu0 %v2705
      %v2996 = vpop.f32.mrf.mxu0
      %v2997 = vadd.f32 0.0, %v2996
      %v2998 = vpop.f32.mrf.mxu0
      %v2999 = vpop.f32.mrf.mxu0
      %v3000 = vadd.f32 0.0, %v2999
      %v3001 = vpop.f32.mrf.mxu0
      %3002 = vmatprep.mubr.bf16.mxu0 0
      %3003 = vmatmul.mubr.bf16.gmra.mxu0 %v2713
      %v3004 = vpop.f32.mrf.mxu0
      %v3005 = vadd.f32 0.0, %v3004
      %v3006 = vpop.f32.mrf.mxu0
      %v3007 = vpop.f32.mrf.mxu0
      %v3008 = vadd.f32 0.0, %v3007
      %v3009 = vpop.f32.mrf.mxu0
      %3010 = vmatprep.mubr.bf16.mxu0 0
      %3011 = vmatmul.mubr.bf16.gmra.mxu0 %v2721
      %v3012 = vpop.f32.mrf.mxu0
      %v3013 = vadd.f32 0.0, %v3012
      %v3014 = vpop.f32.mrf.mxu0
      %v3015 = vpop.f32.mrf.mxu0
      %v3016 = vadd.f32 0.0, %v3015
      %v3017 = vpop.f32.mrf.mxu0
      %3018 = vmatprep.mubr.bf16.mxu0 0
      %3019 = vmatmul.mubr.bf16.gmra.mxu0 %v2729
      %v3020 = vpop.f32.mrf.mxu0
      %v3021 = vadd.f32 0.0, %v3020
      %v3022 = vpop.f32.mrf.mxu0
      %v3023 = vpop.f32.mrf.mxu0
      %v3024 = vadd.f32 0.0, %v3023
      %v3025 = vpop.f32.mrf.mxu0
      %3026 = vmatprep.mubr.bf16.mxu0 0
      %3027 = vmatmul.mubr.bf16.gmra.mxu0 %v2737
      %v3028 = vpop.f32.mrf.mxu0
      %v3029 = vadd.f32 0.0, %v3028
      %v3030 = vpop.f32.mrf.mxu0
      %v3031 = vpop.f32.mrf.mxu0
      %v3032 = vadd.f32 0.0, %v3031
      %v3033 = vpop.f32.mrf.mxu0
      %3034 = vdwg.mxu0
      %v3035 = vadd.f32 %v2305, %v2845
      %v3036 = vadd.f32 %v2306, %v2848
      %v3037 = vadd.f32 %v2307, %v2853
      %v3038 = vadd.f32 %v2308, %v2856
      %v3039 = vadd.f32 %v2309, %v2861
      %v3040 = vadd.f32 %v2310, %v2864
      %v3041 = vadd.f32 %v2311, %v2869
      %v3042 = vadd.f32 %v2312, %v2872
      %v3043 = vadd.f32 %v2313, %v2877
      %v3044 = vadd.f32 %v2314, %v2880
      %v3045 = vadd.f32 %v2315, %v2885
      %v3046 = vadd.f32 %v2316, %v2888
      %v3047 = vadd.f32 %v2317, %v2893
      %v3048 = vadd.f32 %v2318, %v2896
      %v3049 = vadd.f32 %v2319, %v2901
      %v3050 = vadd.f32 %v2320, %v2904
      %v3051 = vadd.f32 %v2321, %v2909
      %v3052 = vadd.f32 %v2322, %v2912
      %v3053 = vadd.f32 %v2323, %v2917
      %v3054 = vadd.f32 %v2324, %v2920
      %v3055 = vadd.f32 %v2325, %v2925
      %v3056 = vadd.f32 %v2326, %v2928
      %v3057 = vadd.f32 %v2327, %v2933
      %v3058 = vadd.f32 %v2328, %v2936
      %v3059 = vadd.f32 %v2329, %v2941
      %v3060 = vadd.f32 %v2330, %v2944
      %v3061 = vadd.f32 %v2331, %v2949
      %v3062 = vadd.f32 %v2332, %v2952
      %v3063 = vadd.f32 %v2333, %v2957
      %v3064 = vadd.f32 %v2334, %v2960
      %v3065 = vadd.f32 %v2335, %v2965
      %v3066 = vadd.f32 %v2336, %v2968
      %v3067 = vadd.f32 %v2337, %v2973
      %v3068 = vadd.f32 %v2338, %v2976
      %v3069 = vadd.f32 %v2339, %v2981
      %v3070 = vadd.f32 %v2340, %v2984
      %v3071 = vadd.f32 %v2341, %v2989
      %v3072 = vadd.f32 %v2342, %v2992
      %v3073 = vadd.f32 %v2343, %v2997
      %v3074 = vadd.f32 %v2344, %v3000
      %v3075 = vadd.f32 %v2345, %v3005
      %v3076 = vadd.f32 %v2346, %v3008
      %v3077 = vadd.f32 %v2347, %v3013
      %v3078 = vadd.f32 %v2348, %v3016
      %v3079 = vadd.f32 %v2349, %v3021
      %v3080 = vadd.f32 %v2350, %v3024
      %v3081 = vadd.f32 %v2351, %v3029
      %v3082 = vadd.f32 %v2352, %v3032
      %v3083 = vld [vmem:[%s405 + $0xc] sm:$0xe]
      %s3084 = scalar_lea.vmem %s1, 320
      %v3085 = vld [vmem:[%s3084] sm:$0xf]
      %v3086 = vld [vmem:[%s3084 + $0x4] sm:$0xf]
      %v3087 = vld [vmem:[%s3084 + $0x8] sm:$0xf]
      %v3088 = vld [vmem:[%s3084 + $0xc] sm:$0xf]
      %v3089 = vld [vmem:[%s3084 + $0x10] sm:$0xf]
      %v3090 = vld [vmem:[%s3084 + $0x14] sm:$0xf]
      %v3091 = vld [vmem:[%s3084 + $0x18] sm:$0xf]
      %v3092 = vld [vmem:[%s3084 + $0x1c] sm:$0xf]
      %v3093 = vld [vmem:[%s3084 + $0x20] sm:$0xf]
      %v3094 = vld [vmem:[%s3084 + $0x24] sm:$0xf]
      %v3095 = vld [vmem:[%s3084 + $0x28] sm:$0xf]
      %v3096 = vld [vmem:[%s3084 + $0x2c] sm:$0xf]
      %v3097 = vld [vmem:[%s3084 + $0x30] sm:$0xf]
      %v3098 = vld [vmem:[%s3084 + $0x34] sm:$0xf]
      %v3099 = vld [vmem:[%s3084 + $0x38] sm:$0xf]
      %v3100 = vld [vmem:[%s3084 + $0x3c] sm:$0xf]
      %v3102 = vunpack.c.l.b16 %v3083
      %v3103 = vpack.c.b16 %v2469, %v3102
      %v3104 = vrot.slane %v3103, 1
      %v3105 = vrot.slane %v2518, 1
      %v3106 = vsel %vm1428, %v3104, %v3105
      %v3107 = vrot.slane %v2519, 1
      %v3108 = vsel %vm1428, %v3105, %v3107
      %v3109 = vrot.slane %v2520, 1
      %v3110 = vsel %vm1428, %v3107, %v3109
      %v3111 = vrot.slane %v2521, 1
      %v3112 = vsel %vm1428, %v3109, %v3111
      %v3113 = vrot.slane %v2522, 1
      %v3114 = vsel %vm1428, %v3111, %v3113
      %v3115 = vrot.slane %v2523, 1
      %v3116 = vsel %vm1428, %v3113, %v3115
      %v3117 = vrot.slane %v2524, 1
      %v3118 = vsel %vm1428, %v3115, %v3117
      %v3119 = vrot.slane %v2525, 1
      %v3120 = vsel %vm1428, %v3117, %v3119
      %v3121 = vrot.slane %v2526, 1
      %v3122 = vsel %vm1428, %v3119, %v3121
      %v3123 = vrot.slane %v2527, 1
      %v3124 = vsel %vm1428, %v3121, %v3123
      %v3125 = vrot.slane %v2528, 1
      %v3126 = vsel %vm1428, %v3123, %v3125
      %v3127 = vrot.slane %v2529, 1
      %v3128 = vsel %vm1428, %v3125, %v3127
      %v3129 = vrot.slane %v2530, 1
      %v3130 = vsel %vm1428, %v3127, %v3129
      %v3131 = vrot.slane %v2531, 1
      %v3132 = vsel %vm1428, %v3129, %v3131
      %v3133 = vrot.slane %v2532, 1
      %v3134 = vsel %vm1428, %v3131, %v3133
      %v3135 = vrot.slane %v2533, 1
      %v3136 = vsel %vm1428, %v3133, %v3135
      %v3137 = vrot.slane %v2534, 1
      %v3138 = vsel %vm1428, %v3135, %v3137
      %v3139 = vrot.slane %v2535, 1
      %v3140 = vsel %vm1428, %v3137, %v3139
      %v3141 = vrot.slane %v2536, 1
      %v3142 = vsel %vm1428, %v3139, %v3141
      %v3143 = vrot.slane %v2537, 1
      %v3144 = vsel %vm1428, %v3141, %v3143
      %v3145 = vrot.slane %v2538, 1
      %v3146 = vsel %vm1428, %v3143, %v3145
      %v3147 = vrot.slane %v2539, 1
      %v3148 = vsel %vm1428, %v3145, %v3147
      %v3149 = vrot.slane %v2540, 1
      %v3150 = vsel %vm1428, %v3147, %v3149
      %v3151 = vrot.slane %v2541, 1
      %v3152 = vsel %vm1428, %v3149, %v3151
      %v3193 = vunpack.c.l.b16 %v3085
      %v3194 = vunpack.c.l.b16 %v3086
      %v3195 = vunpack.c.l.b16 %v3087
      %v3196 = vunpack.c.l.b16 %v3088
      %v3197 = vunpack.c.l.b16 %v3089
      %v3198 = vunpack.c.l.b16 %v3090
      %v3199 = vunpack.c.l.b16 %v3091
      %v3200 = vunpack.c.l.b16 %v3092
      %v3201 = vunpack.c.l.b16 %v3093
      %v3202 = vunpack.c.l.b16 %v3094
      %v3203 = vunpack.c.l.b16 %v3095
      %v3204 = vunpack.c.l.b16 %v3096
      %v3205 = vunpack.c.l.b16 %v3097
      %v3206 = vunpack.c.l.b16 %v3098
      %v3207 = vunpack.c.l.b16 %v3099
      %v3208 = vunpack.c.l.b16 %v3100
      %v3209 = vpack.c.b16 %v3194, %v3193
      %v3210 = vpack.c.b16 %v3196, %v3195
      %v3211 = vpack.c.b16 %v3198, %v3197
      %v3212 = vpack.c.b16 %v3200, %v3199
      %v3213 = vpack.c.b16 %v3202, %v3201
      %v3214 = vpack.c.b16 %v3204, %v3203
      %v3215 = vpack.c.b16 %v3206, %v3205
      %v3216 = vpack.c.b16 %v3208, %v3207
      %3225 = vmatprep.subr.bf16.mxu0 0
      %3226 = vmatpush1.bf16.msra.mxu0 %v3216
      %3227 = vmatprep.subr.bf16.mxu0 0
      %3228 = vmatpush1.bf16.msra.mxu0 %v3215
      %3229 = vmatprep.subr.bf16.mxu0 0
      %3230 = vmatpush1.bf16.msra.mxu0 %v3214
      %3231 = vmatprep.subr.bf16.mxu0 0
      %3232 = vmatpush1.bf16.msra.mxu0 %v3213
      %3233 = vmatprep.subr.bf16.mxu0 0
      %3234 = vmatpush1.bf16.msra.mxu0 %v3212
      %3235 = vmatprep.subr.bf16.mxu0 0
      %3236 = vmatpush1.bf16.msra.mxu0 %v3211
      %3237 = vmatprep.subr.bf16.mxu0 0
      %3238 = vmatpush1.bf16.msra.mxu0 %v3210
      %3239 = vmatprep.subr.bf16.mxu0 0
      %3240 = vmatpush1.bf16.msra.mxu0 %v3209
      %3241 = vmatprep.subr.bf16.mxu0 0
      %3242 = vmatpush2.bf16.msra.mxu0 0
      %3243 = vmatprep.subr.bf16.mxu0 0
      %3244 = vmatpush2.bf16.msra.mxu0 0
      %3245 = vmatprep.subr.bf16.mxu0 0
      %3246 = vmatpush2.bf16.msra.mxu0 0
      %3247 = vmatprep.subr.bf16.mxu0 0
      %3248 = vmatpush2.bf16.msra.mxu0 0
      %3249 = vmatprep.subr.bf16.mxu0 0
      %3250 = vmatpush2.bf16.msra.mxu0 0
      %3251 = vmatprep.subr.bf16.mxu0 0
      %3252 = vmatpush2.bf16.msra.mxu0 0
      %3253 = vmatprep.subr.bf16.mxu0 0
      %3254 = vmatpush2.bf16.msra.mxu0 0
      %3255 = vmatprep.subr.bf16.mxu0 0
      %3256 = vmatpush2.bf16.msra.mxu0 0
      %3257 = vmatprep.mubr.bf16.mxu0 0
      %3258 = vmatmul.mubr.bf16.gmra.mxu0 %v3106
      %v3259 = vpop.f32.mrf.mxu0
      %v3260 = vadd.f32 0.0, %v3259
      %v3261 = vpop.f32.mrf.mxu0
      %v3262 = vpop.f32.mrf.mxu0
      %v3263 = vadd.f32 0.0, %v3262
      %v3264 = vpop.f32.mrf.mxu0
      %3265 = vmatprep.mubr.bf16.mxu0 0
      %3266 = vmatmul.mubr.bf16.gmra.mxu0 %v3108
      %v3267 = vpop.f32.mrf.mxu0
      %v3268 = vadd.f32 0.0, %v3267
      %v3269 = vpop.f32.mrf.mxu0
      %v3270 = vpop.f32.mrf.mxu0
      %v3271 = vadd.f32 0.0, %v3270
      %v3272 = vpop.f32.mrf.mxu0
      %3273 = vmatprep.mubr.bf16.mxu0 0
      %3274 = vmatmul.mubr.bf16.gmra.mxu0 %v3110
      %v3275 = vpop.f32.mrf.mxu0
      %v3276 = vadd.f32 0.0, %v3275
      %v3277 = vpop.f32.mrf.mxu0
      %v3278 = vpop.f32.mrf.mxu0
      %v3279 = vadd.f32 0.0, %v3278
      %v3280 = vpop.f32.mrf.mxu0
      %3281 = vmatprep.mubr.bf16.mxu0 0
      %3282 = vmatmul.mubr.bf16.gmra.mxu0 %v3112
      %v3283 = vpop.f32.mrf.mxu0
      %v3284 = vadd.f32 0.0, %v3283
      %v3285 = vpop.f32.mrf.mxu0
      %v3286 = vpop.f32.mrf.mxu0
      %v3287 = vadd.f32 0.0, %v3286
      %v3288 = vpop.f32.mrf.mxu0
      %3289 = vmatprep.mubr.bf16.mxu0 0
      %3290 = vmatmul.mubr.bf16.gmra.mxu0 %v3114
      %v3291 = vpop.f32.mrf.mxu0
      %v3292 = vadd.f32 0.0, %v3291
      %v3293 = vpop.f32.mrf.mxu0
      %v3294 = vpop.f32.mrf.mxu0
      %v3295 = vadd.f32 0.0, %v3294
      %v3296 = vpop.f32.mrf.mxu0
      %3297 = vmatprep.mubr.bf16.mxu0 0
      %3298 = vmatmul.mubr.bf16.gmra.mxu0 %v3116
      %v3299 = vpop.f32.mrf.mxu0
      %v3300 = vadd.f32 0.0, %v3299
      %v3301 = vpop.f32.mrf.mxu0
      %v3302 = vpop.f32.mrf.mxu0
      %v3303 = vadd.f32 0.0, %v3302
      %v3304 = vpop.f32.mrf.mxu0
      %3305 = vmatprep.mubr.bf16.mxu0 0
      %3306 = vmatmul.mubr.bf16.gmra.mxu0 %v3118
      %v3307 = vpop.f32.mrf.mxu0
      %v3308 = vadd.f32 0.0, %v3307
      %v3309 = vpop.f32.mrf.mxu0
      %v3310 = vpop.f32.mrf.mxu0
      %v3311 = vadd.f32 0.0, %v3310
      %v3312 = vpop.f32.mrf.mxu0
      %3313 = vmatprep.mubr.bf16.mxu0 0
      %3314 = vmatmul.mubr.bf16.gmra.mxu0 %v3120
      %v3315 = vpop.f32.mrf.mxu0
      %v3316 = vadd.f32 0.0, %v3315
      %v3317 = vpop.f32.mrf.mxu0
      %v3318 = vpop.f32.mrf.mxu0
      %v3319 = vadd.f32 0.0, %v3318
      %v3320 = vpop.f32.mrf.mxu0
      %3321 = vmatprep.mubr.bf16.mxu0 0
      %3322 = vmatmul.mubr.bf16.gmra.mxu0 %v3122
      %v3323 = vpop.f32.mrf.mxu0
      %v3324 = vadd.f32 0.0, %v3323
      %v3325 = vpop.f32.mrf.mxu0
      %v3326 = vpop.f32.mrf.mxu0
      %v3327 = vadd.f32 0.0, %v3326
      %v3328 = vpop.f32.mrf.mxu0
      %3329 = vmatprep.mubr.bf16.mxu0 0
      %3330 = vmatmul.mubr.bf16.gmra.mxu0 %v3124
      %v3331 = vpop.f32.mrf.mxu0
      %v3332 = vadd.f32 0.0, %v3331
      %v3333 = vpop.f32.mrf.mxu0
      %v3334 = vpop.f32.mrf.mxu0
      %v3335 = vadd.f32 0.0, %v3334
      %v3336 = vpop.f32.mrf.mxu0
      %3337 = vmatprep.mubr.bf16.mxu0 0
      %3338 = vmatmul.mubr.bf16.gmra.mxu0 %v3126
      %v3339 = vpop.f32.mrf.mxu0
      %v3340 = vadd.f32 0.0, %v3339
      %v3341 = vpop.f32.mrf.mxu0
      %v3342 = vpop.f32.mrf.mxu0
      %v3343 = vadd.f32 0.0, %v3342
      %v3344 = vpop.f32.mrf.mxu0
      %3345 = vmatprep.mubr.bf16.mxu0 0
      %3346 = vmatmul.mubr.bf16.gmra.mxu0 %v3128
      %v3347 = vpop.f32.mrf.mxu0
      %v3348 = vadd.f32 0.0, %v3347
      %v3349 = vpop.f32.mrf.mxu0
      %v3350 = vpop.f32.mrf.mxu0
      %v3351 = vadd.f32 0.0, %v3350
      %v3352 = vpop.f32.mrf.mxu0
      %3353 = vmatprep.mubr.bf16.mxu0 0
      %3354 = vmatmul.mubr.bf16.gmra.mxu0 %v3130
      %v3355 = vpop.f32.mrf.mxu0
      %v3356 = vadd.f32 0.0, %v3355
      %v3357 = vpop.f32.mrf.mxu0
      %v3358 = vpop.f32.mrf.mxu0
      %v3359 = vadd.f32 0.0, %v3358
      %v3360 = vpop.f32.mrf.mxu0
      %3361 = vmatprep.mubr.bf16.mxu0 0
      %3362 = vmatmul.mubr.bf16.gmra.mxu0 %v3132
      %v3363 = vpop.f32.mrf.mxu0
      %v3364 = vadd.f32 0.0, %v3363
      %v3365 = vpop.f32.mrf.mxu0
      %v3366 = vpop.f32.mrf.mxu0
      %v3367 = vadd.f32 0.0, %v3366
      %v3368 = vpop.f32.mrf.mxu0
      %3369 = vmatprep.mubr.bf16.mxu0 0
      %3370 = vmatmul.mubr.bf16.gmra.mxu0 %v3134
      %v3371 = vpop.f32.mrf.mxu0
      %v3372 = vadd.f32 0.0, %v3371
      %v3373 = vpop.f32.mrf.mxu0
      %v3374 = vpop.f32.mrf.mxu0
      %v3375 = vadd.f32 0.0, %v3374
      %v3376 = vpop.f32.mrf.mxu0
      %3377 = vmatprep.mubr.bf16.mxu0 0
      %3378 = vmatmul.mubr.bf16.gmra.mxu0 %v3136
      %v3379 = vpop.f32.mrf.mxu0
      %v3380 = vadd.f32 0.0, %v3379
      %v3381 = vpop.f32.mrf.mxu0
      %v3382 = vpop.f32.mrf.mxu0
      %v3383 = vadd.f32 0.0, %v3382
      %v3384 = vpop.f32.mrf.mxu0
      %3385 = vmatprep.mubr.bf16.mxu0 0
      %3386 = vmatmul.mubr.bf16.gmra.mxu0 %v3138
      %v3387 = vpop.f32.mrf.mxu0
      %v3388 = vadd.f32 0.0, %v3387
      %v3389 = vpop.f32.mrf.mxu0
      %v3390 = vpop.f32.mrf.mxu0
      %v3391 = vadd.f32 0.0, %v3390
      %v3392 = vpop.f32.mrf.mxu0
      %3393 = vmatprep.mubr.bf16.mxu0 0
      %3394 = vmatmul.mubr.bf16.gmra.mxu0 %v3140
      %v3395 = vpop.f32.mrf.mxu0
      %v3396 = vadd.f32 0.0, %v3395
      %v3397 = vpop.f32.mrf.mxu0
      %v3398 = vpop.f32.mrf.mxu0
      %v3399 = vadd.f32 0.0, %v3398
      %v3400 = vpop.f32.mrf.mxu0
      %3401 = vmatprep.mubr.bf16.mxu0 0
      %3402 = vmatmul.mubr.bf16.gmra.mxu0 %v3142
      %v3403 = vpop.f32.mrf.mxu0
      %v3404 = vadd.f32 0.0, %v3403
      %v3405 = vpop.f32.mrf.mxu0
      %v3406 = vpop.f32.mrf.mxu0
      %v3407 = vadd.f32 0.0, %v3406
      %v3408 = vpop.f32.mrf.mxu0
      %3409 = vmatprep.mubr.bf16.mxu0 0
      %3410 = vmatmul.mubr.bf16.gmra.mxu0 %v3144
      %v3411 = vpop.f32.mrf.mxu0
      %v3412 = vadd.f32 0.0, %v3411
      %v3413 = vpop.f32.mrf.mxu0
      %v3414 = vpop.f32.mrf.mxu0
      %v3415 = vadd.f32 0.0, %v3414
      %v3416 = vpop.f32.mrf.mxu0
      %3417 = vmatprep.mubr.bf16.mxu0 0
      %3418 = vmatmul.mubr.bf16.gmra.mxu0 %v3146
      %v3419 = vpop.f32.mrf.mxu0
      %v3420 = vadd.f32 0.0, %v3419
      %v3421 = vpop.f32.mrf.mxu0
      %v3422 = vpop.f32.mrf.mxu0
      %v3423 = vadd.f32 0.0, %v3422
      %v3424 = vpop.f32.mrf.mxu0
      %3425 = vmatprep.mubr.bf16.mxu0 0
      %3426 = vmatmul.mubr.bf16.gmra.mxu0 %v3148
      %v3427 = vpop.f32.mrf.mxu0
      %v3428 = vadd.f32 0.0, %v3427
      %v3429 = vpop.f32.mrf.mxu0
      %v3430 = vpop.f32.mrf.mxu0
      %v3431 = vadd.f32 0.0, %v3430
      %v3432 = vpop.f32.mrf.mxu0
      %3433 = vmatprep.mubr.bf16.mxu0 0
      %3434 = vmatmul.mubr.bf16.gmra.mxu0 %v3150
      %v3435 = vpop.f32.mrf.mxu0
      %v3436 = vadd.f32 0.0, %v3435
      %v3437 = vpop.f32.mrf.mxu0
      %v3438 = vpop.f32.mrf.mxu0
      %v3439 = vadd.f32 0.0, %v3438
      %v3440 = vpop.f32.mrf.mxu0
      %3441 = vmatprep.mubr.bf16.mxu0 0
      %3442 = vmatmul.mubr.bf16.gmra.mxu0 %v3152
      %v3443 = vpop.f32.mrf.mxu0
      %v3444 = vadd.f32 0.0, %v3443
      %v3445 = vpop.f32.mrf.mxu0
      %v3446 = vpop.f32.mrf.mxu0
      %v3447 = vadd.f32 0.0, %v3446
      %v3448 = vpop.f32.mrf.mxu0
      %3449 = vdwg.mxu0
      %v3450 = vadd.f32 %v3035, %v3260
      %v3451 = vadd.f32 %v3036, %v3263
      %v3452 = vadd.f32 %v3037, %v3268
      %v3453 = vadd.f32 %v3038, %v3271
      %v3454 = vadd.f32 %v3039, %v3276
      %v3455 = vadd.f32 %v3040, %v3279
      %v3456 = vadd.f32 %v3041, %v3284
      %v3457 = vadd.f32 %v3042, %v3287
      %v3458 = vadd.f32 %v3043, %v3292
      %v3459 = vadd.f32 %v3044, %v3295
      %v3460 = vadd.f32 %v3045, %v3300
      %v3461 = vadd.f32 %v3046, %v3303
      %v3462 = vadd.f32 %v3047, %v3308
      %v3463 = vadd.f32 %v3048, %v3311
      %v3464 = vadd.f32 %v3049, %v3316
      %v3465 = vadd.f32 %v3050, %v3319
      %v3466 = vadd.f32 %v3051, %v3324
      %v3467 = vadd.f32 %v3052, %v3327
      %v3468 = vadd.f32 %v3053, %v3332
      %v3469 = vadd.f32 %v3054, %v3335
      %v3470 = vadd.f32 %v3055, %v3340
      %v3471 = vadd.f32 %v3056, %v3343
      %v3472 = vadd.f32 %v3057, %v3348
      %v3473 = vadd.f32 %v3058, %v3351
      %v3474 = vadd.f32 %v3059, %v3356
      %v3475 = vadd.f32 %v3060, %v3359
      %v3476 = vadd.f32 %v3061, %v3364
      %v3477 = vadd.f32 %v3062, %v3367
      %v3478 = vadd.f32 %v3063, %v3372
      %v3479 = vadd.f32 %v3064, %v3375
      %v3480 = vadd.f32 %v3065, %v3380
      %v3481 = vadd.f32 %v3066, %v3383
      %v3482 = vadd.f32 %v3067, %v3388
      %v3483 = vadd.f32 %v3068, %v3391
      %v3484 = vadd.f32 %v3069, %v3396
      %v3485 = vadd.f32 %v3070, %v3399
      %v3486 = vadd.f32 %v3071, %v3404
      %v3487 = vadd.f32 %v3072, %v3407
      %v3488 = vadd.f32 %v3073, %v3412
      %v3489 = vadd.f32 %v3074, %v3415
      %v3490 = vadd.f32 %v3075, %v3420
      %v3491 = vadd.f32 %v3076, %v3423
      %v3492 = vadd.f32 %v3077, %v3428
      %v3493 = vadd.f32 %v3078, %v3431
      %v3494 = vadd.f32 %v3079, %v3436
      %v3495 = vadd.f32 %v3080, %v3439
      %v3496 = vadd.f32 %v3081, %v3444
      %v3497 = vadd.f32 %v3082, %v3447
      %v3498 = vld [vmem:[%s405 + $0x18] sm:$0xf]
      %v3499 = vld [vmem:[%s405 + $0x1c] sm:$0xf]
      %v3500 = vld [vmem:[%s405 + $0x20] sm:$0xf]
      %v3501 = vld [vmem:[%s405 + $0x24] sm:$0xf]
      %v3502 = vld [vmem:[%s405 + $0x28] sm:$0xf]
      %v3503 = vld [vmem:[%s405 + $0x2c] sm:$0xf]
      %v3504 = vld [vmem:[%s405 + $0x30] sm:$0xf]
      %v3505 = vld [vmem:[%s405 + $0x34] sm:$0xf]
      %v3506 = vld [vmem:[%s405 + $0x38] sm:$0xf]
      %v3507 = vld [vmem:[%s405 + $0x3c] sm:$0xf]
      %v3508 = vld [vmem:[%s405 + $0x40] sm:$0xf]
      %v3509 = vld [vmem:[%s405 + $0x44] sm:$0xf]
      %v3510 = vld [vmem:[%s405 + $0x48] sm:$0xf]
      %v3511 = vld [vmem:[%s405 + $0x4c] sm:$0xf]
      %v3512 = vld [vmem:[%s405 + $0x50] sm:$0xf]
      %v3513 = vld [vmem:[%s405 + $0x54] sm:$0xf]
      %v3514 = vld [vmem:[%s405 + $0x58] sm:$0xf]
      %v3515 = vld [vmem:[%s405 + $0x5c] sm:$0xf]
      %v3516 = vld [vmem:[%s405 + $0x60] sm:$0xf]
      %v3517 = vld [vmem:[%s405 + $0x64] sm:$0xf]
      %v3518 = vld [vmem:[%s405 + $0x68] sm:$0xf]
      %v3519 = vld [vmem:[%s405 + $0x6c] sm:$0xf]
      %v3520 = vld [vmem:[%s405 + $0x70] sm:$0xf]
      %v3521 = vld [vmem:[%s405 + $0x74] sm:$0xf]
      %v3522 = vld [vmem:[%s405 + $0x78] sm:$0xf]
      %v3523 = vld [vmem:[%s405 + $0x7c] sm:$0xf]
      %v3524 = vld [vmem:[%s405 + $0x80] sm:$0xf]
      %v3525 = vld [vmem:[%s405 + $0x84] sm:$0xf]
      %v3526 = vld [vmem:[%s405 + $0x88] sm:$0xf]
      %v3527 = vld [vmem:[%s405 + $0x8c] sm:$0xf]
      %v3528 = vld [vmem:[%s405 + $0x90] sm:$0xf]
      %v3529 = vld [vmem:[%s405 + $0x94] sm:$0xf]
      %v3530 = vld [vmem:[%s405 + $0x98] sm:$0xf]
      %v3531 = vld [vmem:[%s405 + $0x9c] sm:$0xf]
      %v3532 = vld [vmem:[%s405 + $0xa0] sm:$0xf]
      %v3533 = vld [vmem:[%s405 + $0xa4] sm:$0xf]
      %v3534 = vld [vmem:[%s405 + $0xa8] sm:$0xf]
      %v3535 = vld [vmem:[%s405 + $0xac] sm:$0xf]
      %v3536 = vld [vmem:[%s405 + $0xb0] sm:$0xf]
      %v3537 = vld [vmem:[%s405 + $0xb4] sm:$0xf]
      %v3538 = vld [vmem:[%s405 + $0xb8] sm:$0xf]
      %v3539 = vld [vmem:[%s405 + $0xbc] sm:$0xf]
      %v3540 = vld [vmem:[%s405 + $0xc0] sm:$0xf]
      %v3541 = vld [vmem:[%s405 + $0xc4] sm:$0xf]
      %v3542 = vld [vmem:[%s405 + $0xc8] sm:$0xf]
      %v3543 = vld [vmem:[%s405 + $0xcc] sm:$0xf]
      %v3544 = vld [vmem:[%s405 + $0xd0] sm:$0xf]
      %v3545 = vld [vmem:[%s405 + $0xd4] sm:$0xf]
      %s3546 = scalar_lea.vmem %s1, 384
      %v3547 = vld [vmem:[%s3546] sm:$0xf]
      %v3548 = vld [vmem:[%s3546 + $0x4] sm:$0xf]
      %v3549 = vld [vmem:[%s3546 + $0x8] sm:$0xf]
      %v3550 = vld [vmem:[%s3546 + $0xc] sm:$0xf]
      %v3551 = vld [vmem:[%s3546 + $0x10] sm:$0xf]
      %v3552 = vld [vmem:[%s3546 + $0x14] sm:$0xf]
      %v3553 = vld [vmem:[%s3546 + $0x18] sm:$0xf]
      %v3554 = vld [vmem:[%s3546 + $0x1c] sm:$0xf]
      %v3555 = vld [vmem:[%s3546 + $0x20] sm:$0xf]
      %v3556 = vld [vmem:[%s3546 + $0x24] sm:$0xf]
      %v3557 = vld [vmem:[%s3546 + $0x28] sm:$0xf]
      %v3558 = vld [vmem:[%s3546 + $0x2c] sm:$0xf]
      %v3559 = vld [vmem:[%s3546 + $0x30] sm:$0xf]
      %v3560 = vld [vmem:[%s3546 + $0x34] sm:$0xf]
      %v3561 = vld [vmem:[%s3546 + $0x38] sm:$0xf]
      %v3562 = vld [vmem:[%s3546 + $0x3c] sm:$0xf]
      %v3611 = vunpack.c.l.b16 %v3498
      %v3612 = vunpack.c.l.b16 %v3499
      %v3613 = vunpack.c.l.b16 %v3500
      %v3614 = vunpack.c.l.b16 %v3501
      %v3615 = vunpack.c.l.b16 %v3502
      %v3616 = vunpack.c.l.b16 %v3503
      %v3617 = vunpack.c.l.b16 %v3504
      %v3618 = vunpack.c.l.b16 %v3505
      %v3619 = vunpack.c.l.b16 %v3506
      %v3620 = vunpack.c.l.b16 %v3507
      %v3621 = vunpack.c.l.b16 %v3508
      %v3622 = vunpack.c.l.b16 %v3509
      %v3623 = vunpack.c.l.b16 %v3510
      %v3624 = vunpack.c.l.b16 %v3511
      %v3625 = vunpack.c.l.b16 %v3512
      %v3626 = vunpack.c.l.b16 %v3513
      %v3627 = vunpack.c.l.b16 %v3514
      %v3628 = vunpack.c.l.b16 %v3515
      %v3629 = vunpack.c.l.b16 %v3516
      %v3630 = vunpack.c.l.b16 %v3517
      %v3631 = vunpack.c.l.b16 %v3518
      %v3632 = vunpack.c.l.b16 %v3519
      %v3633 = vunpack.c.l.b16 %v3520
      %v3634 = vunpack.c.l.b16 %v3521
      %v3635 = vunpack.c.l.b16 %v3522
      %v3636 = vunpack.c.l.b16 %v3523
      %v3637 = vunpack.c.l.b16 %v3524
      %v3638 = vunpack.c.l.b16 %v3525
      %v3639 = vunpack.c.l.b16 %v3526
      %v3640 = vunpack.c.l.b16 %v3527
      %v3641 = vunpack.c.l.b16 %v3528
      %v3642 = vunpack.c.l.b16 %v3529
      %v3643 = vunpack.c.l.b16 %v3530
      %v3644 = vunpack.c.l.b16 %v3531
      %v3645 = vunpack.c.l.b16 %v3532
      %v3646 = vunpack.c.l.b16 %v3533
      %v3647 = vunpack.c.l.b16 %v3534
      %v3648 = vunpack.c.l.b16 %v3535
      %v3649 = vunpack.c.l.b16 %v3536
      %v3650 = vunpack.c.l.b16 %v3537
      %v3651 = vunpack.c.l.b16 %v3538
      %v3652 = vunpack.c.l.b16 %v3539
      %v3653 = vunpack.c.l.b16 %v3540
      %v3654 = vunpack.c.l.b16 %v3541
      %v3655 = vunpack.c.l.b16 %v3542
      %v3656 = vunpack.c.l.b16 %v3543
      %v3657 = vunpack.c.l.b16 %v3544
      %v3658 = vunpack.c.l.b16 %v3545
      %v3659 = vpack.c.b16 %v3612, %v3611
      %v3660 = vpack.c.b16 %v3614, %v3613
      %v3661 = vpack.c.b16 %v3616, %v3615
      %v3662 = vpack.c.b16 %v3618, %v3617
      %v3663 = vpack.c.b16 %v3620, %v3619
      %v3664 = vpack.c.b16 %v3622, %v3621
      %v3665 = vpack.c.b16 %v3624, %v3623
      %v3666 = vpack.c.b16 %v3626, %v3625
      %v3667 = vpack.c.b16 %v3628, %v3627
      %v3668 = vpack.c.b16 %v3630, %v3629
      %v3669 = vpack.c.b16 %v3632, %v3631
      %v3670 = vpack.c.b16 %v3634, %v3633
      %v3671 = vpack.c.b16 %v3636, %v3635
      %v3672 = vpack.c.b16 %v3638, %v3637
      %v3673 = vpack.c.b16 %v3640, %v3639
      %v3674 = vpack.c.b16 %v3642, %v3641
      %v3675 = vpack.c.b16 %v3644, %v3643
      %v3676 = vpack.c.b16 %v3646, %v3645
      %v3677 = vpack.c.b16 %v3648, %v3647
      %v3678 = vpack.c.b16 %v3650, %v3649
      %v3679 = vpack.c.b16 %v3652, %v3651
      %v3680 = vpack.c.b16 %v3654, %v3653
      %v3681 = vpack.c.b16 %v3656, %v3655
      %v3682 = vpack.c.b16 %v3658, %v3657
      %v3723 = vunpack.c.l.b16 %v3547
      %v3724 = vunpack.c.l.b16 %v3548
      %v3725 = vunpack.c.l.b16 %v3549
      %v3726 = vunpack.c.l.b16 %v3550
      %v3727 = vunpack.c.l.b16 %v3551
      %v3728 = vunpack.c.l.b16 %v3552
      %v3729 = vunpack.c.l.b16 %v3553
      %v3730 = vunpack.c.l.b16 %v3554
      %v3731 = vunpack.c.l.b16 %v3555
      %v3732 = vunpack.c.l.b16 %v3556
      %v3733 = vunpack.c.l.b16 %v3557
      %v3734 = vunpack.c.l.b16 %v3558
      %v3735 = vunpack.c.l.b16 %v3559
      %v3736 = vunpack.c.l.b16 %v3560
      %v3737 = vunpack.c.l.b16 %v3561
      %v3738 = vunpack.c.l.b16 %v3562
      %v3739 = vpack.c.b16 %v3724, %v3723
      %v3740 = vpack.c.b16 %v3726, %v3725
      %v3741 = vpack.c.b16 %v3728, %v3727
      %v3742 = vpack.c.b16 %v3730, %v3729
      %v3743 = vpack.c.b16 %v3732, %v3731
      %v3744 = vpack.c.b16 %v3734, %v3733
      %v3745 = vpack.c.b16 %v3736, %v3735
      %v3746 = vpack.c.b16 %v3738, %v3737
      %3755 = vmatprep.subr.bf16.mxu0 0
      %3756 = vmatpush1.bf16.msra.mxu0 %v3746
      %3757 = vmatprep.subr.bf16.mxu0 0
      %3758 = vmatpush1.bf16.msra.mxu0 %v3745
      %3759 = vmatprep.subr.bf16.mxu0 0
      %3760 = vmatpush1.bf16.msra.mxu0 %v3744
      %3761 = vmatprep.subr.bf16.mxu0 0
      %3762 = vmatpush1.bf16.msra.mxu0 %v3743
      %3763 = vmatprep.subr.bf16.mxu0 0
      %3764 = vmatpush1.bf16.msra.mxu0 %v3742
      %3765 = vmatprep.subr.bf16.mxu0 0
      %3766 = vmatpush1.bf16.msra.mxu0 %v3741
      %3767 = vmatprep.subr.bf16.mxu0 0
      %3768 = vmatpush1.bf16.msra.mxu0 %v3740
      %3769 = vmatprep.subr.bf16.mxu0 0
      %3770 = vmatpush1.bf16.msra.mxu0 %v3739
      %3771 = vmatprep.subr.bf16.mxu0 0
      %3772 = vmatpush2.bf16.msra.mxu0 0
      %3773 = vmatprep.subr.bf16.mxu0 0
      %3774 = vmatpush2.bf16.msra.mxu0 0
      %3775 = vmatprep.subr.bf16.mxu0 0
      %3776 = vmatpush2.bf16.msra.mxu0 0
      %3777 = vmatprep.subr.bf16.mxu0 0
      %3778 = vmatpush2.bf16.msra.mxu0 0
      %3779 = vmatprep.subr.bf16.mxu0 0
      %3780 = vmatpush2.bf16.msra.mxu0 0
      %3781 = vmatprep.subr.bf16.mxu0 0
      %3782 = vmatpush2.bf16.msra.mxu0 0
      %3783 = vmatprep.subr.bf16.mxu0 0
      %3784 = vmatpush2.bf16.msra.mxu0 0
      %3785 = vmatprep.subr.bf16.mxu0 0
      %3786 = vmatpush2.bf16.msra.mxu0 0
      %3787 = vmatprep.mubr.bf16.mxu0 0
      %3788 = vmatmul.mubr.bf16.gmra.mxu0 %v3659
      %v3789 = vpop.f32.mrf.mxu0
      %v3790 = vadd.f32 0.0, %v3789
      %v3791 = vpop.f32.mrf.mxu0
      %v3792 = vpop.f32.mrf.mxu0
      %v3793 = vadd.f32 0.0, %v3792
      %v3794 = vpop.f32.mrf.mxu0
      %3795 = vmatprep.mubr.bf16.mxu0 0
      %3796 = vmatmul.mubr.bf16.gmra.mxu0 %v3660
      %v3797 = vpop.f32.mrf.mxu0
      %v3798 = vadd.f32 0.0, %v3797
      %v3799 = vpop.f32.mrf.mxu0
      %v3800 = vpop.f32.mrf.mxu0
      %v3801 = vadd.f32 0.0, %v3800
      %v3802 = vpop.f32.mrf.mxu0
      %3803 = vmatprep.mubr.bf16.mxu0 0
      %3804 = vmatmul.mubr.bf16.gmra.mxu0 %v3661
      %v3805 = vpop.f32.mrf.mxu0
      %v3806 = vadd.f32 0.0, %v3805
      %v3807 = vpop.f32.mrf.mxu0
      %v3808 = vpop.f32.mrf.mxu0
      %v3809 = vadd.f32 0.0, %v3808
      %v3810 = vpop.f32.mrf.mxu0
      %3811 = vmatprep.mubr.bf16.mxu0 0
      %3812 = vmatmul.mubr.bf16.gmra.mxu0 %v3662
      %v3813 = vpop.f32.mrf.mxu0
      %v3814 = vadd.f32 0.0, %v3813
      %v3815 = vpop.f32.mrf.mxu0
      %v3816 = vpop.f32.mrf.mxu0
      %v3817 = vadd.f32 0.0, %v3816
      %v3818 = vpop.f32.mrf.mxu0
      %3819 = vmatprep.mubr.bf16.mxu0 0
      %3820 = vmatmul.mubr.bf16.gmra.mxu0 %v3663
      %v3821 = vpop.f32.mrf.mxu0
      %v3822 = vadd.f32 0.0, %v3821
      %v3823 = vpop.f32.mrf.mxu0
      %v3824 = vpop.f32.mrf.mxu0
      %v3825 = vadd.f32 0.0, %v3824
      %v3826 = vpop.f32.mrf.mxu0
      %3827 = vmatprep.mubr.bf16.mxu0 0
      %3828 = vmatmul.mubr.bf16.gmra.mxu0 %v3664
      %v3829 = vpop.f32.mrf.mxu0
      %v3830 = vadd.f32 0.0, %v3829
      %v3831 = vpop.f32.mrf.mxu0
      %v3832 = vpop.f32.mrf.mxu0
      %v3833 = vadd.f32 0.0, %v3832
      %v3834 = vpop.f32.mrf.mxu0
      %3835 = vmatprep.mubr.bf16.mxu0 0
      %3836 = vmatmul.mubr.bf16.gmra.mxu0 %v3665
      %v3837 = vpop.f32.mrf.mxu0
      %v3838 = vadd.f32 0.0, %v3837
      %v3839 = vpop.f32.mrf.mxu0
      %v3840 = vpop.f32.mrf.mxu0
      %v3841 = vadd.f32 0.0, %v3840
      %v3842 = vpop.f32.mrf.mxu0
      %3843 = vmatprep.mubr.bf16.mxu0 0
      %3844 = vmatmul.mubr.bf16.gmra.mxu0 %v3666
      %v3845 = vpop.f32.mrf.mxu0
      %v3846 = vadd.f32 0.0, %v3845
      %v3847 = vpop.f32.mrf.mxu0
      %v3848 = vpop.f32.mrf.mxu0
      %v3849 = vadd.f32 0.0, %v3848
      %v3850 = vpop.f32.mrf.mxu0
      %3851 = vmatprep.mubr.bf16.mxu0 0
      %3852 = vmatmul.mubr.bf16.gmra.mxu0 %v3667
      %v3853 = vpop.f32.mrf.mxu0
      %v3854 = vadd.f32 0.0, %v3853
      %v3855 = vpop.f32.mrf.mxu0
      %v3856 = vpop.f32.mrf.mxu0
      %v3857 = vadd.f32 0.0, %v3856
      %v3858 = vpop.f32.mrf.mxu0
      %3859 = vmatprep.mubr.bf16.mxu0 0
      %3860 = vmatmul.mubr.bf16.gmra.mxu0 %v3668
      %v3861 = vpop.f32.mrf.mxu0
      %v3862 = vadd.f32 0.0, %v3861
      %v3863 = vpop.f32.mrf.mxu0
      %v3864 = vpop.f32.mrf.mxu0
      %v3865 = vadd.f32 0.0, %v3864
      %v3866 = vpop.f32.mrf.mxu0
      %3867 = vmatprep.mubr.bf16.mxu0 0
      %3868 = vmatmul.mubr.bf16.gmra.mxu0 %v3669
      %v3869 = vpop.f32.mrf.mxu0
      %v3870 = vadd.f32 0.0, %v3869
      %v3871 = vpop.f32.mrf.mxu0
      %v3872 = vpop.f32.mrf.mxu0
      %v3873 = vadd.f32 0.0, %v3872
      %v3874 = vpop.f32.mrf.mxu0
      %3875 = vmatprep.mubr.bf16.mxu0 0
      %3876 = vmatmul.mubr.bf16.gmra.mxu0 %v3670
      %v3877 = vpop.f32.mrf.mxu0
      %v3878 = vadd.f32 0.0, %v3877
      %v3879 = vpop.f32.mrf.mxu0
      %v3880 = vpop.f32.mrf.mxu0
      %v3881 = vadd.f32 0.0, %v3880
      %v3882 = vpop.f32.mrf.mxu0
      %3883 = vmatprep.mubr.bf16.mxu0 0
      %3884 = vmatmul.mubr.bf16.gmra.mxu0 %v3671
      %v3885 = vpop.f32.mrf.mxu0
      %v3886 = vadd.f32 0.0, %v3885
      %v3887 = vpop.f32.mrf.mxu0
      %v3888 = vpop.f32.mrf.mxu0
      %v3889 = vadd.f32 0.0, %v3888
      %v3890 = vpop.f32.mrf.mxu0
      %3891 = vmatprep.mubr.bf16.mxu0 0
      %3892 = vmatmul.mubr.bf16.gmra.mxu0 %v3672
      %v3893 = vpop.f32.mrf.mxu0
      %v3894 = vadd.f32 0.0, %v3893
      %v3895 = vpop.f32.mrf.mxu0
      %v3896 = vpop.f32.mrf.mxu0
      %v3897 = vadd.f32 0.0, %v3896
      %v3898 = vpop.f32.mrf.mxu0
      %3899 = vmatprep.mubr.bf16.mxu0 0
      %3900 = vmatmul.mubr.bf16.gmra.mxu0 %v3673
      %v3901 = vpop.f32.mrf.mxu0
      %v3902 = vadd.f32 0.0, %v3901
      %v3903 = vpop.f32.mrf.mxu0
      %v3904 = vpop.f32.mrf.mxu0
      %v3905 = vadd.f32 0.0, %v3904
      %v3906 = vpop.f32.mrf.mxu0
      %3907 = vmatprep.mubr.bf16.mxu0 0
      %3908 = vmatmul.mubr.bf16.gmra.mxu0 %v3674
      %v3909 = vpop.f32.mrf.mxu0
      %v3910 = vadd.f32 0.0, %v3909
      %v3911 = vpop.f32.mrf.mxu0
      %v3912 = vpop.f32.mrf.mxu0
      %v3913 = vadd.f32 0.0, %v3912
      %v3914 = vpop.f32.mrf.mxu0
      %3915 = vmatprep.mubr.bf16.mxu0 0
      %3916 = vmatmul.mubr.bf16.gmra.mxu0 %v3675
      %v3917 = vpop.f32.mrf.mxu0
      %v3918 = vadd.f32 0.0, %v3917
      %v3919 = vpop.f32.mrf.mxu0
      %v3920 = vpop.f32.mrf.mxu0
      %v3921 = vadd.f32 0.0, %v3920
      %v3922 = vpop.f32.mrf.mxu0
      %3923 = vmatprep.mubr.bf16.mxu0 0
      %3924 = vmatmul.mubr.bf16.gmra.mxu0 %v3676
      %v3925 = vpop.f32.mrf.mxu0
      %v3926 = vadd.f32 0.0, %v3925
      %v3927 = vpop.f32.mrf.mxu0
      %v3928 = vpop.f32.mrf.mxu0
      %v3929 = vadd.f32 0.0, %v3928
      %v3930 = vpop.f32.mrf.mxu0
      %3931 = vmatprep.mubr.bf16.mxu0 0
      %3932 = vmatmul.mubr.bf16.gmra.mxu0 %v3677
      %v3933 = vpop.f32.mrf.mxu0
      %v3934 = vadd.f32 0.0, %v3933
      %v3935 = vpop.f32.mrf.mxu0
      %v3936 = vpop.f32.mrf.mxu0
      %v3937 = vadd.f32 0.0, %v3936
      %v3938 = vpop.f32.mrf.mxu0
      %3939 = vmatprep.mubr.bf16.mxu0 0
      %3940 = vmatmul.mubr.bf16.gmra.mxu0 %v3678
      %v3941 = vpop.f32.mrf.mxu0
      %v3942 = vadd.f32 0.0, %v3941
      %v3943 = vpop.f32.mrf.mxu0
      %v3944 = vpop.f32.mrf.mxu0
      %v3945 = vadd.f32 0.0, %v3944
      %v3946 = vpop.f32.mrf.mxu0
      %3947 = vmatprep.mubr.bf16.mxu0 0
      %3948 = vmatmul.mubr.bf16.gmra.mxu0 %v3679
      %v3949 = vpop.f32.mrf.mxu0
      %v3950 = vadd.f32 0.0, %v3949
      %v3951 = vpop.f32.mrf.mxu0
      %v3952 = vpop.f32.mrf.mxu0
      %v3953 = vadd.f32 0.0, %v3952
      %v3954 = vpop.f32.mrf.mxu0
      %3955 = vmatprep.mubr.bf16.mxu0 0
      %3956 = vmatmul.mubr.bf16.gmra.mxu0 %v3680
      %v3957 = vpop.f32.mrf.mxu0
      %v3958 = vadd.f32 0.0, %v3957
      %v3959 = vpop.f32.mrf.mxu0
      %v3960 = vpop.f32.mrf.mxu0
      %v3961 = vadd.f32 0.0, %v3960
      %v3962 = vpop.f32.mrf.mxu0
      %3963 = vmatprep.mubr.bf16.mxu0 0
      %3964 = vmatmul.mubr.bf16.gmra.mxu0 %v3681
      %v3965 = vpop.f32.mrf.mxu0
      %v3966 = vadd.f32 0.0, %v3965
      %v3967 = vpop.f32.mrf.mxu0
      %v3968 = vpop.f32.mrf.mxu0
      %v3969 = vadd.f32 0.0, %v3968
      %v3970 = vpop.f32.mrf.mxu0
      %3971 = vmatprep.mubr.bf16.mxu0 0
      %3972 = vmatmul.mubr.bf16.gmra.mxu0 %v3682
      %v3973 = vpop.f32.mrf.mxu0
      %v3974 = vadd.f32 0.0, %v3973
      %v3975 = vpop.f32.mrf.mxu0
      %v3976 = vpop.f32.mrf.mxu0
      %v3977 = vadd.f32 0.0, %v3976
      %v3978 = vpop.f32.mrf.mxu0
      %3979 = vdwg.mxu0
      %v3980 = vadd.f32 %v3450, %v3790
      %v3981 = vadd.f32 %v3451, %v3793
      %v3982 = vadd.f32 %v3452, %v3798
      %v3983 = vadd.f32 %v3453, %v3801
      %v3984 = vadd.f32 %v3454, %v3806
      %v3985 = vadd.f32 %v3455, %v3809
      %v3986 = vadd.f32 %v3456, %v3814
      %v3987 = vadd.f32 %v3457, %v3817
      %v3988 = vadd.f32 %v3458, %v3822
      %v3989 = vadd.f32 %v3459, %v3825
      %v3990 = vadd.f32 %v3460, %v3830
      %v3991 = vadd.f32 %v3461, %v3833
      %v3992 = vadd.f32 %v3462, %v3838
      %v3993 = vadd.f32 %v3463, %v3841
      %v3994 = vadd.f32 %v3464, %v3846
      %v3995 = vadd.f32 %v3465, %v3849
      %v3996 = vadd.f32 %v3466, %v3854
      %v3997 = vadd.f32 %v3467, %v3857
      %v3998 = vadd.f32 %v3468, %v3862
      %v3999 = vadd.f32 %v3469, %v3865
      %v4000 = vadd.f32 %v3470, %v3870
      %v4001 = vadd.f32 %v3471, %v3873
      %v4002 = vadd.f32 %v3472, %v3878
      %v4003 = vadd.f32 %v3473, %v3881
      %v4004 = vadd.f32 %v3474, %v3886
      %v4005 = vadd.f32 %v3475, %v3889
      %v4006 = vadd.f32 %v3476, %v3894
      %v4007 = vadd.f32 %v3477, %v3897
      %v4008 = vadd.f32 %v3478, %v3902
      %v4009 = vadd.f32 %v3479, %v3905
      %v4010 = vadd.f32 %v3480, %v3910
      %v4011 = vadd.f32 %v3481, %v3913
      %v4012 = vadd.f32 %v3482, %v3918
      %v4013 = vadd.f32 %v3483, %v3921
      %v4014 = vadd.f32 %v3484, %v3926
      %v4015 = vadd.f32 %v3485, %v3929
      %v4016 = vadd.f32 %v3486, %v3934
      %v4017 = vadd.f32 %v3487, %v3937
      %v4018 = vadd.f32 %v3488, %v3942
      %v4019 = vadd.f32 %v3489, %v3945
      %v4020 = vadd.f32 %v3490, %v3950
      %v4021 = vadd.f32 %v3491, %v3953
      %v4022 = vadd.f32 %v3492, %v3958
      %v4023 = vadd.f32 %v3493, %v3961
      %v4024 = vadd.f32 %v3494, %v3966
      %v4025 = vadd.f32 %v3495, %v3969
      %v4026 = vadd.f32 %v3496, %v3974
      %v4027 = vadd.f32 %v3497, %v3977
      %v4028 = vld [vmem:[%s405 + $0x18] sm:$0xf]
      %v4029 = vld [vmem:[%s405 + $0x1c] sm:$0xf]
      %v4030 = vld [vmem:[%s405 + $0x20] sm:$0xf]
      %v4031 = vld [vmem:[%s405 + $0x24] sm:$0xf]
      %v4032 = vld [vmem:[%s405 + $0x28] sm:$0xf]
      %v4033 = vld [vmem:[%s405 + $0x2c] sm:$0xf]
      %v4034 = vld [vmem:[%s405 + $0x30] sm:$0xf]
      %v4035 = vld [vmem:[%s405 + $0x34] sm:$0xf]
      %v4036 = vld [vmem:[%s405 + $0x38] sm:$0xf]
      %v4037 = vld [vmem:[%s405 + $0x3c] sm:$0xf]
      %v4038 = vld [vmem:[%s405 + $0x40] sm:$0xf]
      %v4039 = vld [vmem:[%s405 + $0x44] sm:$0xf]
      %v4040 = vld [vmem:[%s405 + $0x48] sm:$0xf]
      %v4041 = vld [vmem:[%s405 + $0x4c] sm:$0xf]
      %v4042 = vld [vmem:[%s405 + $0x50] sm:$0xf]
      %v4043 = vld [vmem:[%s405 + $0x54] sm:$0xf]
      %v4044 = vld [vmem:[%s405 + $0x58] sm:$0xf]
      %v4045 = vld [vmem:[%s405 + $0x5c] sm:$0xf]
      %v4046 = vld [vmem:[%s405 + $0x60] sm:$0xf]
      %v4047 = vld [vmem:[%s405 + $0x64] sm:$0xf]
      %v4048 = vld [vmem:[%s405 + $0x68] sm:$0xf]
      %v4049 = vld [vmem:[%s405 + $0x6c] sm:$0xf]
      %v4050 = vld [vmem:[%s405 + $0x70] sm:$0xf]
      %v4051 = vld [vmem:[%s405 + $0x74] sm:$0xf]
      %v4052 = vld [vmem:[%s405 + $0x78] sm:$0xf]
      %v4053 = vld [vmem:[%s405 + $0x7c] sm:$0xf]
      %v4054 = vld [vmem:[%s405 + $0x80] sm:$0xf]
      %v4055 = vld [vmem:[%s405 + $0x84] sm:$0xf]
      %v4056 = vld [vmem:[%s405 + $0x88] sm:$0xf]
      %v4057 = vld [vmem:[%s405 + $0x8c] sm:$0xf]
      %v4058 = vld [vmem:[%s405 + $0x90] sm:$0xf]
      %v4059 = vld [vmem:[%s405 + $0x94] sm:$0xf]
      %v4060 = vld [vmem:[%s405 + $0x98] sm:$0xf]
      %v4061 = vld [vmem:[%s405 + $0x9c] sm:$0xf]
      %v4062 = vld [vmem:[%s405 + $0xa0] sm:$0xf]
      %v4063 = vld [vmem:[%s405 + $0xa4] sm:$0xf]
      %v4064 = vld [vmem:[%s405 + $0xa8] sm:$0xf]
      %v4065 = vld [vmem:[%s405 + $0xac] sm:$0xf]
      %v4066 = vld [vmem:[%s405 + $0xb0] sm:$0xf]
      %v4067 = vld [vmem:[%s405 + $0xb4] sm:$0xf]
      %v4068 = vld [vmem:[%s405 + $0xb8] sm:$0xf]
      %v4069 = vld [vmem:[%s405 + $0xbc] sm:$0xf]
      %v4070 = vld [vmem:[%s405 + $0xc0] sm:$0xf]
      %v4071 = vld [vmem:[%s405 + $0xc4] sm:$0xf]
      %v4072 = vld [vmem:[%s405 + $0xc8] sm:$0xf]
      %v4073 = vld [vmem:[%s405 + $0xcc] sm:$0xf]
      %v4074 = vld [vmem:[%s405 + $0xd0] sm:$0xf]
      %v4075 = vld [vmem:[%s405 + $0xd4] sm:$0xf]
      %v4076 = vld [vmem:[%s405 + $0xd8] sm:$0x1]
      %s4077 = scalar_lea.vmem %s1, 448
      %v4078 = vld [vmem:[%s4077] sm:$0xf]
      %v4079 = vld [vmem:[%s4077 + $0x4] sm:$0xf]
      %v4080 = vld [vmem:[%s4077 + $0x8] sm:$0xf]
      %v4081 = vld [vmem:[%s4077 + $0xc] sm:$0xf]
      %v4082 = vld [vmem:[%s4077 + $0x10] sm:$0xf]
      %v4083 = vld [vmem:[%s4077 + $0x14] sm:$0xf]
      %v4084 = vld [vmem:[%s4077 + $0x18] sm:$0xf]
      %v4085 = vld [vmem:[%s4077 + $0x1c] sm:$0xf]
      %v4086 = vld [vmem:[%s4077 + $0x20] sm:$0xf]
      %v4087 = vld [vmem:[%s4077 + $0x24] sm:$0xf]
      %v4088 = vld [vmem:[%s4077 + $0x28] sm:$0xf]
      %v4089 = vld [vmem:[%s4077 + $0x2c] sm:$0xf]
      %v4090 = vld [vmem:[%s4077 + $0x30] sm:$0xf]
      %v4091 = vld [vmem:[%s4077 + $0x34] sm:$0xf]
      %v4092 = vld [vmem:[%s4077 + $0x38] sm:$0xf]
      %v4093 = vld [vmem:[%s4077 + $0x3c] sm:$0xf]
      %v4143 = vunpack.c.l.b16 %v4028
      %v4144 = vunpack.c.l.b16 %v4029
      %v4145 = vunpack.c.l.b16 %v4030
      %v4146 = vunpack.c.l.b16 %v4031
      %v4147 = vunpack.c.l.b16 %v4032
      %v4148 = vunpack.c.l.b16 %v4033
      %v4149 = vunpack.c.l.b16 %v4034
      %v4150 = vunpack.c.l.b16 %v4035
      %v4151 = vunpack.c.l.b16 %v4036
      %v4152 = vunpack.c.l.b16 %v4037
      %v4153 = vunpack.c.l.b16 %v4038
      %v4154 = vunpack.c.l.b16 %v4039
      %v4155 = vunpack.c.l.b16 %v4040
      %v4156 = vunpack.c.l.b16 %v4041
      %v4157 = vunpack.c.l.b16 %v4042
      %v4158 = vunpack.c.l.b16 %v4043
      %v4159 = vunpack.c.l.b16 %v4044
      %v4160 = vunpack.c.l.b16 %v4045
      %v4161 = vunpack.c.l.b16 %v4046
      %v4162 = vunpack.c.l.b16 %v4047
      %v4163 = vunpack.c.l.b16 %v4048
      %v4164 = vunpack.c.l.b16 %v4049
      %v4165 = vunpack.c.l.b16 %v4050
      %v4166 = vunpack.c.l.b16 %v4051
      %v4167 = vunpack.c.l.b16 %v4052
      %v4168 = vunpack.c.l.b16 %v4053
      %v4169 = vunpack.c.l.b16 %v4054
      %v4170 = vunpack.c.l.b16 %v4055
      %v4171 = vunpack.c.l.b16 %v4056
      %v4172 = vunpack.c.l.b16 %v4057
      %v4173 = vunpack.c.l.b16 %v4058
      %v4174 = vunpack.c.l.b16 %v4059
      %v4175 = vunpack.c.l.b16 %v4060
      %v4176 = vunpack.c.l.b16 %v4061
      %v4177 = vunpack.c.l.b16 %v4062
      %v4178 = vunpack.c.l.b16 %v4063
      %v4179 = vunpack.c.l.b16 %v4064
      %v4180 = vunpack.c.l.b16 %v4065
      %v4181 = vunpack.c.l.b16 %v4066
      %v4182 = vunpack.c.l.b16 %v4067
      %v4183 = vunpack.c.l.b16 %v4068
      %v4184 = vunpack.c.l.b16 %v4069
      %v4185 = vunpack.c.l.b16 %v4070
      %v4186 = vunpack.c.l.b16 %v4071
      %v4187 = vunpack.c.l.b16 %v4072
      %v4188 = vunpack.c.l.b16 %v4073
      %v4189 = vunpack.c.l.b16 %v4074
      %v4190 = vunpack.c.l.b16 %v4075
      %v4191 = vunpack.c.l.b16 %v4076
      %v4192 = vpack.c.b16 %v4144, %v4143
      %v4193 = vpack.c.b16 %v4146, %v4145
      %v4194 = vpack.c.b16 %v4148, %v4147
      %v4195 = vpack.c.b16 %v4150, %v4149
      %v4196 = vpack.c.b16 %v4152, %v4151
      %v4197 = vpack.c.b16 %v4154, %v4153
      %v4198 = vpack.c.b16 %v4156, %v4155
      %v4199 = vpack.c.b16 %v4158, %v4157
      %v4200 = vpack.c.b16 %v4160, %v4159
      %v4201 = vpack.c.b16 %v4162, %v4161
      %v4202 = vpack.c.b16 %v4164, %v4163
      %v4203 = vpack.c.b16 %v4166, %v4165
      %v4204 = vpack.c.b16 %v4168, %v4167
      %v4205 = vpack.c.b16 %v4170, %v4169
      %v4206 = vpack.c.b16 %v4172, %v4171
      %v4207 = vpack.c.b16 %v4174, %v4173
      %v4208 = vpack.c.b16 %v4176, %v4175
      %v4209 = vpack.c.b16 %v4178, %v4177
      %v4210 = vpack.c.b16 %v4180, %v4179
      %v4211 = vpack.c.b16 %v4182, %v4181
      %v4212 = vpack.c.b16 %v4184, %v4183
      %v4213 = vpack.c.b16 %v4186, %v4185
      %v4214 = vpack.c.b16 %v4188, %v4187
      %v4215 = vpack.c.b16 %v4190, %v4189
      %v4216 = vpack.c.b16 %v4191, %v4191
      %v4218 = vshrl.u32 %v4192, 16
      %v4220 = vshll.u32 %v4192, 16
      %v4222 = vrot.slane %v4220, 1
      %v4223 = vor.u32 %v4218, %v4222
      %v4225 = vshll.u32 %v4193, 16
      %v4227 = vrot.slane %v4225, 1
      %v4228 = vsel %vm616, %v4223, %v4227
      %v4229 = vshrl.u32 %v4193, 16
      %v4231 = vor.u32 %v4229, %v4227
      %v4233 = vshll.u32 %v4194, 16
      %v4235 = vrot.slane %v4233, 1
      %v4236 = vsel %vm616, %v4231, %v4235
      %v4237 = vshrl.u32 %v4194, 16
      %v4239 = vor.u32 %v4237, %v4235
      %v4241 = vshll.u32 %v4195, 16
      %v4243 = vrot.slane %v4241, 1
      %v4244 = vsel %vm616, %v4239, %v4243
      %v4245 = vshrl.u32 %v4195, 16
      %v4247 = vor.u32 %v4245, %v4243
      %v4249 = vshll.u32 %v4196, 16
      %v4251 = vrot.slane %v4249, 1
      %v4252 = vsel %vm616, %v4247, %v4251
      %v4253 = vshrl.u32 %v4196, 16
      %v4255 = vor.u32 %v4253, %v4251
      %v4257 = vshll.u32 %v4197, 16
      %v4259 = vrot.slane %v4257, 1
      %v4260 = vsel %vm616, %v4255, %v4259
      %v4261 = vshrl.u32 %v4197, 16
      %v4263 = vor.u32 %v4261, %v4259
      %v4265 = vshll.u32 %v4198, 16
      %v4267 = vrot.slane %v4265, 1
      %v4268 = vsel %vm616, %v4263, %v4267
      %v4269 = vshrl.u32 %v4198, 16
      %v4271 = vor.u32 %v4269, %v4267
      %v4273 = vshll.u32 %v4199, 16
      %v4275 = vrot.slane %v4273, 1
      %v4276 = vsel %vm616, %v4271, %v4275
      %v4277 = vshrl.u32 %v4199, 16
      %v4279 = vor.u32 %v4277, %v4275
      %v4281 = vshll.u32 %v4200, 16
      %v4283 = vrot.slane %v4281, 1
      %v4284 = vsel %vm616, %v4279, %v4283
      %v4285 = vshrl.u32 %v4200, 16
      %v4287 = vor.u32 %v4285, %v4283
      %v4289 = vshll.u32 %v4201, 16
      %v4291 = vrot.slane %v4289, 1
      %v4292 = vsel %vm616, %v4287, %v4291
      %v4293 = vshrl.u32 %v4201, 16
      %v4295 = vor.u32 %v4293, %v4291
      %v4297 = vshll.u32 %v4202, 16
      %v4299 = vrot.slane %v4297, 1
      %v4300 = vsel %vm616, %v4295, %v4299
      %v4301 = vshrl.u32 %v4202, 16
      %v4303 = vor.u32 %v4301, %v4299
      %v4305 = vshll.u32 %v4203, 16
      %v4307 = vrot.slane %v4305, 1
      %v4308 = vsel %vm616, %v4303, %v4307
      %v4309 = vshrl.u32 %v4203, 16
      %v4311 = vor.u32 %v4309, %v4307
      %v4313 = vshll.u32 %v4204, 16
      %v4315 = vrot.slane %v4313, 1
      %v4316 = vsel %vm616, %v4311, %v4315
      %v4317 = vshrl.u32 %v4204, 16
      %v4319 = vor.u32 %v4317, %v4315
      %v4321 = vshll.u32 %v4205, 16
      %v4323 = vrot.slane %v4321, 1
      %v4324 = vsel %vm616, %v4319, %v4323
      %v4325 = vshrl.u32 %v4205, 16
      %v4327 = vor.u32 %v4325, %v4323
      %v4329 = vshll.u32 %v4206, 16
      %v4331 = vrot.slane %v4329, 1
      %v4332 = vsel %vm616, %v4327, %v4331
      %v4333 = vshrl.u32 %v4206, 16
      %v4335 = vor.u32 %v4333, %v4331
      %v4337 = vshll.u32 %v4207, 16
      %v4339 = vrot.slane %v4337, 1
      %v4340 = vsel %vm616, %v4335, %v4339
      %v4341 = vshrl.u32 %v4207, 16
      %v4343 = vor.u32 %v4341, %v4339
      %v4345 = vshll.u32 %v4208, 16
      %v4347 = vrot.slane %v4345, 1
      %v4348 = vsel %vm616, %v4343, %v4347
      %v4349 = vshrl.u32 %v4208, 16
      %v4351 = vor.u32 %v4349, %v4347
      %v4353 = vshll.u32 %v4209, 16
      %v4355 = vrot.slane %v4353, 1
      %v4356 = vsel %vm616, %v4351, %v4355
      %v4357 = vshrl.u32 %v4209, 16
      %v4359 = vor.u32 %v4357, %v4355
      %v4361 = vshll.u32 %v4210, 16
      %v4363 = vrot.slane %v4361, 1
      %v4364 = vsel %vm616, %v4359, %v4363
      %v4365 = vshrl.u32 %v4210, 16
      %v4367 = vor.u32 %v4365, %v4363
      %v4369 = vshll.u32 %v4211, 16
      %v4371 = vrot.slane %v4369, 1
      %v4372 = vsel %vm616, %v4367, %v4371
      %v4373 = vshrl.u32 %v4211, 16
      %v4375 = vor.u32 %v4373, %v4371
      %v4377 = vshll.u32 %v4212, 16
      %v4379 = vrot.slane %v4377, 1
      %v4380 = vsel %vm616, %v4375, %v4379
      %v4381 = vshrl.u32 %v4212, 16
      %v4383 = vor.u32 %v4381, %v4379
      %v4385 = vshll.u32 %v4213, 16
      %v4387 = vrot.slane %v4385, 1
      %v4388 = vsel %vm616, %v4383, %v4387
      %v4389 = vshrl.u32 %v4213, 16
      %v4391 = vor.u32 %v4389, %v4387
      %v4393 = vshll.u32 %v4214, 16
      %v4395 = vrot.slane %v4393, 1
      %v4396 = vsel %vm616, %v4391, %v4395
      %v4397 = vshrl.u32 %v4214, 16
      %v4399 = vor.u32 %v4397, %v4395
      %v4401 = vshll.u32 %v4215, 16
      %v4403 = vrot.slane %v4401, 1
      %v4404 = vsel %vm616, %v4399, %v4403
      %v4405 = vshrl.u32 %v4215, 16
      %v4407 = vor.u32 %v4405, %v4403
      %v4409 = vshll.u32 %v4216, 16
      %v4411 = vrot.slane %v4409, 1
      %v4412 = vsel %vm616, %v4407, %v4411
      %v4453 = vunpack.c.l.b16 %v4078
      %v4454 = vunpack.c.l.b16 %v4079
      %v4455 = vunpack.c.l.b16 %v4080
      %v4456 = vunpack.c.l.b16 %v4081
      %v4457 = vunpack.c.l.b16 %v4082
      %v4458 = vunpack.c.l.b16 %v4083
      %v4459 = vunpack.c.l.b16 %v4084
      %v4460 = vunpack.c.l.b16 %v4085
      %v4461 = vunpack.c.l.b16 %v4086
      %v4462 = vunpack.c.l.b16 %v4087
      %v4463 = vunpack.c.l.b16 %v4088
      %v4464 = vunpack.c.l.b16 %v4089
      %v4465 = vunpack.c.l.b16 %v4090
      %v4466 = vunpack.c.l.b16 %v4091
      %v4467 = vunpack.c.l.b16 %v4092
      %v4468 = vunpack.c.l.b16 %v4093
      %v4469 = vpack.c.b16 %v4454, %v4453
      %v4470 = vpack.c.b16 %v4456, %v4455
      %v4471 = vpack.c.b16 %v4458, %v4457
      %v4472 = vpack.c.b16 %v4460, %v4459
      %v4473 = vpack.c.b16 %v4462, %v4461
      %v4474 = vpack.c.b16 %v4464, %v4463
      %v4475 = vpack.c.b16 %v4466, %v4465
      %v4476 = vpack.c.b16 %v4468, %v4467
      %4485 = vmatprep.subr.bf16.mxu0 0
      %4486 = vmatpush1.bf16.msra.mxu0 %v4476
      %4487 = vmatprep.subr.bf16.mxu0 0
      %4488 = vmatpush1.bf16.msra.mxu0 %v4475
      %4489 = vmatprep.subr.bf16.mxu0 0
      %4490 = vmatpush1.bf16.msra.mxu0 %v4474
      %4491 = vmatprep.subr.bf16.mxu0 0
      %4492 = vmatpush1.bf16.msra.mxu0 %v4473
      %4493 = vmatprep.subr.bf16.mxu0 0
      %4494 = vmatpush1.bf16.msra.mxu0 %v4472
      %4495 = vmatprep.subr.bf16.mxu0 0
      %4496 = vmatpush1.bf16.msra.mxu0 %v4471
      %4497 = vmatprep.subr.bf16.mxu0 0
      %4498 = vmatpush1.bf16.msra.mxu0 %v4470
      %4499 = vmatprep.subr.bf16.mxu0 0
      %4500 = vmatpush1.bf16.msra.mxu0 %v4469
      %4501 = vmatprep.subr.bf16.mxu0 0
      %4502 = vmatpush2.bf16.msra.mxu0 0
      %4503 = vmatprep.subr.bf16.mxu0 0
      %4504 = vmatpush2.bf16.msra.mxu0 0
      %4505 = vmatprep.subr.bf16.mxu0 0
      %4506 = vmatpush2.bf16.msra.mxu0 0
      %4507 = vmatprep.subr.bf16.mxu0 0
      %4508 = vmatpush2.bf16.msra.mxu0 0
      %4509 = vmatprep.subr.bf16.mxu0 0
      %4510 = vmatpush2.bf16.msra.mxu0 0
      %4511 = vmatprep.subr.bf16.mxu0 0
      %4512 = vmatpush2.bf16.msra.mxu0 0
      %4513 = vmatprep.subr.bf16.mxu0 0
      %4514 = vmatpush2.bf16.msra.mxu0 0
      %4515 = vmatprep.subr.bf16.mxu0 0
      %4516 = vmatpush2.bf16.msra.mxu0 0
      %4517 = vmatprep.mubr.bf16.mxu0 0
      %4518 = vmatmul.mubr.bf16.gmra.mxu0 %v4228
      %v4519 = vpop.f32.mrf.mxu0
      %v4520 = vadd.f32 0.0, %v4519
      %v4521 = vpop.f32.mrf.mxu0
      %v4522 = vpop.f32.mrf.mxu0
      %v4523 = vadd.f32 0.0, %v4522
      %v4524 = vpop.f32.mrf.mxu0
      %4525 = vmatprep.mubr.bf16.mxu0 0
      %4526 = vmatmul.mubr.bf16.gmra.mxu0 %v4236
      %v4527 = vpop.f32.mrf.mxu0
      %v4528 = vadd.f32 0.0, %v4527
      %v4529 = vpop.f32.mrf.mxu0
      %v4530 = vpop.f32.mrf.mxu0
      %v4531 = vadd.f32 0.0, %v4530
      %v4532 = vpop.f32.mrf.mxu0
      %4533 = vmatprep.mubr.bf16.mxu0 0
      %4534 = vmatmul.mubr.bf16.gmra.mxu0 %v4244
      %v4535 = vpop.f32.mrf.mxu0
      %v4536 = vadd.f32 0.0, %v4535
      %v4537 = vpop.f32.mrf.mxu0
      %v4538 = vpop.f32.mrf.mxu0
      %v4539 = vadd.f32 0.0, %v4538
      %v4540 = vpop.f32.mrf.mxu0
      %4541 = vmatprep.mubr.bf16.mxu0 0
      %4542 = vmatmul.mubr.bf16.gmra.mxu0 %v4252
      %v4543 = vpop.f32.mrf.mxu0
      %v4544 = vadd.f32 0.0, %v4543
      %v4545 = vpop.f32.mrf.mxu0
      %v4546 = vpop.f32.mrf.mxu0
      %v4547 = vadd.f32 0.0, %v4546
      %v4548 = vpop.f32.mrf.mxu0
      %4549 = vmatprep.mubr.bf16.mxu0 0
      %4550 = vmatmul.mubr.bf16.gmra.mxu0 %v4260
      %v4551 = vpop.f32.mrf.mxu0
      %v4552 = vadd.f32 0.0, %v4551
      %v4553 = vpop.f32.mrf.mxu0
      %v4554 = vpop.f32.mrf.mxu0
      %v4555 = vadd.f32 0.0, %v4554
      %v4556 = vpop.f32.mrf.mxu0
      %4557 = vmatprep.mubr.bf16.mxu0 0
      %4558 = vmatmul.mubr.bf16.gmra.mxu0 %v4268
      %v4559 = vpop.f32.mrf.mxu0
      %v4560 = vadd.f32 0.0, %v4559
      %v4561 = vpop.f32.mrf.mxu0
      %v4562 = vpop.f32.mrf.mxu0
      %v4563 = vadd.f32 0.0, %v4562
      %v4564 = vpop.f32.mrf.mxu0
      %4565 = vmatprep.mubr.bf16.mxu0 0
      %4566 = vmatmul.mubr.bf16.gmra.mxu0 %v4276
      %v4567 = vpop.f32.mrf.mxu0
      %v4568 = vadd.f32 0.0, %v4567
      %v4569 = vpop.f32.mrf.mxu0
      %v4570 = vpop.f32.mrf.mxu0
      %v4571 = vadd.f32 0.0, %v4570
      %v4572 = vpop.f32.mrf.mxu0
      %4573 = vmatprep.mubr.bf16.mxu0 0
      %4574 = vmatmul.mubr.bf16.gmra.mxu0 %v4284
      %v4575 = vpop.f32.mrf.mxu0
      %v4576 = vadd.f32 0.0, %v4575
      %v4577 = vpop.f32.mrf.mxu0
      %v4578 = vpop.f32.mrf.mxu0
      %v4579 = vadd.f32 0.0, %v4578
      %v4580 = vpop.f32.mrf.mxu0
      %4581 = vmatprep.mubr.bf16.mxu0 0
      %4582 = vmatmul.mubr.bf16.gmra.mxu0 %v4292
      %v4583 = vpop.f32.mrf.mxu0
      %v4584 = vadd.f32 0.0, %v4583
      %v4585 = vpop.f32.mrf.mxu0
      %v4586 = vpop.f32.mrf.mxu0
      %v4587 = vadd.f32 0.0, %v4586
      %v4588 = vpop.f32.mrf.mxu0
      %4589 = vmatprep.mubr.bf16.mxu0 0
      %4590 = vmatmul.mubr.bf16.gmra.mxu0 %v4300
      %v4591 = vpop.f32.mrf.mxu0
      %v4592 = vadd.f32 0.0, %v4591
      %v4593 = vpop.f32.mrf.mxu0
      %v4594 = vpop.f32.mrf.mxu0
      %v4595 = vadd.f32 0.0, %v4594
      %v4596 = vpop.f32.mrf.mxu0
      %4597 = vmatprep.mubr.bf16.mxu0 0
      %4598 = vmatmul.mubr.bf16.gmra.mxu0 %v4308
      %v4599 = vpop.f32.mrf.mxu0
      %v4600 = vadd.f32 0.0, %v4599
      %v4601 = vpop.f32.mrf.mxu0
      %v4602 = vpop.f32.mrf.mxu0
      %v4603 = vadd.f32 0.0, %v4602
      %v4604 = vpop.f32.mrf.mxu0
      %4605 = vmatprep.mubr.bf16.mxu0 0
      %4606 = vmatmul.mubr.bf16.gmra.mxu0 %v4316
      %v4607 = vpop.f32.mrf.mxu0
      %v4608 = vadd.f32 0.0, %v4607
      %v4609 = vpop.f32.mrf.mxu0
      %v4610 = vpop.f32.mrf.mxu0
      %v4611 = vadd.f32 0.0, %v4610
      %v4612 = vpop.f32.mrf.mxu0
      %4613 = vmatprep.mubr.bf16.mxu0 0
      %4614 = vmatmul.mubr.bf16.gmra.mxu0 %v4324
      %v4615 = vpop.f32.mrf.mxu0
      %v4616 = vadd.f32 0.0, %v4615
      %v4617 = vpop.f32.mrf.mxu0
      %v4618 = vpop.f32.mrf.mxu0
      %v4619 = vadd.f32 0.0, %v4618
      %v4620 = vpop.f32.mrf.mxu0
      %4621 = vmatprep.mubr.bf16.mxu0 0
      %4622 = vmatmul.mubr.bf16.gmra.mxu0 %v4332
      %v4623 = vpop.f32.mrf.mxu0
      %v4624 = vadd.f32 0.0, %v4623
      %v4625 = vpop.f32.mrf.mxu0
      %v4626 = vpop.f32.mrf.mxu0
      %v4627 = vadd.f32 0.0, %v4626
      %v4628 = vpop.f32.mrf.mxu0
      %4629 = vmatprep.mubr.bf16.mxu0 0
      %4630 = vmatmul.mubr.bf16.gmra.mxu0 %v4340
      %v4631 = vpop.f32.mrf.mxu0
      %v4632 = vadd.f32 0.0, %v4631
      %v4633 = vpop.f32.mrf.mxu0
      %v4634 = vpop.f32.mrf.mxu0
      %v4635 = vadd.f32 0.0, %v4634
      %v4636 = vpop.f32.mrf.mxu0
      %4637 = vmatprep.mubr.bf16.mxu0 0
      %4638 = vmatmul.mubr.bf16.gmra.mxu0 %v4348
      %v4639 = vpop.f32.mrf.mxu0
      %v4640 = vadd.f32 0.0, %v4639
      %v4641 = vpop.f32.mrf.mxu0
      %v4642 = vpop.f32.mrf.mxu0
      %v4643 = vadd.f32 0.0, %v4642
      %v4644 = vpop.f32.mrf.mxu0
      %4645 = vmatprep.mubr.bf16.mxu0 0
      %4646 = vmatmul.mubr.bf16.gmra.mxu0 %v4356
      %v4647 = vpop.f32.mrf.mxu0
      %v4648 = vadd.f32 0.0, %v4647
      %v4649 = vpop.f32.mrf.mxu0
      %v4650 = vpop.f32.mrf.mxu0
      %v4651 = vadd.f32 0.0, %v4650
      %v4652 = vpop.f32.mrf.mxu0
      %4653 = vmatprep.mubr.bf16.mxu0 0
      %4654 = vmatmul.mubr.bf16.gmra.mxu0 %v4364
      %v4655 = vpop.f32.mrf.mxu0
      %v4656 = vadd.f32 0.0, %v4655
      %v4657 = vpop.f32.mrf.mxu0
      %v4658 = vpop.f32.mrf.mxu0
      %v4659 = vadd.f32 0.0, %v4658
      %v4660 = vpop.f32.mrf.mxu0
      %4661 = vmatprep.mubr.bf16.mxu0 0
      %4662 = vmatmul.mubr.bf16.gmra.mxu0 %v4372
      %v4663 = vpop.f32.mrf.mxu0
      %v4664 = vadd.f32 0.0, %v4663
      %v4665 = vpop.f32.mrf.mxu0
      %v4666 = vpop.f32.mrf.mxu0
      %v4667 = vadd.f32 0.0, %v4666
      %v4668 = vpop.f32.mrf.mxu0
      %4669 = vmatprep.mubr.bf16.mxu0 0
      %4670 = vmatmul.mubr.bf16.gmra.mxu0 %v4380
      %v4671 = vpop.f32.mrf.mxu0
      %v4672 = vadd.f32 0.0, %v4671
      %v4673 = vpop.f32.mrf.mxu0
      %v4674 = vpop.f32.mrf.mxu0
      %v4675 = vadd.f32 0.0, %v4674
      %v4676 = vpop.f32.mrf.mxu0
      %4677 = vmatprep.mubr.bf16.mxu0 0
      %4678 = vmatmul.mubr.bf16.gmra.mxu0 %v4388
      %v4679 = vpop.f32.mrf.mxu0
      %v4680 = vadd.f32 0.0, %v4679
      %v4681 = vpop.f32.mrf.mxu0
      %v4682 = vpop.f32.mrf.mxu0
      %v4683 = vadd.f32 0.0, %v4682
      %v4684 = vpop.f32.mrf.mxu0
      %4685 = vmatprep.mubr.bf16.mxu0 0
      %4686 = vmatmul.mubr.bf16.gmra.mxu0 %v4396
      %v4687 = vpop.f32.mrf.mxu0
      %v4688 = vadd.f32 0.0, %v4687
      %v4689 = vpop.f32.mrf.mxu0
      %v4690 = vpop.f32.mrf.mxu0
      %v4691 = vadd.f32 0.0, %v4690
      %v4692 = vpop.f32.mrf.mxu0
      %4693 = vmatprep.mubr.bf16.mxu0 0
      %4694 = vmatmul.mubr.bf16.gmra.mxu0 %v4404
      %v4695 = vpop.f32.mrf.mxu0
      %v4696 = vadd.f32 0.0, %v4695
      %v4697 = vpop.f32.mrf.mxu0
      %v4698 = vpop.f32.mrf.mxu0
      %v4699 = vadd.f32 0.0, %v4698
      %v4700 = vpop.f32.mrf.mxu0
      %4701 = vmatprep.mubr.bf16.mxu0 0
      %4702 = vmatmul.mubr.bf16.gmra.mxu0 %v4412
      %v4703 = vpop.f32.mrf.mxu0
      %v4704 = vadd.f32 0.0, %v4703
      %v4705 = vpop.f32.mrf.mxu0
      %v4706 = vpop.f32.mrf.mxu0
      %v4707 = vadd.f32 0.0, %v4706
      %v4708 = vpop.f32.mrf.mxu0
      %4709 = vdwg.mxu0
      %v4710 = vadd.f32 %v3980, %v4520
      %v4711 = vadd.f32 %v3981, %v4523
      %v4712 = vadd.f32 %v3982, %v4528
      %v4713 = vadd.f32 %v3983, %v4531
      %v4714 = vadd.f32 %v3984, %v4536
      %v4715 = vadd.f32 %v3985, %v4539
      %v4716 = vadd.f32 %v3986, %v4544
      %v4717 = vadd.f32 %v3987, %v4547
      %v4718 = vadd.f32 %v3988, %v4552
      %v4719 = vadd.f32 %v3989, %v4555
      %v4720 = vadd.f32 %v3990, %v4560
      %v4721 = vadd.f32 %v3991, %v4563
      %v4722 = vadd.f32 %v3992, %v4568
      %v4723 = vadd.f32 %v3993, %v4571
      %v4724 = vadd.f32 %v3994, %v4576
      %v4725 = vadd.f32 %v3995, %v4579
      %v4726 = vadd.f32 %v3996, %v4584
      %v4727 = vadd.f32 %v3997, %v4587
      %v4728 = vadd.f32 %v3998, %v4592
      %v4729 = vadd.f32 %v3999, %v4595
      %v4730 = vadd.f32 %v4000, %v4600
      %v4731 = vadd.f32 %v4001, %v4603
      %v4732 = vadd.f32 %v4002, %v4608
      %v4733 = vadd.f32 %v4003, %v4611
      %v4734 = vadd.f32 %v4004, %v4616
      %v4735 = vadd.f32 %v4005, %v4619
      %v4736 = vadd.f32 %v4006, %v4624
      %v4737 = vadd.f32 %v4007, %v4627
      %v4738 = vadd.f32 %v4008, %v4632
      %v4739 = vadd.f32 %v4009, %v4635
      %v4740 = vadd.f32 %v4010, %v4640
      %v4741 = vadd.f32 %v4011, %v4643
      %v4742 = vadd.f32 %v4012, %v4648
      %v4743 = vadd.f32 %v4013, %v4651
      %v4744 = vadd.f32 %v4014, %v4656
      %v4745 = vadd.f32 %v4015, %v4659
      %v4746 = vadd.f32 %v4016, %v4664
      %v4747 = vadd.f32 %v4017, %v4667
      %v4748 = vadd.f32 %v4018, %v4672
      %v4749 = vadd.f32 %v4019, %v4675
      %v4750 = vadd.f32 %v4020, %v4680
      %v4751 = vadd.f32 %v4021, %v4683
      %v4752 = vadd.f32 %v4022, %v4688
      %v4753 = vadd.f32 %v4023, %v4691
      %v4754 = vadd.f32 %v4024, %v4696
      %v4755 = vadd.f32 %v4025, %v4699
      %v4756 = vadd.f32 %v4026, %v4704
      %v4757 = vadd.f32 %v4027, %v4707
      %v4758 = vld [vmem:[%s405 + $0x18] sm:$0xe]
      %s4759 = scalar_lea.vmem %s1, 512
      %v4760 = vld [vmem:[%s4759] sm:$0xf]
      %v4761 = vld [vmem:[%s4759 + $0x4] sm:$0xf]
      %v4762 = vld [vmem:[%s4759 + $0x8] sm:$0xf]
      %v4763 = vld [vmem:[%s4759 + $0xc] sm:$0xf]
      %v4764 = vld [vmem:[%s4759 + $0x10] sm:$0xf]
      %v4765 = vld [vmem:[%s4759 + $0x14] sm:$0xf]
      %v4766 = vld [vmem:[%s4759 + $0x18] sm:$0xf]
      %v4767 = vld [vmem:[%s4759 + $0x1c] sm:$0xf]
      %v4768 = vld [vmem:[%s4759 + $0x20] sm:$0xf]
      %v4769 = vld [vmem:[%s4759 + $0x24] sm:$0xf]
      %v4770 = vld [vmem:[%s4759 + $0x28] sm:$0xf]
      %v4771 = vld [vmem:[%s4759 + $0x2c] sm:$0xf]
      %v4772 = vld [vmem:[%s4759 + $0x30] sm:$0xf]
      %v4773 = vld [vmem:[%s4759 + $0x34] sm:$0xf]
      %v4774 = vld [vmem:[%s4759 + $0x38] sm:$0xf]
      %v4775 = vld [vmem:[%s4759 + $0x3c] sm:$0xf]
      %v4777 = vunpack.c.l.b16 %v4758
      %v4778 = vpack.c.b16 %v4144, %v4777
      %v4779 = vrot.slane %v4778, 1
      %v4780 = vrot.slane %v4193, 1
      %v4781 = vsel %vm1428, %v4779, %v4780
      %v4782 = vrot.slane %v4194, 1
      %v4783 = vsel %vm1428, %v4780, %v4782
      %v4784 = vrot.slane %v4195, 1
      %v4785 = vsel %vm1428, %v4782, %v4784
      %v4786 = vrot.slane %v4196, 1
      %v4787 = vsel %vm1428, %v4784, %v4786
      %v4788 = vrot.slane %v4197, 1
      %v4789 = vsel %vm1428, %v4786, %v4788
      %v4790 = vrot.slane %v4198, 1
      %v4791 = vsel %vm1428, %v4788, %v4790
      %v4792 = vrot.slane %v4199, 1
      %v4793 = vsel %vm1428, %v4790, %v4792
      %v4794 = vrot.slane %v4200, 1
      %v4795 = vsel %vm1428, %v4792, %v4794
      %v4796 = vrot.slane %v4201, 1
      %v4797 = vsel %vm1428, %v4794, %v4796
      %v4798 = vrot.slane %v4202, 1
      %v4799 = vsel %vm1428, %v4796, %v4798
      %v4800 = vrot.slane %v4203, 1
      %v4801 = vsel %vm1428, %v4798, %v4800
      %v4802 = vrot.slane %v4204, 1
      %v4803 = vsel %vm1428, %v4800, %v4802
      %v4804 = vrot.slane %v4205, 1
      %v4805 = vsel %vm1428, %v4802, %v4804
      %v4806 = vrot.slane %v4206, 1
      %v4807 = vsel %vm1428, %v4804, %v4806
      %v4808 = vrot.slane %v4207, 1
      %v4809 = vsel %vm1428, %v4806, %v4808
      %v4810 = vrot.slane %v4208, 1
      %v4811 = vsel %vm1428, %v4808, %v4810
      %v4812 = vrot.slane %v4209, 1
      %v4813 = vsel %vm1428, %v4810, %v4812
      %v4814 = vrot.slane %v4210, 1
      %v4815 = vsel %vm1428, %v4812, %v4814
      %v4816 = vrot.slane %v4211, 1
      %v4817 = vsel %vm1428, %v4814, %v4816
      %v4818 = vrot.slane %v4212, 1
      %v4819 = vsel %vm1428, %v4816, %v4818
      %v4820 = vrot.slane %v4213, 1
      %v4821 = vsel %vm1428, %v4818, %v4820
      %v4822 = vrot.slane %v4214, 1
      %v4823 = vsel %vm1428, %v4820, %v4822
      %v4824 = vrot.slane %v4215, 1
      %v4825 = vsel %vm1428, %v4822, %v4824
      %v4826 = vrot.slane %v4216, 1
      %v4827 = vsel %vm1428, %v4824, %v4826
      %v4868 = vunpack.c.l.b16 %v4760
      %v4869 = vunpack.c.l.b16 %v4761
      %v4870 = vunpack.c.l.b16 %v4762
      %v4871 = vunpack.c.l.b16 %v4763
      %v4872 = vunpack.c.l.b16 %v4764
      %v4873 = vunpack.c.l.b16 %v4765
      %v4874 = vunpack.c.l.b16 %v4766
      %v4875 = vunpack.c.l.b16 %v4767
      %v4876 = vunpack.c.l.b16 %v4768
      %v4877 = vunpack.c.l.b16 %v4769
      %v4878 = vunpack.c.l.b16 %v4770
      %v4879 = vunpack.c.l.b16 %v4771
      %v4880 = vunpack.c.l.b16 %v4772
      %v4881 = vunpack.c.l.b16 %v4773
      %v4882 = vunpack.c.l.b16 %v4774
      %v4883 = vunpack.c.l.b16 %v4775
      %v4884 = vpack.c.b16 %v4869, %v4868
      %v4885 = vpack.c.b16 %v4871, %v4870
      %v4886 = vpack.c.b16 %v4873, %v4872
      %v4887 = vpack.c.b16 %v4875, %v4874
      %v4888 = vpack.c.b16 %v4877, %v4876
      %v4889 = vpack.c.b16 %v4879, %v4878
      %v4890 = vpack.c.b16 %v4881, %v4880
      %v4891 = vpack.c.b16 %v4883, %v4882
      %4900 = vmatprep.subr.bf16.mxu0 0
      %4901 = vmatpush1.bf16.msra.mxu0 %v4891
      %4902 = vmatprep.subr.bf16.mxu0 0
      %4903 = vmatpush1.bf16.msra.mxu0 %v4890
      %4904 = vmatprep.subr.bf16.mxu0 0
      %4905 = vmatpush1.bf16.msra.mxu0 %v4889
      %4906 = vmatprep.subr.bf16.mxu0 0
      %4907 = vmatpush1.bf16.msra.mxu0 %v4888
      %4908 = vmatprep.subr.bf16.mxu0 0
      %4909 = vmatpush1.bf16.msra.mxu0 %v4887
      %4910 = vmatprep.subr.bf16.mxu0 0
      %4911 = vmatpush1.bf16.msra.mxu0 %v4886
      %4912 = vmatprep.subr.bf16.mxu0 0
      %4913 = vmatpush1.bf16.msra.mxu0 %v4885
      %4914 = vmatprep.subr.bf16.mxu0 0
      %4915 = vmatpush1.bf16.msra.mxu0 %v4884
      %4916 = vmatprep.subr.bf16.mxu0 0
      %4917 = vmatpush2.bf16.msra.mxu0 0
      %4918 = vmatprep.subr.bf16.mxu0 0
      %4919 = vmatpush2.bf16.msra.mxu0 0
      %4920 = vmatprep.subr.bf16.mxu0 0
      %4921 = vmatpush2.bf16.msra.mxu0 0
      %4922 = vmatprep.subr.bf16.mxu0 0
      %4923 = vmatpush2.bf16.msra.mxu0 0
      %4924 = vmatprep.subr.bf16.mxu0 0
      %4925 = vmatpush2.bf16.msra.mxu0 0
      %4926 = vmatprep.subr.bf16.mxu0 0
      %4927 = vmatpush2.bf16.msra.mxu0 0
      %4928 = vmatprep.subr.bf16.mxu0 0
      %4929 = vmatpush2.bf16.msra.mxu0 0
      %4930 = vmatprep.subr.bf16.mxu0 0
      %4931 = vmatpush2.bf16.msra.mxu0 0
      %4932 = vmatprep.mubr.bf16.mxu0 0
      %4933 = vmatmul.mubr.bf16.gmra.mxu0 %v4781
      %v4934 = vpop.f32.mrf.mxu0
      %v4935 = vadd.f32 0.0, %v4934
      %v4936 = vpop.f32.mrf.mxu0
      %v4937 = vpop.f32.mrf.mxu0
      %v4938 = vadd.f32 0.0, %v4937
      %v4939 = vpop.f32.mrf.mxu0
      %4940 = vmatprep.mubr.bf16.mxu0 0
      %4941 = vmatmul.mubr.bf16.gmra.mxu0 %v4783
      %v4942 = vpop.f32.mrf.mxu0
      %v4943 = vadd.f32 0.0, %v4942
      %v4944 = vpop.f32.mrf.mxu0
      %v4945 = vpop.f32.mrf.mxu0
      %v4946 = vadd.f32 0.0, %v4945
      %v4947 = vpop.f32.mrf.mxu0
      %4948 = vmatprep.mubr.bf16.mxu0 0
      %4949 = vmatmul.mubr.bf16.gmra.mxu0 %v4785
      %v4950 = vpop.f32.mrf.mxu0
      %v4951 = vadd.f32 0.0, %v4950
      %v4952 = vpop.f32.mrf.mxu0
      %v4953 = vpop.f32.mrf.mxu0
      %v4954 = vadd.f32 0.0, %v4953
      %v4955 = vpop.f32.mrf.mxu0
      %4956 = vmatprep.mubr.bf16.mxu0 0
      %4957 = vmatmul.mubr.bf16.gmra.mxu0 %v4787
      %v4958 = vpop.f32.mrf.mxu0
      %v4959 = vadd.f32 0.0, %v4958
      %v4960 = vpop.f32.mrf.mxu0
      %v4961 = vpop.f32.mrf.mxu0
      %v4962 = vadd.f32 0.0, %v4961
      %v4963 = vpop.f32.mrf.mxu0
      %4964 = vmatprep.mubr.bf16.mxu0 0
      %4965 = vmatmul.mubr.bf16.gmra.mxu0 %v4789
      %v4966 = vpop.f32.mrf.mxu0
      %v4967 = vadd.f32 0.0, %v4966
      %v4968 = vpop.f32.mrf.mxu0
      %v4969 = vpop.f32.mrf.mxu0
      %v4970 = vadd.f32 0.0, %v4969
      %v4971 = vpop.f32.mrf.mxu0
      %4972 = vmatprep.mubr.bf16.mxu0 0
      %4973 = vmatmul.mubr.bf16.gmra.mxu0 %v4791
      %v4974 = vpop.f32.mrf.mxu0
      %v4975 = vadd.f32 0.0, %v4974
      %v4976 = vpop.f32.mrf.mxu0
      %v4977 = vpop.f32.mrf.mxu0
      %v4978 = vadd.f32 0.0, %v4977
      %v4979 = vpop.f32.mrf.mxu0
      %4980 = vmatprep.mubr.bf16.mxu0 0
      %4981 = vmatmul.mubr.bf16.gmra.mxu0 %v4793
      %v4982 = vpop.f32.mrf.mxu0
      %v4983 = vadd.f32 0.0, %v4982
      %v4984 = vpop.f32.mrf.mxu0
      %v4985 = vpop.f32.mrf.mxu0
      %v4986 = vadd.f32 0.0, %v4985
      %v4987 = vpop.f32.mrf.mxu0
      %4988 = vmatprep.mubr.bf16.mxu0 0
      %4989 = vmatmul.mubr.bf16.gmra.mxu0 %v4795
      %v4990 = vpop.f32.mrf.mxu0
      %v4991 = vadd.f32 0.0, %v4990
      %v4992 = vpop.f32.mrf.mxu0
      %v4993 = vpop.f32.mrf.mxu0
      %v4994 = vadd.f32 0.0, %v4993
      %v4995 = vpop.f32.mrf.mxu0
      %4996 = vmatprep.mubr.bf16.mxu0 0
      %4997 = vmatmul.mubr.bf16.gmra.mxu0 %v4797
      %v4998 = vpop.f32.mrf.mxu0
      %v4999 = vadd.f32 0.0, %v4998
      %v5000 = vpop.f32.mrf.mxu0
      %v5001 = vpop.f32.mrf.mxu0
      %v5002 = vadd.f32 0.0, %v5001
      %v5003 = vpop.f32.mrf.mxu0
      %5004 = vmatprep.mubr.bf16.mxu0 0
      %5005 = vmatmul.mubr.bf16.gmra.mxu0 %v4799
      %v5006 = vpop.f32.mrf.mxu0
      %v5007 = vadd.f32 0.0, %v5006
      %v5008 = vpop.f32.mrf.mxu0
      %v5009 = vpop.f32.mrf.mxu0
      %v5010 = vadd.f32 0.0, %v5009
      %v5011 = vpop.f32.mrf.mxu0
      %5012 = vmatprep.mubr.bf16.mxu0 0
      %5013 = vmatmul.mubr.bf16.gmra.mxu0 %v4801
      %v5014 = vpop.f32.mrf.mxu0
      %v5015 = vadd.f32 0.0, %v5014
      %v5016 = vpop.f32.mrf.mxu0
      %v5017 = vpop.f32.mrf.mxu0
      %v5018 = vadd.f32 0.0, %v5017
      %v5019 = vpop.f32.mrf.mxu0
      %5020 = vmatprep.mubr.bf16.mxu0 0
      %5021 = vmatmul.mubr.bf16.gmra.mxu0 %v4803
      %v5022 = vpop.f32.mrf.mxu0
      %v5023 = vadd.f32 0.0, %v5022
      %v5024 = vpop.f32.mrf.mxu0
      %v5025 = vpop.f32.mrf.mxu0
      %v5026 = vadd.f32 0.0, %v5025
      %v5027 = vpop.f32.mrf.mxu0
      %5028 = vmatprep.mubr.bf16.mxu0 0
      %5029 = vmatmul.mubr.bf16.gmra.mxu0 %v4805
      %v5030 = vpop.f32.mrf.mxu0
      %v5031 = vadd.f32 0.0, %v5030
      %v5032 = vpop.f32.mrf.mxu0
      %v5033 = vpop.f32.mrf.mxu0
      %v5034 = vadd.f32 0.0, %v5033
      %v5035 = vpop.f32.mrf.mxu0
      %5036 = vmatprep.mubr.bf16.mxu0 0
      %5037 = vmatmul.mubr.bf16.gmra.mxu0 %v4807
      %v5038 = vpop.f32.mrf.mxu0
      %v5039 = vadd.f32 0.0, %v5038
      %v5040 = vpop.f32.mrf.mxu0
      %v5041 = vpop.f32.mrf.mxu0
      %v5042 = vadd.f32 0.0, %v5041
      %v5043 = vpop.f32.mrf.mxu0
      %5044 = vmatprep.mubr.bf16.mxu0 0
      %5045 = vmatmul.mubr.bf16.gmra.mxu0 %v4809
      %v5046 = vpop.f32.mrf.mxu0
      %v5047 = vadd.f32 0.0, %v5046
      %v5048 = vpop.f32.mrf.mxu0
      %v5049 = vpop.f32.mrf.mxu0
      %v5050 = vadd.f32 0.0, %v5049
      %v5051 = vpop.f32.mrf.mxu0
      %5052 = vmatprep.mubr.bf16.mxu0 0
      %5053 = vmatmul.mubr.bf16.gmra.mxu0 %v4811
      %v5054 = vpop.f32.mrf.mxu0
      %v5055 = vadd.f32 0.0, %v5054
      %v5056 = vpop.f32.mrf.mxu0
      %v5057 = vpop.f32.mrf.mxu0
      %v5058 = vadd.f32 0.0, %v5057
      %v5059 = vpop.f32.mrf.mxu0
      %5060 = vmatprep.mubr.bf16.mxu0 0
      %5061 = vmatmul.mubr.bf16.gmra.mxu0 %v4813
      %v5062 = vpop.f32.mrf.mxu0
      %v5063 = vadd.f32 0.0, %v5062
      %v5064 = vpop.f32.mrf.mxu0
      %v5065 = vpop.f32.mrf.mxu0
      %v5066 = vadd.f32 0.0, %v5065
      %v5067 = vpop.f32.mrf.mxu0
      %5068 = vmatprep.mubr.bf16.mxu0 0
      %5069 = vmatmul.mubr.bf16.gmra.mxu0 %v4815
      %v5070 = vpop.f32.mrf.mxu0
      %v5071 = vadd.f32 0.0, %v5070
      %v5072 = vpop.f32.mrf.mxu0
      %v5073 = vpop.f32.mrf.mxu0
      %v5074 = vadd.f32 0.0, %v5073
      %v5075 = vpop.f32.mrf.mxu0
      %5076 = vmatprep.mubr.bf16.mxu0 0
      %5077 = vmatmul.mubr.bf16.gmra.mxu0 %v4817
      %v5078 = vpop.f32.mrf.mxu0
      %v5079 = vadd.f32 0.0, %v5078
      %v5080 = vpop.f32.mrf.mxu0
      %v5081 = vpop.f32.mrf.mxu0
      %v5082 = vadd.f32 0.0, %v5081
      %v5083 = vpop.f32.mrf.mxu0
      %5084 = vmatprep.mubr.bf16.mxu0 0
      %5085 = vmatmul.mubr.bf16.gmra.mxu0 %v4819
      %v5086 = vpop.f32.mrf.mxu0
      %v5087 = vadd.f32 0.0, %v5086
      %v5088 = vpop.f32.mrf.mxu0
      %v5089 = vpop.f32.mrf.mxu0
      %v5090 = vadd.f32 0.0, %v5089
      %v5091 = vpop.f32.mrf.mxu0
      %5092 = vmatprep.mubr.bf16.mxu0 0
      %5093 = vmatmul.mubr.bf16.gmra.mxu0 %v4821
      %v5094 = vpop.f32.mrf.mxu0
      %v5095 = vadd.f32 0.0, %v5094
      %v5096 = vpop.f32.mrf.mxu0
      %v5097 = vpop.f32.mrf.mxu0
      %v5098 = vadd.f32 0.0, %v5097
      %v5099 = vpop.f32.mrf.mxu0
      %5100 = vmatprep.mubr.bf16.mxu0 0
      %5101 = vmatmul.mubr.bf16.gmra.mxu0 %v4823
      %v5102 = vpop.f32.mrf.mxu0
      %v5103 = vadd.f32 0.0, %v5102
      %v5104 = vpop.f32.mrf.mxu0
      %v5105 = vpop.f32.mrf.mxu0
      %v5106 = vadd.f32 0.0, %v5105
      %v5107 = vpop.f32.mrf.mxu0
      %5108 = vmatprep.mubr.bf16.mxu0 0
      %5109 = vmatmul.mubr.bf16.gmra.mxu0 %v4825
      %v5110 = vpop.f32.mrf.mxu0
      %v5111 = vadd.f32 0.0, %v5110
      %v5112 = vpop.f32.mrf.mxu0
      %v5113 = vpop.f32.mrf.mxu0
      %v5114 = vadd.f32 0.0, %v5113
      %v5115 = vpop.f32.mrf.mxu0
      %5116 = vmatprep.mubr.bf16.mxu0 0
      %5117 = vmatmul.mubr.bf16.gmra.mxu0 %v4827
      %v5118 = vpop.f32.mrf.mxu0
      %v5119 = vadd.f32 0.0, %v5118
      %v5120 = vpop.f32.mrf.mxu0
      %v5121 = vpop.f32.mrf.mxu0
      %v5122 = vadd.f32 0.0, %v5121
      %v5123 = vpop.f32.mrf.mxu0
      %5124 = vdwg.mxu0
      %v5125 = vadd.f32 %v4710, %v4935
      %v5126 = vadd.f32 %v4711, %v4938
      %v5127 = vadd.f32 %v4712, %v4943
      %v5128 = vadd.f32 %v4713, %v4946
      %v5129 = vadd.f32 %v4714, %v4951
      %v5130 = vadd.f32 %v4715, %v4954
      %v5131 = vadd.f32 %v4716, %v4959
      %v5132 = vadd.f32 %v4717, %v4962
      %v5133 = vadd.f32 %v4718, %v4967
      %v5134 = vadd.f32 %v4719, %v4970
      %v5135 = vadd.f32 %v4720, %v4975
      %v5136 = vadd.f32 %v4721, %v4978
      %v5137 = vadd.f32 %v4722, %v4983
      %v5138 = vadd.f32 %v4723, %v4986
      %v5139 = vadd.f32 %v4724, %v4991
      %v5140 = vadd.f32 %v4725, %v4994
      %v5141 = vadd.f32 %v4726, %v4999
      %v5142 = vadd.f32 %v4727, %v5002
      %v5143 = vadd.f32 %v4728, %v5007
      %v5144 = vadd.f32 %v4729, %v5010
      %v5145 = vadd.f32 %v4730, %v5015
      %v5146 = vadd.f32 %v4731, %v5018
      %v5147 = vadd.f32 %v4732, %v5023
      %v5148 = vadd.f32 %v4733, %v5026
      %v5149 = vadd.f32 %v4734, %v5031
      %v5150 = vadd.f32 %v4735, %v5034
      %v5151 = vadd.f32 %v4736, %v5039
      %v5152 = vadd.f32 %v4737, %v5042
      %v5153 = vadd.f32 %v4738, %v5047
      %v5154 = vadd.f32 %v4739, %v5050
      %v5155 = vadd.f32 %v4740, %v5055
      %v5156 = vadd.f32 %v4741, %v5058
      %v5157 = vadd.f32 %v4742, %v5063
      %v5158 = vadd.f32 %v4743, %v5066
      %v5159 = vadd.f32 %v4744, %v5071
      %v5160 = vadd.f32 %v4745, %v5074
      %v5161 = vadd.f32 %v4746, %v5079
      %v5162 = vadd.f32 %v4747, %v5082
      %v5163 = vadd.f32 %v4748, %v5087
      %v5164 = vadd.f32 %v4749, %v5090
      %v5165 = vadd.f32 %v4750, %v5095
      %v5166 = vadd.f32 %v4751, %v5098
      %v5167 = vadd.f32 %v4752, %v5103
      %v5168 = vadd.f32 %v4753, %v5106
      %v5169 = vadd.f32 %v4754, %v5111
      %v5170 = vadd.f32 %v4755, %v5114
      %v5171 = vadd.f32 %v4756, %v5119
      %v5172 = vadd.f32 %v4757, %v5122
      %v5173 = vld [vmem:[%s2] sm:$0x1]
      %v5175 = vlaneseq
      %v5176 = vshrl.u32 %v5175, 7
      %v5177 = vsub.s32 0, %v5176
      %v5178 = vrot.slane %v5173, %v5177
      %v5180 = vadd.f32 %v5125, %v5178
      %v5181 = vadd.f32 %v5126, %v5178
      %v5182 = vadd.f32 %v5127, %v5178
      %v5183 = vadd.f32 %v5128, %v5178
      %v5184 = vadd.f32 %v5129, %v5178
      %v5185 = vadd.f32 %v5130, %v5178
      %v5186 = vadd.f32 %v5131, %v5178
      %v5187 = vadd.f32 %v5132, %v5178
      %v5188 = vadd.f32 %v5133, %v5178
      %v5189 = vadd.f32 %v5134, %v5178
      %v5190 = vadd.f32 %v5135, %v5178
      %v5191 = vadd.f32 %v5136, %v5178
      %v5192 = vadd.f32 %v5137, %v5178
      %v5193 = vadd.f32 %v5138, %v5178
      %v5194 = vadd.f32 %v5139, %v5178
      %v5195 = vadd.f32 %v5140, %v5178
      %v5196 = vadd.f32 %v5141, %v5178
      %v5197 = vadd.f32 %v5142, %v5178
      %v5198 = vadd.f32 %v5143, %v5178
      %v5199 = vadd.f32 %v5144, %v5178
      %v5200 = vadd.f32 %v5145, %v5178
      %v5201 = vadd.f32 %v5146, %v5178
      %v5202 = vadd.f32 %v5147, %v5178
      %v5203 = vadd.f32 %v5148, %v5178
      %v5204 = vadd.f32 %v5149, %v5178
      %v5205 = vadd.f32 %v5150, %v5178
      %v5206 = vadd.f32 %v5151, %v5178
      %v5207 = vadd.f32 %v5152, %v5178
      %v5208 = vadd.f32 %v5153, %v5178
      %v5209 = vadd.f32 %v5154, %v5178
      %v5210 = vadd.f32 %v5155, %v5178
      %v5211 = vadd.f32 %v5156, %v5178
      %v5212 = vadd.f32 %v5157, %v5178
      %v5213 = vadd.f32 %v5158, %v5178
      %v5214 = vadd.f32 %v5159, %v5178
      %v5215 = vadd.f32 %v5160, %v5178
      %v5216 = vadd.f32 %v5161, %v5178
      %v5217 = vadd.f32 %v5162, %v5178
      %v5218 = vadd.f32 %v5163, %v5178
      %v5219 = vadd.f32 %v5164, %v5178
      %v5220 = vadd.f32 %v5165, %v5178
      %v5221 = vadd.f32 %v5166, %v5178
      %v5222 = vadd.f32 %v5167, %v5178
      %v5223 = vadd.f32 %v5168, %v5178
      %v5224 = vadd.f32 %v5169, %v5178
      %v5225 = vadd.f32 %v5170, %v5178
      %v5226 = vadd.f32 %v5171, %v5178
      %v5227 = vadd.f32 %v5172, %v5178
      %v5228 = vmax.f32 %v5180, 0.0
      %v5229 = vmax.f32 %v5181, 0.0
      %v5230 = vmax.f32 %v5182, 0.0
      %v5231 = vmax.f32 %v5183, 0.0
      %v5232 = vmax.f32 %v5184, 0.0
      %v5233 = vmax.f32 %v5185, 0.0
      %v5234 = vmax.f32 %v5186, 0.0
      %v5235 = vmax.f32 %v5187, 0.0
      %v5236 = vmax.f32 %v5188, 0.0
      %v5237 = vmax.f32 %v5189, 0.0
      %v5238 = vmax.f32 %v5190, 0.0
      %v5239 = vmax.f32 %v5191, 0.0
      %v5240 = vmax.f32 %v5192, 0.0
      %v5241 = vmax.f32 %v5193, 0.0
      %v5242 = vmax.f32 %v5194, 0.0
      %v5243 = vmax.f32 %v5195, 0.0
      %v5244 = vmax.f32 %v5196, 0.0
      %v5245 = vmax.f32 %v5197, 0.0
      %v5246 = vmax.f32 %v5198, 0.0
      %v5247 = vmax.f32 %v5199, 0.0
      %v5248 = vmax.f32 %v5200, 0.0
      %v5249 = vmax.f32 %v5201, 0.0
      %v5250 = vmax.f32 %v5202, 0.0
      %v5251 = vmax.f32 %v5203, 0.0
      %v5252 = vmax.f32 %v5204, 0.0
      %v5253 = vmax.f32 %v5205, 0.0
      %v5254 = vmax.f32 %v5206, 0.0
      %v5255 = vmax.f32 %v5207, 0.0
      %v5256 = vmax.f32 %v5208, 0.0
      %v5257 = vmax.f32 %v5209, 0.0
      %v5258 = vmax.f32 %v5210, 0.0
      %v5259 = vmax.f32 %v5211, 0.0
      %v5260 = vmax.f32 %v5212, 0.0
      %v5261 = vmax.f32 %v5213, 0.0
      %v5262 = vmax.f32 %v5214, 0.0
      %v5263 = vmax.f32 %v5215, 0.0
      %v5264 = vmax.f32 %v5216, 0.0
      %v5265 = vmax.f32 %v5217, 0.0
      %v5266 = vmax.f32 %v5218, 0.0
      %v5267 = vmax.f32 %v5219, 0.0
      %v5268 = vmax.f32 %v5220, 0.0
      %v5269 = vmax.f32 %v5221, 0.0
      %v5270 = vmax.f32 %v5222, 0.0
      %v5271 = vmax.f32 %v5223, 0.0
      %v5272 = vmax.f32 %v5224, 0.0
      %v5273 = vmax.f32 %v5225, 0.0
      %v5274 = vmax.f32 %v5226, 0.0
      %v5275 = vmax.f32 %v5227, 0.0
      %v5276 = vpack.c.bf16 %v5229, %v5228
      %v5277 = vpack.c.bf16 %v5231, %v5230
      %v5278 = vpack.c.bf16 %v5233, %v5232
      %v5279 = vpack.c.bf16 %v5235, %v5234
      %v5280 = vpack.c.bf16 %v5237, %v5236
      %v5281 = vpack.c.bf16 %v5239, %v5238
      %v5282 = vpack.c.bf16 %v5241, %v5240
      %v5283 = vpack.c.bf16 %v5243, %v5242
      %v5284 = vpack.c.bf16 %v5245, %v5244
      %v5285 = vpack.c.bf16 %v5247, %v5246
      %v5286 = vpack.c.bf16 %v5249, %v5248
      %v5287 = vpack.c.bf16 %v5251, %v5250
      %v5288 = vpack.c.bf16 %v5253, %v5252
      %v5289 = vpack.c.bf16 %v5255, %v5254
      %v5290 = vpack.c.bf16 %v5257, %v5256
      %v5291 = vpack.c.bf16 %v5259, %v5258
      %v5292 = vpack.c.bf16 %v5261, %v5260
      %v5293 = vpack.c.bf16 %v5263, %v5262
      %v5294 = vpack.c.bf16 %v5265, %v5264
      %v5295 = vpack.c.bf16 %v5267, %v5266
      %v5296 = vpack.c.bf16 %v5269, %v5268
      %v5297 = vpack.c.bf16 %v5271, %v5270
      %v5298 = vpack.c.bf16 %v5273, %v5272
      %v5299 = vpack.c.bf16 %v5275, %v5274
      %v5324 = vunpack.c.l.b16 %v5276
      %v5325 = vunpack.c.h.b16 %v5276
      %v5326 = vunpack.c.l.b16 %v5277
      %v5327 = vunpack.c.h.b16 %v5277
      %v5328 = vunpack.c.l.b16 %v5278
      %v5329 = vunpack.c.h.b16 %v5278
      %v5330 = vunpack.c.l.b16 %v5279
      %v5331 = vunpack.c.h.b16 %v5279
      %v5332 = vunpack.c.l.b16 %v5280
      %v5333 = vunpack.c.h.b16 %v5280
      %v5334 = vunpack.c.l.b16 %v5281
      %v5335 = vunpack.c.h.b16 %v5281
      %v5336 = vunpack.c.l.b16 %v5282
      %v5337 = vunpack.c.h.b16 %v5282
      %v5338 = vunpack.c.l.b16 %v5283
      %v5339 = vunpack.c.h.b16 %v5283
      %v5340 = vunpack.c.l.b16 %v5284
      %v5341 = vunpack.c.h.b16 %v5284
      %v5342 = vunpack.c.l.b16 %v5285
      %v5343 = vunpack.c.h.b16 %v5285
      %v5344 = vunpack.c.l.b16 %v5286
      %v5345 = vunpack.c.h.b16 %v5286
      %v5346 = vunpack.c.l.b16 %v5287
      %v5347 = vunpack.c.h.b16 %v5287
      %v5348 = vunpack.c.l.b16 %v5288
      %v5349 = vunpack.c.h.b16 %v5288
      %v5350 = vunpack.c.l.b16 %v5289
      %v5351 = vunpack.c.h.b16 %v5289
      %v5352 = vunpack.c.l.b16 %v5290
      %v5353 = vunpack.c.h.b16 %v5290
      %v5354 = vunpack.c.l.b16 %v5291
      %v5355 = vunpack.c.h.b16 %v5291
      %v5356 = vunpack.c.l.b16 %v5292
      %v5357 = vunpack.c.h.b16 %v5292
      %v5358 = vunpack.c.l.b16 %v5293
      %v5359 = vunpack.c.h.b16 %v5293
      %v5360 = vunpack.c.l.b16 %v5294
      %v5361 = vunpack.c.h.b16 %v5294
      %v5362 = vunpack.c.l.b16 %v5295
      %v5363 = vunpack.c.h.b16 %v5295
      %v5364 = vunpack.c.l.b16 %v5296
      %v5365 = vunpack.c.h.b16 %v5296
      %v5366 = vunpack.c.l.b16 %v5297
      %v5367 = vunpack.c.h.b16 %v5297
      %v5368 = vunpack.c.l.b16 %v5298
      %v5369 = vunpack.c.h.b16 %v5298
      %v5370 = vunpack.c.l.b16 %v5299
      %v5371 = vunpack.c.h.b16 %v5299
      %v5372 = vpack.c.b16 %v5324, %v5324
      %v5373 = vpack.c.b16 %v5325, %v5325
      %v5374 = vpack.c.b16 %v5326, %v5326
      %v5375 = vpack.c.b16 %v5327, %v5327
      %v5376 = vpack.c.b16 %v5328, %v5328
      %v5377 = vpack.c.b16 %v5329, %v5329
      %v5378 = vpack.c.b16 %v5330, %v5330
      %v5379 = vpack.c.b16 %v5331, %v5331
      %v5380 = vpack.c.b16 %v5332, %v5332
      %v5381 = vpack.c.b16 %v5333, %v5333
      %v5382 = vpack.c.b16 %v5334, %v5334
      %v5383 = vpack.c.b16 %v5335, %v5335
      %v5384 = vpack.c.b16 %v5336, %v5336
      %v5385 = vpack.c.b16 %v5337, %v5337
      %v5386 = vpack.c.b16 %v5338, %v5338
      %v5387 = vpack.c.b16 %v5339, %v5339
      %v5388 = vpack.c.b16 %v5340, %v5340
      %v5389 = vpack.c.b16 %v5341, %v5341
      %v5390 = vpack.c.b16 %v5342, %v5342
      %v5391 = vpack.c.b16 %v5343, %v5343
      %v5392 = vpack.c.b16 %v5344, %v5344
      %v5393 = vpack.c.b16 %v5345, %v5345
      %v5394 = vpack.c.b16 %v5346, %v5346
      %v5395 = vpack.c.b16 %v5347, %v5347
      %v5396 = vpack.c.b16 %v5348, %v5348
      %v5397 = vpack.c.b16 %v5349, %v5349
      %v5398 = vpack.c.b16 %v5350, %v5350
      %v5399 = vpack.c.b16 %v5351, %v5351
      %v5400 = vpack.c.b16 %v5352, %v5352
      %v5401 = vpack.c.b16 %v5353, %v5353
      %v5402 = vpack.c.b16 %v5354, %v5354
      %v5403 = vpack.c.b16 %v5355, %v5355
      %v5404 = vpack.c.b16 %v5356, %v5356
      %v5405 = vpack.c.b16 %v5357, %v5357
      %v5406 = vpack.c.b16 %v5358, %v5358
      %v5407 = vpack.c.b16 %v5359, %v5359
      %v5408 = vpack.c.b16 %v5360, %v5360
      %v5409 = vpack.c.b16 %v5361, %v5361
      %v5410 = vpack.c.b16 %v5362, %v5362
      %v5411 = vpack.c.b16 %v5363, %v5363
      %v5412 = vpack.c.b16 %v5364, %v5364
      %v5413 = vpack.c.b16 %v5365, %v5365
      %v5414 = vpack.c.b16 %v5366, %v5366
      %v5415 = vpack.c.b16 %v5367, %v5367
      %v5416 = vpack.c.b16 %v5368, %v5368
      %v5417 = vpack.c.b16 %v5369, %v5369
      %v5418 = vpack.c.b16 %v5370, %v5370
      %v5419 = vpack.c.b16 %v5371, %v5371
      %5468 = vst [vmem:[%s146] sm:$0xf] %v5372
      %5469 = vst [vmem:[%s146 + $0x4] sm:$0xf] %v5373
      %5470 = vst [vmem:[%s146 + $0x8] sm:$0xf] %v5374
      %5471 = vst [vmem:[%s146 + $0xc] sm:$0xf] %v5375
      %5472 = vst [vmem:[%s146 + $0x10] sm:$0xf] %v5376
      %5473 = vst [vmem:[%s146 + $0x14] sm:$0xf] %v5377
      %5474 = vst [vmem:[%s146 + $0x18] sm:$0xf] %v5378
      %5475 = vst [vmem:[%s146 + $0x1c] sm:$0xf] %v5379
      %5476 = vst [vmem:[%s146 + $0x20] sm:$0xf] %v5380
      %5477 = vst [vmem:[%s146 + $0x24] sm:$0xf] %v5381
      %5478 = vst [vmem:[%s146 + $0x28] sm:$0xf] %v5382
      %5479 = vst [vmem:[%s146 + $0x2c] sm:$0xf] %v5383
      %5480 = vst [vmem:[%s146 + $0x30] sm:$0xf] %v5384
      %5481 = vst [vmem:[%s146 + $0x34] sm:$0xf] %v5385
      %5482 = vst [vmem:[%s146 + $0x38] sm:$0xf] %v5386
      %5483 = vst [vmem:[%s146 + $0x3c] sm:$0xf] %v5387
      %5484 = vst [vmem:[%s146 + $0x40] sm:$0xf] %v5388
      %5485 = vst [vmem:[%s146 + $0x44] sm:$0xf] %v5389
      %5486 = vst [vmem:[%s146 + $0x48] sm:$0xf] %v5390
      %5487 = vst [vmem:[%s146 + $0x4c] sm:$0xf] %v5391
      %5488 = vst [vmem:[%s146 + $0x50] sm:$0xf] %v5392
      %5489 = vst [vmem:[%s146 + $0x54] sm:$0xf] %v5393
      %5490 = vst [vmem:[%s146 + $0x58] sm:$0xf] %v5394
      %5491 = vst [vmem:[%s146 + $0x5c] sm:$0xf] %v5395
      %5492 = vst [vmem:[%s146 + $0x60] sm:$0xf] %v5396
      %5493 = vst [vmem:[%s146 + $0x64] sm:$0xf] %v5397
      %5494 = vst [vmem:[%s146 + $0x68] sm:$0xf] %v5398
      %5495 = vst [vmem:[%s146 + $0x6c] sm:$0xf] %v5399
      %5496 = vst [vmem:[%s146 + $0x70] sm:$0xf] %v5400
      %5497 = vst [vmem:[%s146 + $0x74] sm:$0xf] %v5401
      %5498 = vst [vmem:[%s146 + $0x78] sm:$0xf] %v5402
      %5499 = vst [vmem:[%s146 + $0x7c] sm:$0xf] %v5403
      %5500 = vst [vmem:[%s146 + $0x80] sm:$0xf] %v5404
      %5501 = vst [vmem:[%s146 + $0x84] sm:$0xf] %v5405
      %5502 = vst [vmem:[%s146 + $0x88] sm:$0xf] %v5406
      %5503 = vst [vmem:[%s146 + $0x8c] sm:$0xf] %v5407
      %5504 = vst [vmem:[%s146 + $0x90] sm:$0xf] %v5408
      %5505 = vst [vmem:[%s146 + $0x94] sm:$0xf] %v5409
      %5506 = vst [vmem:[%s146 + $0x98] sm:$0xf] %v5410
      %5507 = vst [vmem:[%s146 + $0x9c] sm:$0xf] %v5411
      %5508 = vst [vmem:[%s146 + $0xa0] sm:$0xf] %v5412
      %5509 = vst [vmem:[%s146 + $0xa4] sm:$0xf] %v5413
      %5510 = vst [vmem:[%s146 + $0xa8] sm:$0xf] %v5414
      %5511 = vst [vmem:[%s146 + $0xac] sm:$0xf] %v5415
      %5512 = vst [vmem:[%s146 + $0xb0] sm:$0xf] %v5416
      %5513 = vst [vmem:[%s146 + $0xb4] sm:$0xf] %v5417
      %5514 = vst [vmem:[%s146 + $0xb8] sm:$0xf] %v5418
      %5515 = vst [vmem:[%s146 + $0xbc] sm:$0xf] %v5419
      %s5516 = smul.u32 48, %s19
      %p5517 = scmp.lt.s32.totalorder %s18, 1
      %s5518 = scalar_select %p5517, %s18, 1
      %p5519 = scmp.lt.s32.totalorder %s5516, 47
      %s5520 = scalar_select %p5519, %s5516, 47
      %s5521 = smul.addr %s5518, 48
      %s5522 = sadd.s32 %s5520, %s5521
      %s5523 = smul.addr %s5522, 4
      %s5524 = scalar_lea.vmem %s3, %s5523
      // Predicated region
      $region111: #{resnet_block_forward.2} parent=27 // pred_check
        %p5525 = pneg %p88
      $region112: #{resnet_block_forward.2} parent=27 // pred_check_branch
        %5527 = sbr.rel (%p5525) target = $region114
      $region113: #{resnet_block_forward.2} parent=27 // pred_region
        %s5528 = smul.u32 48, %s19
      $region114: #{resnet_block_forward.2} parent=27 // pred_fallthru
        _
    $region28: #{resnet_block_forward.2} parent=5 // pred_fallthru
      _
    %p5529 = scmp.le.s32.totalorder 2, %s9
    // Predicated region
    $region115: #{resnet_block_forward.2} parent=5 // pred_check
      %p5530 = pneg %p5529
    $region116: #{resnet_block_forward.2} parent=5 // pred_check_branch
      %5532 = sbr.rel (%p5530) target = $region118
    $region117: #{resnet_block_forward.2} parent=5 // pred_region
      %s5533 = ssub.s32 %s9, 2
      // Predicated region
      $region119: #{resnet_block_forward.2} parent=117 // pred_check
        %p5534 = pneg %p94
      $region120: #{resnet_block_forward.2} parent=117 // pred_check_branch
        %5536 = sbr.rel (%p5534) target = $region122
      $region121: #{resnet_block_forward.2} parent=117 // pred_region
        %s5537 = smul.u32 48, %s21
        %p5538 = scmp.lt.s32.totalorder %s20, 1
        %s5539 = scalar_select %p5538, %s20, 1
        %p5540 = scmp.lt.s32.totalorder %s5537, 47
        %s5541 = scalar_select %p5540, %s5537, 47
        %s5542 = smul.addr %s5539, 48
        %s5543 = sadd.s32 %s5541, %s5542
        %s5544 = smul.addr %s5543, 4
        %s5545 = scalar_lea.vmem %s3, %s5544
      $region122: #{resnet_block_forward.2} parent=117 // pred_fallthru
        _
    $region118: #{resnet_block_forward.2} parent=5 // pred_fallthru
      _
  $region6: #{resnet_block_forward.2} parent=0 // loop_footer
    %s13 = sadd.s32 1, %s9
  $region7: #{resnet_block_forward.2} parent=0 // loop_footer_branch
    %8 = sbr.rel target = $region3
  $region8: #{resnet_block_forward.2} parent=0 // loop_exit
    _
  %5546 = vsyncmov [#allocation3]
  %s5547 = vpop.sfrf %5546
  %p5548 = scmp.eq.s32.totalorder %s5547, 0
  %p5549 = pneg %p5548
  %5551 = shalt.err (%p5549)
  %s5552 = scalar_lea.sflag [#allocation3], 1
  %5553 = vsyncmov %s5552
  %s5554 = vpop.sfrf %5553
  %p5555 = scmp.eq.s32.totalorder %s5554, 0
  %p5556 = pneg %p5555
  %5558 = shalt.err (%p5556)

// kernel: resnet_block_forward.3
$region0: #{resnet_block_forward.3}
  #allocation0 [shape = 'u32[]', space=smem, size = 0x4, offset = 0x4, fixed_abs, tag = 'smem constant byte address 0x4 - core index']
  #allocation1 [shape = 'u32[144,128]{1,0:T(1,128)}', space=vmem, size = 0x12000, scoped, tag = 'internal scratch']
  #allocation2 [shape = 'bf16[2,440,128]{2,1,0:T(8,128)(2,1)}', space=vmem, size = 0x37000, scoped, tag = 'scratch operand']
  #allocation3 [shape = 'bf16[2,392,128]{2,1,0:T(8,128)(2,1)}', space=vmem, size = 0x31000, scoped, tag = 'scratch operand']
  #allocation4 [shape = 's32[2]{0}', space=sflag, size = 0x8, scoped, tag = 'scratch operand']
  #allocation5 [shape = 's32[2]{0}', space=sflag, size = 0x8, scoped, tag = 'scratch operand']
  #allocation6 [shape = 's32[]', space=sflag, size = 0x4, offset = 0, fixed_abs, tag = 'sflag constant byte address 0x0 - dummy sync flag']
  #allocation7 [shape = 's32[]', space=sflag, size = 0x4, offset = 0, fixed_abs, tag = 'sflag constant byte address 0x0 - dummy sync flag']
  #allocation8 [shape = 's32[]', space=sflag, size = 0x4, offset = 0, fixed_abs, tag = 'sflag constant byte address 0x0 - dummy sync flag']
  #allocation9 [shape = 's32[]', space=sflag, size = 0x4, offset = 0, fixed_abs, tag = 'sflag constant byte address 0x0 - dummy sync flag']
  %s0 = inlined_call_operand.vmem [shape: bf16[2,456,128], index: 0, kind: input, shape index: {}]
  %s1 = inlined_call_operand.vmem [shape: bf16[9,128,128], index: 1, kind: input, shape index: {}]
  %s2 = inlined_call_operand.vmem [shape: f32[1,128], index: 2, kind: input, shape index: {}]
  %s3 = inlined_call_operand.vmem [shape: bf16[2,456,128], index: 3, kind: input, shape index: {}]
  %s4 = inlined_call_operand.vmem [shape: f32[2,384,128], index: 4, kind: output, shape index: {}]
  %s5 = sld [smem:[#allocation0]]
  $region197: #{resnet_block_forward.3} parent=0
    _
  %s7 = ssub.s32 1, %s5
  %s8 = scalar_select 0, %s7, %s5
  loop: start=0, step=1, limit=4
  $region2: #{resnet_block_forward.3} parent=0 // loop_pre_header
    _
  $region3: #{resnet_block_forward.3} parent=0 // loop_header
    %s10 = sphi 0, %s14
    %p11 = scmp.ge.s32.totalorder %s10, 4
    %s17 = sphi 0, %s29
    %s18 = sphi 0, %s25
    %s19 = sphi 0, %s17
    %s20 = sphi 0, %s18
    %s21 = sphi 0, %s19
    %s22 = sphi 0, %s20
    %s30 = sphi 0, %s30
    %s32 = sphi 0, %s30
    %s33 = sphi 0, %s32
    %s47 = sphi 0, %s33
    %s51 = sphi 0, %s51
    %s53 = sphi 0, %s51
    %s54 = sphi 0, %s53
    %s68 = sphi 0, %s54
    %s76 = sphi 0, %s78
    %s79 = sphi 0, %s76
    %s80 = sphi 0, %s79
    %s96 = sphi 0, %s80
  $region4: #{resnet_block_forward.3} parent=0 // loop_header_branch
    %13 = sbr.rel (%p11) target = $region8
  $region5: #{resnet_block_forward.3} parent=0 // loop_body
    %s15 = ssub.s32 %s10, 1
    %s16 = ssub.s32 %s10, 2
    %s23 = sadd.s32 1, %s18
    %p24 = scmp.ge.s32.totalorder %s23, 1
    %s25 = scalar_select %p24, 0, %s23
    %s26 = sadd.s32 1, %s17
    %s27 = scalar_select %p24, %s26, %s17
    %p28 = scmp.ge.s32.totalorder %s27, 2
    %s29 = scalar_select %p28, 0, %s27
    %s31 = sadd.s32 %s30, 1
    %p34 = scmp.eq.s32.totalorder %s10, 1
    %p35 = scmp.ne.s32.totalorder %s30, %s32
    %p36 = scmp.eq.s32.totalorder %s10, 0
    %p37 = por %p35, %p36
    %p38 = scmp.ne.s32.totalorder %s30, %s32
    %p39 = scmp.eq.s32.totalorder %s15, 1
    %p40 = por %p38, %p39
    %p41 = scmp.ne.s32.totalorder %s32, %s33
    %p42 = scmp.eq.s32.totalorder %s15, 0
    %p43 = por %p41, %p42
    %p44 = scmp.ne.s32.totalorder %s32, %s33
    %p45 = scmp.eq.s32.totalorder %s16, 1
    %p46 = por %p44, %p45
    %p48 = scmp.ne.s32.totalorder %s33, %s47
    %p49 = scmp.eq.s32.totalorder %s16, 0
    %p50 = por %p48, %p49
    %s52 = sadd.s32 %s51, 1
    %p55 = scmp.eq.s32.totalorder %s10, 1
    %p56 = scmp.ne.s32.totalorder %s51, %s53
    %p57 = scmp.eq.s32.totalorder %s10, 0
    %p58 = por %p56, %p57
    %p59 = scmp.ne.s32.totalorder %s51, %s53
    %p60 = scmp.eq.s32.totalorder %s15, 1
    %p61 = por %p59, %p60
    %p62 = scmp.ne.s32.totalorder %s53, %s54
    %p63 = scmp.eq.s32.totalorder %s15, 0
    %p64 = por %p62, %p63
    %p65 = scmp.ne.s32.totalorder %s53, %s54
    %p66 = scmp.eq.s32.totalorder %s16, 1
    %p67 = por %p65, %p66
    %p69 = scmp.ne.s32.totalorder %s54, %s68
    %p70 = scmp.eq.s32.totalorder %s16, 0
    %p71 = por %p69, %p70
    %s72 = ssub.s32 %s17, %s29
    %s73 = ssub.s32 %s18, %s25
    %s74 = sor.u32 %s72, %s73
    %p75 = scmp.eq.s32.totalorder %s74, 0
    %s77 = sadd.s32 %s76, 1
    %s78 = scalar_select %p75, %s76, %s77
    %p81 = pneg %p75
    %p82 = scmp.eq.s32.totalorder %s10, 1
    %p83 = por %p81, %p82
    %p84 = scmp.ne.s32.totalorder %s76, %s79
    %p85 = scmp.eq.s32.totalorder %s10, 0
    %p86 = por %p84, %p85
    %p87 = scmp.ne.s32.totalorder %s76, %s79
    %p88 = scmp.eq.s32.totalorder %s15, 1
    %p89 = por %p87, %p88
    %p90 = scmp.ne.s32.totalorder %s79, %s80
    %p91 = scmp.eq.s32.totalorder %s15, 0
    %p92 = por %p90, %p91
    %p93 = scmp.ne.s32.totalorder %s79, %s80
    %p94 = scmp.eq.s32.totalorder %s16, 1
    %p95 = por %p93, %p94
    %p97 = scmp.ne.s32.totalorder %s80, %s96
    %p98 = scmp.eq.s32.totalorder %s16, 0
    %p99 = por %p97, %p98
    %p100 = scmp.le.s32.totalorder 1, %s10
    %p101 = scmp.lt.s32.totalorder %s10, 3
    %p102 = pnand %p100, %p101
    %p103 = pneg %p102
    // Predicated region
    $region9: #{resnet_block_forward.3} parent=5 // pred_check
      _
    $region10: #{resnet_block_forward.3} parent=5 // pred_check_branch
      %105 = sbr.rel (%p102) target = $region12
    $region11: #{resnet_block_forward.3} parent=5 // pred_region
      %s106 = ssub.s32 %s10, 1
      // Predicated region
      $region13: #{resnet_block_forward.3} parent=11 // pred_check
        %p107 = pneg %p43
      $region14: #{resnet_block_forward.3} parent=11 // pred_check_branch
        %109 = sbr.rel (%p107) target = $region16
      $region15: #{resnet_block_forward.3} parent=11 // pred_region
        _
      $region16: #{resnet_block_forward.3} parent=11 // pred_fallthru
        _
      // Predicated region
      $region17: #{resnet_block_forward.3} parent=11 // pred_check
        %p110 = pneg %p64
      $region18: #{resnet_block_forward.3} parent=11 // pred_check_branch
        %112 = sbr.rel (%p110) target = $region20
      $region19: #{resnet_block_forward.3} parent=11 // pred_region
        _
      $region20: #{resnet_block_forward.3} parent=11 // pred_fallthru
        _
    $region12: #{resnet_block_forward.3} parent=5 // pred_fallthru
      _
    %p113 = scmp.lt.s32.totalorder %s10, 2
    // Predicated region
    $region21: #{resnet_block_forward.3} parent=5 // pred_check
      %p114 = pneg %p113
    $region22: #{resnet_block_forward.3} parent=5 // pred_check_branch
      %116 = sbr.rel (%p114) target = $region24
    $region23: #{resnet_block_forward.3} parent=5 // pred_region
      _
    $region24: #{resnet_block_forward.3} parent=5 // pred_fallthru
      _
    %p117 = scmp.le.s32.totalorder 1, %s10
    %p118 = scmp.lt.s32.totalorder %s10, 3
    %p119 = pnand %p117, %p118
    %p120 = pneg %p119
    // Predicated region
    $region25: #{resnet_block_forward.3} parent=5 // pred_check
      _
    $region26: #{resnet_block_forward.3} parent=5 // pred_check_branch
      %122 = sbr.rel (%p119) target = $region28
    $region27: #{resnet_block_forward.3} parent=5 // pred_region
      %s123 = ssub.s32 %s10, 1
      %p124 = pneg %p43
      %p125 = pneg %p40
      %p126 = pneg %p64
      %p127 = pneg %p61
      %p128 = pneg %p92
      %p129 = pneg %p89
      %s130 = smul.u32 48, %s20
      %p131 = scmp.lt.s32.totalorder %s19, 1
      %s132 = scalar_select %p131, %s19, 1
      %p133 = scmp.lt.s32.totalorder %s130, 47
      %s134 = scalar_select %p133, %s130, 47
      %s135 = smul.addr %s132, 48
      %s136 = sadd.s32 %s134, %s135
      %s137 = smul.addr %s136, 8
      %s138 = scalar_lea.vmem %s4, %s137
      %s139 = smul.u32 48, %s20
      %p140 = scmp.lt.s32.totalorder %s19, 1
      %s141 = scalar_select %p140, %s19, 1
      %p142 = scmp.lt.s32.totalorder %s139, 47
      %s143 = scalar_select %p142, %s139, 47
      %s144 = smul.addr %s141, 48
      %s145 = sadd.s32 %s143, %s144
      %s146 = smul.addr %s145, 8
      %s147 = scalar_lea.vmem %s4, %s146
      %s148 = smul.u32 48, %s20
      %p150 = scmp.lt.s32.totalorder %s20, 0
      %s151 = ssub.s32 0, %s20
      %s152 = scalar_select %p150, %s151, %s20
      %s153 = sand.u32 %s152, 1
      %s154 = ssub.s32 0, %s153
      %s155 = scalar_select %p150, %s154, %s153
      %p156 = scmp.eq.s32.totalorder %s20, 0
      // Predicated region
      $region29: #{resnet_block_forward.3} parent=27 // pred_check
        %p157 = pneg %p156
      $region30: #{resnet_block_forward.3} parent=27 // pred_check_branch
        %159 = sbr.rel (%p157) target = $region32
      $region31: #{resnet_block_forward.3} parent=27 // pred_region
        %s160 = smul.u32 %s20, 384
        %s161 = sshra.s32 %s160, 3
        %s162 = sand.u32 %s160, 7
        %s163 = smul.u32 %s19, 57
        %s164 = sadd.s32 %s161, %s163
        %s165 = smul.addr %s164, 4
        %s166 = scalar_lea.vmem %s0, %s165
        %s167 = smul.u32 %s155, 55
        %s168 = smul.addr %s167, 4
        %s169 = scalar_lea.vmem [#allocation2], %s168
        %s170 = scalar_lea.sflag [#allocation4], %s155
        %p172 = scmp.lt.u32.totalorder 220, 8
        %p173 = pneg %p172
        // Predicated region
        $region33: #{resnet_block_forward.3} parent=31 // pred_check
          _
        $region34: #{resnet_block_forward.3} parent=31 // pred_check_branch
          %175 = sbr.rel (%p172) target = $region36
        $region35: #{resnet_block_forward.3} parent=31 // pred_region
          %s191 = sand.u32 220, 7
          %p192 = scmp.eq.s32.totalorder %s191, 0
          %p193 = pneg %p192
          // Predicated region
          $region48: #{resnet_block_forward.3} parent=35 // pred_check
            _
          $region49: #{resnet_block_forward.3} parent=35 // pred_check_branch
            %195 = sbr.rel (%p192) target = $region51
          $region50: #{resnet_block_forward.3} parent=35 // pred_region
            %s196 = sand.u32 220, 7
            %s197 = ssub.s32 220, %s196
            %s198 = scalar_lea.vmem %s166, %s197
            %s199 = ssub.s32 220, %s196
            %s200 = scalar_lea.vmem %s169, %s199 [#allocation2]
            loop: start=0, step=1, limit=1
            $region52: #{resnet_block_forward.3} parent=50 // loop_pre_header
              _
            $region53: #{resnet_block_forward.3} parent=50 // loop_header
              %s202 = sphi 0, %s206
              %p203 = scmp.ge.s32.totalorder %s202, 1
              %s207 = sphi %s166, %s166
              %s208 = sphi %s169, %s169
            $region54: #{resnet_block_forward.3} parent=50 // loop_header_branch
              %205 = sbr.rel (%p203) target = $region58
            $region55: #{resnet_block_forward.3} parent=50 // loop_body
              %v209 = vld [vmem:[%s207] sm:$0xff]
              %210 = vst [vmem:[%s208] sm:$0xff] %v209
              %v211 = vld [vmem:[%s207 + $0x8] sm:$0xff]
              %212 = vst [vmem:[%s208 + $0x8] sm:$0xff] %v211
              %v213 = vld [vmem:[%s207 + $0x10] sm:$0xff]
              %214 = vst [vmem:[%s208 + $0x10] sm:$0xff] %v213
              %v215 = vld [vmem:[%s207 + $0x18] sm:$0xff]
              %216 = vst [vmem:[%s208 + $0x18] sm:$0xff] %v215
              %v217 = vld [vmem:[%s207 + $0x20] sm:$0xff]
              %218 = vst [vmem:[%s208 + $0x20] sm:$0xff] %v217
              %v219 = vld [vmem:[%s207 + $0x28] sm:$0xff]
              %220 = vst [vmem:[%s208 + $0x28] sm:$0xff] %v219
              %v221 = vld [vmem:[%s207 + $0x30] sm:$0xff]
              %222 = vst [vmem:[%s208 + $0x30] sm:$0xff] %v221
              %v223 = vld [vmem:[%s207 + $0x38] sm:$0xff]
              %224 = vst [vmem:[%s208 + $0x38] sm:$0xff] %v223
              %v225 = vld [vmem:[%s207 + $0x40] sm:$0xff]
              %226 = vst [vmem:[%s208 + $0x40] sm:$0xff] %v225
              %v227 = vld [vmem:[%s207 + $0x48] sm:$0xff]
              %228 = vst [vmem:[%s208 + $0x48] sm:$0xff] %v227
              %v229 = vld [vmem:[%s207 + $0x50] sm:$0xff]
              %230 = vst [vmem:[%s208 + $0x50] sm:$0xff] %v229
              %v231 = vld [vmem:[%s207 + $0x58] sm:$0xff]
              %232 = vst [vmem:[%s208 + $0x58] sm:$0xff] %v231
              %v233 = vld [vmem:[%s207 + $0x60] sm:$0xff]
              %234 = vst [vmem:[%s208 + $0x60] sm:$0xff] %v233
              %v235 = vld [vmem:[%s207 + $0x68] sm:$0xff]
              %236 = vst [vmem:[%s208 + $0x68] sm:$0xff] %v235
              %v237 = vld [vmem:[%s207 + $0x70] sm:$0xff]
              %238 = vst [vmem:[%s208 + $0x70] sm:$0xff] %v237
              %v239 = vld [vmem:[%s207 + $0x78] sm:$0xff]
              %240 = vst [vmem:[%s208 + $0x78] sm:$0xff] %v239
              %v241 = vld [vmem:[%s207 + $0x80] sm:$0xff]
              %242 = vst [vmem:[%s208 + $0x80] sm:$0xff] %v241
              %v243 = vld [vmem:[%s207 + $0x88] sm:$0xff]
              %244 = vst [vmem:[%s208 + $0x88] sm:$0xff] %v243
              %v245 = vld [vmem:[%s207 + $0x90] sm:$0xff]
              %246 = vst [vmem:[%s208 + $0x90] sm:$0xff] %v245
              %v247 = vld [vmem:[%s207 + $0x98] sm:$0xff]
              %248 = vst [vmem:[%s208 + $0x98] sm:$0xff] %v247
              %v249 = vld [vmem:[%s207 + $0xa0] sm:$0xff]
              %250 = vst [vmem:[%s208 + $0xa0] sm:$0xff] %v249
              %v251 = vld [vmem:[%s207 + $0xa8] sm:$0xff]
              %252 = vst [vmem:[%s208 + $0xa8] sm:$0xff] %v251
              %v253 = vld [vmem:[%s207 + $0xb0] sm:$0xff]
              %254 = vst [vmem:[%s208 + $0xb0] sm:$0xff] %v253
              %v255 = vld [vmem:[%s207 + $0xb8] sm:$0xff]
              %256 = vst [vmem:[%s208 + $0xb8] sm:$0xff] %v255
              %v257 = vld [vmem:[%s207 + $0xc0] sm:$0xff]
              %258 = vst [vmem:[%s208 + $0xc0] sm:$0xff] %v257
              %v259 = vld [vmem:[%s207 + $0xc8] sm:$0xff]
              %260 = vst [vmem:[%s208 + $0xc8] sm:$0xff] %v259
              %v261 = vld [vmem:[%s207 + $0xd0] sm:$0xff]
              %262 = vst [vmem:[%s208 + $0xd0] sm:$0xff] %v261
            $region56: #{resnet_block_forward.3} parent=50 // loop_footer
              %s206 = sadd.s32 1, %s202
            $region57: #{resnet_block_forward.3} parent=50 // loop_footer_branch
              %201 = sbr.rel target = $region53
            $region58: #{resnet_block_forward.3} parent=50 // loop_exit
              _
            %s263 = sshll.u32 1, %s196
            %s264 = ssub.s32 %s263, 1
            loop: start=0, step=1, limit=1
            $region59: #{resnet_block_forward.3} parent=50 // loop_pre_header
              _
            $region60: #{resnet_block_forward.3} parent=50 // loop_header
              %s266 = sphi 0, %s270
              %p267 = scmp.ge.s32.totalorder %s266, 1
              %s271 = sphi %s198, %s198
              %s272 = sphi %s200, %s200
            $region61: #{resnet_block_forward.3} parent=50 // loop_header_branch
              %269 = sbr.rel (%p267) target = $region65
            $region62: #{resnet_block_forward.3} parent=50 // loop_body
              %v273 = vld [vmem:[%s271] sm:%s264]
              %274 = vst [vmem:[%s272] sm:%s264] %v273
            $region63: #{resnet_block_forward.3} parent=50 // loop_footer
              %s270 = sadd.s32 1, %s266
            $region64: #{resnet_block_forward.3} parent=50 // loop_footer_branch
              %265 = sbr.rel target = $region60
            $region65: #{resnet_block_forward.3} parent=50 // loop_exit
              _
          $region51: #{resnet_block_forward.3} parent=35 // pred_fallthru
            _
        $region36: #{resnet_block_forward.3} parent=31 // pred_fallthru
          _
        // Predicated region
        $region37: #{resnet_block_forward.3} parent=31 // pred_check
          %p176 = pneg %p172
        $region38: #{resnet_block_forward.3} parent=31 // pred_check_branch
          %178 = sbr.rel (%p176) target = $region40
        $region39: #{resnet_block_forward.3} parent=31 // pred_region
          %s179 = sshll.u32 1, 220
          %s180 = ssub.s32 %s179, 1
          loop: start=0, step=1, limit=1
          $region41: #{resnet_block_forward.3} parent=39 // loop_pre_header
            _
          $region42: #{resnet_block_forward.3} parent=39 // loop_header
            %s182 = sphi 0, %s186
            %p183 = scmp.ge.s32.totalorder %s182, 1
            %s187 = sphi %s166, %s166
            %s188 = sphi %s169, %s169
          $region43: #{resnet_block_forward.3} parent=39 // loop_header_branch
            %185 = sbr.rel (%p183) target = $region47
          $region44: #{resnet_block_forward.3} parent=39 // loop_body
            %v189 = vld [vmem:[%s187] sm:%s180]
            %190 = vst [vmem:[%s188] sm:%s180] %v189
          $region45: #{resnet_block_forward.3} parent=39 // loop_footer
            %s186 = sadd.s32 1, %s182
          $region46: #{resnet_block_forward.3} parent=39 // loop_footer_branch
            %181 = sbr.rel target = $region42
          $region47: #{resnet_block_forward.3} parent=39 // loop_exit
            _
        $region40: #{resnet_block_forward.3} parent=31 // pred_fallthru
          _
        // Predicated region
        $region66: #{resnet_block_forward.3} parent=31 // pred_check
          _
        $region67: #{resnet_block_forward.3} parent=31 // pred_check_branch
          %277 = sbr.rel (0) target = $region69
        $region68: #{resnet_block_forward.3} parent=31 // pred_region
          %278 = vsyncadd %s170, 3520
        $region69: #{resnet_block_forward.3} parent=31 // pred_fallthru
          _
        %s279 = sadd.s32 %s160, 24
        %s280 = sshra.s32 %s279, 3
        %s281 = sand.u32 %s279, 7
        %s282 = sadd.s32 %s280, %s163
        %s283 = smul.addr %s282, 4
        %s284 = scalar_lea.vmem %s3, %s283
        %s285 = smul.u32 %s155, 49
        %s286 = smul.addr %s285, 4
        %s287 = scalar_lea.vmem [#allocation3], %s286
        %s288 = scalar_lea.sflag [#allocation5], %s155
        %p290 = scmp.lt.u32.totalorder 196, 8
        %p291 = pneg %p290
        // Predicated region
        $region70: #{resnet_block_forward.3} parent=31 // pred_check
          _
        $region71: #{resnet_block_forward.3} parent=31 // pred_check_branch
          %293 = sbr.rel (%p290) target = $region73
        $region72: #{resnet_block_forward.3} parent=31 // pred_region
          %s309 = sand.u32 196, 7
          %p310 = scmp.eq.s32.totalorder %s309, 0
          %p311 = pneg %p310
          // Predicated region
          $region85: #{resnet_block_forward.3} parent=72 // pred_check
            _
          $region86: #{resnet_block_forward.3} parent=72 // pred_check_branch
            %313 = sbr.rel (%p310) target = $region88
          $region87: #{resnet_block_forward.3} parent=72 // pred_region
            %s314 = sand.u32 196, 7
            %s315 = ssub.s32 196, %s314
            %s316 = scalar_lea.vmem %s284, %s315
            %s317 = ssub.s32 196, %s314
            %s318 = scalar_lea.vmem %s287, %s317 [#allocation3]
            loop: start=0, step=1, limit=1
            $region89: #{resnet_block_forward.3} parent=87 // loop_pre_header
              _
            $region90: #{resnet_block_forward.3} parent=87 // loop_header
              %s320 = sphi 0, %s324
              %p321 = scmp.ge.s32.totalorder %s320, 1
              %s325 = sphi %s284, %s284
              %s326 = sphi %s287, %s287
            $region91: #{resnet_block_forward.3} parent=87 // loop_header_branch
              %323 = sbr.rel (%p321) target = $region95
            $region92: #{resnet_block_forward.3} parent=87 // loop_body
              %v327 = vld [vmem:[%s325] sm:$0xff]
              %328 = vst [vmem:[%s326] sm:$0xff] %v327
              %v329 = vld [vmem:[%s325 + $0x8] sm:$0xff]
              %330 = vst [vmem:[%s326 + $0x8] sm:$0xff] %v329
              %v331 = vld [vmem:[%s325 + $0x10] sm:$0xff]
              %332 = vst [vmem:[%s326 + $0x10] sm:$0xff] %v331
              %v333 = vld [vmem:[%s325 + $0x18] sm:$0xff]
              %334 = vst [vmem:[%s326 + $0x18] sm:$0xff] %v333
              %v335 = vld [vmem:[%s325 + $0x20] sm:$0xff]
              %336 = vst [vmem:[%s326 + $0x20] sm:$0xff] %v335
              %v337 = vld [vmem:[%s325 + $0x28] sm:$0xff]
              %338 = vst [vmem:[%s326 + $0x28] sm:$0xff] %v337
              %v339 = vld [vmem:[%s325 + $0x30] sm:$0xff]
              %340 = vst [vmem:[%s326 + $0x30] sm:$0xff] %v339
              %v341 = vld [vmem:[%s325 + $0x38] sm:$0xff]
              %342 = vst [vmem:[%s326 + $0x38] sm:$0xff] %v341
              %v343 = vld [vmem:[%s325 + $0x40] sm:$0xff]
              %344 = vst [vmem:[%s326 + $0x40] sm:$0xff] %v343
              %v345 = vld [vmem:[%s325 + $0x48] sm:$0xff]
              %346 = vst [vmem:[%s326 + $0x48] sm:$0xff] %v345
              %v347 = vld [vmem:[%s325 + $0x50] sm:$0xff]
              %348 = vst [vmem:[%s326 + $0x50] sm:$0xff] %v347
              %v349 = vld [vmem:[%s325 + $0x58] sm:$0xff]
              %350 = vst [vmem:[%s326 + $0x58] sm:$0xff] %v349
              %v351 = vld [vmem:[%s325 + $0x60] sm:$0xff]
              %352 = vst [vmem:[%s326 + $0x60] sm:$0xff] %v351
              %v353 = vld [vmem:[%s325 + $0x68] sm:$0xff]
              %354 = vst [vmem:[%s326 + $0x68] sm:$0xff] %v353
              %v355 = vld [vmem:[%s325 + $0x70] sm:$0xff]
              %356 = vst [vmem:[%s326 + $0x70] sm:$0xff] %v355
              %v357 = vld [vmem:[%s325 + $0x78] sm:$0xff]
              %358 = vst [vmem:[%s326 + $0x78] sm:$0xff] %v357
              %v359 = vld [vmem:[%s325 + $0x80] sm:$0xff]
              %360 = vst [vmem:[%s326 + $0x80] sm:$0xff] %v359
              %v361 = vld [vmem:[%s325 + $0x88] sm:$0xff]
              %362 = vst [vmem:[%s326 + $0x88] sm:$0xff] %v361
              %v363 = vld [vmem:[%s325 + $0x90] sm:$0xff]
              %364 = vst [vmem:[%s326 + $0x90] sm:$0xff] %v363
              %v365 = vld [vmem:[%s325 + $0x98] sm:$0xff]
              %366 = vst [vmem:[%s326 + $0x98] sm:$0xff] %v365
              %v367 = vld [vmem:[%s325 + $0xa0] sm:$0xff]
              %368 = vst [vmem:[%s326 + $0xa0] sm:$0xff] %v367
              %v369 = vld [vmem:[%s325 + $0xa8] sm:$0xff]
              %370 = vst [vmem:[%s326 + $0xa8] sm:$0xff] %v369
              %v371 = vld [vmem:[%s325 + $0xb0] sm:$0xff]
              %372 = vst [vmem:[%s326 + $0xb0] sm:$0xff] %v371
              %v373 = vld [vmem:[%s325 + $0xb8] sm:$0xff]
              %374 = vst [vmem:[%s326 + $0xb8] sm:$0xff] %v373
            $region93: #{resnet_block_forward.3} parent=87 // loop_footer
              %s324 = sadd.s32 1, %s320
            $region94: #{resnet_block_forward.3} parent=87 // loop_footer_branch
              %319 = sbr.rel target = $region90
            $region95: #{resnet_block_forward.3} parent=87 // loop_exit
              _
            %s375 = sshll.u32 1, %s314
            %s376 = ssub.s32 %s375, 1
            loop: start=0, step=1, limit=1
            $region96: #{resnet_block_forward.3} parent=87 // loop_pre_header
              _
            $region97: #{resnet_block_forward.3} parent=87 // loop_header
              %s378 = sphi 0, %s382
              %p379 = scmp.ge.s32.totalorder %s378, 1
              %s383 = sphi %s316, %s316
              %s384 = sphi %s318, %s318
            $region98: #{resnet_block_forward.3} parent=87 // loop_header_branch
              %381 = sbr.rel (%p379) target = $region102
            $region99: #{resnet_block_forward.3} parent=87 // loop_body
              %v385 = vld [vmem:[%s383] sm:%s376]
              %386 = vst [vmem:[%s384] sm:%s376] %v385
            $region100: #{resnet_block_forward.3} parent=87 // loop_footer
              %s382 = sadd.s32 1, %s378
            $region101: #{resnet_block_forward.3} parent=87 // loop_footer_branch
              %377 = sbr.rel target = $region97
            $region102: #{resnet_block_forward.3} parent=87 // loop_exit
              _
          $region88: #{resnet_block_forward.3} parent=72 // pred_fallthru
            _
        $region73: #{resnet_block_forward.3} parent=31 // pred_fallthru
          _
        // Predicated region
        $region74: #{resnet_block_forward.3} parent=31 // pred_check
          %p294 = pneg %p290
        $region75: #{resnet_block_forward.3} parent=31 // pred_check_branch
          %296 = sbr.rel (%p294) target = $region77
        $region76: #{resnet_block_forward.3} parent=31 // pred_region
          %s297 = sshll.u32 1, 196
          %s298 = ssub.s32 %s297, 1
          loop: start=0, step=1, limit=1
          $region78: #{resnet_block_forward.3} parent=76 // loop_pre_header
            _
          $region79: #{resnet_block_forward.3} parent=76 // loop_header
            %s300 = sphi 0, %s304
            %p301 = scmp.ge.s32.totalorder %s300, 1
            %s305 = sphi %s284, %s284
            %s306 = sphi %s287, %s287
          $region80: #{resnet_block_forward.3} parent=76 // loop_header_branch
            %303 = sbr.rel (%p301) target = $region84
          $region81: #{resnet_block_forward.3} parent=76 // loop_body
            %v307 = vld [vmem:[%s305] sm:%s298]
            %308 = vst [vmem:[%s306] sm:%s298] %v307
          $region82: #{resnet_block_forward.3} parent=76 // loop_footer
            %s304 = sadd.s32 1, %s300
          $region83: #{resnet_block_forward.3} parent=76 // loop_footer_branch
            %299 = sbr.rel target = $region79
          $region84: #{resnet_block_forward.3} parent=76 // loop_exit
            _
        $region77: #{resnet_block_forward.3} parent=31 // pred_fallthru
          _
        // Predicated region
        $region103: #{resnet_block_forward.3} parent=31 // pred_check
          _
        $region104: #{resnet_block_forward.3} parent=31 // pred_check_branch
          %389 = sbr.rel (0) target = $region106
        $region105: #{resnet_block_forward.3} parent=31 // pred_region
          %390 = vsyncadd %s288, 3136
        $region106: #{resnet_block_forward.3} parent=31 // pred_fallthru
          _
      $region32: #{resnet_block_forward.3} parent=27 // pred_fallthru
        _
      %s391 = sadd.s32 %s20, 1
      %p392 = scmp.lt.s32.totalorder %s391, 1
      // Predicated region
      $region107: #{resnet_block_forward.3} parent=27 // pred_check
        %p393 = pneg %p392
      $region108: #{resnet_block_forward.3} parent=27 // pred_check_branch
        %395 = sbr.rel (%p393) target = $region110
      $region109: #{resnet_block_forward.3} parent=27 // pred_region
        %s396 = ssub.s32 1, %s155
        %s397 = smul.u32 %s391, 384
        %s398 = sshra.s32 %s397, 3
        %s399 = sand.u32 %s397, 7
        %s400 = smul.u32 %s19, 57
        %s401 = sadd.s32 %s398, %s400
        %s402 = smul.addr %s401, 4
        %s403 = scalar_lea.vmem %s0, %s402
        %s404 = smul.u32 %s396, 55
        %s405 = smul.addr %s404, 4
        %s406 = scalar_lea.vmem [#allocation2], %s405
        %s407 = scalar_lea.sflag [#allocation4], %s396
        %p409 = scmp.lt.u32.totalorder 220, 8
        %p410 = pneg %p409
        // Predicated region
        $region111: #{resnet_block_forward.3} parent=109 // pred_check
          _
        $region112: #{resnet_block_forward.3} parent=109 // pred_check_branch
          %412 = sbr.rel (%p409) target = $region114
        $region113: #{resnet_block_forward.3} parent=109 // pred_region
          %s428 = sand.u32 220, 7
          %p429 = scmp.eq.s32.totalorder %s428, 0
          %p430 = pneg %p429
          // Predicated region
          $region126: #{resnet_block_forward.3} parent=113 // pred_check
            _
          $region127: #{resnet_block_forward.3} parent=113 // pred_check_branch
            %432 = sbr.rel (%p429) target = $region129
          $region128: #{resnet_block_forward.3} parent=113 // pred_region
            %s433 = sand.u32 220, 7
            %s434 = ssub.s32 220, %s433
            %s435 = scalar_lea.vmem %s403, %s434
            %s436 = ssub.s32 220, %s433
            %s437 = scalar_lea.vmem %s406, %s436 [#allocation2]
            loop: start=0, step=1, limit=1
            $region130: #{resnet_block_forward.3} parent=128 // loop_pre_header
              _
            $region131: #{resnet_block_forward.3} parent=128 // loop_header
              %s439 = sphi 0, %s443
              %p440 = scmp.ge.s32.totalorder %s439, 1
              %s444 = sphi %s403, %s403
              %s445 = sphi %s406, %s406
            $region132: #{resnet_block_forward.3} parent=128 // loop_header_branch
              %442 = sbr.rel (%p440) target = $region136
            $region133: #{resnet_block_forward.3} parent=128 // loop_body
              %v446 = vld [vmem:[%s444] sm:$0xff]
              %447 = vst [vmem:[%s445] sm:$0xff] %v446
              %v448 = vld [vmem:[%s444 + $0x8] sm:$0xff]
              %449 = vst [vmem:[%s445 + $0x8] sm:$0xff] %v448
              %v450 = vld [vmem:[%s444 + $0x10] sm:$0xff]
              %451 = vst [vmem:[%s445 + $0x10] sm:$0xff] %v450
              %v452 = vld [vmem:[%s444 + $0x18] sm:$0xff]
              %453 = vst [vmem:[%s445 + $0x18] sm:$0xff] %v452
              %v454 = vld [vmem:[%s444 + $0x20] sm:$0xff]
              %455 = vst [vmem:[%s445 + $0x20] sm:$0xff] %v454
              %v456 = vld [vmem:[%s444 + $0x28] sm:$0xff]
              %457 = vst [vmem:[%s445 + $0x28] sm:$0xff] %v456
              %v458 = vld [vmem:[%s444 + $0x30] sm:$0xff]
              %459 = vst [vmem:[%s445 + $0x30] sm:$0xff] %v458
              %v460 = vld [vmem:[%s444 + $0x38] sm:$0xff]
              %461 = vst [vmem:[%s445 + $0x38] sm:$0xff] %v460
              %v462 = vld [vmem:[%s444 + $0x40] sm:$0xff]
              %463 = vst [vmem:[%s445 + $0x40] sm:$0xff] %v462
              %v464 = vld [vmem:[%s444 + $0x48] sm:$0xff]
              %465 = vst [vmem:[%s445 + $0x48] sm:$0xff] %v464
              %v466 = vld [vmem:[%s444 + $0x50] sm:$0xff]
              %467 = vst [vmem:[%s445 + $0x50] sm:$0xff] %v466
              %v468 = vld [vmem:[%s444 + $0x58] sm:$0xff]
              %469 = vst [vmem:[%s445 + $0x58] sm:$0xff] %v468
              %v470 = vld [vmem:[%s444 + $0x60] sm:$0xff]
              %471 = vst [vmem:[%s445 + $0x60] sm:$0xff] %v470
              %v472 = vld [vmem:[%s444 + $0x68] sm:$0xff]
              %473 = vst [vmem:[%s445 + $0x68] sm:$0xff] %v472
              %v474 = vld [vmem:[%s444 + $0x70] sm:$0xff]
              %475 = vst [vmem:[%s445 + $0x70] sm:$0xff] %v474
              %v476 = vld [vmem:[%s444 + $0x78] sm:$0xff]
              %477 = vst [vmem:[%s445 + $0x78] sm:$0xff] %v476
              %v478 = vld [vmem:[%s444 + $0x80] sm:$0xff]
              %479 = vst [vmem:[%s445 + $0x80] sm:$0xff] %v478
              %v480 = vld [vmem:[%s444 + $0x88] sm:$0xff]
              %481 = vst [vmem:[%s445 + $0x88] sm:$0xff] %v480
              %v482 = vld [vmem:[%s444 + $0x90] sm:$0xff]
              %483 = vst [vmem:[%s445 + $0x90] sm:$0xff] %v482
              %v484 = vld [vmem:[%s444 + $0x98] sm:$0xff]
              %485 = vst [vmem:[%s445 + $0x98] sm:$0xff] %v484
              %v486 = vld [vmem:[%s444 + $0xa0] sm:$0xff]
              %487 = vst [vmem:[%s445 + $0xa0] sm:$0xff] %v486
              %v488 = vld [vmem:[%s444 + $0xa8] sm:$0xff]
              %489 = vst [vmem:[%s445 + $0xa8] sm:$0xff] %v488
              %v490 = vld [vmem:[%s444 + $0xb0] sm:$0xff]
              %491 = vst [vmem:[%s445 + $0xb0] sm:$0xff] %v490
              %v492 = vld [vmem:[%s444 + $0xb8] sm:$0xff]
              %493 = vst [vmem:[%s445 + $0xb8] sm:$0xff] %v492
              %v494 = vld [vmem:[%s444 + $0xc0] sm:$0xff]
              %495 = vst [vmem:[%s445 + $0xc0] sm:$0xff] %v494
              %v496 = vld [vmem:[%s444 + $0xc8] sm:$0xff]
              %497 = vst [vmem:[%s445 + $0xc8] sm:$0xff] %v496
              %v498 = vld [vmem:[%s444 + $0xd0] sm:$0xff]
              %499 = vst [vmem:[%s445 + $0xd0] sm:$0xff] %v498
            $region134: #{resnet_block_forward.3} parent=128 // loop_footer
              %s443 = sadd.s32 1, %s439
            $region135: #{resnet_block_forward.3} parent=128 // loop_footer_branch
              %438 = sbr.rel target = $region131
            $region136: #{resnet_block_forward.3} parent=128 // loop_exit
              _
            %s500 = sshll.u32 1, %s433
            %s501 = ssub.s32 %s500, 1
            loop: start=0, step=1, limit=1
            $region137: #{resnet_block_forward.3} parent=128 // loop_pre_header
              _
            $region138: #{resnet_block_forward.3} parent=128 // loop_header
              %s503 = sphi 0, %s507
              %p504 = scmp.ge.s32.totalorder %s503, 1
              %s508 = sphi %s435, %s435
              %s509 = sphi %s437, %s437
            $region139: #{resnet_block_forward.3} parent=128 // loop_header_branch
              %506 = sbr.rel (%p504) target = $region143
            $region140: #{resnet_block_forward.3} parent=128 // loop_body
              %v510 = vld [vmem:[%s508] sm:%s501]
              %511 = vst [vmem:[%s509] sm:%s501] %v510
            $region141: #{resnet_block_forward.3} parent=128 // loop_footer
              %s507 = sadd.s32 1, %s503
            $region142: #{resnet_block_forward.3} parent=128 // loop_footer_branch
              %502 = sbr.rel target = $region138
            $region143: #{resnet_block_forward.3} parent=128 // loop_exit
              _
          $region129: #{resnet_block_forward.3} parent=113 // pred_fallthru
            _
        $region114: #{resnet_block_forward.3} parent=109 // pred_fallthru
          _
        // Predicated region
        $region115: #{resnet_block_forward.3} parent=109 // pred_check
          %p413 = pneg %p409
        $region116: #{resnet_block_forward.3} parent=109 // pred_check_branch
          %415 = sbr.rel (%p413) target = $region118
        $region117: #{resnet_block_forward.3} parent=109 // pred_region
          %s416 = sshll.u32 1, 220
          %s417 = ssub.s32 %s416, 1
          loop: start=0, step=1, limit=1
          $region119: #{resnet_block_forward.3} parent=117 // loop_pre_header
            _
          $region120: #{resnet_block_forward.3} parent=117 // loop_header
            %s419 = sphi 0, %s423
            %p420 = scmp.ge.s32.totalorder %s419, 1
            %s424 = sphi %s403, %s403
            %s425 = sphi %s406, %s406
          $region121: #{resnet_block_forward.3} parent=117 // loop_header_branch
            %422 = sbr.rel (%p420) target = $region125
          $region122: #{resnet_block_forward.3} parent=117 // loop_body
            %v426 = vld [vmem:[%s424] sm:%s417]
            %427 = vst [vmem:[%s425] sm:%s417] %v426
          $region123: #{resnet_block_forward.3} parent=117 // loop_footer
            %s423 = sadd.s32 1, %s419
          $region124: #{resnet_block_forward.3} parent=117 // loop_footer_branch
            %418 = sbr.rel target = $region120
          $region125: #{resnet_block_forward.3} parent=117 // loop_exit
            _
        $region118: #{resnet_block_forward.3} parent=109 // pred_fallthru
          _
        // Predicated region
        $region144: #{resnet_block_forward.3} parent=109 // pred_check
          _
        $region145: #{resnet_block_forward.3} parent=109 // pred_check_branch
          %514 = sbr.rel (0) target = $region147
        $region146: #{resnet_block_forward.3} parent=109 // pred_region
          %515 = vsyncadd %s407, 3520
        $region147: #{resnet_block_forward.3} parent=109 // pred_fallthru
          _
        %s516 = sadd.s32 %s397, 24
        %s517 = sshra.s32 %s516, 3
        %s518 = sand.u32 %s516, 7
        %s519 = sadd.s32 %s517, %s400
        %s520 = smul.addr %s519, 4
        %s521 = scalar_lea.vmem %s3, %s520
        %s522 = smul.u32 %s396, 49
        %s523 = smul.addr %s522, 4
        %s524 = scalar_lea.vmem [#allocation3], %s523
        %s525 = scalar_lea.sflag [#allocation5], %s396
        %p527 = scmp.lt.u32.totalorder 196, 8
        %p528 = pneg %p527
        // Predicated region
        $region148: #{resnet_block_forward.3} parent=109 // pred_check
          _
        $region149: #{resnet_block_forward.3} parent=109 // pred_check_branch
          %530 = sbr.rel (%p527) target = $region151
        $region150: #{resnet_block_forward.3} parent=109 // pred_region
          %s546 = sand.u32 196, 7
          %p547 = scmp.eq.s32.totalorder %s546, 0
          %p548 = pneg %p547
          // Predicated region
          $region163: #{resnet_block_forward.3} parent=150 // pred_check
            _
          $region164: #{resnet_block_forward.3} parent=150 // pred_check_branch
            %550 = sbr.rel (%p547) target = $region166
          $region165: #{resnet_block_forward.3} parent=150 // pred_region
            %s551 = sand.u32 196, 7
            %s552 = ssub.s32 196, %s551
            %s553 = scalar_lea.vmem %s521, %s552
            %s554 = ssub.s32 196, %s551
            %s555 = scalar_lea.vmem %s524, %s554 [#allocation3]
            loop: start=0, step=1, limit=1
            $region167: #{resnet_block_forward.3} parent=165 // loop_pre_header
              _
            $region168: #{resnet_block_forward.3} parent=165 // loop_header
              %s557 = sphi 0, %s561
              %p558 = scmp.ge.s32.totalorder %s557, 1
              %s562 = sphi %s521, %s521
              %s563 = sphi %s524, %s524
            $region169: #{resnet_block_forward.3} parent=165 // loop_header_branch
              %560 = sbr.rel (%p558) target = $region173
            $region170: #{resnet_block_forward.3} parent=165 // loop_body
              %v564 = vld [vmem:[%s562] sm:$0xff]
              %565 = vst [vmem:[%s563] sm:$0xff] %v564
              %v566 = vld [vmem:[%s562 + $0x8] sm:$0xff]
              %567 = vst [vmem:[%s563 + $0x8] sm:$0xff] %v566
              %v568 = vld [vmem:[%s562 + $0x10] sm:$0xff]
              %569 = vst [vmem:[%s563 + $0x10] sm:$0xff] %v568
              %v570 = vld [vmem:[%s562 + $0x18] sm:$0xff]
              %571 = vst [vmem:[%s563 + $0x18] sm:$0xff] %v570
              %v572 = vld [vmem:[%s562 + $0x20] sm:$0xff]
              %573 = vst [vmem:[%s563 + $0x20] sm:$0xff] %v572
              %v574 = vld [vmem:[%s562 + $0x28] sm:$0xff]
              %575 = vst [vmem:[%s563 + $0x28] sm:$0xff] %v574
              %v576 = vld [vmem:[%s562 + $0x30] sm:$0xff]
              %577 = vst [vmem:[%s563 + $0x30] sm:$0xff] %v576
              %v578 = vld [vmem:[%s562 + $0x38] sm:$0xff]
              %579 = vst [vmem:[%s563 + $0x38] sm:$0xff] %v578
              %v580 = vld [vmem:[%s562 + $0x40] sm:$0xff]
              %581 = vst [vmem:[%s563 + $0x40] sm:$0xff] %v580
              %v582 = vld [vmem:[%s562 + $0x48] sm:$0xff]
              %583 = vst [vmem:[%s563 + $0x48] sm:$0xff] %v582
              %v584 = vld [vmem:[%s562 + $0x50] sm:$0xff]
              %585 = vst [vmem:[%s563 + $0x50] sm:$0xff] %v584
              %v586 = vld [vmem:[%s562 + $0x58] sm:$0xff]
              %587 = vst [vmem:[%s563 + $0x58] sm:$0xff] %v586
              %v588 = vld [vmem:[%s562 + $0x60] sm:$0xff]
              %589 = vst [vmem:[%s563 + $0x60] sm:$0xff] %v588
              %v590 = vld [vmem:[%s562 + $0x68] sm:$0xff]
              %591 = vst [vmem:[%s563 + $0x68] sm:$0xff] %v590
              %v592 = vld [vmem:[%s562 + $0x70] sm:$0xff]
              %593 = vst [vmem:[%s563 + $0x70] sm:$0xff] %v592
              %v594 = vld [vmem:[%s562 + $0x78] sm:$0xff]
              %595 = vst [vmem:[%s563 + $0x78] sm:$0xff] %v594
              %v596 = vld [vmem:[%s562 + $0x80] sm:$0xff]
              %597 = vst [vmem:[%s563 + $0x80] sm:$0xff] %v596
              %v598 = vld [vmem:[%s562 + $0x88] sm:$0xff]
              %599 = vst [vmem:[%s563 + $0x88] sm:$0xff] %v598
              %v600 = vld [vmem:[%s562 + $0x90] sm:$0xff]
              %601 = vst [vmem:[%s563 + $0x90] sm:$0xff] %v600
              %v602 = vld [vmem:[%s562 + $0x98] sm:$0xff]
              %603 = vst [vmem:[%s563 + $0x98] sm:$0xff] %v602
              %v604 = vld [vmem:[%s562 + $0xa0] sm:$0xff]
              %605 = vst [vmem:[%s563 + $0xa0] sm:$0xff] %v604
              %v606 = vld [vmem:[%s562 + $0xa8] sm:$0xff]
              %607 = vst [vmem:[%s563 + $0xa8] sm:$0xff] %v606
              %v608 = vld [vmem:[%s562 + $0xb0] sm:$0xff]
              %609 = vst [vmem:[%s563 + $0xb0] sm:$0xff] %v608
              %v610 = vld [vmem:[%s562 + $0xb8] sm:$0xff]
              %611 = vst [vmem:[%s563 + $0xb8] sm:$0xff] %v610
            $region171: #{resnet_block_forward.3} parent=165 // loop_footer
              %s561 = sadd.s32 1, %s557
            $region172: #{resnet_block_forward.3} parent=165 // loop_footer_branch
              %556 = sbr.rel target = $region168
            $region173: #{resnet_block_forward.3} parent=165 // loop_exit
              _
            %s612 = sshll.u32 1, %s551
            %s613 = ssub.s32 %s612, 1
            loop: start=0, step=1, limit=1
            $region174: #{resnet_block_forward.3} parent=165 // loop_pre_header
              _
            $region175: #{resnet_block_forward.3} parent=165 // loop_header
              %s615 = sphi 0, %s619
              %p616 = scmp.ge.s32.totalorder %s615, 1
              %s620 = sphi %s553, %s553
              %s621 = sphi %s555, %s555
            $region176: #{resnet_block_forward.3} parent=165 // loop_header_branch
              %618 = sbr.rel (%p616) target = $region180
            $region177: #{resnet_block_forward.3} parent=165 // loop_body
              %v622 = vld [vmem:[%s620] sm:%s613]
              %623 = vst [vmem:[%s621] sm:%s613] %v622
            $region178: #{resnet_block_forward.3} parent=165 // loop_footer
              %s619 = sadd.s32 1, %s615
            $region179: #{resnet_block_forward.3} parent=165 // loop_footer_branch
              %614 = sbr.rel target = $region175
            $region180: #{resnet_block_forward.3} parent=165 // loop_exit
              _
          $region166: #{resnet_block_forward.3} parent=150 // pred_fallthru
            _
        $region151: #{resnet_block_forward.3} parent=109 // pred_fallthru
          _
        // Predicated region
        $region152: #{resnet_block_forward.3} parent=109 // pred_check
          %p531 = pneg %p527
        $region153: #{resnet_block_forward.3} parent=109 // pred_check_branch
          %533 = sbr.rel (%p531) target = $region155
        $region154: #{resnet_block_forward.3} parent=109 // pred_region
          %s534 = sshll.u32 1, 196
          %s535 = ssub.s32 %s534, 1
          loop: start=0, step=1, limit=1
          $region156: #{resnet_block_forward.3} parent=154 // loop_pre_header
            _
          $region157: #{resnet_block_forward.3} parent=154 // loop_header
            %s537 = sphi 0, %s541
            %p538 = scmp.ge.s32.totalorder %s537, 1
            %s542 = sphi %s521, %s521
            %s543 = sphi %s524, %s524
          $region158: #{resnet_block_forward.3} parent=154 // loop_header_branch
            %540 = sbr.rel (%p538) target = $region162
          $region159: #{resnet_block_forward.3} parent=154 // loop_body
            %v544 = vld [vmem:[%s542] sm:%s535]
            %545 = vst [vmem:[%s543] sm:%s535] %v544
          $region160: #{resnet_block_forward.3} parent=154 // loop_footer
            %s541 = sadd.s32 1, %s537
          $region161: #{resnet_block_forward.3} parent=154 // loop_footer_branch
            %536 = sbr.rel target = $region157
          $region162: #{resnet_block_forward.3} parent=154 // loop_exit
            _
        $region155: #{resnet_block_forward.3} parent=109 // pred_fallthru
          _
        // Predicated region
        $region181: #{resnet_block_forward.3} parent=109 // pred_check
          _
        $region182: #{resnet_block_forward.3} parent=109 // pred_check_branch
          %626 = sbr.rel (0) target = $region184
        $region183: #{resnet_block_forward.3} parent=109 // pred_region
          %627 = vsyncadd %s525, 3136
        $region184: #{resnet_block_forward.3} parent=109 // pred_fallthru
          _
      $region110: #{resnet_block_forward.3} parent=27 // pred_fallthru
        _
      %s628 = smul.u32 %s155, 55
      %s629 = smul.addr %s628, 4
      %s630 = scalar_lea.vmem [#allocation2], %s629
      %s631 = scalar_lea.sflag [#allocation4], %s155
      %s632 = smul.u32 4, 55
      %s633 = smul.u32 %s632, 1
      %s634 = sshll.u32 %s633, 4
      %635 = dma.done %s631, %s634
      %v636 = vld [vmem:[%s630] sm:$0xf]
      %v637 = vld [vmem:[%s630 + $0x4] sm:$0xf]
      %v638 = vld [vmem:[%s630 + $0x8] sm:$0xf]
      %v639 = vld [vmem:[%s630 + $0xc] sm:$0xf]
      %v640 = vld [vmem:[%s630 + $0x10] sm:$0xf]
      %v641 = vld [vmem:[%s630 + $0x14] sm:$0xf]
      %v642 = vld [vmem:[%s630 + $0x18] sm:$0xf]
      %v643 = vld [vmem:[%s630 + $0x1c] sm:$0xf]
      %v644 = vld [vmem:[%s630 + $0x20] sm:$0xf]
      %v645 = vld [vmem:[%s630 + $0x24] sm:$0xf]
      %v646 = vld [vmem:[%s630 + $0x28] sm:$0xf]
      %v647 = vld [vmem:[%s630 + $0x2c] sm:$0xf]
      %v648 = vld [vmem:[%s630 + $0x30] sm:$0xf]
      %v649 = vld [vmem:[%s630 + $0x34] sm:$0xf]
      %v650 = vld [vmem:[%s630 + $0x38] sm:$0xf]
      %v651 = vld [vmem:[%s630 + $0x3c] sm:$0xf]
      %v652 = vld [vmem:[%s630 + $0x40] sm:$0xf]
      %v653 = vld [vmem:[%s630 + $0x44] sm:$0xf]
      %v654 = vld [vmem:[%s630 + $0x48] sm:$0xf]
      %v655 = vld [vmem:[%s630 + $0x4c] sm:$0xf]
      %v656 = vld [vmem:[%s630 + $0x50] sm:$0xf]
      %v657 = vld [vmem:[%s630 + $0x54] sm:$0xf]
      %v658 = vld [vmem:[%s630 + $0x58] sm:$0xf]
      %v659 = vld [vmem:[%s630 + $0x5c] sm:$0xf]
      %v660 = vld [vmem:[%s630 + $0x60] sm:$0xf]
      %v661 = vld [vmem:[%s630 + $0x64] sm:$0xf]
      %v662 = vld [vmem:[%s630 + $0x68] sm:$0xf]
      %v663 = vld [vmem:[%s630 + $0x6c] sm:$0xf]
      %v664 = vld [vmem:[%s630 + $0x70] sm:$0xf]
      %v665 = vld [vmem:[%s630 + $0x74] sm:$0xf]
      %v666 = vld [vmem:[%s630 + $0x78] sm:$0xf]
      %v667 = vld [vmem:[%s630 + $0x7c] sm:$0xf]
      %v668 = vld [vmem:[%s630 + $0x80] sm:$0xf]
      %v669 = vld [vmem:[%s630 + $0x84] sm:$0xf]
      %v670 = vld [vmem:[%s630 + $0x88] sm:$0xf]
      %v671 = vld [vmem:[%s630 + $0x8c] sm:$0xf]
      %v672 = vld [vmem:[%s630 + $0x90] sm:$0xf]
      %v673 = vld [vmem:[%s630 + $0x94] sm:$0xf]
      %v674 = vld [vmem:[%s630 + $0x98] sm:$0xf]
      %v675 = vld [vmem:[%s630 + $0x9c] sm:$0xf]
      %v676 = vld [vmem:[%s630 + $0xa0] sm:$0xf]
      %v677 = vld [vmem:[%s630 + $0xa4] sm:$0xf]
      %v678 = vld [vmem:[%s630 + $0xa8] sm:$0xf]
      %v679 = vld [vmem:[%s630 + $0xac] sm:$0xf]
      %v680 = vld [vmem:[%s630 + $0xb0] sm:$0xf]
      %v681 = vld [vmem:[%s630 + $0xb4] sm:$0xf]
      %v682 = vld [vmem:[%s630 + $0xb8] sm:$0xf]
      %v683 = vld [vmem:[%s630 + $0xbc] sm:$0xf]
      %v684 = vld [vmem:[%s1] sm:$0xf]
      %v685 = vld [vmem:[%s1 + $0x4] sm:$0xf]
      %v686 = vld [vmem:[%s1 + $0x8] sm:$0xf]
      %v687 = vld [vmem:[%s1 + $0xc] sm:$0xf]
      %v688 = vld [vmem:[%s1 + $0x10] sm:$0xf]
      %v689 = vld [vmem:[%s1 + $0x14] sm:$0xf]
      %v690 = vld [vmem:[%s1 + $0x18] sm:$0xf]
      %v691 = vld [vmem:[%s1 + $0x1c] sm:$0xf]
      %v692 = vld [vmem:[%s1 + $0x20] sm:$0xf]
      %v693 = vld [vmem:[%s1 + $0x24] sm:$0xf]
      %v694 = vld [vmem:[%s1 + $0x28] sm:$0xf]
      %v695 = vld [vmem:[%s1 + $0x2c] sm:$0xf]
      %v696 = vld [vmem:[%s1 + $0x30] sm:$0xf]
      %v697 = vld [vmem:[%s1 + $0x34] sm:$0xf]
      %v698 = vld [vmem:[%s1 + $0x38] sm:$0xf]
      %v699 = vld [vmem:[%s1 + $0x3c] sm:$0xf]
      %v700 = vld [vmem:[%s630 + $0xc0] sm:$0x1]
      %s701 = scalar_lea.vmem %s1, 64
      %v702 = vld [vmem:[%s701] sm:$0xf]
      %v703 = vld [vmem:[%s701 + $0x4] sm:$0xf]
      %v704 = vld [vmem:[%s701 + $0x8] sm:$0xf]
      %v705 = vld [vmem:[%s701 + $0xc] sm:$0xf]
      %v706 = vld [vmem:[%s701 + $0x10] sm:$0xf]
      %v707 = vld [vmem:[%s701 + $0x14] sm:$0xf]
      %v708 = vld [vmem:[%s701 + $0x18] sm:$0xf]
      %v709 = vld [vmem:[%s701 + $0x1c] sm:$0xf]
      %v710 = vld [vmem:[%s701 + $0x20] sm:$0xf]
      %v711 = vld [vmem:[%s701 + $0x24] sm:$0xf]
      %v712 = vld [vmem:[%s701 + $0x28] sm:$0xf]
      %v713 = vld [vmem:[%s701 + $0x2c] sm:$0xf]
      %v714 = vld [vmem:[%s701 + $0x30] sm:$0xf]
      %v715 = vld [vmem:[%s701 + $0x34] sm:$0xf]
      %v716 = vld [vmem:[%s701 + $0x38] sm:$0xf]
      %v717 = vld [vmem:[%s701 + $0x3c] sm:$0xf]
      %v767 = vunpack.c.l.b16 %v636
      %v768 = vunpack.c.l.b16 %v637
      %v769 = vunpack.c.l.b16 %v638
      %v770 = vunpack.c.l.b16 %v639
      %v771 = vunpack.c.l.b16 %v640
      %v772 = vunpack.c.l.b16 %v641
      %v773 = vunpack.c.l.b16 %v642
      %v774 = vunpack.c.l.b16 %v643
      %v775 = vunpack.c.l.b16 %v644
      %v776 = vunpack.c.l.b16 %v645
      %v777 = vunpack.c.l.b16 %v646
      %v778 = vunpack.c.l.b16 %v647
      %v779 = vunpack.c.l.b16 %v648
      %v780 = vunpack.c.l.b16 %v649
      %v781 = vunpack.c.l.b16 %v650
      %v782 = vunpack.c.l.b16 %v651
      %v783 = vunpack.c.l.b16 %v652
      %v784 = vunpack.c.l.b16 %v653
      %v785 = vunpack.c.l.b16 %v654
      %v786 = vunpack.c.l.b16 %v655
      %v787 = vunpack.c.l.b16 %v656
      %v788 = vunpack.c.l.b16 %v657
      %v789 = vunpack.c.l.b16 %v658
      %v790 = vunpack.c.l.b16 %v659
      %v791 = vunpack.c.l.b16 %v660
      %v792 = vunpack.c.l.b16 %v661
      %v793 = vunpack.c.l.b16 %v662
      %v794 = vunpack.c.l.b16 %v663
      %v795 = vunpack.c.l.b16 %v664
      %v796 = vunpack.c.l.b16 %v665
      %v797 = vunpack.c.l.b16 %v666
      %v798 = vunpack.c.l.b16 %v667
      %v799 = vunpack.c.l.b16 %v668
      %v800 = vunpack.c.l.b16 %v669
      %v801 = vunpack.c.l.b16 %v670
      %v802 = vunpack.c.l.b16 %v671
      %v803 = vunpack.c.l.b16 %v672
      %v804 = vunpack.c.l.b16 %v673
      %v805 = vunpack.c.l.b16 %v674
      %v806 = vunpack.c.l.b16 %v675
      %v807 = vunpack.c.l.b16 %v676
      %v808 = vunpack.c.l.b16 %v677
      %v809 = vunpack.c.l.b16 %v678
      %v810 = vunpack.c.l.b16 %v679
      %v811 = vunpack.c.l.b16 %v680
      %v812 = vunpack.c.l.b16 %v681
      %v813 = vunpack.c.l.b16 %v682
      %v814 = vunpack.c.l.b16 %v683
      %v815 = vunpack.c.l.b16 %v700
      %v816 = vpack.c.b16 %v768, %v767
      %v817 = vpack.c.b16 %v770, %v769
      %v818 = vpack.c.b16 %v772, %v771
      %v819 = vpack.c.b16 %v774, %v773
      %v820 = vpack.c.b16 %v776, %v775
      %v821 = vpack.c.b16 %v778, %v777
      %v822 = vpack.c.b16 %v780, %v779
      %v823 = vpack.c.b16 %v782, %v781
      %v824 = vpack.c.b16 %v784, %v783
      %v825 = vpack.c.b16 %v786, %v785
      %v826 = vpack.c.b16 %v788, %v787
      %v827 = vpack.c.b16 %v790, %v789
      %v828 = vpack.c.b16 %v792, %v791
      %v829 = vpack.c.b16 %v794, %v793
      %v830 = vpack.c.b16 %v796, %v795
      %v831 = vpack.c.b16 %v798, %v797
      %v832 = vpack.c.b16 %v800, %v799
      %v833 = vpack.c.b16 %v802, %v801
      %v834 = vpack.c.b16 %v804, %v803
      %v835 = vpack.c.b16 %v806, %v805
      %v836 = vpack.c.b16 %v808, %v807
      %v837 = vpack.c.b16 %v810, %v809
      %v838 = vpack.c.b16 %v812, %v811
      %v839 = vpack.c.b16 %v814, %v813
      %v840 = vpack.c.b16 %v815, %v815
      %vm841 = vsmask.f32 7424
      %v843 = vshrl.u32 %v816, 16
      %v845 = vshll.u32 %v816, 16
      %v847 = vrot.slane %v845, 1
      %v848 = vor.u32 %v843, %v847
      %v850 = vshll.u32 %v817, 16
      %v852 = vrot.slane %v850, 1
      %v853 = vsel %vm841, %v848, %v852
      %v854 = vshrl.u32 %v817, 16
      %v856 = vor.u32 %v854, %v852
      %v858 = vshll.u32 %v818, 16
      %v860 = vrot.slane %v858, 1
      %v861 = vsel %vm841, %v856, %v860
      %v862 = vshrl.u32 %v818, 16
      %v864 = vor.u32 %v862, %v860
      %v866 = vshll.u32 %v819, 16
      %v868 = vrot.slane %v866, 1
      %v869 = vsel %vm841, %v864, %v868
      %v870 = vshrl.u32 %v819, 16
      %v872 = vor.u32 %v870, %v868
      %v874 = vshll.u32 %v820, 16
      %v876 = vrot.slane %v874, 1
      %v877 = vsel %vm841, %v872, %v876
      %v878 = vshrl.u32 %v820, 16
      %v880 = vor.u32 %v878, %v876
      %v882 = vshll.u32 %v821, 16
      %v884 = vrot.slane %v882, 1
      %v885 = vsel %vm841, %v880, %v884
      %v886 = vshrl.u32 %v821, 16
      %v888 = vor.u32 %v886, %v884
      %v890 = vshll.u32 %v822, 16
      %v892 = vrot.slane %v890, 1
      %v893 = vsel %vm841, %v888, %v892
      %v894 = vshrl.u32 %v822, 16
      %v896 = vor.u32 %v894, %v892
      %v898 = vshll.u32 %v823, 16
      %v900 = vrot.slane %v898, 1
      %v901 = vsel %vm841, %v896, %v900
      %v902 = vshrl.u32 %v823, 16
      %v904 = vor.u32 %v902, %v900
      %v906 = vshll.u32 %v824, 16
      %v908 = vrot.slane %v906, 1
      %v909 = vsel %vm841, %v904, %v908
      %v910 = vshrl.u32 %v824, 16
      %v912 = vor.u32 %v910, %v908
      %v914 = vshll.u32 %v825, 16
      %v916 = vrot.slane %v914, 1
      %v917 = vsel %vm841, %v912, %v916
      %v918 = vshrl.u32 %v825, 16
      %v920 = vor.u32 %v918, %v916
      %v922 = vshll.u32 %v826, 16
      %v924 = vrot.slane %v922, 1
      %v925 = vsel %vm841, %v920, %v924
      %v926 = vshrl.u32 %v826, 16
      %v928 = vor.u32 %v926, %v924
      %v930 = vshll.u32 %v827, 16
      %v932 = vrot.slane %v930, 1
      %v933 = vsel %vm841, %v928, %v932
      %v934 = vshrl.u32 %v827, 16
      %v936 = vor.u32 %v934, %v932
      %v938 = vshll.u32 %v828, 16
      %v940 = vrot.slane %v938, 1
      %v941 = vsel %vm841, %v936, %v940
      %v942 = vshrl.u32 %v828, 16
      %v944 = vor.u32 %v942, %v940
      %v946 = vshll.u32 %v829, 16
      %v948 = vrot.slane %v946, 1
      %v949 = vsel %vm841, %v944, %v948
      %v950 = vshrl.u32 %v829, 16
      %v952 = vor.u32 %v950, %v948
      %v954 = vshll.u32 %v830, 16
      %v956 = vrot.slane %v954, 1
      %v957 = vsel %vm841, %v952, %v956
      %v958 = vshrl.u32 %v830, 16
      %v960 = vor.u32 %v958, %v956
      %v962 = vshll.u32 %v831, 16
      %v964 = vrot.slane %v962, 1
      %v965 = vsel %vm841, %v960, %v964
      %v966 = vshrl.u32 %v831, 16
      %v968 = vor.u32 %v966, %v964
      %v970 = vshll.u32 %v832, 16
      %v972 = vrot.slane %v970, 1
      %v973 = vsel %vm841, %v968, %v972
      %v974 = vshrl.u32 %v832, 16
      %v976 = vor.u32 %v974, %v972
      %v978 = vshll.u32 %v833, 16
      %v980 = vrot.slane %v978, 1
      %v981 = vsel %vm841, %v976, %v980
      %v982 = vshrl.u32 %v833, 16
      %v984 = vor.u32 %v982, %v980
      %v986 = vshll.u32 %v834, 16
      %v988 = vrot.slane %v986, 1
      %v989 = vsel %vm841, %v984, %v988
      %v990 = vshrl.u32 %v834, 16
      %v992 = vor.u32 %v990, %v988
      %v994 = vshll.u32 %v835, 16
      %v996 = vrot.slane %v994, 1
      %v997 = vsel %vm841, %v992, %v996
      %v998 = vshrl.u32 %v835, 16
      %v1000 = vor.u32 %v998, %v996
      %v1002 = vshll.u32 %v836, 16
      %v1004 = vrot.slane %v1002, 1
      %v1005 = vsel %vm841, %v1000, %v1004
      %v1006 = vshrl.u32 %v836, 16
      %v1008 = vor.u32 %v1006, %v1004
      %v1010 = vshll.u32 %v837, 16
      %v1012 = vrot.slane %v1010, 1
      %v1013 = vsel %vm841, %v1008, %v1012
      %v1014 = vshrl.u32 %v837, 16
      %v1016 = vor.u32 %v1014, %v1012
      %v1018 = vshll.u32 %v838, 16
      %v1020 = vrot.slane %v1018, 1
      %v1021 = vsel %vm841, %v1016, %v1020
      %v1022 = vshrl.u32 %v838, 16
      %v1024 = vor.u32 %v1022, %v1020
      %v1026 = vshll.u32 %v839, 16
      %v1028 = vrot.slane %v1026, 1
      %v1029 = vsel %vm841, %v1024, %v1028
      %v1030 = vshrl.u32 %v839, 16
      %v1032 = vor.u32 %v1030, %v1028
      %v1034 = vshll.u32 %v840, 16
      %v1036 = vrot.slane %v1034, 1
      %v1037 = vsel %vm841, %v1032, %v1036
      %v1078 = vunpack.c.l.b16 %v702
      %v1079 = vunpack.c.l.b16 %v703
      %v1080 = vunpack.c.l.b16 %v704
      %v1081 = vunpack.c.l.b16 %v705
      %v1082 = vunpack.c.l.b16 %v706
      %v1083 = vunpack.c.l.b16 %v707
      %v1084 = vunpack.c.l.b16 %v708
      %v1085 = vunpack.c.l.b16 %v709
      %v1086 = vunpack.c.l.b16 %v710
      %v1087 = vunpack.c.l.b16 %v711
      %v1088 = vunpack.c.l.b16 %v712
      %v1089 = vunpack.c.l.b16 %v713
      %v1090 = vunpack.c.l.b16 %v714
      %v1091 = vunpack.c.l.b16 %v715
      %v1092 = vunpack.c.l.b16 %v716
      %v1093 = vunpack.c.l.b16 %v717
      %v1094 = vpack.c.b16 %v1079, %v1078
      %v1095 = vpack.c.b16 %v1081, %v1080
      %v1096 = vpack.c.b16 %v1083, %v1082
      %v1097 = vpack.c.b16 %v1085, %v1084
      %v1098 = vpack.c.b16 %v1087, %v1086
      %v1099 = vpack.c.b16 %v1089, %v1088
      %v1100 = vpack.c.b16 %v1091, %v1090
      %v1101 = vpack.c.b16 %v1093, %v1092
      %1110 = vmatprep.subr.bf16.mxu0 0
      %1111 = vmatpush1.bf16.msra.mxu0 %v1101
      %1112 = vmatprep.subr.bf16.mxu0 0
      %1113 = vmatpush1.bf16.msra.mxu0 %v1100
      %1114 = vmatprep.subr.bf16.mxu0 0
      %1115 = vmatpush1.bf16.msra.mxu0 %v1099
      %1116 = vmatprep.subr.bf16.mxu0 0
      %1117 = vmatpush1.bf16.msra.mxu0 %v1098
      %1118 = vmatprep.subr.bf16.mxu0 0
      %1119 = vmatpush1.bf16.msra.mxu0 %v1097
      %1120 = vmatprep.subr.bf16.mxu0 0
      %1121 = vmatpush1.bf16.msra.mxu0 %v1096
      %1122 = vmatprep.subr.bf16.mxu0 0
      %1123 = vmatpush1.bf16.msra.mxu0 %v1095
      %1124 = vmatprep.subr.bf16.mxu0 0
      %1125 = vmatpush1.bf16.msra.mxu0 %v1094
      %1126 = vmatprep.subr.bf16.mxu0 0
      %1127 = vmatpush2.bf16.msra.mxu0 0
      %1128 = vmatprep.subr.bf16.mxu0 0
      %1129 = vmatpush2.bf16.msra.mxu0 0
      %1130 = vmatprep.subr.bf16.mxu0 0
      %1131 = vmatpush2.bf16.msra.mxu0 0
      %1132 = vmatprep.subr.bf16.mxu0 0
      %1133 = vmatpush2.bf16.msra.mxu0 0
      %1134 = vmatprep.subr.bf16.mxu0 0
      %1135 = vmatpush2.bf16.msra.mxu0 0
      %1136 = vmatprep.subr.bf16.mxu0 0
      %1137 = vmatpush2.bf16.msra.mxu0 0
      %1138 = vmatprep.subr.bf16.mxu0 0
      %1139 = vmatpush2.bf16.msra.mxu0 0
      %1140 = vmatprep.subr.bf16.mxu0 0
      %1141 = vmatpush2.bf16.msra.mxu0 0
      %1142 = vmatprep.mubr.bf16.mxu0 0
      %1143 = vmatmul.mubr.bf16.gmra.mxu0 %v853
      %v1144 = vpop.f32.mrf.mxu0
      %v1145 = vadd.f32 0.0, %v1144
      %v1146 = vpop.f32.mrf.mxu0
      %v1147 = vpop.f32.mrf.mxu0
      %v1148 = vadd.f32 0.0, %v1147
      %v1149 = vpop.f32.mrf.mxu0
      %1150 = vmatprep.mubr.bf16.mxu0 0
      %1151 = vmatmul.mubr.bf16.gmra.mxu0 %v861
      %v1152 = vpop.f32.mrf.mxu0
      %v1153 = vadd.f32 0.0, %v1152
      %v1154 = vpop.f32.mrf.mxu0
      %v1155 = vpop.f32.mrf.mxu0
      %v1156 = vadd.f32 0.0, %v1155
      %v1157 = vpop.f32.mrf.mxu0
      %1158 = vmatprep.mubr.bf16.mxu0 0
      %1159 = vmatmul.mubr.bf16.gmra.mxu0 %v869
      %v1160 = vpop.f32.mrf.mxu0
      %v1161 = vadd.f32 0.0, %v1160
      %v1162 = vpop.f32.mrf.mxu0
      %v1163 = vpop.f32.mrf.mxu0
      %v1164 = vadd.f32 0.0, %v1163
      %v1165 = vpop.f32.mrf.mxu0
      %1166 = vmatprep.mubr.bf16.mxu0 0
      %1167 = vmatmul.mubr.bf16.gmra.mxu0 %v877
      %v1168 = vpop.f32.mrf.mxu0
      %v1169 = vadd.f32 0.0, %v1168
      %v1170 = vpop.f32.mrf.mxu0
      %v1171 = vpop.f32.mrf.mxu0
      %v1172 = vadd.f32 0.0, %v1171
      %v1173 = vpop.f32.mrf.mxu0
      %1174 = vmatprep.mubr.bf16.mxu0 0
      %1175 = vmatmul.mubr.bf16.gmra.mxu0 %v885
      %v1176 = vpop.f32.mrf.mxu0
      %v1177 = vadd.f32 0.0, %v1176
      %v1178 = vpop.f32.mrf.mxu0
      %v1179 = vpop.f32.mrf.mxu0
      %v1180 = vadd.f32 0.0, %v1179
      %v1181 = vpop.f32.mrf.mxu0
      %1182 = vmatprep.mubr.bf16.mxu0 0
      %1183 = vmatmul.mubr.bf16.gmra.mxu0 %v893
      %v1184 = vpop.f32.mrf.mxu0
      %v1185 = vadd.f32 0.0, %v1184
      %v1186 = vpop.f32.mrf.mxu0
      %v1187 = vpop.f32.mrf.mxu0
      %v1188 = vadd.f32 0.0, %v1187
      %v1189 = vpop.f32.mrf.mxu0
      %1190 = vmatprep.mubr.bf16.mxu0 0
      %1191 = vmatmul.mubr.bf16.gmra.mxu0 %v901
      %v1192 = vpop.f32.mrf.mxu0
      %v1193 = vadd.f32 0.0, %v1192
      %v1194 = vpop.f32.mrf.mxu0
      %v1195 = vpop.f32.mrf.mxu0
      %v1196 = vadd.f32 0.0, %v1195
      %v1197 = vpop.f32.mrf.mxu0
      %1198 = vmatprep.mubr.bf16.mxu0 0
      %1199 = vmatmul.mubr.bf16.gmra.mxu0 %v909
      %v1200 = vpop.f32.mrf.mxu0
      %v1201 = vadd.f32 0.0, %v1200
      %v1202 = vpop.f32.mrf.mxu0
      %v1203 = vpop.f32.mrf.mxu0
      %v1204 = vadd.f32 0.0, %v1203
      %v1205 = vpop.f32.mrf.mxu0
      %1206 = vmatprep.mubr.bf16.mxu0 0
      %1207 = vmatmul.mubr.bf16.gmra.mxu0 %v917
      %v1208 = vpop.f32.mrf.mxu0
      %v1209 = vadd.f32 0.0, %v1208
      %v1210 = vpop.f32.mrf.mxu0
      %v1211 = vpop.f32.mrf.mxu0
      %v1212 = vadd.f32 0.0, %v1211
      %v1213 = vpop.f32.mrf.mxu0
      %1214 = vmatprep.mubr.bf16.mxu0 0
      %1215 = vmatmul.mubr.bf16.gmra.mxu0 %v925
      %v1216 = vpop.f32.mrf.mxu0
      %v1217 = vadd.f32 0.0, %v1216
      %v1218 = vpop.f32.mrf.mxu0
      %v1219 = vpop.f32.mrf.mxu0
      %v1220 = vadd.f32 0.0, %v1219
      %v1221 = vpop.f32.mrf.mxu0
      %1222 = vmatprep.mubr.bf16.mxu0 0
      %1223 = vmatmul.mubr.bf16.gmra.mxu0 %v933
      %v1224 = vpop.f32.mrf.mxu0
      %v1225 = vadd.f32 0.0, %v1224
      %v1226 = vpop.f32.mrf.mxu0
      %v1227 = vpop.f32.mrf.mxu0
      %v1228 = vadd.f32 0.0, %v1227
      %v1229 = vpop.f32.mrf.mxu0
      %1230 = vmatprep.mubr.bf16.mxu0 0
      %1231 = vmatmul.mubr.bf16.gmra.mxu0 %v941
      %v1232 = vpop.f32.mrf.mxu0
      %v1233 = vadd.f32 0.0, %v1232
      %v1234 = vpop.f32.mrf.mxu0
      %v1235 = vpop.f32.mrf.mxu0
      %v1236 = vadd.f32 0.0, %v1235
      %v1237 = vpop.f32.mrf.mxu0
      %1238 = vmatprep.mubr.bf16.mxu0 0
      %1239 = vmatmul.mubr.bf16.gmra.mxu0 %v949
      %v1240 = vpop.f32.mrf.mxu0
      %v1241 = vadd.f32 0.0, %v1240
      %v1242 = vpop.f32.mrf.mxu0
      %v1243 = vpop.f32.mrf.mxu0
      %v1244 = vadd.f32 0.0, %v1243
      %v1245 = vpop.f32.mrf.mxu0
      %1246 = vmatprep.mubr.bf16.mxu0 0
      %1247 = vmatmul.mubr.bf16.gmra.mxu0 %v957
      %v1248 = vpop.f32.mrf.mxu0
      %v1249 = vadd.f32 0.0, %v1248
      %v1250 = vpop.f32.mrf.mxu0
      %v1251 = vpop.f32.mrf.mxu0
      %v1252 = vadd.f32 0.0, %v1251
      %v1253 = vpop.f32.mrf.mxu0
      %1254 = vmatprep.mubr.bf16.mxu0 0
      %1255 = vmatmul.mubr.bf16.gmra.mxu0 %v965
      %v1256 = vpop.f32.mrf.mxu0
      %v1257 = vadd.f32 0.0, %v1256
      %v1258 = vpop.f32.mrf.mxu0
      %v1259 = vpop.f32.mrf.mxu0
      %v1260 = vadd.f32 0.0, %v1259
      %v1261 = vpop.f32.mrf.mxu0
      %1262 = vmatprep.mubr.bf16.mxu0 0
      %1263 = vmatmul.mubr.bf16.gmra.mxu0 %v973
      %v1264 = vpop.f32.mrf.mxu0
      %v1265 = vadd.f32 0.0, %v1264
      %v1266 = vpop.f32.mrf.mxu0
      %v1267 = vpop.f32.mrf.mxu0
      %v1268 = vadd.f32 0.0, %v1267
      %v1269 = vpop.f32.mrf.mxu0
      %1270 = vmatprep.mubr.bf16.mxu0 0
      %1271 = vmatmul.mubr.bf16.gmra.mxu0 %v981
      %v1272 = vpop.f32.mrf.mxu0
      %v1273 = vadd.f32 0.0, %v1272
      %v1274 = vpop.f32.mrf.mxu0
      %v1275 = vpop.f32.mrf.mxu0
      %v1276 = vadd.f32 0.0, %v1275
      %v1277 = vpop.f32.mrf.mxu0
      %1278 = vmatprep.mubr.bf16.mxu0 0
      %1279 = vmatmul.mubr.bf16.gmra.mxu0 %v989
      %v1280 = vpop.f32.mrf.mxu0
      %v1281 = vadd.f32 0.0, %v1280
      %v1282 = vpop.f32.mrf.mxu0
      %v1283 = vpop.f32.mrf.mxu0
      %v1284 = vadd.f32 0.0, %v1283
      %v1285 = vpop.f32.mrf.mxu0
      %1286 = vmatprep.mubr.bf16.mxu0 0
      %1287 = vmatmul.mubr.bf16.gmra.mxu0 %v997
      %v1288 = vpop.f32.mrf.mxu0
      %v1289 = vadd.f32 0.0, %v1288
      %v1290 = vpop.f32.mrf.mxu0
      %v1291 = vpop.f32.mrf.mxu0
      %v1292 = vadd.f32 0.0, %v1291
      %v1293 = vpop.f32.mrf.mxu0
      %1294 = vmatprep.mubr.bf16.mxu0 0
      %1295 = vmatmul.mubr.bf16.gmra.mxu0 %v1005
      %v1296 = vpop.f32.mrf.mxu0
      %v1297 = vadd.f32 0.0, %v1296
      %v1298 = vpop.f32.mrf.mxu0
      %v1299 = vpop.f32.mrf.mxu0
      %v1300 = vadd.f32 0.0, %v1299
      %v1301 = vpop.f32.mrf.mxu0
      %1302 = vmatprep.mubr.bf16.mxu0 0
      %1303 = vmatmul.mubr.bf16.gmra.mxu0 %v1013
      %v1304 = vpop.f32.mrf.mxu0
      %v1305 = vadd.f32 0.0, %v1304
      %v1306 = vpop.f32.mrf.mxu0
      %v1307 = vpop.f32.mrf.mxu0
      %v1308 = vadd.f32 0.0, %v1307
      %v1309 = vpop.f32.mrf.mxu0
      %1310 = vmatprep.mubr.bf16.mxu0 0
      %1311 = vmatmul.mubr.bf16.gmra.mxu0 %v1021
      %v1312 = vpop.f32.mrf.mxu0
      %v1313 = vadd.f32 0.0, %v1312
      %v1314 = vpop.f32.mrf.mxu0
      %v1315 = vpop.f32.mrf.mxu0
      %v1316 = vadd.f32 0.0, %v1315
      %v1317 = vpop.f32.mrf.mxu0
      %1318 = vmatprep.mubr.bf16.mxu0 0
      %1319 = vmatmul.mubr.bf16.gmra.mxu0 %v1029
      %v1320 = vpop.f32.mrf.mxu0
      %v1321 = vadd.f32 0.0, %v1320
      %v1322 = vpop.f32.mrf.mxu0
      %v1323 = vpop.f32.mrf.mxu0
      %v1324 = vadd.f32 0.0, %v1323
      %v1325 = vpop.f32.mrf.mxu0
      %1326 = vmatprep.mubr.bf16.mxu0 0
      %1327 = vmatmul.mubr.bf16.gmra.mxu0 %v1037
      %v1328 = vpop.f32.mrf.mxu0
      %v1329 = vadd.f32 0.0, %v1328
      %v1330 = vpop.f32.mrf.mxu0
      %v1331 = vpop.f32.mrf.mxu0
      %v1332 = vadd.f32 0.0, %v1331
      %v1333 = vpop.f32.mrf.mxu0
      %1334 = vdwg.mxu0
      %v1375 = vunpack.c.l.b16 %v684
      %v1376 = vunpack.c.l.b16 %v685
      %v1377 = vunpack.c.l.b16 %v686
      %v1378 = vunpack.c.l.b16 %v687
      %v1379 = vunpack.c.l.b16 %v688
      %v1380 = vunpack.c.l.b16 %v689
      %v1381 = vunpack.c.l.b16 %v690
      %v1382 = vunpack.c.l.b16 %v691
      %v1383 = vunpack.c.l.b16 %v692
      %v1384 = vunpack.c.l.b16 %v693
      %v1385 = vunpack.c.l.b16 %v694
      %v1386 = vunpack.c.l.b16 %v695
      %v1387 = vunpack.c.l.b16 %v696
      %v1388 = vunpack.c.l.b16 %v697
      %v1389 = vunpack.c.l.b16 %v698
      %v1390 = vunpack.c.l.b16 %v699
      %v1391 = vpack.c.b16 %v1376, %v1375
      %v1392 = vpack.c.b16 %v1378, %v1377
      %v1393 = vpack.c.b16 %v1380, %v1379
      %v1394 = vpack.c.b16 %v1382, %v1381
      %v1395 = vpack.c.b16 %v1384, %v1383
      %v1396 = vpack.c.b16 %v1386, %v1385
      %v1397 = vpack.c.b16 %v1388, %v1387
      %v1398 = vpack.c.b16 %v1390, %v1389
      %1407 = vmatprep.subr.bf16.mxu0 0
      %1408 = vmatpush1.bf16.msra.mxu0 %v1398
      %1409 = vmatprep.subr.bf16.mxu0 0
      %1410 = vmatpush1.bf16.msra.mxu0 %v1397
      %1411 = vmatprep.subr.bf16.mxu0 0
      %1412 = vmatpush1.bf16.msra.mxu0 %v1396
      %1413 = vmatprep.subr.bf16.mxu0 0
      %1414 = vmatpush1.bf16.msra.mxu0 %v1395
      %1415 = vmatprep.subr.bf16.mxu0 0
      %1416 = vmatpush1.bf16.msra.mxu0 %v1394
      %1417 = vmatprep.subr.bf16.mxu0 0
      %1418 = vmatpush1.bf16.msra.mxu0 %v1393
      %1419 = vmatprep.subr.bf16.mxu0 0
      %1420 = vmatpush1.bf16.msra.mxu0 %v1392
      %1421 = vmatprep.subr.bf16.mxu0 0
      %1422 = vmatpush1.bf16.msra.mxu0 %v1391
      %1423 = vmatprep.subr.bf16.mxu0 0
      %1424 = vmatpush2.bf16.msra.mxu0 0
      %1425 = vmatprep.subr.bf16.mxu0 0
      %1426 = vmatpush2.bf16.msra.mxu0 0
      %1427 = vmatprep.subr.bf16.mxu0 0
      %1428 = vmatpush2.bf16.msra.mxu0 0
      %1429 = vmatprep.subr.bf16.mxu0 0
      %1430 = vmatpush2.bf16.msra.mxu0 0
      %1431 = vmatprep.subr.bf16.mxu0 0
      %1432 = vmatpush2.bf16.msra.mxu0 0
      %1433 = vmatprep.subr.bf16.mxu0 0
      %1434 = vmatpush2.bf16.msra.mxu0 0
      %1435 = vmatprep.subr.bf16.mxu0 0
      %1436 = vmatpush2.bf16.msra.mxu0 0
      %1437 = vmatprep.subr.bf16.mxu0 0
      %1438 = vmatpush2.bf16.msra.mxu0 0
      %1439 = vmatprep.mubr.bf16.mxu0 0
      %1440 = vmatmul.mubr.bf16.gmra.mxu0 %v816
      %v1441 = vpop.f32.mrf.mxu0
      %v1442 = vadd.f32 %v1145, %v1441
      %v1443 = vpop.f32.mrf.mxu0
      %v1444 = vpop.f32.mrf.mxu0
      %v1445 = vadd.f32 %v1148, %v1444
      %v1446 = vpop.f32.mrf.mxu0
      %1447 = vmatprep.mubr.bf16.mxu0 0
      %1448 = vmatmul.mubr.bf16.gmra.mxu0 %v817
      %v1449 = vpop.f32.mrf.mxu0
      %v1450 = vadd.f32 %v1153, %v1449
      %v1451 = vpop.f32.mrf.mxu0
      %v1452 = vpop.f32.mrf.mxu0
      %v1453 = vadd.f32 %v1156, %v1452
      %v1454 = vpop.f32.mrf.mxu0
      %1455 = vmatprep.mubr.bf16.mxu0 0
      %1456 = vmatmul.mubr.bf16.gmra.mxu0 %v818
      %v1457 = vpop.f32.mrf.mxu0
      %v1458 = vadd.f32 %v1161, %v1457
      %v1459 = vpop.f32.mrf.mxu0
      %v1460 = vpop.f32.mrf.mxu0
      %v1461 = vadd.f32 %v1164, %v1460
      %v1462 = vpop.f32.mrf.mxu0
      %1463 = vmatprep.mubr.bf16.mxu0 0
      %1464 = vmatmul.mubr.bf16.gmra.mxu0 %v819
      %v1465 = vpop.f32.mrf.mxu0
      %v1466 = vadd.f32 %v1169, %v1465
      %v1467 = vpop.f32.mrf.mxu0
      %v1468 = vpop.f32.mrf.mxu0
      %v1469 = vadd.f32 %v1172, %v1468
      %v1470 = vpop.f32.mrf.mxu0
      %1471 = vmatprep.mubr.bf16.mxu0 0
      %1472 = vmatmul.mubr.bf16.gmra.mxu0 %v820
      %v1473 = vpop.f32.mrf.mxu0
      %v1474 = vadd.f32 %v1177, %v1473
      %v1475 = vpop.f32.mrf.mxu0
      %v1476 = vpop.f32.mrf.mxu0
      %v1477 = vadd.f32 %v1180, %v1476
      %v1478 = vpop.f32.mrf.mxu0
      %1479 = vmatprep.mubr.bf16.mxu0 0
      %1480 = vmatmul.mubr.bf16.gmra.mxu0 %v821
      %v1481 = vpop.f32.mrf.mxu0
      %v1482 = vadd.f32 %v1185, %v1481
      %v1483 = vpop.f32.mrf.mxu0
      %v1484 = vpop.f32.mrf.mxu0
      %v1485 = vadd.f32 %v1188, %v1484
      %v1486 = vpop.f32.mrf.mxu0
      %1487 = vmatprep.mubr.bf16.mxu0 0
      %1488 = vmatmul.mubr.bf16.gmra.mxu0 %v822
      %v1489 = vpop.f32.mrf.mxu0
      %v1490 = vadd.f32 %v1193, %v1489
      %v1491 = vpop.f32.mrf.mxu0
      %v1492 = vpop.f32.mrf.mxu0
      %v1493 = vadd.f32 %v1196, %v1492
      %v1494 = vpop.f32.mrf.mxu0
      %1495 = vmatprep.mubr.bf16.mxu0 0
      %1496 = vmatmul.mubr.bf16.gmra.mxu0 %v823
      %v1497 = vpop.f32.mrf.mxu0
      %v1498 = vadd.f32 %v1201, %v1497
      %v1499 = vpop.f32.mrf.mxu0
      %v1500 = vpop.f32.mrf.mxu0
      %v1501 = vadd.f32 %v1204, %v1500
      %v1502 = vpop.f32.mrf.mxu0
      %1503 = vmatprep.mubr.bf16.mxu0 0
      %1504 = vmatmul.mubr.bf16.gmra.mxu0 %v824
      %v1505 = vpop.f32.mrf.mxu0
      %v1506 = vadd.f32 %v1209, %v1505
      %v1507 = vpop.f32.mrf.mxu0
      %v1508 = vpop.f32.mrf.mxu0
      %v1509 = vadd.f32 %v1212, %v1508
      %v1510 = vpop.f32.mrf.mxu0
      %1511 = vmatprep.mubr.bf16.mxu0 0
      %1512 = vmatmul.mubr.bf16.gmra.mxu0 %v825
      %v1513 = vpop.f32.mrf.mxu0
      %v1514 = vadd.f32 %v1217, %v1513
      %v1515 = vpop.f32.mrf.mxu0
      %v1516 = vpop.f32.mrf.mxu0
      %v1517 = vadd.f32 %v1220, %v1516
      %v1518 = vpop.f32.mrf.mxu0
      %1519 = vmatprep.mubr.bf16.mxu0 0
      %1520 = vmatmul.mubr.bf16.gmra.mxu0 %v826
      %v1521 = vpop.f32.mrf.mxu0
      %v1522 = vadd.f32 %v1225, %v1521
      %v1523 = vpop.f32.mrf.mxu0
      %v1524 = vpop.f32.mrf.mxu0
      %v1525 = vadd.f32 %v1228, %v1524
      %v1526 = vpop.f32.mrf.mxu0
      %1527 = vmatprep.mubr.bf16.mxu0 0
      %1528 = vmatmul.mubr.bf16.gmra.mxu0 %v827
      %v1529 = vpop.f32.mrf.mxu0
      %v1530 = vadd.f32 %v1233, %v1529
      %v1531 = vpop.f32.mrf.mxu0
      %v1532 = vpop.f32.mrf.mxu0
      %v1533 = vadd.f32 %v1236, %v1532
      %v1534 = vpop.f32.mrf.mxu0
      %1535 = vmatprep.mubr.bf16.mxu0 0
      %1536 = vmatmul.mubr.bf16.gmra.mxu0 %v828
      %v1537 = vpop.f32.mrf.mxu0
      %v1538 = vadd.f32 %v1241, %v1537
      %v1539 = vpop.f32.mrf.mxu0
      %v1540 = vpop.f32.mrf.mxu0
      %v1541 = vadd.f32 %v1244, %v1540
      %v1542 = vpop.f32.mrf.mxu0
      %1543 = vmatprep.mubr.bf16.mxu0 0
      %1544 = vmatmul.mubr.bf16.gmra.mxu0 %v829
      %v1545 = vpop.f32.mrf.mxu0
      %v1546 = vadd.f32 %v1249, %v1545
      %v1547 = vpop.f32.mrf.mxu0
      %v1548 = vpop.f32.mrf.mxu0
      %v1549 = vadd.f32 %v1252, %v1548
      %v1550 = vpop.f32.mrf.mxu0
      %1551 = vmatprep.mubr.bf16.mxu0 0
      %1552 = vmatmul.mubr.bf16.gmra.mxu0 %v830
      %v1553 = vpop.f32.mrf.mxu0
      %v1554 = vadd.f32 %v1257, %v1553
      %v1555 = vpop.f32.mrf.mxu0
      %v1556 = vpop.f32.mrf.mxu0
      %v1557 = vadd.f32 %v1260, %v1556
      %v1558 = vpop.f32.mrf.mxu0
      %1559 = vmatprep.mubr.bf16.mxu0 0
      %1560 = vmatmul.mubr.bf16.gmra.mxu0 %v831
      %v1561 = vpop.f32.mrf.mxu0
      %v1562 = vadd.f32 %v1265, %v1561
      %v1563 = vpop.f32.mrf.mxu0
      %v1564 = vpop.f32.mrf.mxu0
      %v1565 = vadd.f32 %v1268, %v1564
      %v1566 = vpop.f32.mrf.mxu0
      %1567 = vmatprep.mubr.bf16.mxu0 0
      %1568 = vmatmul.mubr.bf16.gmra.mxu0 %v832
      %v1569 = vpop.f32.mrf.mxu0
      %v1570 = vadd.f32 %v1273, %v1569
      %v1571 = vpop.f32.mrf.mxu0
      %v1572 = vpop.f32.mrf.mxu0
      %v1573 = vadd.f32 %v1276, %v1572
      %v1574 = vpop.f32.mrf.mxu0
      %1575 = vmatprep.mubr.bf16.mxu0 0
      %1576 = vmatmul.mubr.bf16.gmra.mxu0 %v833
      %v1577 = vpop.f32.mrf.mxu0
      %v1578 = vadd.f32 %v1281, %v1577
      %v1579 = vpop.f32.mrf.mxu0
      %v1580 = vpop.f32.mrf.mxu0
      %v1581 = vadd.f32 %v1284, %v1580
      %v1582 = vpop.f32.mrf.mxu0
      %1583 = vmatprep.mubr.bf16.mxu0 0
      %1584 = vmatmul.mubr.bf16.gmra.mxu0 %v834
      %v1585 = vpop.f32.mrf.mxu0
      %v1586 = vadd.f32 %v1289, %v1585
      %v1587 = vpop.f32.mrf.mxu0
      %v1588 = vpop.f32.mrf.mxu0
      %v1589 = vadd.f32 %v1292, %v1588
      %v1590 = vpop.f32.mrf.mxu0
      %1591 = vmatprep.mubr.bf16.mxu0 0
      %1592 = vmatmul.mubr.bf16.gmra.mxu0 %v835
      %v1593 = vpop.f32.mrf.mxu0
      %v1594 = vadd.f32 %v1297, %v1593
      %v1595 = vpop.f32.mrf.mxu0
      %v1596 = vpop.f32.mrf.mxu0
      %v1597 = vadd.f32 %v1300, %v1596
      %v1598 = vpop.f32.mrf.mxu0
      %1599 = vmatprep.mubr.bf16.mxu0 0
      %1600 = vmatmul.mubr.bf16.gmra.mxu0 %v836
      %v1601 = vpop.f32.mrf.mxu0
      %v1602 = vadd.f32 %v1305, %v1601
      %v1603 = vpop.f32.mrf.mxu0
      %v1604 = vpop.f32.mrf.mxu0
      %v1605 = vadd.f32 %v1308, %v1604
      %v1606 = vpop.f32.mrf.mxu0
      %1607 = vmatprep.mubr.bf16.mxu0 0
      %1608 = vmatmul.mubr.bf16.gmra.mxu0 %v837
      %v1609 = vpop.f32.mrf.mxu0
      %v1610 = vadd.f32 %v1313, %v1609
      %v1611 = vpop.f32.mrf.mxu0
      %v1612 = vpop.f32.mrf.mxu0
      %v1613 = vadd.f32 %v1316, %v1612
      %v1614 = vpop.f32.mrf.mxu0
      %1615 = vmatprep.mubr.bf16.mxu0 0
      %1616 = vmatmul.mubr.bf16.gmra.mxu0 %v838
      %v1617 = vpop.f32.mrf.mxu0
      %v1618 = vadd.f32 %v1321, %v1617
      %v1619 = vpop.f32.mrf.mxu0
      %v1620 = vpop.f32.mrf.mxu0
      %v1621 = vadd.f32 %v1324, %v1620
      %v1622 = vpop.f32.mrf.mxu0
      %1623 = vmatprep.mubr.bf16.mxu0 0
      %1624 = vmatmul.mubr.bf16.gmra.mxu0 %v839
      %v1625 = vpop.f32.mrf.mxu0
      %v1626 = vadd.f32 %v1329, %v1625
      %v1627 = vpop.f32.mrf.mxu0
      %v1628 = vpop.f32.mrf.mxu0
      %v1629 = vadd.f32 %v1332, %v1628
      %v1630 = vpop.f32.mrf.mxu0
      %1631 = vdwg.mxu0
      %v1632 = vld [vmem:[%s630] sm:$0xe]
      %s1633 = scalar_lea.vmem %s1, 128
      %v1634 = vld [vmem:[%s1633] sm:$0xf]
      %v1635 = vld [vmem:[%s1633 + $0x4] sm:$0xf]
      %v1636 = vld [vmem:[%s1633 + $0x8] sm:$0xf]
      %v1637 = vld [vmem:[%s1633 + $0xc] sm:$0xf]
      %v1638 = vld [vmem:[%s1633 + $0x10] sm:$0xf]
      %v1639 = vld [vmem:[%s1633 + $0x14] sm:$0xf]
      %v1640 = vld [vmem:[%s1633 + $0x18] sm:$0xf]
      %v1641 = vld [vmem:[%s1633 + $0x1c] sm:$0xf]
      %v1642 = vld [vmem:[%s1633 + $0x20] sm:$0xf]
      %v1643 = vld [vmem:[%s1633 + $0x24] sm:$0xf]
      %v1644 = vld [vmem:[%s1633 + $0x28] sm:$0xf]
      %v1645 = vld [vmem:[%s1633 + $0x2c] sm:$0xf]
      %v1646 = vld [vmem:[%s1633 + $0x30] sm:$0xf]
      %v1647 = vld [vmem:[%s1633 + $0x34] sm:$0xf]
      %v1648 = vld [vmem:[%s1633 + $0x38] sm:$0xf]
      %v1649 = vld [vmem:[%s1633 + $0x3c] sm:$0xf]
      %v1651 = vunpack.c.l.b16 %v1632
      %v1652 = vpack.c.b16 %v768, %v1651
      %vm1653 = vcmask 1046528
      %v1654 = vrot.slane %v1652, 1
      %v1655 = vrot.slane %v817, 1
      %v1656 = vsel %vm1653, %v1654, %v1655
      %v1657 = vrot.slane %v818, 1
      %v1658 = vsel %vm1653, %v1655, %v1657
      %v1659 = vrot.slane %v819, 1
      %v1660 = vsel %vm1653, %v1657, %v1659
      %v1661 = vrot.slane %v820, 1
      %v1662 = vsel %vm1653, %v1659, %v1661
      %v1663 = vrot.slane %v821, 1
      %v1664 = vsel %vm1653, %v1661, %v1663
      %v1665 = vrot.slane %v822, 1
      %v1666 = vsel %vm1653, %v1663, %v1665
      %v1667 = vrot.slane %v823, 1
      %v1668 = vsel %vm1653, %v1665, %v1667
      %v1669 = vrot.slane %v824, 1
      %v1670 = vsel %vm1653, %v1667, %v1669
      %v1671 = vrot.slane %v825, 1
      %v1672 = vsel %vm1653, %v1669, %v1671
      %v1673 = vrot.slane %v826, 1
      %v1674 = vsel %vm1653, %v1671, %v1673
      %v1675 = vrot.slane %v827, 1
      %v1676 = vsel %vm1653, %v1673, %v1675
      %v1677 = vrot.slane %v828, 1
      %v1678 = vsel %vm1653, %v1675, %v1677
      %v1679 = vrot.slane %v829, 1
      %v1680 = vsel %vm1653, %v1677, %v1679
      %v1681 = vrot.slane %v830, 1
      %v1682 = vsel %vm1653, %v1679, %v1681
      %v1683 = vrot.slane %v831, 1
      %v1684 = vsel %vm1653, %v1681, %v1683
      %v1685 = vrot.slane %v832, 1
      %v1686 = vsel %vm1653, %v1683, %v1685
      %v1687 = vrot.slane %v833, 1
      %v1688 = vsel %vm1653, %v1685, %v1687
      %v1689 = vrot.slane %v834, 1
      %v1690 = vsel %vm1653, %v1687, %v1689
      %v1691 = vrot.slane %v835, 1
      %v1692 = vsel %vm1653, %v1689, %v1691
      %v1693 = vrot.slane %v836, 1
      %v1694 = vsel %vm1653, %v1691, %v1693
      %v1695 = vrot.slane %v837, 1
      %v1696 = vsel %vm1653, %v1693, %v1695
      %v1697 = vrot.slane %v838, 1
      %v1698 = vsel %vm1653, %v1695, %v1697
      %v1699 = vrot.slane %v839, 1
      %v1700 = vsel %vm1653, %v1697, %v1699
      %v1701 = vrot.slane %v840, 1
      %v1702 = vsel %vm1653, %v1699, %v1701
      %v1743 = vunpack.c.l.b16 %v1634
      %v1744 = vunpack.c.l.b16 %v1635
      %v1745 = vunpack.c.l.b16 %v1636
      %v1746 = vunpack.c.l.b16 %v1637
      %v1747 = vunpack.c.l.b16 %v1638
      %v1748 = vunpack.c.l.b16 %v1639
      %v1749 = vunpack.c.l.b16 %v1640
      %v1750 = vunpack.c.l.b16 %v1641
      %v1751 = vunpack.c.l.b16 %v1642
      %v1752 = vunpack.c.l.b16 %v1643
      %v1753 = vunpack.c.l.b16 %v1644
      %v1754 = vunpack.c.l.b16 %v1645
      %v1755 = vunpack.c.l.b16 %v1646
      %v1756 = vunpack.c.l.b16 %v1647
      %v1757 = vunpack.c.l.b16 %v1648
      %v1758 = vunpack.c.l.b16 %v1649
      %v1759 = vpack.c.b16 %v1744, %v1743
      %v1760 = vpack.c.b16 %v1746, %v1745
      %v1761 = vpack.c.b16 %v1748, %v1747
      %v1762 = vpack.c.b16 %v1750, %v1749
      %v1763 = vpack.c.b16 %v1752, %v1751
      %v1764 = vpack.c.b16 %v1754, %v1753
      %v1765 = vpack.c.b16 %v1756, %v1755
      %v1766 = vpack.c.b16 %v1758, %v1757
      %1775 = vmatprep.subr.bf16.mxu0 0
      %1776 = vmatpush1.bf16.msra.mxu0 %v1766
      %1777 = vmatprep.subr.bf16.mxu0 0
      %1778 = vmatpush1.bf16.msra.mxu0 %v1765
      %1779 = vmatprep.subr.bf16.mxu0 0
      %1780 = vmatpush1.bf16.msra.mxu0 %v1764
      %1781 = vmatprep.subr.bf16.mxu0 0
      %1782 = vmatpush1.bf16.msra.mxu0 %v1763
      %1783 = vmatprep.subr.bf16.mxu0 0
      %1784 = vmatpush1.bf16.msra.mxu0 %v1762
      %1785 = vmatprep.subr.bf16.mxu0 0
      %1786 = vmatpush1.bf16.msra.mxu0 %v1761
      %1787 = vmatprep.subr.bf16.mxu0 0
      %1788 = vmatpush1.bf16.msra.mxu0 %v1760
      %1789 = vmatprep.subr.bf16.mxu0 0
      %1790 = vmatpush1.bf16.msra.mxu0 %v1759
      %1791 = vmatprep.subr.bf16.mxu0 0
      %1792 = vmatpush2.bf16.msra.mxu0 0
      %1793 = vmatprep.subr.bf16.mxu0 0
      %1794 = vmatpush2.bf16.msra.mxu0 0
      %1795 = vmatprep.subr.bf16.mxu0 0
      %1796 = vmatpush2.bf16.msra.mxu0 0
      %1797 = vmatprep.subr.bf16.mxu0 0
      %1798 = vmatpush2.bf16.msra.mxu0 0
      %1799 = vmatprep.subr.bf16.mxu0 0
      %1800 = vmatpush2.bf16.msra.mxu0 0
      %1801 = vmatprep.subr.bf16.mxu0 0
      %1802 = vmatpush2.bf16.msra.mxu0 0
      %1803 = vmatprep.subr.bf16.mxu0 0
      %1804 = vmatpush2.bf16.msra.mxu0 0
      %1805 = vmatprep.subr.bf16.mxu0 0
      %1806 = vmatpush2.bf16.msra.mxu0 0
      %1807 = vmatprep.mubr.bf16.mxu0 0
      %1808 = vmatmul.mubr.bf16.gmra.mxu0 %v1656
      %v1809 = vpop.f32.mrf.mxu0
      %v1810 = vadd.f32 0.0, %v1809
      %v1811 = vpop.f32.mrf.mxu0
      %v1812 = vpop.f32.mrf.mxu0
      %v1813 = vadd.f32 0.0, %v1812
      %v1814 = vpop.f32.mrf.mxu0
      %1815 = vmatprep.mubr.bf16.mxu0 0
      %1816 = vmatmul.mubr.bf16.gmra.mxu0 %v1658
      %v1817 = vpop.f32.mrf.mxu0
      %v1818 = vadd.f32 0.0, %v1817
      %v1819 = vpop.f32.mrf.mxu0
      %v1820 = vpop.f32.mrf.mxu0
      %v1821 = vadd.f32 0.0, %v1820
      %v1822 = vpop.f32.mrf.mxu0
      %1823 = vmatprep.mubr.bf16.mxu0 0
      %1824 = vmatmul.mubr.bf16.gmra.mxu0 %v1660
      %v1825 = vpop.f32.mrf.mxu0
      %v1826 = vadd.f32 0.0, %v1825
      %v1827 = vpop.f32.mrf.mxu0
      %v1828 = vpop.f32.mrf.mxu0
      %v1829 = vadd.f32 0.0, %v1828
      %v1830 = vpop.f32.mrf.mxu0
      %1831 = vmatprep.mubr.bf16.mxu0 0
      %1832 = vmatmul.mubr.bf16.gmra.mxu0 %v1662
      %v1833 = vpop.f32.mrf.mxu0
      %v1834 = vadd.f32 0.0, %v1833
      %v1835 = vpop.f32.mrf.mxu0
      %v1836 = vpop.f32.mrf.mxu0
      %v1837 = vadd.f32 0.0, %v1836
      %v1838 = vpop.f32.mrf.mxu0
      %1839 = vmatprep.mubr.bf16.mxu0 0
      %1840 = vmatmul.mubr.bf16.gmra.mxu0 %v1664
      %v1841 = vpop.f32.mrf.mxu0
      %v1842 = vadd.f32 0.0, %v1841
      %v1843 = vpop.f32.mrf.mxu0
      %v1844 = vpop.f32.mrf.mxu0
      %v1845 = vadd.f32 0.0, %v1844
      %v1846 = vpop.f32.mrf.mxu0
      %1847 = vmatprep.mubr.bf16.mxu0 0
      %1848 = vmatmul.mubr.bf16.gmra.mxu0 %v1666
      %v1849 = vpop.f32.mrf.mxu0
      %v1850 = vadd.f32 0.0, %v1849
      %v1851 = vpop.f32.mrf.mxu0
      %v1852 = vpop.f32.mrf.mxu0
      %v1853 = vadd.f32 0.0, %v1852
      %v1854 = vpop.f32.mrf.mxu0
      %1855 = vmatprep.mubr.bf16.mxu0 0
      %1856 = vmatmul.mubr.bf16.gmra.mxu0 %v1668
      %v1857 = vpop.f32.mrf.mxu0
      %v1858 = vadd.f32 0.0, %v1857
      %v1859 = vpop.f32.mrf.mxu0
      %v1860 = vpop.f32.mrf.mxu0
      %v1861 = vadd.f32 0.0, %v1860
      %v1862 = vpop.f32.mrf.mxu0
      %1863 = vmatprep.mubr.bf16.mxu0 0
      %1864 = vmatmul.mubr.bf16.gmra.mxu0 %v1670
      %v1865 = vpop.f32.mrf.mxu0
      %v1866 = vadd.f32 0.0, %v1865
      %v1867 = vpop.f32.mrf.mxu0
      %v1868 = vpop.f32.mrf.mxu0
      %v1869 = vadd.f32 0.0, %v1868
      %v1870 = vpop.f32.mrf.mxu0
      %1871 = vmatprep.mubr.bf16.mxu0 0
      %1872 = vmatmul.mubr.bf16.gmra.mxu0 %v1672
      %v1873 = vpop.f32.mrf.mxu0
      %v1874 = vadd.f32 0.0, %v1873
      %v1875 = vpop.f32.mrf.mxu0
      %v1876 = vpop.f32.mrf.mxu0
      %v1877 = vadd.f32 0.0, %v1876
      %v1878 = vpop.f32.mrf.mxu0
      %1879 = vmatprep.mubr.bf16.mxu0 0
      %1880 = vmatmul.mubr.bf16.gmra.mxu0 %v1674
      %v1881 = vpop.f32.mrf.mxu0
      %v1882 = vadd.f32 0.0, %v1881
      %v1883 = vpop.f32.mrf.mxu0
      %v1884 = vpop.f32.mrf.mxu0
      %v1885 = vadd.f32 0.0, %v1884
      %v1886 = vpop.f32.mrf.mxu0
      %1887 = vmatprep.mubr.bf16.mxu0 0
      %1888 = vmatmul.mubr.bf16.gmra.mxu0 %v1676
      %v1889 = vpop.f32.mrf.mxu0
      %v1890 = vadd.f32 0.0, %v1889
      %v1891 = vpop.f32.mrf.mxu0
      %v1892 = vpop.f32.mrf.mxu0
      %v1893 = vadd.f32 0.0, %v1892
      %v1894 = vpop.f32.mrf.mxu0
      %1895 = vmatprep.mubr.bf16.mxu0 0
      %1896 = vmatmul.mubr.bf16.gmra.mxu0 %v1678
      %v1897 = vpop.f32.mrf.mxu0
      %v1898 = vadd.f32 0.0, %v1897
      %v1899 = vpop.f32.mrf.mxu0
      %v1900 = vpop.f32.mrf.mxu0
      %v1901 = vadd.f32 0.0, %v1900
      %v1902 = vpop.f32.mrf.mxu0
      %1903 = vmatprep.mubr.bf16.mxu0 0
      %1904 = vmatmul.mubr.bf16.gmra.mxu0 %v1680
      %v1905 = vpop.f32.mrf.mxu0
      %v1906 = vadd.f32 0.0, %v1905
      %v1907 = vpop.f32.mrf.mxu0
      %v1908 = vpop.f32.mrf.mxu0
      %v1909 = vadd.f32 0.0, %v1908
      %v1910 = vpop.f32.mrf.mxu0
      %1911 = vmatprep.mubr.bf16.mxu0 0
      %1912 = vmatmul.mubr.bf16.gmra.mxu0 %v1682
      %v1913 = vpop.f32.mrf.mxu0
      %v1914 = vadd.f32 0.0, %v1913
      %v1915 = vpop.f32.mrf.mxu0
      %v1916 = vpop.f32.mrf.mxu0
      %v1917 = vadd.f32 0.0, %v1916
      %v1918 = vpop.f32.mrf.mxu0
      %1919 = vmatprep.mubr.bf16.mxu0 0
      %1920 = vmatmul.mubr.bf16.gmra.mxu0 %v1684
      %v1921 = vpop.f32.mrf.mxu0
      %v1922 = vadd.f32 0.0, %v1921
      %v1923 = vpop.f32.mrf.mxu0
      %v1924 = vpop.f32.mrf.mxu0
      %v1925 = vadd.f32 0.0, %v1924
      %v1926 = vpop.f32.mrf.mxu0
      %1927 = vmatprep.mubr.bf16.mxu0 0
      %1928 = vmatmul.mubr.bf16.gmra.mxu0 %v1686
      %v1929 = vpop.f32.mrf.mxu0
      %v1930 = vadd.f32 0.0, %v1929
      %v1931 = vpop.f32.mrf.mxu0
      %v1932 = vpop.f32.mrf.mxu0
      %v1933 = vadd.f32 0.0, %v1932
      %v1934 = vpop.f32.mrf.mxu0
      %1935 = vmatprep.mubr.bf16.mxu0 0
      %1936 = vmatmul.mubr.bf16.gmra.mxu0 %v1688
      %v1937 = vpop.f32.mrf.mxu0
      %v1938 = vadd.f32 0.0, %v1937
      %v1939 = vpop.f32.mrf.mxu0
      %v1940 = vpop.f32.mrf.mxu0
      %v1941 = vadd.f32 0.0, %v1940
      %v1942 = vpop.f32.mrf.mxu0
      %1943 = vmatprep.mubr.bf16.mxu0 0
      %1944 = vmatmul.mubr.bf16.gmra.mxu0 %v1690
      %v1945 = vpop.f32.mrf.mxu0
      %v1946 = vadd.f32 0.0, %v1945
      %v1947 = vpop.f32.mrf.mxu0
      %v1948 = vpop.f32.mrf.mxu0
      %v1949 = vadd.f32 0.0, %v1948
      %v1950 = vpop.f32.mrf.mxu0
      %1951 = vmatprep.mubr.bf16.mxu0 0
      %1952 = vmatmul.mubr.bf16.gmra.mxu0 %v1692
      %v1953 = vpop.f32.mrf.mxu0
      %v1954 = vadd.f32 0.0, %v1953
      %v1955 = vpop.f32.mrf.mxu0
      %v1956 = vpop.f32.mrf.mxu0
      %v1957 = vadd.f32 0.0, %v1956
      %v1958 = vpop.f32.mrf.mxu0
      %1959 = vmatprep.mubr.bf16.mxu0 0
      %1960 = vmatmul.mubr.bf16.gmra.mxu0 %v1694
      %v1961 = vpop.f32.mrf.mxu0
      %v1962 = vadd.f32 0.0, %v1961
      %v1963 = vpop.f32.mrf.mxu0
      %v1964 = vpop.f32.mrf.mxu0
      %v1965 = vadd.f32 0.0, %v1964
      %v1966 = vpop.f32.mrf.mxu0
      %1967 = vmatprep.mubr.bf16.mxu0 0
      %1968 = vmatmul.mubr.bf16.gmra.mxu0 %v1696
      %v1969 = vpop.f32.mrf.mxu0
      %v1970 = vadd.f32 0.0, %v1969
      %v1971 = vpop.f32.mrf.mxu0
      %v1972 = vpop.f32.mrf.mxu0
      %v1973 = vadd.f32 0.0, %v1972
      %v1974 = vpop.f32.mrf.mxu0
      %1975 = vmatprep.mubr.bf16.mxu0 0
      %1976 = vmatmul.mubr.bf16.gmra.mxu0 %v1698
      %v1977 = vpop.f32.mrf.mxu0
      %v1978 = vadd.f32 0.0, %v1977
      %v1979 = vpop.f32.mrf.mxu0
      %v1980 = vpop.f32.mrf.mxu0
      %v1981 = vadd.f32 0.0, %v1980
      %v1982 = vpop.f32.mrf.mxu0
      %1983 = vmatprep.mubr.bf16.mxu0 0
      %1984 = vmatmul.mubr.bf16.gmra.mxu0 %v1700
      %v1985 = vpop.f32.mrf.mxu0
      %v1986 = vadd.f32 0.0, %v1985
      %v1987 = vpop.f32.mrf.mxu0
      %v1988 = vpop.f32.mrf.mxu0
      %v1989 = vadd.f32 0.0, %v1988
      %v1990 = vpop.f32.mrf.mxu0
      %1991 = vmatprep.mubr.bf16.mxu0 0
      %1992 = vmatmul.mubr.bf16.gmra.mxu0 %v1702
      %v1993 = vpop.f32.mrf.mxu0
      %v1994 = vadd.f32 0.0, %v1993
      %v1995 = vpop.f32.mrf.mxu0
      %v1996 = vpop.f32.mrf.mxu0
      %v1997 = vadd.f32 0.0, %v1996
      %v1998 = vpop.f32.mrf.mxu0
      %1999 = vdwg.mxu0
      %v2000 = vadd.f32 %v1442, %v1810
      %v2001 = vadd.f32 %v1445, %v1813
      %v2002 = vadd.f32 %v1450, %v1818
      %v2003 = vadd.f32 %v1453, %v1821
      %v2004 = vadd.f32 %v1458, %v1826
      %v2005 = vadd.f32 %v1461, %v1829
      %v2006 = vadd.f32 %v1466, %v1834
      %v2007 = vadd.f32 %v1469, %v1837
      %v2008 = vadd.f32 %v1474, %v1842
      %v2009 = vadd.f32 %v1477, %v1845
      %v2010 = vadd.f32 %v1482, %v1850
      %v2011 = vadd.f32 %v1485, %v1853
      %v2012 = vadd.f32 %v1490, %v1858
      %v2013 = vadd.f32 %v1493, %v1861
      %v2014 = vadd.f32 %v1498, %v1866
      %v2015 = vadd.f32 %v1501, %v1869
      %v2016 = vadd.f32 %v1506, %v1874
      %v2017 = vadd.f32 %v1509, %v1877
      %v2018 = vadd.f32 %v1514, %v1882
      %v2019 = vadd.f32 %v1517, %v1885
      %v2020 = vadd.f32 %v1522, %v1890
      %v2021 = vadd.f32 %v1525, %v1893
      %v2022 = vadd.f32 %v1530, %v1898
      %v2023 = vadd.f32 %v1533, %v1901
      %v2024 = vadd.f32 %v1538, %v1906
      %v2025 = vadd.f32 %v1541, %v1909
      %v2026 = vadd.f32 %v1546, %v1914
      %v2027 = vadd.f32 %v1549, %v1917
      %v2028 = vadd.f32 %v1554, %v1922
      %v2029 = vadd.f32 %v1557, %v1925
      %v2030 = vadd.f32 %v1562, %v1930
      %v2031 = vadd.f32 %v1565, %v1933
      %v2032 = vadd.f32 %v1570, %v1938
      %v2033 = vadd.f32 %v1573, %v1941
      %v2034 = vadd.f32 %v1578, %v1946
      %v2035 = vadd.f32 %v1581, %v1949
      %v2036 = vadd.f32 %v1586, %v1954
      %v2037 = vadd.f32 %v1589, %v1957
      %v2038 = vadd.f32 %v1594, %v1962
      %v2039 = vadd.f32 %v1597, %v1965
      %v2040 = vadd.f32 %v1602, %v1970
      %v2041 = vadd.f32 %v1605, %v1973
      %v2042 = vadd.f32 %v1610, %v1978
      %v2043 = vadd.f32 %v1613, %v1981
      %v2044 = vadd.f32 %v1618, %v1986
      %v2045 = vadd.f32 %v1621, %v1989
      %v2046 = vadd.f32 %v1626, %v1994
      %v2047 = vadd.f32 %v1629, %v1997
      %v2048 = vld [vmem:[%s630 + $0xc] sm:$0xf]
      %v2049 = vld [vmem:[%s630 + $0x10] sm:$0xf]
      %v2050 = vld [vmem:[%s630 + $0x14] sm:$0xf]
      %v2051 = vld [vmem:[%s630 + $0x18] sm:$0xf]
      %v2052 = vld [vmem:[%s630 + $0x1c] sm:$0xf]
      %v2053 = vld [vmem:[%s630 + $0x20] sm:$0xf]
      %v2054 = vld [vmem:[%s630 + $0x24] sm:$0xf]
      %v2055 = vld [vmem:[%s630 + $0x28] sm:$0xf]
      %v2056 = vld [vmem:[%s630 + $0x2c] sm:$0xf]
      %v2057 = vld [vmem:[%s630 + $0x30] sm:$0xf]
      %v2058 = vld [vmem:[%s630 + $0x34] sm:$0xf]
      %v2059 = vld [vmem:[%s630 + $0x38] sm:$0xf]
      %v2060 = vld [vmem:[%s630 + $0x3c] sm:$0xf]
      %v2061 = vld [vmem:[%s630 + $0x40] sm:$0xf]
      %v2062 = vld [vmem:[%s630 + $0x44] sm:$0xf]
      %v2063 = vld [vmem:[%s630 + $0x48] sm:$0xf]
      %v2064 = vld [vmem:[%s630 + $0x4c] sm:$0xf]
      %v2065 = vld [vmem:[%s630 + $0x50] sm:$0xf]
      %v2066 = vld [vmem:[%s630 + $0x54] sm:$0xf]
      %v2067 = vld [vmem:[%s630 + $0x58] sm:$0xf]
      %v2068 = vld [vmem:[%s630 + $0x5c] sm:$0xf]
      %v2069 = vld [vmem:[%s630 + $0x60] sm:$0xf]
      %v2070 = vld [vmem:[%s630 + $0x64] sm:$0xf]
      %v2071 = vld [vmem:[%s630 + $0x68] sm:$0xf]
      %v2072 = vld [vmem:[%s630 + $0x6c] sm:$0xf]
      %v2073 = vld [vmem:[%s630 + $0x70] sm:$0xf]
      %v2074 = vld [vmem:[%s630 + $0x74] sm:$0xf]
      %v2075 = vld [vmem:[%s630 + $0x78] sm:$0xf]
      %v2076 = vld [vmem:[%s630 + $0x7c] sm:$0xf]
      %v2077 = vld [vmem:[%s630 + $0x80] sm:$0xf]
      %v2078 = vld [vmem:[%s630 + $0x84] sm:$0xf]
      %v2079 = vld [vmem:[%s630 + $0x88] sm:$0xf]
      %v2080 = vld [vmem:[%s630 + $0x8c] sm:$0xf]
      %v2081 = vld [vmem:[%s630 + $0x90] sm:$0xf]
      %v2082 = vld [vmem:[%s630 + $0x94] sm:$0xf]
      %v2083 = vld [vmem:[%s630 + $0x98] sm:$0xf]
      %v2084 = vld [vmem:[%s630 + $0x9c] sm:$0xf]
      %v2085 = vld [vmem:[%s630 + $0xa0] sm:$0xf]
      %v2086 = vld [vmem:[%s630 + $0xa4] sm:$0xf]
      %v2087 = vld [vmem:[%s630 + $0xa8] sm:$0xf]
      %v2088 = vld [vmem:[%s630 + $0xac] sm:$0xf]
      %v2089 = vld [vmem:[%s630 + $0xb0] sm:$0xf]
      %v2090 = vld [vmem:[%s630 + $0xb4] sm:$0xf]
      %v2091 = vld [vmem:[%s630 + $0xb8] sm:$0xf]
      %v2092 = vld [vmem:[%s630 + $0xbc] sm:$0xf]
      %v2093 = vld [vmem:[%s630 + $0xc0] sm:$0xf]
      %v2094 = vld [vmem:[%s630 + $0xc4] sm:$0xf]
      %v2095 = vld [vmem:[%s630 + $0xc8] sm:$0xf]
      %s2096 = scalar_lea.vmem %s1, 192
      %v2097 = vld [vmem:[%s2096] sm:$0xf]
      %v2098 = vld [vmem:[%s2096 + $0x4] sm:$0xf]
      %v2099 = vld [vmem:[%s2096 + $0x8] sm:$0xf]
      %v2100 = vld [vmem:[%s2096 + $0xc] sm:$0xf]
      %v2101 = vld [vmem:[%s2096 + $0x10] sm:$0xf]
      %v2102 = vld [vmem:[%s2096 + $0x14] sm:$0xf]
      %v2103 = vld [vmem:[%s2096 + $0x18] sm:$0xf]
      %v2104 = vld [vmem:[%s2096 + $0x1c] sm:$0xf]
      %v2105 = vld [vmem:[%s2096 + $0x20] sm:$0xf]
      %v2106 = vld [vmem:[%s2096 + $0x24] sm:$0xf]
      %v2107 = vld [vmem:[%s2096 + $0x28] sm:$0xf]
      %v2108 = vld [vmem:[%s2096 + $0x2c] sm:$0xf]
      %v2109 = vld [vmem:[%s2096 + $0x30] sm:$0xf]
      %v2110 = vld [vmem:[%s2096 + $0x34] sm:$0xf]
      %v2111 = vld [vmem:[%s2096 + $0x38] sm:$0xf]
      %v2112 = vld [vmem:[%s2096 + $0x3c] sm:$0xf]
      %v2161 = vunpack.c.l.b16 %v2048
      %v2162 = vunpack.c.l.b16 %v2049
      %v2163 = vunpack.c.l.b16 %v2050
      %v2164 = vunpack.c.l.b16 %v2051
      %v2165 = vunpack.c.l.b16 %v2052
      %v2166 = vunpack.c.l.b16 %v2053
      %v2167 = vunpack.c.l.b16 %v2054
      %v2168 = vunpack.c.l.b16 %v2055
      %v2169 = vunpack.c.l.b16 %v2056
      %v2170 = vunpack.c.l.b16 %v2057
      %v2171 = vunpack.c.l.b16 %v2058
      %v2172 = vunpack.c.l.b16 %v2059
      %v2173 = vunpack.c.l.b16 %v2060
      %v2174 = vunpack.c.l.b16 %v2061
      %v2175 = vunpack.c.l.b16 %v2062
      %v2176 = vunpack.c.l.b16 %v2063
      %v2177 = vunpack.c.l.b16 %v2064
      %v2178 = vunpack.c.l.b16 %v2065
      %v2179 = vunpack.c.l.b16 %v2066
      %v2180 = vunpack.c.l.b16 %v2067
      %v2181 = vunpack.c.l.b16 %v2068
      %v2182 = vunpack.c.l.b16 %v2069
      %v2183 = vunpack.c.l.b16 %v2070
      %v2184 = vunpack.c.l.b16 %v2071
      %v2185 = vunpack.c.l.b16 %v2072
      %v2186 = vunpack.c.l.b16 %v2073
      %v2187 = vunpack.c.l.b16 %v2074
      %v2188 = vunpack.c.l.b16 %v2075
      %v2189 = vunpack.c.l.b16 %v2076
      %v2190 = vunpack.c.l.b16 %v2077
      %v2191 = vunpack.c.l.b16 %v2078
      %v2192 = vunpack.c.l.b16 %v2079
      %v2193 = vunpack.c.l.b16 %v2080
      %v2194 = vunpack.c.l.b16 %v2081
      %v2195 = vunpack.c.l.b16 %v2082
      %v2196 = vunpack.c.l.b16 %v2083
      %v2197 = vunpack.c.l.b16 %v2084
      %v2198 = vunpack.c.l.b16 %v2085
      %v2199 = vunpack.c.l.b16 %v2086
      %v2200 = vunpack.c.l.b16 %v2087
      %v2201 = vunpack.c.l.b16 %v2088
      %v2202 = vunpack.c.l.b16 %v2089
      %v2203 = vunpack.c.l.b16 %v2090
      %v2204 = vunpack.c.l.b16 %v2091
      %v2205 = vunpack.c.l.b16 %v2092
      %v2206 = vunpack.c.l.b16 %v2093
      %v2207 = vunpack.c.l.b16 %v2094
      %v2208 = vunpack.c.l.b16 %v2095
      %v2209 = vpack.c.b16 %v2162, %v2161
      %v2210 = vpack.c.b16 %v2164, %v2163
      %v2211 = vpack.c.b16 %v2166, %v2165
      %v2212 = vpack.c.b16 %v2168, %v2167
      %v2213 = vpack.c.b16 %v2170, %v2169
      %v2214 = vpack.c.b16 %v2172, %v2171
      %v2215 = vpack.c.b16 %v2174, %v2173
      %v2216 = vpack.c.b16 %v2176, %v2175
      %v2217 = vpack.c.b16 %v2178, %v2177
      %v2218 = vpack.c.b16 %v2180, %v2179
      %v2219 = vpack.c.b16 %v2182, %v2181
      %v2220 = vpack.c.b16 %v2184, %v2183
      %v2221 = vpack.c.b16 %v2186, %v2185
      %v2222 = vpack.c.b16 %v2188, %v2187
      %v2223 = vpack.c.b16 %v2190, %v2189
      %v2224 = vpack.c.b16 %v2192, %v2191
      %v2225 = vpack.c.b16 %v2194, %v2193
      %v2226 = vpack.c.b16 %v2196, %v2195
      %v2227 = vpack.c.b16 %v2198, %v2197
      %v2228 = vpack.c.b16 %v2200, %v2199
      %v2229 = vpack.c.b16 %v2202, %v2201
      %v2230 = vpack.c.b16 %v2204, %v2203
      %v2231 = vpack.c.b16 %v2206, %v2205
      %v2232 = vpack.c.b16 %v2208, %v2207
      %v2273 = vunpack.c.l.b16 %v2097
      %v2274 = vunpack.c.l.b16 %v2098
      %v2275 = vunpack.c.l.b16 %v2099
      %v2276 = vunpack.c.l.b16 %v2100
      %v2277 = vunpack.c.l.b16 %v2101
      %v2278 = vunpack.c.l.b16 %v2102
      %v2279 = vunpack.c.l.b16 %v2103
      %v2280 = vunpack.c.l.b16 %v2104
      %v2281 = vunpack.c.l.b16 %v2105
      %v2282 = vunpack.c.l.b16 %v2106
      %v2283 = vunpack.c.l.b16 %v2107
      %v2284 = vunpack.c.l.b16 %v2108
      %v2285 = vunpack.c.l.b16 %v2109
      %v2286 = vunpack.c.l.b16 %v2110
      %v2287 = vunpack.c.l.b16 %v2111
      %v2288 = vunpack.c.l.b16 %v2112
      %v2289 = vpack.c.b16 %v2274, %v2273
      %v2290 = vpack.c.b16 %v2276, %v2275
      %v2291 = vpack.c.b16 %v2278, %v2277
      %v2292 = vpack.c.b16 %v2280, %v2279
      %v2293 = vpack.c.b16 %v2282, %v2281
      %v2294 = vpack.c.b16 %v2284, %v2283
      %v2295 = vpack.c.b16 %v2286, %v2285
      %v2296 = vpack.c.b16 %v2288, %v2287
      %2305 = vmatprep.subr.bf16.mxu0 0
      %2306 = vmatpush1.bf16.msra.mxu0 %v2296
      %2307 = vmatprep.subr.bf16.mxu0 0
      %2308 = vmatpush1.bf16.msra.mxu0 %v2295
      %2309 = vmatprep.subr.bf16.mxu0 0
      %2310 = vmatpush1.bf16.msra.mxu0 %v2294
      %2311 = vmatprep.subr.bf16.mxu0 0
      %2312 = vmatpush1.bf16.msra.mxu0 %v2293
      %2313 = vmatprep.subr.bf16.mxu0 0
      %2314 = vmatpush1.bf16.msra.mxu0 %v2292
      %2315 = vmatprep.subr.bf16.mxu0 0
      %2316 = vmatpush1.bf16.msra.mxu0 %v2291
      %2317 = vmatprep.subr.bf16.mxu0 0
      %2318 = vmatpush1.bf16.msra.mxu0 %v2290
      %2319 = vmatprep.subr.bf16.mxu0 0
      %2320 = vmatpush1.bf16.msra.mxu0 %v2289
      %2321 = vmatprep.subr.bf16.mxu0 0
      %2322 = vmatpush2.bf16.msra.mxu0 0
      %2323 = vmatprep.subr.bf16.mxu0 0
      %2324 = vmatpush2.bf16.msra.mxu0 0
      %2325 = vmatprep.subr.bf16.mxu0 0
      %2326 = vmatpush2.bf16.msra.mxu0 0
      %2327 = vmatprep.subr.bf16.mxu0 0
      %2328 = vmatpush2.bf16.msra.mxu0 0
      %2329 = vmatprep.subr.bf16.mxu0 0
      %2330 = vmatpush2.bf16.msra.mxu0 0
      %2331 = vmatprep.subr.bf16.mxu0 0
      %2332 = vmatpush2.bf16.msra.mxu0 0
      %2333 = vmatprep.subr.bf16.mxu0 0
      %2334 = vmatpush2.bf16.msra.mxu0 0
      %2335 = vmatprep.subr.bf16.mxu0 0
      %2336 = vmatpush2.bf16.msra.mxu0 0
      %2337 = vmatprep.mubr.bf16.mxu0 0
      %2338 = vmatmul.mubr.bf16.gmra.mxu0 %v2209
      %v2339 = vpop.f32.mrf.mxu0
      %v2340 = vadd.f32 0.0, %v2339
      %v2341 = vpop.f32.mrf.mxu0
      %v2342 = vpop.f32.mrf.mxu0
      %v2343 = vadd.f32 0.0, %v2342
      %v2344 = vpop.f32.mrf.mxu0
      %2345 = vmatprep.mubr.bf16.mxu0 0
      %2346 = vmatmul.mubr.bf16.gmra.mxu0 %v2210
      %v2347 = vpop.f32.mrf.mxu0
      %v2348 = vadd.f32 0.0, %v2347
      %v2349 = vpop.f32.mrf.mxu0
      %v2350 = vpop.f32.mrf.mxu0
      %v2351 = vadd.f32 0.0, %v2350
      %v2352 = vpop.f32.mrf.mxu0
      %2353 = vmatprep.mubr.bf16.mxu0 0
      %2354 = vmatmul.mubr.bf16.gmra.mxu0 %v2211
      %v2355 = vpop.f32.mrf.mxu0
      %v2356 = vadd.f32 0.0, %v2355
      %v2357 = vpop.f32.mrf.mxu0
      %v2358 = vpop.f32.mrf.mxu0
      %v2359 = vadd.f32 0.0, %v2358
      %v2360 = vpop.f32.mrf.mxu0
      %2361 = vmatprep.mubr.bf16.mxu0 0
      %2362 = vmatmul.mubr.bf16.gmra.mxu0 %v2212
      %v2363 = vpop.f32.mrf.mxu0
      %v2364 = vadd.f32 0.0, %v2363
      %v2365 = vpop.f32.mrf.mxu0
      %v2366 = vpop.f32.mrf.mxu0
      %v2367 = vadd.f32 0.0, %v2366
      %v2368 = vpop.f32.mrf.mxu0
      %2369 = vmatprep.mubr.bf16.mxu0 0
      %2370 = vmatmul.mubr.bf16.gmra.mxu0 %v2213
      %v2371 = vpop.f32.mrf.mxu0
      %v2372 = vadd.f32 0.0, %v2371
      %v2373 = vpop.f32.mrf.mxu0
      %v2374 = vpop.f32.mrf.mxu0
      %v2375 = vadd.f32 0.0, %v2374
      %v2376 = vpop.f32.mrf.mxu0
      %2377 = vmatprep.mubr.bf16.mxu0 0
      %2378 = vmatmul.mubr.bf16.gmra.mxu0 %v2214
      %v2379 = vpop.f32.mrf.mxu0
      %v2380 = vadd.f32 0.0, %v2379
      %v2381 = vpop.f32.mrf.mxu0
      %v2382 = vpop.f32.mrf.mxu0
      %v2383 = vadd.f32 0.0, %v2382
      %v2384 = vpop.f32.mrf.mxu0
      %2385 = vmatprep.mubr.bf16.mxu0 0
      %2386 = vmatmul.mubr.bf16.gmra.mxu0 %v2215
      %v2387 = vpop.f32.mrf.mxu0
      %v2388 = vadd.f32 0.0, %v2387
      %v2389 = vpop.f32.mrf.mxu0
      %v2390 = vpop.f32.mrf.mxu0
      %v2391 = vadd.f32 0.0, %v2390
      %v2392 = vpop.f32.mrf.mxu0
      %2393 = vmatprep.mubr.bf16.mxu0 0
      %2394 = vmatmul.mubr.bf16.gmra.mxu0 %v2216
      %v2395 = vpop.f32.mrf.mxu0
      %v2396 = vadd.f32 0.0, %v2395
      %v2397 = vpop.f32.mrf.mxu0
      %v2398 = vpop.f32.mrf.mxu0
      %v2399 = vadd.f32 0.0, %v2398
      %v2400 = vpop.f32.mrf.mxu0
      %2401 = vmatprep.mubr.bf16.mxu0 0
      %2402 = vmatmul.mubr.bf16.gmra.mxu0 %v2217
      %v2403 = vpop.f32.mrf.mxu0
      %v2404 = vadd.f32 0.0, %v2403
      %v2405 = vpop.f32.mrf.mxu0
      %v2406 = vpop.f32.mrf.mxu0
      %v2407 = vadd.f32 0.0, %v2406
      %v2408 = vpop.f32.mrf.mxu0
      %2409 = vmatprep.mubr.bf16.mxu0 0
      %2410 = vmatmul.mubr.bf16.gmra.mxu0 %v2218
      %v2411 = vpop.f32.mrf.mxu0
      %v2412 = vadd.f32 0.0, %v2411
      %v2413 = vpop.f32.mrf.mxu0
      %v2414 = vpop.f32.mrf.mxu0
      %v2415 = vadd.f32 0.0, %v2414
      %v2416 = vpop.f32.mrf.mxu0
      %2417 = vmatprep.mubr.bf16.mxu0 0
      %2418 = vmatmul.mubr.bf16.gmra.mxu0 %v2219
      %v2419 = vpop.f32.mrf.mxu0
      %v2420 = vadd.f32 0.0, %v2419
      %v2421 = vpop.f32.mrf.mxu0
      %v2422 = vpop.f32.mrf.mxu0
      %v2423 = vadd.f32 0.0, %v2422
      %v2424 = vpop.f32.mrf.mxu0
      %2425 = vmatprep.mubr.bf16.mxu0 0
      %2426 = vmatmul.mubr.bf16.gmra.mxu0 %v2220
      %v2427 = vpop.f32.mrf.mxu0
      %v2428 = vadd.f32 0.0, %v2427
      %v2429 = vpop.f32.mrf.mxu0
      %v2430 = vpop.f32.mrf.mxu0
      %v2431 = vadd.f32 0.0, %v2430
      %v2432 = vpop.f32.mrf.mxu0
      %2433 = vmatprep.mubr.bf16.mxu0 0
      %2434 = vmatmul.mubr.bf16.gmra.mxu0 %v2221
      %v2435 = vpop.f32.mrf.mxu0
      %v2436 = vadd.f32 0.0, %v2435
      %v2437 = vpop.f32.mrf.mxu0
      %v2438 = vpop.f32.mrf.mxu0
      %v2439 = vadd.f32 0.0, %v2438
      %v2440 = vpop.f32.mrf.mxu0
      %2441 = vmatprep.mubr.bf16.mxu0 0
      %2442 = vmatmul.mubr.bf16.gmra.mxu0 %v2222
      %v2443 = vpop.f32.mrf.mxu0
      %v2444 = vadd.f32 0.0, %v2443
      %v2445 = vpop.f32.mrf.mxu0
      %v2446 = vpop.f32.mrf.mxu0
      %v2447 = vadd.f32 0.0, %v2446
      %v2448 = vpop.f32.mrf.mxu0
      %2449 = vmatprep.mubr.bf16.mxu0 0
      %2450 = vmatmul.mubr.bf16.gmra.mxu0 %v2223
      %v2451 = vpop.f32.mrf.mxu0
      %v2452 = vadd.f32 0.0, %v2451
      %v2453 = vpop.f32.mrf.mxu0
      %v2454 = vpop.f32.mrf.mxu0
      %v2455 = vadd.f32 0.0, %v2454
      %v2456 = vpop.f32.mrf.mxu0
      %2457 = vmatprep.mubr.bf16.mxu0 0
      %2458 = vmatmul.mubr.bf16.gmra.mxu0 %v2224
      %v2459 = vpop.f32.mrf.mxu0
      %v2460 = vadd.f32 0.0, %v2459
      %v2461 = vpop.f32.mrf.mxu0
      %v2462 = vpop.f32.mrf.mxu0
      %v2463 = vadd.f32 0.0, %v2462
      %v2464 = vpop.f32.mrf.mxu0
      %2465 = vmatprep.mubr.bf16.mxu0 0
      %2466 = vmatmul.mubr.bf16.gmra.mxu0 %v2225
      %v2467 = vpop.f32.mrf.mxu0
      %v2468 = vadd.f32 0.0, %v2467
      %v2469 = vpop.f32.mrf.mxu0
      %v2470 = vpop.f32.mrf.mxu0
      %v2471 = vadd.f32 0.0, %v2470
      %v2472 = vpop.f32.mrf.mxu0
      %2473 = vmatprep.mubr.bf16.mxu0 0
      %2474 = vmatmul.mubr.bf16.gmra.mxu0 %v2226
      %v2475 = vpop.f32.mrf.mxu0
      %v2476 = vadd.f32 0.0, %v2475
      %v2477 = vpop.f32.mrf.mxu0
      %v2478 = vpop.f32.mrf.mxu0
      %v2479 = vadd.f32 0.0, %v2478
      %v2480 = vpop.f32.mrf.mxu0
      %2481 = vmatprep.mubr.bf16.mxu0 0
      %2482 = vmatmul.mubr.bf16.gmra.mxu0 %v2227
      %v2483 = vpop.f32.mrf.mxu0
      %v2484 = vadd.f32 0.0, %v2483
      %v2485 = vpop.f32.mrf.mxu0
      %v2486 = vpop.f32.mrf.mxu0
      %v2487 = vadd.f32 0.0, %v2486
      %v2488 = vpop.f32.mrf.mxu0
      %2489 = vmatprep.mubr.bf16.mxu0 0
      %2490 = vmatmul.mubr.bf16.gmra.mxu0 %v2228
      %v2491 = vpop.f32.mrf.mxu0
      %v2492 = vadd.f32 0.0, %v2491
      %v2493 = vpop.f32.mrf.mxu0
      %v2494 = vpop.f32.mrf.mxu0
      %v2495 = vadd.f32 0.0, %v2494
      %v2496 = vpop.f32.mrf.mxu0
      %2497 = vmatprep.mubr.bf16.mxu0 0
      %2498 = vmatmul.mubr.bf16.gmra.mxu0 %v2229
      %v2499 = vpop.f32.mrf.mxu0
      %v2500 = vadd.f32 0.0, %v2499
      %v2501 = vpop.f32.mrf.mxu0
      %v2502 = vpop.f32.mrf.mxu0
      %v2503 = vadd.f32 0.0, %v2502
      %v2504 = vpop.f32.mrf.mxu0
      %2505 = vmatprep.mubr.bf16.mxu0 0
      %2506 = vmatmul.mubr.bf16.gmra.mxu0 %v2230
      %v2507 = vpop.f32.mrf.mxu0
      %v2508 = vadd.f32 0.0, %v2507
      %v2509 = vpop.f32.mrf.mxu0
      %v2510 = vpop.f32.mrf.mxu0
      %v2511 = vadd.f32 0.0, %v2510
      %v2512 = vpop.f32.mrf.mxu0
      %2513 = vmatprep.mubr.bf16.mxu0 0
      %2514 = vmatmul.mubr.bf16.gmra.mxu0 %v2231
      %v2515 = vpop.f32.mrf.mxu0
      %v2516 = vadd.f32 0.0, %v2515
      %v2517 = vpop.f32.mrf.mxu0
      %v2518 = vpop.f32.mrf.mxu0
      %v2519 = vadd.f32 0.0, %v2518
      %v2520 = vpop.f32.mrf.mxu0
      %2521 = vmatprep.mubr.bf16.mxu0 0
      %2522 = vmatmul.mubr.bf16.gmra.mxu0 %v2232
      %v2523 = vpop.f32.mrf.mxu0
      %v2524 = vadd.f32 0.0, %v2523
      %v2525 = vpop.f32.mrf.mxu0
      %v2526 = vpop.f32.mrf.mxu0
      %v2527 = vadd.f32 0.0, %v2526
      %v2528 = vpop.f32.mrf.mxu0
      %2529 = vdwg.mxu0
      %v2530 = vadd.f32 %v2000, %v2340
      %v2531 = vadd.f32 %v2001, %v2343
      %v2532 = vadd.f32 %v2002, %v2348
      %v2533 = vadd.f32 %v2003, %v2351
      %v2534 = vadd.f32 %v2004, %v2356
      %v2535 = vadd.f32 %v2005, %v2359
      %v2536 = vadd.f32 %v2006, %v2364
      %v2537 = vadd.f32 %v2007, %v2367
      %v2538 = vadd.f32 %v2008, %v2372
      %v2539 = vadd.f32 %v2009, %v2375
      %v2540 = vadd.f32 %v2010, %v2380
      %v2541 = vadd.f32 %v2011, %v2383
      %v2542 = vadd.f32 %v2012, %v2388
      %v2543 = vadd.f32 %v2013, %v2391
      %v2544 = vadd.f32 %v2014, %v2396
      %v2545 = vadd.f32 %v2015, %v2399
      %v2546 = vadd.f32 %v2016, %v2404
      %v2547 = vadd.f32 %v2017, %v2407
      %v2548 = vadd.f32 %v2018, %v2412
      %v2549 = vadd.f32 %v2019, %v2415
      %v2550 = vadd.f32 %v2020, %v2420
      %v2551 = vadd.f32 %v2021, %v2423
      %v2552 = vadd.f32 %v2022, %v2428
      %v2553 = vadd.f32 %v2023, %v2431
      %v2554 = vadd.f32 %v2024, %v2436
      %v2555 = vadd.f32 %v2025, %v2439
      %v2556 = vadd.f32 %v2026, %v2444
      %v2557 = vadd.f32 %v2027, %v2447
      %v2558 = vadd.f32 %v2028, %v2452
      %v2559 = vadd.f32 %v2029, %v2455
      %v2560 = vadd.f32 %v2030, %v2460
      %v2561 = vadd.f32 %v2031, %v2463
      %v2562 = vadd.f32 %v2032, %v2468
      %v2563 = vadd.f32 %v2033, %v2471
      %v2564 = vadd.f32 %v2034, %v2476
      %v2565 = vadd.f32 %v2035, %v2479
      %v2566 = vadd.f32 %v2036, %v2484
      %v2567 = vadd.f32 %v2037, %v2487
      %v2568 = vadd.f32 %v2038, %v2492
      %v2569 = vadd.f32 %v2039, %v2495
      %v2570 = vadd.f32 %v2040, %v2500
      %v2571 = vadd.f32 %v2041, %v2503
      %v2572 = vadd.f32 %v2042, %v2508
      %v2573 = vadd.f32 %v2043, %v2511
      %v2574 = vadd.f32 %v2044, %v2516
      %v2575 = vadd.f32 %v2045, %v2519
      %v2576 = vadd.f32 %v2046, %v2524
      %v2577 = vadd.f32 %v2047, %v2527
      %v2578 = vld [vmem:[%s630 + $0xc] sm:$0xf]
      %v2579 = vld [vmem:[%s630 + $0x10] sm:$0xf]
      %v2580 = vld [vmem:[%s630 + $0x14] sm:$0xf]
      %v2581 = vld [vmem:[%s630 + $0x18] sm:$0xf]
      %v2582 = vld [vmem:[%s630 + $0x1c] sm:$0xf]
      %v2583 = vld [vmem:[%s630 + $0x20] sm:$0xf]
      %v2584 = vld [vmem:[%s630 + $0x24] sm:$0xf]
      %v2585 = vld [vmem:[%s630 + $0x28] sm:$0xf]
      %v2586 = vld [vmem:[%s630 + $0x2c] sm:$0xf]
      %v2587 = vld [vmem:[%s630 + $0x30] sm:$0xf]
      %v2588 = vld [vmem:[%s630 + $0x34] sm:$0xf]
      %v2589 = vld [vmem:[%s630 + $0x38] sm:$0xf]
      %v2590 = vld [vmem:[%s630 + $0x3c] sm:$0xf]
      %v2591 = vld [vmem:[%s630 + $0x40] sm:$0xf]
      %v2592 = vld [vmem:[%s630 + $0x44] sm:$0xf]
      %v2593 = vld [vmem:[%s630 + $0x48] sm:$0xf]
      %v2594 = vld [vmem:[%s630 + $0x4c] sm:$0xf]
      %v2595 = vld [vmem:[%s630 + $0x50] sm:$0xf]
      %v2596 = vld [vmem:[%s630 + $0x54] sm:$0xf]
      %v2597 = vld [vmem:[%s630 + $0x58] sm:$0xf]
      %v2598 = vld [vmem:[%s630 + $0x5c] sm:$0xf]
      %v2599 = vld [vmem:[%s630 + $0x60] sm:$0xf]
      %v2600 = vld [vmem:[%s630 + $0x64] sm:$0xf]
      %v2601 = vld [vmem:[%s630 + $0x68] sm:$0xf]
      %v2602 = vld [vmem:[%s630 + $0x6c] sm:$0xf]
      %v2603 = vld [vmem:[%s630 + $0x70] sm:$0xf]
      %v2604 = vld [vmem:[%s630 + $0x74] sm:$0xf]
      %v2605 = vld [vmem:[%s630 + $0x78] sm:$0xf]
      %v2606 = vld [vmem:[%s630 + $0x7c] sm:$0xf]
      %v2607 = vld [vmem:[%s630 + $0x80] sm:$0xf]
      %v2608 = vld [vmem:[%s630 + $0x84] sm:$0xf]
      %v2609 = vld [vmem:[%s630 + $0x88] sm:$0xf]
      %v2610 = vld [vmem:[%s630 + $0x8c] sm:$0xf]
      %v2611 = vld [vmem:[%s630 + $0x90] sm:$0xf]
      %v2612 = vld [vmem:[%s630 + $0x94] sm:$0xf]
      %v2613 = vld [vmem:[%s630 + $0x98] sm:$0xf]
      %v2614 = vld [vmem:[%s630 + $0x9c] sm:$0xf]
      %v2615 = vld [vmem:[%s630 + $0xa0] sm:$0xf]
      %v2616 = vld [vmem:[%s630 + $0xa4] sm:$0xf]
      %v2617 = vld [vmem:[%s630 + $0xa8] sm:$0xf]
      %v2618 = vld [vmem:[%s630 + $0xac] sm:$0xf]
      %v2619 = vld [vmem:[%s630 + $0xb0] sm:$0xf]
      %v2620 = vld [vmem:[%s630 + $0xb4] sm:$0xf]
      %v2621 = vld [vmem:[%s630 + $0xb8] sm:$0xf]
      %v2622 = vld [vmem:[%s630 + $0xbc] sm:$0xf]
      %v2623 = vld [vmem:[%s630 + $0xc0] sm:$0xf]
      %v2624 = vld [vmem:[%s630 + $0xc4] sm:$0xf]
      %v2625 = vld [vmem:[%s630 + $0xc8] sm:$0xf]
      %v2626 = vld [vmem:[%s630 + $0xcc] sm:$0x1]
      %s2627 = scalar_lea.vmem %s1, 256
      %v2628 = vld [vmem:[%s2627] sm:$0xf]
      %v2629 = vld [vmem:[%s2627 + $0x4] sm:$0xf]
      %v2630 = vld [vmem:[%s2627 + $0x8] sm:$0xf]
      %v2631 = vld [vmem:[%s2627 + $0xc] sm:$0xf]
      %v2632 = vld [vmem:[%s2627 + $0x10] sm:$0xf]
      %v2633 = vld [vmem:[%s2627 + $0x14] sm:$0xf]
      %v2634 = vld [vmem:[%s2627 + $0x18] sm:$0xf]
      %v2635 = vld [vmem:[%s2627 + $0x1c] sm:$0xf]
      %v2636 = vld [vmem:[%s2627 + $0x20] sm:$0xf]
      %v2637 = vld [vmem:[%s2627 + $0x24] sm:$0xf]
      %v2638 = vld [vmem:[%s2627 + $0x28] sm:$0xf]
      %v2639 = vld [vmem:[%s2627 + $0x2c] sm:$0xf]
      %v2640 = vld [vmem:[%s2627 + $0x30] sm:$0xf]
      %v2641 = vld [vmem:[%s2627 + $0x34] sm:$0xf]
      %v2642 = vld [vmem:[%s2627 + $0x38] sm:$0xf]
      %v2643 = vld [vmem:[%s2627 + $0x3c] sm:$0xf]
      %v2693 = vunpack.c.l.b16 %v2578
      %v2694 = vunpack.c.l.b16 %v2579
      %v2695 = vunpack.c.l.b16 %v2580
      %v2696 = vunpack.c.l.b16 %v2581
      %v2697 = vunpack.c.l.b16 %v2582
      %v2698 = vunpack.c.l.b16 %v2583
      %v2699 = vunpack.c.l.b16 %v2584
      %v2700 = vunpack.c.l.b16 %v2585
      %v2701 = vunpack.c.l.b16 %v2586
      %v2702 = vunpack.c.l.b16 %v2587
      %v2703 = vunpack.c.l.b16 %v2588
      %v2704 = vunpack.c.l.b16 %v2589
      %v2705 = vunpack.c.l.b16 %v2590
      %v2706 = vunpack.c.l.b16 %v2591
      %v2707 = vunpack.c.l.b16 %v2592
      %v2708 = vunpack.c.l.b16 %v2593
      %v2709 = vunpack.c.l.b16 %v2594
      %v2710 = vunpack.c.l.b16 %v2595
      %v2711 = vunpack.c.l.b16 %v2596
      %v2712 = vunpack.c.l.b16 %v2597
      %v2713 = vunpack.c.l.b16 %v2598
      %v2714 = vunpack.c.l.b16 %v2599
      %v2715 = vunpack.c.l.b16 %v2600
      %v2716 = vunpack.c.l.b16 %v2601
      %v2717 = vunpack.c.l.b16 %v2602
      %v2718 = vunpack.c.l.b16 %v2603
      %v2719 = vunpack.c.l.b16 %v2604
      %v2720 = vunpack.c.l.b16 %v2605
      %v2721 = vunpack.c.l.b16 %v2606
      %v2722 = vunpack.c.l.b16 %v2607
      %v2723 = vunpack.c.l.b16 %v2608
      %v2724 = vunpack.c.l.b16 %v2609
      %v2725 = vunpack.c.l.b16 %v2610
      %v2726 = vunpack.c.l.b16 %v2611
      %v2727 = vunpack.c.l.b16 %v2612
      %v2728 = vunpack.c.l.b16 %v2613
      %v2729 = vunpack.c.l.b16 %v2614
      %v2730 = vunpack.c.l.b16 %v2615
      %v2731 = vunpack.c.l.b16 %v2616
      %v2732 = vunpack.c.l.b16 %v2617
      %v2733 = vunpack.c.l.b16 %v2618
      %v2734 = vunpack.c.l.b16 %v2619
      %v2735 = vunpack.c.l.b16 %v2620
      %v2736 = vunpack.c.l.b16 %v2621
      %v2737 = vunpack.c.l.b16 %v2622
      %v2738 = vunpack.c.l.b16 %v2623
      %v2739 = vunpack.c.l.b16 %v2624
      %v2740 = vunpack.c.l.b16 %v2625
      %v2741 = vunpack.c.l.b16 %v2626
      %v2742 = vpack.c.b16 %v2694, %v2693
      %v2743 = vpack.c.b16 %v2696, %v2695
      %v2744 = vpack.c.b16 %v2698, %v2697
      %v2745 = vpack.c.b16 %v2700, %v2699
      %v2746 = vpack.c.b16 %v2702, %v2701
      %v2747 = vpack.c.b16 %v2704, %v2703
      %v2748 = vpack.c.b16 %v2706, %v2705
      %v2749 = vpack.c.b16 %v2708, %v2707
      %v2750 = vpack.c.b16 %v2710, %v2709
      %v2751 = vpack.c.b16 %v2712, %v2711
      %v2752 = vpack.c.b16 %v2714, %v2713
      %v2753 = vpack.c.b16 %v2716, %v2715
      %v2754 = vpack.c.b16 %v2718, %v2717
      %v2755 = vpack.c.b16 %v2720, %v2719
      %v2756 = vpack.c.b16 %v2722, %v2721
      %v2757 = vpack.c.b16 %v2724, %v2723
      %v2758 = vpack.c.b16 %v2726, %v2725
      %v2759 = vpack.c.b16 %v2728, %v2727
      %v2760 = vpack.c.b16 %v2730, %v2729
      %v2761 = vpack.c.b16 %v2732, %v2731
      %v2762 = vpack.c.b16 %v2734, %v2733
      %v2763 = vpack.c.b16 %v2736, %v2735
      %v2764 = vpack.c.b16 %v2738, %v2737
      %v2765 = vpack.c.b16 %v2740, %v2739
      %v2766 = vpack.c.b16 %v2741, %v2741
      %v2768 = vshrl.u32 %v2742, 16
      %v2770 = vshll.u32 %v2742, 16
      %v2772 = vrot.slane %v2770, 1
      %v2773 = vor.u32 %v2768, %v2772
      %v2775 = vshll.u32 %v2743, 16
      %v2777 = vrot.slane %v2775, 1
      %v2778 = vsel %vm841, %v2773, %v2777
      %v2779 = vshrl.u32 %v2743, 16
      %v2781 = vor.u32 %v2779, %v2777
      %v2783 = vshll.u32 %v2744, 16
      %v2785 = vrot.slane %v2783, 1
      %v2786 = vsel %vm841, %v2781, %v2785
      %v2787 = vshrl.u32 %v2744, 16
      %v2789 = vor.u32 %v2787, %v2785
      %v2791 = vshll.u32 %v2745, 16
      %v2793 = vrot.slane %v2791, 1
      %v2794 = vsel %vm841, %v2789, %v2793
      %v2795 = vshrl.u32 %v2745, 16
      %v2797 = vor.u32 %v2795, %v2793
      %v2799 = vshll.u32 %v2746, 16
      %v2801 = vrot.slane %v2799, 1
      %v2802 = vsel %vm841, %v2797, %v2801
      %v2803 = vshrl.u32 %v2746, 16
      %v2805 = vor.u32 %v2803, %v2801
      %v2807 = vshll.u32 %v2747, 16
      %v2809 = vrot.slane %v2807, 1
      %v2810 = vsel %vm841, %v2805, %v2809
      %v2811 = vshrl.u32 %v2747, 16
      %v2813 = vor.u32 %v2811, %v2809
      %v2815 = vshll.u32 %v2748, 16
      %v2817 = vrot.slane %v2815, 1
      %v2818 = vsel %vm841, %v2813, %v2817
      %v2819 = vshrl.u32 %v2748, 16
      %v2821 = vor.u32 %v2819, %v2817
      %v2823 = vshll.u32 %v2749, 16
      %v2825 = vrot.slane %v2823, 1
      %v2826 = vsel %vm841, %v2821, %v2825
      %v2827 = vshrl.u32 %v2749, 16
      %v2829 = vor.u32 %v2827, %v2825
      %v2831 = vshll.u32 %v2750, 16
      %v2833 = vrot.slane %v2831, 1
      %v2834 = vsel %vm841, %v2829, %v2833
      %v2835 = vshrl.u32 %v2750, 16
      %v2837 = vor.u32 %v2835, %v2833
      %v2839 = vshll.u32 %v2751, 16
      %v2841 = vrot.slane %v2839, 1
      %v2842 = vsel %vm841, %v2837, %v2841
      %v2843 = vshrl.u32 %v2751, 16
      %v2845 = vor.u32 %v2843, %v2841
      %v2847 = vshll.u32 %v2752, 16
      %v2849 = vrot.slane %v2847, 1
      %v2850 = vsel %vm841, %v2845, %v2849
      %v2851 = vshrl.u32 %v2752, 16
      %v2853 = vor.u32 %v2851, %v2849
      %v2855 = vshll.u32 %v2753, 16
      %v2857 = vrot.slane %v2855, 1
      %v2858 = vsel %vm841, %v2853, %v2857
      %v2859 = vshrl.u32 %v2753, 16
      %v2861 = vor.u32 %v2859, %v2857
      %v2863 = vshll.u32 %v2754, 16
      %v2865 = vrot.slane %v2863, 1
      %v2866 = vsel %vm841, %v2861, %v2865
      %v2867 = vshrl.u32 %v2754, 16
      %v2869 = vor.u32 %v2867, %v2865
      %v2871 = vshll.u32 %v2755, 16
      %v2873 = vrot.slane %v2871, 1
      %v2874 = vsel %vm841, %v2869, %v2873
      %v2875 = vshrl.u32 %v2755, 16
      %v2877 = vor.u32 %v2875, %v2873
      %v2879 = vshll.u32 %v2756, 16
      %v2881 = vrot.slane %v2879, 1
      %v2882 = vsel %vm841, %v2877, %v2881
      %v2883 = vshrl.u32 %v2756, 16
      %v2885 = vor.u32 %v2883, %v2881
      %v2887 = vshll.u32 %v2757, 16
      %v2889 = vrot.slane %v2887, 1
      %v2890 = vsel %vm841, %v2885, %v2889
      %v2891 = vshrl.u32 %v2757, 16
      %v2893 = vor.u32 %v2891, %v2889
      %v2895 = vshll.u32 %v2758, 16
      %v2897 = vrot.slane %v2895, 1
      %v2898 = vsel %vm841, %v2893, %v2897
      %v2899 = vshrl.u32 %v2758, 16
      %v2901 = vor.u32 %v2899, %v2897
      %v2903 = vshll.u32 %v2759, 16
      %v2905 = vrot.slane %v2903, 1
      %v2906 = vsel %vm841, %v2901, %v2905
      %v2907 = vshrl.u32 %v2759, 16
      %v2909 = vor.u32 %v2907, %v2905
      %v2911 = vshll.u32 %v2760, 16
      %v2913 = vrot.slane %v2911, 1
      %v2914 = vsel %vm841, %v2909, %v2913
      %v2915 = vshrl.u32 %v2760, 16
      %v2917 = vor.u32 %v2915, %v2913
      %v2919 = vshll.u32 %v2761, 16
      %v2921 = vrot.slane %v2919, 1
      %v2922 = vsel %vm841, %v2917, %v2921
      %v2923 = vshrl.u32 %v2761, 16
      %v2925 = vor.u32 %v2923, %v2921
      %v2927 = vshll.u32 %v2762, 16
      %v2929 = vrot.slane %v2927, 1
      %v2930 = vsel %vm841, %v2925, %v2929
      %v2931 = vshrl.u32 %v2762, 16
      %v2933 = vor.u32 %v2931, %v2929
      %v2935 = vshll.u32 %v2763, 16
      %v2937 = vrot.slane %v2935, 1
      %v2938 = vsel %vm841, %v2933, %v2937
      %v2939 = vshrl.u32 %v2763, 16
      %v2941 = vor.u32 %v2939, %v2937
      %v2943 = vshll.u32 %v2764, 16
      %v2945 = vrot.slane %v2943, 1
      %v2946 = vsel %vm841, %v2941, %v2945
      %v2947 = vshrl.u32 %v2764, 16
      %v2949 = vor.u32 %v2947, %v2945
      %v2951 = vshll.u32 %v2765, 16
      %v2953 = vrot.slane %v2951, 1
      %v2954 = vsel %vm841, %v2949, %v2953
      %v2955 = vshrl.u32 %v2765, 16
      %v2957 = vor.u32 %v2955, %v2953
      %v2959 = vshll.u32 %v2766, 16
      %v2961 = vrot.slane %v2959, 1
      %v2962 = vsel %vm841, %v2957, %v2961
      %v3003 = vunpack.c.l.b16 %v2628
      %v3004 = vunpack.c.l.b16 %v2629
      %v3005 = vunpack.c.l.b16 %v2630
      %v3006 = vunpack.c.l.b16 %v2631
      %v3007 = vunpack.c.l.b16 %v2632
      %v3008 = vunpack.c.l.b16 %v2633
      %v3009 = vunpack.c.l.b16 %v2634
      %v3010 = vunpack.c.l.b16 %v2635
      %v3011 = vunpack.c.l.b16 %v2636
      %v3012 = vunpack.c.l.b16 %v2637
      %v3013 = vunpack.c.l.b16 %v2638
      %v3014 = vunpack.c.l.b16 %v2639
      %v3015 = vunpack.c.l.b16 %v2640
      %v3016 = vunpack.c.l.b16 %v2641
      %v3017 = vunpack.c.l.b16 %v2642
      %v3018 = vunpack.c.l.b16 %v2643
      %v3019 = vpack.c.b16 %v3004, %v3003
      %v3020 = vpack.c.b16 %v3006, %v3005
      %v3021 = vpack.c.b16 %v3008, %v3007
      %v3022 = vpack.c.b16 %v3010, %v3009
      %v3023 = vpack.c.b16 %v3012, %v3011
      %v3024 = vpack.c.b16 %v3014, %v3013
      %v3025 = vpack.c.b16 %v3016, %v3015
      %v3026 = vpack.c.b16 %v3018, %v3017
      %3035 = vmatprep.subr.bf16.mxu0 0
      %3036 = vmatpush1.bf16.msra.mxu0 %v3026
      %3037 = vmatprep.subr.bf16.mxu0 0
      %3038 = vmatpush1.bf16.msra.mxu0 %v3025
      %3039 = vmatprep.subr.bf16.mxu0 0
      %3040 = vmatpush1.bf16.msra.mxu0 %v3024
      %3041 = vmatprep.subr.bf16.mxu0 0
      %3042 = vmatpush1.bf16.msra.mxu0 %v3023
      %3043 = vmatprep.subr.bf16.mxu0 0
      %3044 = vmatpush1.bf16.msra.mxu0 %v3022
      %3045 = vmatprep.subr.bf16.mxu0 0
      %3046 = vmatpush1.bf16.msra.mxu0 %v3021
      %3047 = vmatprep.subr.bf16.mxu0 0
      %3048 = vmatpush1.bf16.msra.mxu0 %v3020
      %3049 = vmatprep.subr.bf16.mxu0 0
      %3050 = vmatpush1.bf16.msra.mxu0 %v3019
      %3051 = vmatprep.subr.bf16.mxu0 0
      %3052 = vmatpush2.bf16.msra.mxu0 0
      %3053 = vmatprep.subr.bf16.mxu0 0
      %3054 = vmatpush2.bf16.msra.mxu0 0
      %3055 = vmatprep.subr.bf16.mxu0 0
      %3056 = vmatpush2.bf16.msra.mxu0 0
      %3057 = vmatprep.subr.bf16.mxu0 0
      %3058 = vmatpush2.bf16.msra.mxu0 0
      %3059 = vmatprep.subr.bf16.mxu0 0
      %3060 = vmatpush2.bf16.msra.mxu0 0
      %3061 = vmatprep.subr.bf16.mxu0 0
      %3062 = vmatpush2.bf16.msra.mxu0 0
      %3063 = vmatprep.subr.bf16.mxu0 0
      %3064 = vmatpush2.bf16.msra.mxu0 0
      %3065 = vmatprep.subr.bf16.mxu0 0
      %3066 = vmatpush2.bf16.msra.mxu0 0
      %3067 = vmatprep.mubr.bf16.mxu0 0
      %3068 = vmatmul.mubr.bf16.gmra.mxu0 %v2778
      %v3069 = vpop.f32.mrf.mxu0
      %v3070 = vadd.f32 0.0, %v3069
      %v3071 = vpop.f32.mrf.mxu0
      %v3072 = vpop.f32.mrf.mxu0
      %v3073 = vadd.f32 0.0, %v3072
      %v3074 = vpop.f32.mrf.mxu0
      %3075 = vmatprep.mubr.bf16.mxu0 0
      %3076 = vmatmul.mubr.bf16.gmra.mxu0 %v2786
      %v3077 = vpop.f32.mrf.mxu0
      %v3078 = vadd.f32 0.0, %v3077
      %v3079 = vpop.f32.mrf.mxu0
      %v3080 = vpop.f32.mrf.mxu0
      %v3081 = vadd.f32 0.0, %v3080
      %v3082 = vpop.f32.mrf.mxu0
      %3083 = vmatprep.mubr.bf16.mxu0 0
      %3084 = vmatmul.mubr.bf16.gmra.mxu0 %v2794
      %v3085 = vpop.f32.mrf.mxu0
      %v3086 = vadd.f32 0.0, %v3085
      %v3087 = vpop.f32.mrf.mxu0
      %v3088 = vpop.f32.mrf.mxu0
      %v3089 = vadd.f32 0.0, %v3088
      %v3090 = vpop.f32.mrf.mxu0
      %3091 = vmatprep.mubr.bf16.mxu0 0
      %3092 = vmatmul.mubr.bf16.gmra.mxu0 %v2802
      %v3093 = vpop.f32.mrf.mxu0
      %v3094 = vadd.f32 0.0, %v3093
      %v3095 = vpop.f32.mrf.mxu0
      %v3096 = vpop.f32.mrf.mxu0
      %v3097 = vadd.f32 0.0, %v3096
      %v3098 = vpop.f32.mrf.mxu0
      %3099 = vmatprep.mubr.bf16.mxu0 0
      %3100 = vmatmul.mubr.bf16.gmra.mxu0 %v2810
      %v3101 = vpop.f32.mrf.mxu0
      %v3102 = vadd.f32 0.0, %v3101
      %v3103 = vpop.f32.mrf.mxu0
      %v3104 = vpop.f32.mrf.mxu0
      %v3105 = vadd.f32 0.0, %v3104
      %v3106 = vpop.f32.mrf.mxu0
      %3107 = vmatprep.mubr.bf16.mxu0 0
      %3108 = vmatmul.mubr.bf16.gmra.mxu0 %v2818
      %v3109 = vpop.f32.mrf.mxu0
      %v3110 = vadd.f32 0.0, %v3109
      %v3111 = vpop.f32.mrf.mxu0
      %v3112 = vpop.f32.mrf.mxu0
      %v3113 = vadd.f32 0.0, %v3112
      %v3114 = vpop.f32.mrf.mxu0
      %3115 = vmatprep.mubr.bf16.mxu0 0
      %3116 = vmatmul.mubr.bf16.gmra.mxu0 %v2826
      %v3117 = vpop.f32.mrf.mxu0
      %v3118 = vadd.f32 0.0, %v3117
      %v3119 = vpop.f32.mrf.mxu0
      %v3120 = vpop.f32.mrf.mxu0
      %v3121 = vadd.f32 0.0, %v3120
      %v3122 = vpop.f32.mrf.mxu0
      %3123 = vmatprep.mubr.bf16.mxu0 0
      %3124 = vmatmul.mubr.bf16.gmra.mxu0 %v2834
      %v3125 = vpop.f32.mrf.mxu0
      %v3126 = vadd.f32 0.0, %v3125
      %v3127 = vpop.f32.mrf.mxu0
      %v3128 = vpop.f32.mrf.mxu0
      %v3129 = vadd.f32 0.0, %v3128
      %v3130 = vpop.f32.mrf.mxu0
      %3131 = vmatprep.mubr.bf16.mxu0 0
      %3132 = vmatmul.mubr.bf16.gmra.mxu0 %v2842
      %v3133 = vpop.f32.mrf.mxu0
      %v3134 = vadd.f32 0.0, %v3133
      %v3135 = vpop.f32.mrf.mxu0
      %v3136 = vpop.f32.mrf.mxu0
      %v3137 = vadd.f32 0.0, %v3136
      %v3138 = vpop.f32.mrf.mxu0
      %3139 = vmatprep.mubr.bf16.mxu0 0
      %3140 = vmatmul.mubr.bf16.gmra.mxu0 %v2850
      %v3141 = vpop.f32.mrf.mxu0
      %v3142 = vadd.f32 0.0, %v3141
      %v3143 = vpop.f32.mrf.mxu0
      %v3144 = vpop.f32.mrf.mxu0
      %v3145 = vadd.f32 0.0, %v3144
      %v3146 = vpop.f32.mrf.mxu0
      %3147 = vmatprep.mubr.bf16.mxu0 0
      %3148 = vmatmul.mubr.bf16.gmra.mxu0 %v2858
      %v3149 = vpop.f32.mrf.mxu0
      %v3150 = vadd.f32 0.0, %v3149
      %v3151 = vpop.f32.mrf.mxu0
      %v3152 = vpop.f32.mrf.mxu0
      %v3153 = vadd.f32 0.0, %v3152
      %v3154 = vpop.f32.mrf.mxu0
      %3155 = vmatprep.mubr.bf16.mxu0 0
      %3156 = vmatmul.mubr.bf16.gmra.mxu0 %v2866
      %v3157 = vpop.f32.mrf.mxu0
      %v3158 = vadd.f32 0.0, %v3157
      %v3159 = vpop.f32.mrf.mxu0
      %v3160 = vpop.f32.mrf.mxu0
      %v3161 = vadd.f32 0.0, %v3160
      %v3162 = vpop.f32.mrf.mxu0
      %3163 = vmatprep.mubr.bf16.mxu0 0
      %3164 = vmatmul.mubr.bf16.gmra.mxu0 %v2874
      %v3165 = vpop.f32.mrf.mxu0
      %v3166 = vadd.f32 0.0, %v3165
      %v3167 = vpop.f32.mrf.mxu0
      %v3168 = vpop.f32.mrf.mxu0
      %v3169 = vadd.f32 0.0, %v3168
      %v3170 = vpop.f32.mrf.mxu0
      %3171 = vmatprep.mubr.bf16.mxu0 0
      %3172 = vmatmul.mubr.bf16.gmra.mxu0 %v2882
      %v3173 = vpop.f32.mrf.mxu0
      %v3174 = vadd.f32 0.0, %v3173
      %v3175 = vpop.f32.mrf.mxu0
      %v3176 = vpop.f32.mrf.mxu0
      %v3177 = vadd.f32 0.0, %v3176
      %v3178 = vpop.f32.mrf.mxu0
      %3179 = vmatprep.mubr.bf16.mxu0 0
      %3180 = vmatmul.mubr.bf16.gmra.mxu0 %v2890
      %v3181 = vpop.f32.mrf.mxu0
      %v3182 = vadd.f32 0.0, %v3181
      %v3183 = vpop.f32.mrf.mxu0
      %v3184 = vpop.f32.mrf.mxu0
      %v3185 = vadd.f32 0.0, %v3184
      %v3186 = vpop.f32.mrf.mxu0
      %3187 = vmatprep.mubr.bf16.mxu0 0
      %3188 = vmatmul.mubr.bf16.gmra.mxu0 %v2898
      %v3189 = vpop.f32.mrf.mxu0
      %v3190 = vadd.f32 0.0, %v3189
      %v3191 = vpop.f32.mrf.mxu0
      %v3192 = vpop.f32.mrf.mxu0
      %v3193 = vadd.f32 0.0, %v3192
      %v3194 = vpop.f32.mrf.mxu0
      %3195 = vmatprep.mubr.bf16.mxu0 0
      %3196 = vmatmul.mubr.bf16.gmra.mxu0 %v2906
      %v3197 = vpop.f32.mrf.mxu0
      %v3198 = vadd.f32 0.0, %v3197
      %v3199 = vpop.f32.mrf.mxu0
      %v3200 = vpop.f32.mrf.mxu0
      %v3201 = vadd.f32 0.0, %v3200
      %v3202 = vpop.f32.mrf.mxu0
      %3203 = vmatprep.mubr.bf16.mxu0 0
      %3204 = vmatmul.mubr.bf16.gmra.mxu0 %v2914
      %v3205 = vpop.f32.mrf.mxu0
      %v3206 = vadd.f32 0.0, %v3205
      %v3207 = vpop.f32.mrf.mxu0
      %v3208 = vpop.f32.mrf.mxu0
      %v3209 = vadd.f32 0.0, %v3208
      %v3210 = vpop.f32.mrf.mxu0
      %3211 = vmatprep.mubr.bf16.mxu0 0
      %3212 = vmatmul.mubr.bf16.gmra.mxu0 %v2922
      %v3213 = vpop.f32.mrf.mxu0
      %v3214 = vadd.f32 0.0, %v3213
      %v3215 = vpop.f32.mrf.mxu0
      %v3216 = vpop.f32.mrf.mxu0
      %v3217 = vadd.f32 0.0, %v3216
      %v3218 = vpop.f32.mrf.mxu0
      %3219 = vmatprep.mubr.bf16.mxu0 0
      %3220 = vmatmul.mubr.bf16.gmra.mxu0 %v2930
      %v3221 = vpop.f32.mrf.mxu0
      %v3222 = vadd.f32 0.0, %v3221
      %v3223 = vpop.f32.mrf.mxu0
      %v3224 = vpop.f32.mrf.mxu0
      %v3225 = vadd.f32 0.0, %v3224
      %v3226 = vpop.f32.mrf.mxu0
      %3227 = vmatprep.mubr.bf16.mxu0 0
      %3228 = vmatmul.mubr.bf16.gmra.mxu0 %v2938
      %v3229 = vpop.f32.mrf.mxu0
      %v3230 = vadd.f32 0.0, %v3229
      %v3231 = vpop.f32.mrf.mxu0
      %v3232 = vpop.f32.mrf.mxu0
      %v3233 = vadd.f32 0.0, %v3232
      %v3234 = vpop.f32.mrf.mxu0
      %3235 = vmatprep.mubr.bf16.mxu0 0
      %3236 = vmatmul.mubr.bf16.gmra.mxu0 %v2946
      %v3237 = vpop.f32.mrf.mxu0
      %v3238 = vadd.f32 0.0, %v3237
      %v3239 = vpop.f32.mrf.mxu0
      %v3240 = vpop.f32.mrf.mxu0
      %v3241 = vadd.f32 0.0, %v3240
      %v3242 = vpop.f32.mrf.mxu0
      %3243 = vmatprep.mubr.bf16.mxu0 0
      %3244 = vmatmul.mubr.bf16.gmra.mxu0 %v2954
      %v3245 = vpop.f32.mrf.mxu0
      %v3246 = vadd.f32 0.0, %v3245
      %v3247 = vpop.f32.mrf.mxu0
      %v3248 = vpop.f32.mrf.mxu0
      %v3249 = vadd.f32 0.0, %v3248
      %v3250 = vpop.f32.mrf.mxu0
      %3251 = vmatprep.mubr.bf16.mxu0 0
      %3252 = vmatmul.mubr.bf16.gmra.mxu0 %v2962
      %v3253 = vpop.f32.mrf.mxu0
      %v3254 = vadd.f32 0.0, %v3253
      %v3255 = vpop.f32.mrf.mxu0
      %v3256 = vpop.f32.mrf.mxu0
      %v3257 = vadd.f32 0.0, %v3256
      %v3258 = vpop.f32.mrf.mxu0
      %3259 = vdwg.mxu0
      %v3260 = vadd.f32 %v2530, %v3070
      %v3261 = vadd.f32 %v2531, %v3073
      %v3262 = vadd.f32 %v2532, %v3078
      %v3263 = vadd.f32 %v2533, %v3081
      %v3264 = vadd.f32 %v2534, %v3086
      %v3265 = vadd.f32 %v2535, %v3089
      %v3266 = vadd.f32 %v2536, %v3094
      %v3267 = vadd.f32 %v2537, %v3097
      %v3268 = vadd.f32 %v2538, %v3102
      %v3269 = vadd.f32 %v2539, %v3105
      %v3270 = vadd.f32 %v2540, %v3110
      %v3271 = vadd.f32 %v2541, %v3113
      %v3272 = vadd.f32 %v2542, %v3118
      %v3273 = vadd.f32 %v2543, %v3121
      %v3274 = vadd.f32 %v2544, %v3126
      %v3275 = vadd.f32 %v2545, %v3129
      %v3276 = vadd.f32 %v2546, %v3134
      %v3277 = vadd.f32 %v2547, %v3137
      %v3278 = vadd.f32 %v2548, %v3142
      %v3279 = vadd.f32 %v2549, %v3145
      %v3280 = vadd.f32 %v2550, %v3150
      %v3281 = vadd.f32 %v2551, %v3153
      %v3282 = vadd.f32 %v2552, %v3158
      %v3283 = vadd.f32 %v2553, %v3161
      %v3284 = vadd.f32 %v2554, %v3166
      %v3285 = vadd.f32 %v2555, %v3169
      %v3286 = vadd.f32 %v2556, %v3174
      %v3287 = vadd.f32 %v2557, %v3177
      %v3288 = vadd.f32 %v2558, %v3182
      %v3289 = vadd.f32 %v2559, %v3185
      %v3290 = vadd.f32 %v2560, %v3190
      %v3291 = vadd.f32 %v2561, %v3193
      %v3292 = vadd.f32 %v2562, %v3198
      %v3293 = vadd.f32 %v2563, %v3201
      %v3294 = vadd.f32 %v2564, %v3206
      %v3295 = vadd.f32 %v2565, %v3209
      %v3296 = vadd.f32 %v2566, %v3214
      %v3297 = vadd.f32 %v2567, %v3217
      %v3298 = vadd.f32 %v2568, %v3222
      %v3299 = vadd.f32 %v2569, %v3225
      %v3300 = vadd.f32 %v2570, %v3230
      %v3301 = vadd.f32 %v2571, %v3233
      %v3302 = vadd.f32 %v2572, %v3238
      %v3303 = vadd.f32 %v2573, %v3241
      %v3304 = vadd.f32 %v2574, %v3246
      %v3305 = vadd.f32 %v2575, %v3249
      %v3306 = vadd.f32 %v2576, %v3254
      %v3307 = vadd.f32 %v2577, %v3257
      %v3308 = vld [vmem:[%s630 + $0xc] sm:$0xe]
      %s3309 = scalar_lea.vmem %s1, 320
      %v3310 = vld [vmem:[%s3309] sm:$0xf]
      %v3311 = vld [vmem:[%s3309 + $0x4] sm:$0xf]
      %v3312 = vld [vmem:[%s3309 + $0x8] sm:$0xf]
      %v3313 = vld [vmem:[%s3309 + $0xc] sm:$0xf]
      %v3314 = vld [vmem:[%s3309 + $0x10] sm:$0xf]
      %v3315 = vld [vmem:[%s3309 + $0x14] sm:$0xf]
      %v3316 = vld [vmem:[%s3309 + $0x18] sm:$0xf]
      %v3317 = vld [vmem:[%s3309 + $0x1c] sm:$0xf]
      %v3318 = vld [vmem:[%s3309 + $0x20] sm:$0xf]
      %v3319 = vld [vmem:[%s3309 + $0x24] sm:$0xf]
      %v3320 = vld [vmem:[%s3309 + $0x28] sm:$0xf]
      %v3321 = vld [vmem:[%s3309 + $0x2c] sm:$0xf]
      %v3322 = vld [vmem:[%s3309 + $0x30] sm:$0xf]
      %v3323 = vld [vmem:[%s3309 + $0x34] sm:$0xf]
      %v3324 = vld [vmem:[%s3309 + $0x38] sm:$0xf]
      %v3325 = vld [vmem:[%s3309 + $0x3c] sm:$0xf]
      %v3327 = vunpack.c.l.b16 %v3308
      %v3328 = vpack.c.b16 %v2694, %v3327
      %v3329 = vrot.slane %v3328, 1
      %v3330 = vrot.slane %v2743, 1
      %v3331 = vsel %vm1653, %v3329, %v3330
      %v3332 = vrot.slane %v2744, 1
      %v3333 = vsel %vm1653, %v3330, %v3332
      %v3334 = vrot.slane %v2745, 1
      %v3335 = vsel %vm1653, %v3332, %v3334
      %v3336 = vrot.slane %v2746, 1
      %v3337 = vsel %vm1653, %v3334, %v3336
      %v3338 = vrot.slane %v2747, 1
      %v3339 = vsel %vm1653, %v3336, %v3338
      %v3340 = vrot.slane %v2748, 1
      %v3341 = vsel %vm1653, %v3338, %v3340
      %v3342 = vrot.slane %v2749, 1
      %v3343 = vsel %vm1653, %v3340, %v3342
      %v3344 = vrot.slane %v2750, 1
      %v3345 = vsel %vm1653, %v3342, %v3344
      %v3346 = vrot.slane %v2751, 1
      %v3347 = vsel %vm1653, %v3344, %v3346
      %v3348 = vrot.slane %v2752, 1
      %v3349 = vsel %vm1653, %v3346, %v3348
      %v3350 = vrot.slane %v2753, 1
      %v3351 = vsel %vm1653, %v3348, %v3350
      %v3352 = vrot.slane %v2754, 1
      %v3353 = vsel %vm1653, %v3350, %v3352
      %v3354 = vrot.slane %v2755, 1
      %v3355 = vsel %vm1653, %v3352, %v3354
      %v3356 = vrot.slane %v2756, 1
      %v3357 = vsel %vm1653, %v3354, %v3356
      %v3358 = vrot.slane %v2757, 1
      %v3359 = vsel %vm1653, %v3356, %v3358
      %v3360 = vrot.slane %v2758, 1
      %v3361 = vsel %vm1653, %v3358, %v3360
      %v3362 = vrot.slane %v2759, 1
      %v3363 = vsel %vm1653, %v3360, %v3362
      %v3364 = vrot.slane %v2760, 1
      %v3365 = vsel %vm1653, %v3362, %v3364
      %v3366 = vrot.slane %v2761, 1
      %v3367 = vsel %vm1653, %v3364, %v3366
      %v3368 = vrot.slane %v2762, 1
      %v3369 = vsel %vm1653, %v3366, %v3368
      %v3370 = vrot.slane %v2763, 1
      %v3371 = vsel %vm1653, %v3368, %v3370
      %v3372 = vrot.slane %v2764, 1
      %v3373 = vsel %vm1653, %v3370, %v3372
      %v3374 = vrot.slane %v2765, 1
      %v3375 = vsel %vm1653, %v3372, %v3374
      %v3376 = vrot.slane %v2766, 1
      %v3377 = vsel %vm1653, %v3374, %v3376
      %v3418 = vunpack.c.l.b16 %v3310
      %v3419 = vunpack.c.l.b16 %v3311
      %v3420 = vunpack.c.l.b16 %v3312
      %v3421 = vunpack.c.l.b16 %v3313
      %v3422 = vunpack.c.l.b16 %v3314
      %v3423 = vunpack.c.l.b16 %v3315
      %v3424 = vunpack.c.l.b16 %v3316
      %v3425 = vunpack.c.l.b16 %v3317
      %v3426 = vunpack.c.l.b16 %v3318
      %v3427 = vunpack.c.l.b16 %v3319
      %v3428 = vunpack.c.l.b16 %v3320
      %v3429 = vunpack.c.l.b16 %v3321
      %v3430 = vunpack.c.l.b16 %v3322
      %v3431 = vunpack.c.l.b16 %v3323
      %v3432 = vunpack.c.l.b16 %v3324
      %v3433 = vunpack.c.l.b16 %v3325
      %v3434 = vpack.c.b16 %v3419, %v3418
      %v3435 = vpack.c.b16 %v3421, %v3420
      %v3436 = vpack.c.b16 %v3423, %v3422
      %v3437 = vpack.c.b16 %v3425, %v3424
      %v3438 = vpack.c.b16 %v3427, %v3426
      %v3439 = vpack.c.b16 %v3429, %v3428
      %v3440 = vpack.c.b16 %v3431, %v3430
      %v3441 = vpack.c.b16 %v3433, %v3432
      %3450 = vmatprep.subr.bf16.mxu0 0
      %3451 = vmatpush1.bf16.msra.mxu0 %v3441
      %3452 = vmatprep.subr.bf16.mxu0 0
      %3453 = vmatpush1.bf16.msra.mxu0 %v3440
      %3454 = vmatprep.subr.bf16.mxu0 0
      %3455 = vmatpush1.bf16.msra.mxu0 %v3439
      %3456 = vmatprep.subr.bf16.mxu0 0
      %3457 = vmatpush1.bf16.msra.mxu0 %v3438
      %3458 = vmatprep.subr.bf16.mxu0 0
      %3459 = vmatpush1.bf16.msra.mxu0 %v3437
      %3460 = vmatprep.subr.bf16.mxu0 0
      %3461 = vmatpush1.bf16.msra.mxu0 %v3436
      %3462 = vmatprep.subr.bf16.mxu0 0
      %3463 = vmatpush1.bf16.msra.mxu0 %v3435
      %3464 = vmatprep.subr.bf16.mxu0 0
      %3465 = vmatpush1.bf16.msra.mxu0 %v3434
      %3466 = vmatprep.subr.bf16.mxu0 0
      %3467 = vmatpush2.bf16.msra.mxu0 0
      %3468 = vmatprep.subr.bf16.mxu0 0
      %3469 = vmatpush2.bf16.msra.mxu0 0
      %3470 = vmatprep.subr.bf16.mxu0 0
      %3471 = vmatpush2.bf16.msra.mxu0 0
      %3472 = vmatprep.subr.bf16.mxu0 0
      %3473 = vmatpush2.bf16.msra.mxu0 0
      %3474 = vmatprep.subr.bf16.mxu0 0
      %3475 = vmatpush2.bf16.msra.mxu0 0
      %3476 = vmatprep.subr.bf16.mxu0 0
      %3477 = vmatpush2.bf16.msra.mxu0 0
      %3478 = vmatprep.subr.bf16.mxu0 0
      %3479 = vmatpush2.bf16.msra.mxu0 0
      %3480 = vmatprep.subr.bf16.mxu0 0
      %3481 = vmatpush2.bf16.msra.mxu0 0
      %3482 = vmatprep.mubr.bf16.mxu0 0
      %3483 = vmatmul.mubr.bf16.gmra.mxu0 %v3331
      %v3484 = vpop.f32.mrf.mxu0
      %v3485 = vadd.f32 0.0, %v3484
      %v3486 = vpop.f32.mrf.mxu0
      %v3487 = vpop.f32.mrf.mxu0
      %v3488 = vadd.f32 0.0, %v3487
      %v3489 = vpop.f32.mrf.mxu0
      %3490 = vmatprep.mubr.bf16.mxu0 0
      %3491 = vmatmul.mubr.bf16.gmra.mxu0 %v3333
      %v3492 = vpop.f32.mrf.mxu0
      %v3493 = vadd.f32 0.0, %v3492
      %v3494 = vpop.f32.mrf.mxu0
      %v3495 = vpop.f32.mrf.mxu0
      %v3496 = vadd.f32 0.0, %v3495
      %v3497 = vpop.f32.mrf.mxu0
      %3498 = vmatprep.mubr.bf16.mxu0 0
      %3499 = vmatmul.mubr.bf16.gmra.mxu0 %v3335
      %v3500 = vpop.f32.mrf.mxu0
      %v3501 = vadd.f32 0.0, %v3500
      %v3502 = vpop.f32.mrf.mxu0
      %v3503 = vpop.f32.mrf.mxu0
      %v3504 = vadd.f32 0.0, %v3503
      %v3505 = vpop.f32.mrf.mxu0
      %3506 = vmatprep.mubr.bf16.mxu0 0
      %3507 = vmatmul.mubr.bf16.gmra.mxu0 %v3337
      %v3508 = vpop.f32.mrf.mxu0
      %v3509 = vadd.f32 0.0, %v3508
      %v3510 = vpop.f32.mrf.mxu0
      %v3511 = vpop.f32.mrf.mxu0
      %v3512 = vadd.f32 0.0, %v3511
      %v3513 = vpop.f32.mrf.mxu0
      %3514 = vmatprep.mubr.bf16.mxu0 0
      %3515 = vmatmul.mubr.bf16.gmra.mxu0 %v3339
      %v3516 = vpop.f32.mrf.mxu0
      %v3517 = vadd.f32 0.0, %v3516
      %v3518 = vpop.f32.mrf.mxu0
      %v3519 = vpop.f32.mrf.mxu0
      %v3520 = vadd.f32 0.0, %v3519
      %v3521 = vpop.f32.mrf.mxu0
      %3522 = vmatprep.mubr.bf16.mxu0 0
      %3523 = vmatmul.mubr.bf16.gmra.mxu0 %v3341
      %v3524 = vpop.f32.mrf.mxu0
      %v3525 = vadd.f32 0.0, %v3524
      %v3526 = vpop.f32.mrf.mxu0
      %v3527 = vpop.f32.mrf.mxu0
      %v3528 = vadd.f32 0.0, %v3527
      %v3529 = vpop.f32.mrf.mxu0
      %3530 = vmatprep.mubr.bf16.mxu0 0
      %3531 = vmatmul.mubr.bf16.gmra.mxu0 %v3343
      %v3532 = vpop.f32.mrf.mxu0
      %v3533 = vadd.f32 0.0, %v3532
      %v3534 = vpop.f32.mrf.mxu0
      %v3535 = vpop.f32.mrf.mxu0
      %v3536 = vadd.f32 0.0, %v3535
      %v3537 = vpop.f32.mrf.mxu0
      %3538 = vmatprep.mubr.bf16.mxu0 0
      %3539 = vmatmul.mubr.bf16.gmra.mxu0 %v3345
      %v3540 = vpop.f32.mrf.mxu0
      %v3541 = vadd.f32 0.0, %v3540
      %v3542 = vpop.f32.mrf.mxu0
      %v3543 = vpop.f32.mrf.mxu0
      %v3544 = vadd.f32 0.0, %v3543
      %v3545 = vpop.f32.mrf.mxu0
      %3546 = vmatprep.mubr.bf16.mxu0 0
      %3547 = vmatmul.mubr.bf16.gmra.mxu0 %v3347
      %v3548 = vpop.f32.mrf.mxu0
      %v3549 = vadd.f32 0.0, %v3548
      %v3550 = vpop.f32.mrf.mxu0
      %v3551 = vpop.f32.mrf.mxu0
      %v3552 = vadd.f32 0.0, %v3551
      %v3553 = vpop.f32.mrf.mxu0
      %3554 = vmatprep.mubr.bf16.mxu0 0
      %3555 = vmatmul.mubr.bf16.gmra.mxu0 %v3349
      %v3556 = vpop.f32.mrf.mxu0
      %v3557 = vadd.f32 0.0, %v3556
      %v3558 = vpop.f32.mrf.mxu0
      %v3559 = vpop.f32.mrf.mxu0
      %v3560 = vadd.f32 0.0, %v3559
      %v3561 = vpop.f32.mrf.mxu0
      %3562 = vmatprep.mubr.bf16.mxu0 0
      %3563 = vmatmul.mubr.bf16.gmra.mxu0 %v3351
      %v3564 = vpop.f32.mrf.mxu0
      %v3565 = vadd.f32 0.0, %v3564
      %v3566 = vpop.f32.mrf.mxu0
      %v3567 = vpop.f32.mrf.mxu0
      %v3568 = vadd.f32 0.0, %v3567
      %v3569 = vpop.f32.mrf.mxu0
      %3570 = vmatprep.mubr.bf16.mxu0 0
      %3571 = vmatmul.mubr.bf16.gmra.mxu0 %v3353
      %v3572 = vpop.f32.mrf.mxu0
      %v3573 = vadd.f32 0.0, %v3572
      %v3574 = vpop.f32.mrf.mxu0
      %v3575 = vpop.f32.mrf.mxu0
      %v3576 = vadd.f32 0.0, %v3575
      %v3577 = vpop.f32.mrf.mxu0
      %3578 = vmatprep.mubr.bf16.mxu0 0
      %3579 = vmatmul.mubr.bf16.gmra.mxu0 %v3355
      %v3580 = vpop.f32.mrf.mxu0
      %v3581 = vadd.f32 0.0, %v3580
      %v3582 = vpop.f32.mrf.mxu0
      %v3583 = vpop.f32.mrf.mxu0
      %v3584 = vadd.f32 0.0, %v3583
      %v3585 = vpop.f32.mrf.mxu0
      %3586 = vmatprep.mubr.bf16.mxu0 0
      %3587 = vmatmul.mubr.bf16.gmra.mxu0 %v3357
      %v3588 = vpop.f32.mrf.mxu0
      %v3589 = vadd.f32 0.0, %v3588
      %v3590 = vpop.f32.mrf.mxu0
      %v3591 = vpop.f32.mrf.mxu0
      %v3592 = vadd.f32 0.0, %v3591
      %v3593 = vpop.f32.mrf.mxu0
      %3594 = vmatprep.mubr.bf16.mxu0 0
      %3595 = vmatmul.mubr.bf16.gmra.mxu0 %v3359
      %v3596 = vpop.f32.mrf.mxu0
      %v3597 = vadd.f32 0.0, %v3596
      %v3598 = vpop.f32.mrf.mxu0
      %v3599 = vpop.f32.mrf.mxu0
      %v3600 = vadd.f32 0.0, %v3599
      %v3601 = vpop.f32.mrf.mxu0
      %3602 = vmatprep.mubr.bf16.mxu0 0
      %3603 = vmatmul.mubr.bf16.gmra.mxu0 %v3361
      %v3604 = vpop.f32.mrf.mxu0
      %v3605 = vadd.f32 0.0, %v3604
      %v3606 = vpop.f32.mrf.mxu0
      %v3607 = vpop.f32.mrf.mxu0
      %v3608 = vadd.f32 0.0, %v3607
      %v3609 = vpop.f32.mrf.mxu0
      %3610 = vmatprep.mubr.bf16.mxu0 0
      %3611 = vmatmul.mubr.bf16.gmra.mxu0 %v3363
      %v3612 = vpop.f32.mrf.mxu0
      %v3613 = vadd.f32 0.0, %v3612
      %v3614 = vpop.f32.mrf.mxu0
      %v3615 = vpop.f32.mrf.mxu0
      %v3616 = vadd.f32 0.0, %v3615
      %v3617 = vpop.f32.mrf.mxu0
      %3618 = vmatprep.mubr.bf16.mxu0 0
      %3619 = vmatmul.mubr.bf16.gmra.mxu0 %v3365
      %v3620 = vpop.f32.mrf.mxu0
      %v3621 = vadd.f32 0.0, %v3620
      %v3622 = vpop.f32.mrf.mxu0
      %v3623 = vpop.f32.mrf.mxu0
      %v3624 = vadd.f32 0.0, %v3623
      %v3625 = vpop.f32.mrf.mxu0
      %3626 = vmatprep.mubr.bf16.mxu0 0
      %3627 = vmatmul.mubr.bf16.gmra.mxu0 %v3367
      %v3628 = vpop.f32.mrf.mxu0
      %v3629 = vadd.f32 0.0, %v3628
      %v3630 = vpop.f32.mrf.mxu0
      %v3631 = vpop.f32.mrf.mxu0
      %v3632 = vadd.f32 0.0, %v3631
      %v3633 = vpop.f32.mrf.mxu0
      %3634 = vmatprep.mubr.bf16.mxu0 0
      %3635 = vmatmul.mubr.bf16.gmra.mxu0 %v3369
      %v3636 = vpop.f32.mrf.mxu0
      %v3637 = vadd.f32 0.0, %v3636
      %v3638 = vpop.f32.mrf.mxu0
      %v3639 = vpop.f32.mrf.mxu0
      %v3640 = vadd.f32 0.0, %v3639
      %v3641 = vpop.f32.mrf.mxu0
      %3642 = vmatprep.mubr.bf16.mxu0 0
      %3643 = vmatmul.mubr.bf16.gmra.mxu0 %v3371
      %v3644 = vpop.f32.mrf.mxu0
      %v3645 = vadd.f32 0.0, %v3644
      %v3646 = vpop.f32.mrf.mxu0
      %v3647 = vpop.f32.mrf.mxu0
      %v3648 = vadd.f32 0.0, %v3647
      %v3649 = vpop.f32.mrf.mxu0
      %3650 = vmatprep.mubr.bf16.mxu0 0
      %3651 = vmatmul.mubr.bf16.gmra.mxu0 %v3373
      %v3652 = vpop.f32.mrf.mxu0
      %v3653 = vadd.f32 0.0, %v3652
      %v3654 = vpop.f32.mrf.mxu0
      %v3655 = vpop.f32.mrf.mxu0
      %v3656 = vadd.f32 0.0, %v3655
      %v3657 = vpop.f32.mrf.mxu0
      %3658 = vmatprep.mubr.bf16.mxu0 0
      %3659 = vmatmul.mubr.bf16.gmra.mxu0 %v3375
      %v3660 = vpop.f32.mrf.mxu0
      %v3661 = vadd.f32 0.0, %v3660
      %v3662 = vpop.f32.mrf.mxu0
      %v3663 = vpop.f32.mrf.mxu0
      %v3664 = vadd.f32 0.0, %v3663
      %v3665 = vpop.f32.mrf.mxu0
      %3666 = vmatprep.mubr.bf16.mxu0 0
      %3667 = vmatmul.mubr.bf16.gmra.mxu0 %v3377
      %v3668 = vpop.f32.mrf.mxu0
      %v3669 = vadd.f32 0.0, %v3668
      %v3670 = vpop.f32.mrf.mxu0
      %v3671 = vpop.f32.mrf.mxu0
      %v3672 = vadd.f32 0.0, %v3671
      %v3673 = vpop.f32.mrf.mxu0
      %3674 = vdwg.mxu0
      %v3675 = vadd.f32 %v3260, %v3485
      %v3676 = vadd.f32 %v3261, %v3488
      %v3677 = vadd.f32 %v3262, %v3493
      %v3678 = vadd.f32 %v3263, %v3496
      %v3679 = vadd.f32 %v3264, %v3501
      %v3680 = vadd.f32 %v3265, %v3504
      %v3681 = vadd.f32 %v3266, %v3509
      %v3682 = vadd.f32 %v3267, %v3512
      %v3683 = vadd.f32 %v3268, %v3517
      %v3684 = vadd.f32 %v3269, %v3520
      %v3685 = vadd.f32 %v3270, %v3525
      %v3686 = vadd.f32 %v3271, %v3528
      %v3687 = vadd.f32 %v3272, %v3533
      %v3688 = vadd.f32 %v3273, %v3536
      %v3689 = vadd.f32 %v3274, %v3541
      %v3690 = vadd.f32 %v3275, %v3544
      %v3691 = vadd.f32 %v3276, %v3549
      %v3692 = vadd.f32 %v3277, %v3552
      %v3693 = vadd.f32 %v3278, %v3557
      %v3694 = vadd.f32 %v3279, %v3560
      %v3695 = vadd.f32 %v3280, %v3565
      %v3696 = vadd.f32 %v3281, %v3568
      %v3697 = vadd.f32 %v3282, %v3573
      %v3698 = vadd.f32 %v3283, %v3576
      %v3699 = vadd.f32 %v3284, %v3581
      %v3700 = vadd.f32 %v3285, %v3584
      %v3701 = vadd.f32 %v3286, %v3589
      %v3702 = vadd.f32 %v3287, %v3592
      %v3703 = vadd.f32 %v3288, %v3597
      %v3704 = vadd.f32 %v3289, %v3600
      %v3705 = vadd.f32 %v3290, %v3605
      %v3706 = vadd.f32 %v3291, %v3608
      %v3707 = vadd.f32 %v3292, %v3613
      %v3708 = vadd.f32 %v3293, %v3616
      %v3709 = vadd.f32 %v3294, %v3621
      %v3710 = vadd.f32 %v3295, %v3624
      %v3711 = vadd.f32 %v3296, %v3629
      %v3712 = vadd.f32 %v3297, %v3632
      %v3713 = vadd.f32 %v3298, %v3637
      %v3714 = vadd.f32 %v3299, %v3640
      %v3715 = vadd.f32 %v3300, %v3645
      %v3716 = vadd.f32 %v3301, %v3648
      %v3717 = vadd.f32 %v3302, %v3653
      %v3718 = vadd.f32 %v3303, %v3656
      %v3719 = vadd.f32 %v3304, %v3661
      %v3720 = vadd.f32 %v3305, %v3664
      %v3721 = vadd.f32 %v3306, %v3669
      %v3722 = vadd.f32 %v3307, %v3672
      %v3723 = vld [vmem:[%s630 + $0x18] sm:$0xf]
      %v3724 = vld [vmem:[%s630 + $0x1c] sm:$0xf]
      %v3725 = vld [vmem:[%s630 + $0x20] sm:$0xf]
      %v3726 = vld [vmem:[%s630 + $0x24] sm:$0xf]
      %v3727 = vld [vmem:[%s630 + $0x28] sm:$0xf]
      %v3728 = vld [vmem:[%s630 + $0x2c] sm:$0xf]
      %v3729 = vld [vmem:[%s630 + $0x30] sm:$0xf]
      %v3730 = vld [vmem:[%s630 + $0x34] sm:$0xf]
      %v3731 = vld [vmem:[%s630 + $0x38] sm:$0xf]
      %v3732 = vld [vmem:[%s630 + $0x3c] sm:$0xf]
      %v3733 = vld [vmem:[%s630 + $0x40] sm:$0xf]
      %v3734 = vld [vmem:[%s630 + $0x44] sm:$0xf]
      %v3735 = vld [vmem:[%s630 + $0x48] sm:$0xf]
      %v3736 = vld [vmem:[%s630 + $0x4c] sm:$0xf]
      %v3737 = vld [vmem:[%s630 + $0x50] sm:$0xf]
      %v3738 = vld [vmem:[%s630 + $0x54] sm:$0xf]
      %v3739 = vld [vmem:[%s630 + $0x58] sm:$0xf]
      %v3740 = vld [vmem:[%s630 + $0x5c] sm:$0xf]
      %v3741 = vld [vmem:[%s630 + $0x60] sm:$0xf]
      %v3742 = vld [vmem:[%s630 + $0x64] sm:$0xf]
      %v3743 = vld [vmem:[%s630 + $0x68] sm:$0xf]
      %v3744 = vld [vmem:[%s630 + $0x6c] sm:$0xf]
      %v3745 = vld [vmem:[%s630 + $0x70] sm:$0xf]
      %v3746 = vld [vmem:[%s630 + $0x74] sm:$0xf]
      %v3747 = vld [vmem:[%s630 + $0x78] sm:$0xf]
      %v3748 = vld [vmem:[%s630 + $0x7c] sm:$0xf]
      %v3749 = vld [vmem:[%s630 + $0x80] sm:$0xf]
      %v3750 = vld [vmem:[%s630 + $0x84] sm:$0xf]
      %v3751 = vld [vmem:[%s630 + $0x88] sm:$0xf]
      %v3752 = vld [vmem:[%s630 + $0x8c] sm:$0xf]
      %v3753 = vld [vmem:[%s630 + $0x90] sm:$0xf]
      %v3754 = vld [vmem:[%s630 + $0x94] sm:$0xf]
      %v3755 = vld [vmem:[%s630 + $0x98] sm:$0xf]
      %v3756 = vld [vmem:[%s630 + $0x9c] sm:$0xf]
      %v3757 = vld [vmem:[%s630 + $0xa0] sm:$0xf]
      %v3758 = vld [vmem:[%s630 + $0xa4] sm:$0xf]
      %v3759 = vld [vmem:[%s630 + $0xa8] sm:$0xf]
      %v3760 = vld [vmem:[%s630 + $0xac] sm:$0xf]
      %v3761 = vld [vmem:[%s630 + $0xb0] sm:$0xf]
      %v3762 = vld [vmem:[%s630 + $0xb4] sm:$0xf]
      %v3763 = vld [vmem:[%s630 + $0xb8] sm:$0xf]
      %v3764 = vld [vmem:[%s630 + $0xbc] sm:$0xf]
      %v3765 = vld [vmem:[%s630 + $0xc0] sm:$0xf]
      %v3766 = vld [vmem:[%s630 + $0xc4] sm:$0xf]
      %v3767 = vld [vmem:[%s630 + $0xc8] sm:$0xf]
      %v3768 = vld [vmem:[%s630 + $0xcc] sm:$0xf]
      %v3769 = vld [vmem:[%s630 + $0xd0] sm:$0xf]
      %v3770 = vld [vmem:[%s630 + $0xd4] sm:$0xf]
      %s3771 = scalar_lea.vmem %s1, 384
      %v3772 = vld [vmem:[%s3771] sm:$0xf]
      %v3773 = vld [vmem:[%s3771 + $0x4] sm:$0xf]
      %v3774 = vld [vmem:[%s3771 + $0x8] sm:$0xf]
      %v3775 = vld [vmem:[%s3771 + $0xc] sm:$0xf]
      %v3776 = vld [vmem:[%s3771 + $0x10] sm:$0xf]
      %v3777 = vld [vmem:[%s3771 + $0x14] sm:$0xf]
      %v3778 = vld [vmem:[%s3771 + $0x18] sm:$0xf]
      %v3779 = vld [vmem:[%s3771 + $0x1c] sm:$0xf]
      %v3780 = vld [vmem:[%s3771 + $0x20] sm:$0xf]
      %v3781 = vld [vmem:[%s3771 + $0x24] sm:$0xf]
      %v3782 = vld [vmem:[%s3771 + $0x28] sm:$0xf]
      %v3783 = vld [vmem:[%s3771 + $0x2c] sm:$0xf]
      %v3784 = vld [vmem:[%s3771 + $0x30] sm:$0xf]
      %v3785 = vld [vmem:[%s3771 + $0x34] sm:$0xf]
      %v3786 = vld [vmem:[%s3771 + $0x38] sm:$0xf]
      %v3787 = vld [vmem:[%s3771 + $0x3c] sm:$0xf]
      %v3836 = vunpack.c.l.b16 %v3723
      %v3837 = vunpack.c.l.b16 %v3724
      %v3838 = vunpack.c.l.b16 %v3725
      %v3839 = vunpack.c.l.b16 %v3726
      %v3840 = vunpack.c.l.b16 %v3727
      %v3841 = vunpack.c.l.b16 %v3728
      %v3842 = vunpack.c.l.b16 %v3729
      %v3843 = vunpack.c.l.b16 %v3730
      %v3844 = vunpack.c.l.b16 %v3731
      %v3845 = vunpack.c.l.b16 %v3732
      %v3846 = vunpack.c.l.b16 %v3733
      %v3847 = vunpack.c.l.b16 %v3734
      %v3848 = vunpack.c.l.b16 %v3735
      %v3849 = vunpack.c.l.b16 %v3736
      %v3850 = vunpack.c.l.b16 %v3737
      %v3851 = vunpack.c.l.b16 %v3738
      %v3852 = vunpack.c.l.b16 %v3739
      %v3853 = vunpack.c.l.b16 %v3740
      %v3854 = vunpack.c.l.b16 %v3741
      %v3855 = vunpack.c.l.b16 %v3742
      %v3856 = vunpack.c.l.b16 %v3743
      %v3857 = vunpack.c.l.b16 %v3744
      %v3858 = vunpack.c.l.b16 %v3745
      %v3859 = vunpack.c.l.b16 %v3746
      %v3860 = vunpack.c.l.b16 %v3747
      %v3861 = vunpack.c.l.b16 %v3748
      %v3862 = vunpack.c.l.b16 %v3749
      %v3863 = vunpack.c.l.b16 %v3750
      %v3864 = vunpack.c.l.b16 %v3751
      %v3865 = vunpack.c.l.b16 %v3752
      %v3866 = vunpack.c.l.b16 %v3753
      %v3867 = vunpack.c.l.b16 %v3754
      %v3868 = vunpack.c.l.b16 %v3755
      %v3869 = vunpack.c.l.b16 %v3756
      %v3870 = vunpack.c.l.b16 %v3757
      %v3871 = vunpack.c.l.b16 %v3758
      %v3872 = vunpack.c.l.b16 %v3759
      %v3873 = vunpack.c.l.b16 %v3760
      %v3874 = vunpack.c.l.b16 %v3761
      %v3875 = vunpack.c.l.b16 %v3762
      %v3876 = vunpack.c.l.b16 %v3763
      %v3877 = vunpack.c.l.b16 %v3764
      %v3878 = vunpack.c.l.b16 %v3765
      %v3879 = vunpack.c.l.b16 %v3766
      %v3880 = vunpack.c.l.b16 %v3767
      %v3881 = vunpack.c.l.b16 %v3768
      %v3882 = vunpack.c.l.b16 %v3769
      %v3883 = vunpack.c.l.b16 %v3770
      %v3884 = vpack.c.b16 %v3837, %v3836
      %v3885 = vpack.c.b16 %v3839, %v3838
      %v3886 = vpack.c.b16 %v3841, %v3840
      %v3887 = vpack.c.b16 %v3843, %v3842
      %v3888 = vpack.c.b16 %v3845, %v3844
      %v3889 = vpack.c.b16 %v3847, %v3846
      %v3890 = vpack.c.b16 %v3849, %v3848
      %v3891 = vpack.c.b16 %v3851, %v3850
      %v3892 = vpack.c.b16 %v3853, %v3852
      %v3893 = vpack.c.b16 %v3855, %v3854
      %v3894 = vpack.c.b16 %v3857, %v3856
      %v3895 = vpack.c.b16 %v3859, %v3858
      %v3896 = vpack.c.b16 %v3861, %v3860
      %v3897 = vpack.c.b16 %v3863, %v3862
      %v3898 = vpack.c.b16 %v3865, %v3864
      %v3899 = vpack.c.b16 %v3867, %v3866
      %v3900 = vpack.c.b16 %v3869, %v3868
      %v3901 = vpack.c.b16 %v3871, %v3870
      %v3902 = vpack.c.b16 %v3873, %v3872
      %v3903 = vpack.c.b16 %v3875, %v3874
      %v3904 = vpack.c.b16 %v3877, %v3876
      %v3905 = vpack.c.b16 %v3879, %v3878
      %v3906 = vpack.c.b16 %v3881, %v3880
      %v3907 = vpack.c.b16 %v3883, %v3882
      %v3948 = vunpack.c.l.b16 %v3772
      %v3949 = vunpack.c.l.b16 %v3773
      %v3950 = vunpack.c.l.b16 %v3774
      %v3951 = vunpack.c.l.b16 %v3775
      %v3952 = vunpack.c.l.b16 %v3776
      %v3953 = vunpack.c.l.b16 %v3777
      %v3954 = vunpack.c.l.b16 %v3778
      %v3955 = vunpack.c.l.b16 %v3779
      %v3956 = vunpack.c.l.b16 %v3780
      %v3957 = vunpack.c.l.b16 %v3781
      %v3958 = vunpack.c.l.b16 %v3782
      %v3959 = vunpack.c.l.b16 %v3783
      %v3960 = vunpack.c.l.b16 %v3784
      %v3961 = vunpack.c.l.b16 %v3785
      %v3962 = vunpack.c.l.b16 %v3786
      %v3963 = vunpack.c.l.b16 %v3787
      %v3964 = vpack.c.b16 %v3949, %v3948
      %v3965 = vpack.c.b16 %v3951, %v3950
      %v3966 = vpack.c.b16 %v3953, %v3952
      %v3967 = vpack.c.b16 %v3955, %v3954
      %v3968 = vpack.c.b16 %v3957, %v3956
      %v3969 = vpack.c.b16 %v3959, %v3958
      %v3970 = vpack.c.b16 %v3961, %v3960
      %v3971 = vpack.c.b16 %v3963, %v3962
      %3980 = vmatprep.subr.bf16.mxu0 0
      %3981 = vmatpush1.bf16.msra.mxu0 %v3971
      %3982 = vmatprep.subr.bf16.mxu0 0
      %3983 = vmatpush1.bf16.msra.mxu0 %v3970
      %3984 = vmatprep.subr.bf16.mxu0 0
      %3985 = vmatpush1.bf16.msra.mxu0 %v3969
      %3986 = vmatprep.subr.bf16.mxu0 0
      %3987 = vmatpush1.bf16.msra.mxu0 %v3968
      %3988 = vmatprep.subr.bf16.mxu0 0
      %3989 = vmatpush1.bf16.msra.mxu0 %v3967
      %3990 = vmatprep.subr.bf16.mxu0 0
      %3991 = vmatpush1.bf16.msra.mxu0 %v3966
      %3992 = vmatprep.subr.bf16.mxu0 0
      %3993 = vmatpush1.bf16.msra.mxu0 %v3965
      %3994 = vmatprep.subr.bf16.mxu0 0
      %3995 = vmatpush1.bf16.msra.mxu0 %v3964
      %3996 = vmatprep.subr.bf16.mxu0 0
      %3997 = vmatpush2.bf16.msra.mxu0 0
      %3998 = vmatprep.subr.bf16.mxu0 0
      %3999 = vmatpush2.bf16.msra.mxu0 0
      %4000 = vmatprep.subr.bf16.mxu0 0
      %4001 = vmatpush2.bf16.msra.mxu0 0
      %4002 = vmatprep.subr.bf16.mxu0 0
      %4003 = vmatpush2.bf16.msra.mxu0 0
      %4004 = vmatprep.subr.bf16.mxu0 0
      %4005 = vmatpush2.bf16.msra.mxu0 0
      %4006 = vmatprep.subr.bf16.mxu0 0
      %4007 = vmatpush2.bf16.msra.mxu0 0
      %4008 = vmatprep.subr.bf16.mxu0 0
      %4009 = vmatpush2.bf16.msra.mxu0 0
      %4010 = vmatprep.subr.bf16.mxu0 0
      %4011 = vmatpush2.bf16.msra.mxu0 0
      %4012 = vmatprep.mubr.bf16.mxu0 0
      %4013 = vmatmul.mubr.bf16.gmra.mxu0 %v3884
      %v4014 = vpop.f32.mrf.mxu0
      %v4015 = vadd.f32 0.0, %v4014
      %v4016 = vpop.f32.mrf.mxu0
      %v4017 = vpop.f32.mrf.mxu0
      %v4018 = vadd.f32 0.0, %v4017
      %v4019 = vpop.f32.mrf.mxu0
      %4020 = vmatprep.mubr.bf16.mxu0 0
      %4021 = vmatmul.mubr.bf16.gmra.mxu0 %v3885
      %v4022 = vpop.f32.mrf.mxu0
      %v4023 = vadd.f32 0.0, %v4022
      %v4024 = vpop.f32.mrf.mxu0
      %v4025 = vpop.f32.mrf.mxu0
      %v4026 = vadd.f32 0.0, %v4025
      %v4027 = vpop.f32.mrf.mxu0
      %4028 = vmatprep.mubr.bf16.mxu0 0
      %4029 = vmatmul.mubr.bf16.gmra.mxu0 %v3886
      %v4030 = vpop.f32.mrf.mxu0
      %v4031 = vadd.f32 0.0, %v4030
      %v4032 = vpop.f32.mrf.mxu0
      %v4033 = vpop.f32.mrf.mxu0
      %v4034 = vadd.f32 0.0, %v4033
      %v4035 = vpop.f32.mrf.mxu0
      %4036 = vmatprep.mubr.bf16.mxu0 0
      %4037 = vmatmul.mubr.bf16.gmra.mxu0 %v3887
      %v4038 = vpop.f32.mrf.mxu0
      %v4039 = vadd.f32 0.0, %v4038
      %v4040 = vpop.f32.mrf.mxu0
      %v4041 = vpop.f32.mrf.mxu0
      %v4042 = vadd.f32 0.0, %v4041
      %v4043 = vpop.f32.mrf.mxu0
      %4044 = vmatprep.mubr.bf16.mxu0 0
      %4045 = vmatmul.mubr.bf16.gmra.mxu0 %v3888
      %v4046 = vpop.f32.mrf.mxu0
      %v4047 = vadd.f32 0.0, %v4046
      %v4048 = vpop.f32.mrf.mxu0
      %v4049 = vpop.f32.mrf.mxu0
      %v4050 = vadd.f32 0.0, %v4049
      %v4051 = vpop.f32.mrf.mxu0
      %4052 = vmatprep.mubr.bf16.mxu0 0
      %4053 = vmatmul.mubr.bf16.gmra.mxu0 %v3889
      %v4054 = vpop.f32.mrf.mxu0
      %v4055 = vadd.f32 0.0, %v4054
      %v4056 = vpop.f32.mrf.mxu0
      %v4057 = vpop.f32.mrf.mxu0
      %v4058 = vadd.f32 0.0, %v4057
      %v4059 = vpop.f32.mrf.mxu0
      %4060 = vmatprep.mubr.bf16.mxu0 0
      %4061 = vmatmul.mubr.bf16.gmra.mxu0 %v3890
      %v4062 = vpop.f32.mrf.mxu0
      %v4063 = vadd.f32 0.0, %v4062
      %v4064 = vpop.f32.mrf.mxu0
      %v4065 = vpop.f32.mrf.mxu0
      %v4066 = vadd.f32 0.0, %v4065
      %v4067 = vpop.f32.mrf.mxu0
      %4068 = vmatprep.mubr.bf16.mxu0 0
      %4069 = vmatmul.mubr.bf16.gmra.mxu0 %v3891
      %v4070 = vpop.f32.mrf.mxu0
      %v4071 = vadd.f32 0.0, %v4070
      %v4072 = vpop.f32.mrf.mxu0
      %v4073 = vpop.f32.mrf.mxu0
      %v4074 = vadd.f32 0.0, %v4073
      %v4075 = vpop.f32.mrf.mxu0
      %4076 = vmatprep.mubr.bf16.mxu0 0
      %4077 = vmatmul.mubr.bf16.gmra.mxu0 %v3892
      %v4078 = vpop.f32.mrf.mxu0
      %v4079 = vadd.f32 0.0, %v4078
      %v4080 = vpop.f32.mrf.mxu0
      %v4081 = vpop.f32.mrf.mxu0
      %v4082 = vadd.f32 0.0, %v4081
      %v4083 = vpop.f32.mrf.mxu0
      %4084 = vmatprep.mubr.bf16.mxu0 0
      %4085 = vmatmul.mubr.bf16.gmra.mxu0 %v3893
      %v4086 = vpop.f32.mrf.mxu0
      %v4087 = vadd.f32 0.0, %v4086
      %v4088 = vpop.f32.mrf.mxu0
      %v4089 = vpop.f32.mrf.mxu0
      %v4090 = vadd.f32 0.0, %v4089
      %v4091 = vpop.f32.mrf.mxu0
      %4092 = vmatprep.mubr.bf16.mxu0 0
      %4093 = vmatmul.mubr.bf16.gmra.mxu0 %v3894
      %v4094 = vpop.f32.mrf.mxu0
      %v4095 = vadd.f32 0.0, %v4094
      %v4096 = vpop.f32.mrf.mxu0
      %v4097 = vpop.f32.mrf.mxu0
      %v4098 = vadd.f32 0.0, %v4097
      %v4099 = vpop.f32.mrf.mxu0
      %4100 = vmatprep.mubr.bf16.mxu0 0
      %4101 = vmatmul.mubr.bf16.gmra.mxu0 %v3895
      %v4102 = vpop.f32.mrf.mxu0
      %v4103 = vadd.f32 0.0, %v4102
      %v4104 = vpop.f32.mrf.mxu0
      %v4105 = vpop.f32.mrf.mxu0
      %v4106 = vadd.f32 0.0, %v4105
      %v4107 = vpop.f32.mrf.mxu0
      %4108 = vmatprep.mubr.bf16.mxu0 0
      %4109 = vmatmul.mubr.bf16.gmra.mxu0 %v3896
      %v4110 = vpop.f32.mrf.mxu0
      %v4111 = vadd.f32 0.0, %v4110
      %v4112 = vpop.f32.mrf.mxu0
      %v4113 = vpop.f32.mrf.mxu0
      %v4114 = vadd.f32 0.0, %v4113
      %v4115 = vpop.f32.mrf.mxu0
      %4116 = vmatprep.mubr.bf16.mxu0 0
      %4117 = vmatmul.mubr.bf16.gmra.mxu0 %v3897
      %v4118 = vpop.f32.mrf.mxu0
      %v4119 = vadd.f32 0.0, %v4118
      %v4120 = vpop.f32.mrf.mxu0
      %v4121 = vpop.f32.mrf.mxu0
      %v4122 = vadd.f32 0.0, %v4121
      %v4123 = vpop.f32.mrf.mxu0
      %4124 = vmatprep.mubr.bf16.mxu0 0
      %4125 = vmatmul.mubr.bf16.gmra.mxu0 %v3898
      %v4126 = vpop.f32.mrf.mxu0
      %v4127 = vadd.f32 0.0, %v4126
      %v4128 = vpop.f32.mrf.mxu0
      %v4129 = vpop.f32.mrf.mxu0
      %v4130 = vadd.f32 0.0, %v4129
      %v4131 = vpop.f32.mrf.mxu0
      %4132 = vmatprep.mubr.bf16.mxu0 0
      %4133 = vmatmul.mubr.bf16.gmra.mxu0 %v3899
      %v4134 = vpop.f32.mrf.mxu0
      %v4135 = vadd.f32 0.0, %v4134
      %v4136 = vpop.f32.mrf.mxu0
      %v4137 = vpop.f32.mrf.mxu0
      %v4138 = vadd.f32 0.0, %v4137
      %v4139 = vpop.f32.mrf.mxu0
      %4140 = vmatprep.mubr.bf16.mxu0 0
      %4141 = vmatmul.mubr.bf16.gmra.mxu0 %v3900
      %v4142 = vpop.f32.mrf.mxu0
      %v4143 = vadd.f32 0.0, %v4142
      %v4144 = vpop.f32.mrf.mxu0
      %v4145 = vpop.f32.mrf.mxu0
      %v4146 = vadd.f32 0.0, %v4145
      %v4147 = vpop.f32.mrf.mxu0
      %4148 = vmatprep.mubr.bf16.mxu0 0
      %4149 = vmatmul.mubr.bf16.gmra.mxu0 %v3901
      %v4150 = vpop.f32.mrf.mxu0
      %v4151 = vadd.f32 0.0, %v4150
      %v4152 = vpop.f32.mrf.mxu0
      %v4153 = vpop.f32.mrf.mxu0
      %v4154 = vadd.f32 0.0, %v4153
      %v4155 = vpop.f32.mrf.mxu0
      %4156 = vmatprep.mubr.bf16.mxu0 0
      %4157 = vmatmul.mubr.bf16.gmra.mxu0 %v3902
      %v4158 = vpop.f32.mrf.mxu0
      %v4159 = vadd.f32 0.0, %v4158
      %v4160 = vpop.f32.mrf.mxu0
      %v4161 = vpop.f32.mrf.mxu0
      %v4162 = vadd.f32 0.0, %v4161
      %v4163 = vpop.f32.mrf.mxu0
      %4164 = vmatprep.mubr.bf16.mxu0 0
      %4165 = vmatmul.mubr.bf16.gmra.mxu0 %v3903
      %v4166 = vpop.f32.mrf.mxu0
      %v4167 = vadd.f32 0.0, %v4166
      %v4168 = vpop.f32.mrf.mxu0
      %v4169 = vpop.f32.mrf.mxu0
      %v4170 = vadd.f32 0.0, %v4169
      %v4171 = vpop.f32.mrf.mxu0
      %4172 = vmatprep.mubr.bf16.mxu0 0
      %4173 = vmatmul.mubr.bf16.gmra.mxu0 %v3904
      %v4174 = vpop.f32.mrf.mxu0
      %v4175 = vadd.f32 0.0, %v4174
      %v4176 = vpop.f32.mrf.mxu0
      %v4177 = vpop.f32.mrf.mxu0
      %v4178 = vadd.f32 0.0, %v4177
      %v4179 = vpop.f32.mrf.mxu0
      %4180 = vmatprep.mubr.bf16.mxu0 0
      %4181 = vmatmul.mubr.bf16.gmra.mxu0 %v3905
      %v4182 = vpop.f32.mrf.mxu0
      %v4183 = vadd.f32 0.0, %v4182
      %v4184 = vpop.f32.mrf.mxu0
      %v4185 = vpop.f32.mrf.mxu0
      %v4186 = vadd.f32 0.0, %v4185
      %v4187 = vpop.f32.mrf.mxu0
      %4188 = vmatprep.mubr.bf16.mxu0 0
      %4189 = vmatmul.mubr.bf16.gmra.mxu0 %v3906
      %v4190 = vpop.f32.mrf.mxu0
      %v4191 = vadd.f32 0.0, %v4190
      %v4192 = vpop.f32.mrf.mxu0
      %v4193 = vpop.f32.mrf.mxu0
      %v4194 = vadd.f32 0.0, %v4193
      %v4195 = vpop.f32.mrf.mxu0
      %4196 = vmatprep.mubr.bf16.mxu0 0
      %4197 = vmatmul.mubr.bf16.gmra.mxu0 %v3907
      %v4198 = vpop.f32.mrf.mxu0
      %v4199 = vadd.f32 0.0, %v4198
      %v4200 = vpop.f32.mrf.mxu0
      %v4201 = vpop.f32.mrf.mxu0
      %v4202 = vadd.f32 0.0, %v4201
      %v4203 = vpop.f32.mrf.mxu0
      %4204 = vdwg.mxu0
      %v4205 = vadd.f32 %v3675, %v4015
      %v4206 = vadd.f32 %v3676, %v4018
      %v4207 = vadd.f32 %v3677, %v4023
      %v4208 = vadd.f32 %v3678, %v4026
      %v4209 = vadd.f32 %v3679, %v4031
      %v4210 = vadd.f32 %v3680, %v4034
      %v4211 = vadd.f32 %v3681, %v4039
      %v4212 = vadd.f32 %v3682, %v4042
      %v4213 = vadd.f32 %v3683, %v4047
      %v4214 = vadd.f32 %v3684, %v4050
      %v4215 = vadd.f32 %v3685, %v4055
      %v4216 = vadd.f32 %v3686, %v4058
      %v4217 = vadd.f32 %v3687, %v4063
      %v4218 = vadd.f32 %v3688, %v4066
      %v4219 = vadd.f32 %v3689, %v4071
      %v4220 = vadd.f32 %v3690, %v4074
      %v4221 = vadd.f32 %v3691, %v4079
      %v4222 = vadd.f32 %v3692, %v4082
      %v4223 = vadd.f32 %v3693, %v4087
      %v4224 = vadd.f32 %v3694, %v4090
      %v4225 = vadd.f32 %v3695, %v4095
      %v4226 = vadd.f32 %v3696, %v4098
      %v4227 = vadd.f32 %v3697, %v4103
      %v4228 = vadd.f32 %v3698, %v4106
      %v4229 = vadd.f32 %v3699, %v4111
      %v4230 = vadd.f32 %v3700, %v4114
      %v4231 = vadd.f32 %v3701, %v4119
      %v4232 = vadd.f32 %v3702, %v4122
      %v4233 = vadd.f32 %v3703, %v4127
      %v4234 = vadd.f32 %v3704, %v4130
      %v4235 = vadd.f32 %v3705, %v4135
      %v4236 = vadd.f32 %v3706, %v4138
      %v4237 = vadd.f32 %v3707, %v4143
      %v4238 = vadd.f32 %v3708, %v4146
      %v4239 = vadd.f32 %v3709, %v4151
      %v4240 = vadd.f32 %v3710, %v4154
      %v4241 = vadd.f32 %v3711, %v4159
      %v4242 = vadd.f32 %v3712, %v4162
      %v4243 = vadd.f32 %v3713, %v4167
      %v4244 = vadd.f32 %v3714, %v4170
      %v4245 = vadd.f32 %v3715, %v4175
      %v4246 = vadd.f32 %v3716, %v4178
      %v4247 = vadd.f32 %v3717, %v4183
      %v4248 = vadd.f32 %v3718, %v4186
      %v4249 = vadd.f32 %v3719, %v4191
      %v4250 = vadd.f32 %v3720, %v4194
      %v4251 = vadd.f32 %v3721, %v4199
      %v4252 = vadd.f32 %v3722, %v4202
      %v4253 = vld [vmem:[%s630 + $0x18] sm:$0xf]
      %v4254 = vld [vmem:[%s630 + $0x1c] sm:$0xf]
      %v4255 = vld [vmem:[%s630 + $0x20] sm:$0xf]
      %v4256 = vld [vmem:[%s630 + $0x24] sm:$0xf]
      %v4257 = vld [vmem:[%s630 + $0x28] sm:$0xf]
      %v4258 = vld [vmem:[%s630 + $0x2c] sm:$0xf]
      %v4259 = vld [vmem:[%s630 + $0x30] sm:$0xf]
      %v4260 = vld [vmem:[%s630 + $0x34] sm:$0xf]
      %v4261 = vld [vmem:[%s630 + $0x38] sm:$0xf]
      %v4262 = vld [vmem:[%s630 + $0x3c] sm:$0xf]
      %v4263 = vld [vmem:[%s630 + $0x40] sm:$0xf]
      %v4264 = vld [vmem:[%s630 + $0x44] sm:$0xf]
      %v4265 = vld [vmem:[%s630 + $0x48] sm:$0xf]
      %v4266 = vld [vmem:[%s630 + $0x4c] sm:$0xf]
      %v4267 = vld [vmem:[%s630 + $0x50] sm:$0xf]
      %v4268 = vld [vmem:[%s630 + $0x54] sm:$0xf]
      %v4269 = vld [vmem:[%s630 + $0x58] sm:$0xf]
      %v4270 = vld [vmem:[%s630 + $0x5c] sm:$0xf]
      %v4271 = vld [vmem:[%s630 + $0x60] sm:$0xf]
      %v4272 = vld [vmem:[%s630 + $0x64] sm:$0xf]
      %v4273 = vld [vmem:[%s630 + $0x68] sm:$0xf]
      %v4274 = vld [vmem:[%s630 + $0x6c] sm:$0xf]
      %v4275 = vld [vmem:[%s630 + $0x70] sm:$0xf]
      %v4276 = vld [vmem:[%s630 + $0x74] sm:$0xf]
      %v4277 = vld [vmem:[%s630 + $0x78] sm:$0xf]
      %v4278 = vld [vmem:[%s630 + $0x7c] sm:$0xf]
      %v4279 = vld [vmem:[%s630 + $0x80] sm:$0xf]
      %v4280 = vld [vmem:[%s630 + $0x84] sm:$0xf]
      %v4281 = vld [vmem:[%s630 + $0x88] sm:$0xf]
      %v4282 = vld [vmem:[%s630 + $0x8c] sm:$0xf]
      %v4283 = vld [vmem:[%s630 + $0x90] sm:$0xf]
      %v4284 = vld [vmem:[%s630 + $0x94] sm:$0xf]
      %v4285 = vld [vmem:[%s630 + $0x98] sm:$0xf]
      %v4286 = vld [vmem:[%s630 + $0x9c] sm:$0xf]
      %v4287 = vld [vmem:[%s630 + $0xa0] sm:$0xf]
      %v4288 = vld [vmem:[%s630 + $0xa4] sm:$0xf]
      %v4289 = vld [vmem:[%s630 + $0xa8] sm:$0xf]
      %v4290 = vld [vmem:[%s630 + $0xac] sm:$0xf]
      %v4291 = vld [vmem:[%s630 + $0xb0] sm:$0xf]
      %v4292 = vld [vmem:[%s630 + $0xb4] sm:$0xf]
      %v4293 = vld [vmem:[%s630 + $0xb8] sm:$0xf]
      %v4294 = vld [vmem:[%s630 + $0xbc] sm:$0xf]
      %v4295 = vld [vmem:[%s630 + $0xc0] sm:$0xf]
      %v4296 = vld [vmem:[%s630 + $0xc4] sm:$0xf]
      %v4297 = vld [vmem:[%s630 + $0xc8] sm:$0xf]
      %v4298 = vld [vmem:[%s630 + $0xcc] sm:$0xf]
      %v4299 = vld [vmem:[%s630 + $0xd0] sm:$0xf]
      %v4300 = vld [vmem:[%s630 + $0xd4] sm:$0xf]
      %v4301 = vld [vmem:[%s630 + $0xd8] sm:$0x1]
      %s4302 = scalar_lea.vmem %s1, 448
      %v4303 = vld [vmem:[%s4302] sm:$0xf]
      %v4304 = vld [vmem:[%s4302 + $0x4] sm:$0xf]
      %v4305 = vld [vmem:[%s4302 + $0x8] sm:$0xf]
      %v4306 = vld [vmem:[%s4302 + $0xc] sm:$0xf]
      %v4307 = vld [vmem:[%s4302 + $0x10] sm:$0xf]
      %v4308 = vld [vmem:[%s4302 + $0x14] sm:$0xf]
      %v4309 = vld [vmem:[%s4302 + $0x18] sm:$0xf]
      %v4310 = vld [vmem:[%s4302 + $0x1c] sm:$0xf]
      %v4311 = vld [vmem:[%s4302 + $0x20] sm:$0xf]
      %v4312 = vld [vmem:[%s4302 + $0x24] sm:$0xf]
      %v4313 = vld [vmem:[%s4302 + $0x28] sm:$0xf]
      %v4314 = vld [vmem:[%s4302 + $0x2c] sm:$0xf]
      %v4315 = vld [vmem:[%s4302 + $0x30] sm:$0xf]
      %v4316 = vld [vmem:[%s4302 + $0x34] sm:$0xf]
      %v4317 = vld [vmem:[%s4302 + $0x38] sm:$0xf]
      %v4318 = vld [vmem:[%s4302 + $0x3c] sm:$0xf]
      %v4368 = vunpack.c.l.b16 %v4253
      %v4369 = vunpack.c.l.b16 %v4254
      %v4370 = vunpack.c.l.b16 %v4255
      %v4371 = vunpack.c.l.b16 %v4256
      %v4372 = vunpack.c.l.b16 %v4257
      %v4373 = vunpack.c.l.b16 %v4258
      %v4374 = vunpack.c.l.b16 %v4259
      %v4375 = vunpack.c.l.b16 %v4260
      %v4376 = vunpack.c.l.b16 %v4261
      %v4377 = vunpack.c.l.b16 %v4262
      %v4378 = vunpack.c.l.b16 %v4263
      %v4379 = vunpack.c.l.b16 %v4264
      %v4380 = vunpack.c.l.b16 %v4265
      %v4381 = vunpack.c.l.b16 %v4266
      %v4382 = vunpack.c.l.b16 %v4267
      %v4383 = vunpack.c.l.b16 %v4268
      %v4384 = vunpack.c.l.b16 %v4269
      %v4385 = vunpack.c.l.b16 %v4270
      %v4386 = vunpack.c.l.b16 %v4271
      %v4387 = vunpack.c.l.b16 %v4272
      %v4388 = vunpack.c.l.b16 %v4273
      %v4389 = vunpack.c.l.b16 %v4274
      %v4390 = vunpack.c.l.b16 %v4275
      %v4391 = vunpack.c.l.b16 %v4276
      %v4392 = vunpack.c.l.b16 %v4277
      %v4393 = vunpack.c.l.b16 %v4278
      %v4394 = vunpack.c.l.b16 %v4279
      %v4395 = vunpack.c.l.b16 %v4280
      %v4396 = vunpack.c.l.b16 %v4281
      %v4397 = vunpack.c.l.b16 %v4282
      %v4398 = vunpack.c.l.b16 %v4283
      %v4399 = vunpack.c.l.b16 %v4284
      %v4400 = vunpack.c.l.b16 %v4285
      %v4401 = vunpack.c.l.b16 %v4286
      %v4402 = vunpack.c.l.b16 %v4287
      %v4403 = vunpack.c.l.b16 %v4288
      %v4404 = vunpack.c.l.b16 %v4289
      %v4405 = vunpack.c.l.b16 %v4290
      %v4406 = vunpack.c.l.b16 %v4291
      %v4407 = vunpack.c.l.b16 %v4292
      %v4408 = vunpack.c.l.b16 %v4293
      %v4409 = vunpack.c.l.b16 %v4294
      %v4410 = vunpack.c.l.b16 %v4295
      %v4411 = vunpack.c.l.b16 %v4296
      %v4412 = vunpack.c.l.b16 %v4297
      %v4413 = vunpack.c.l.b16 %v4298
      %v4414 = vunpack.c.l.b16 %v4299
      %v4415 = vunpack.c.l.b16 %v4300
      %v4416 = vunpack.c.l.b16 %v4301
      %v4417 = vpack.c.b16 %v4369, %v4368
      %v4418 = vpack.c.b16 %v4371, %v4370
      %v4419 = vpack.c.b16 %v4373, %v4372
      %v4420 = vpack.c.b16 %v4375, %v4374
      %v4421 = vpack.c.b16 %v4377, %v4376
      %v4422 = vpack.c.b16 %v4379, %v4378
      %v4423 = vpack.c.b16 %v4381, %v4380
      %v4424 = vpack.c.b16 %v4383, %v4382
      %v4425 = vpack.c.b16 %v4385, %v4384
      %v4426 = vpack.c.b16 %v4387, %v4386
      %v4427 = vpack.c.b16 %v4389, %v4388
      %v4428 = vpack.c.b16 %v4391, %v4390
      %v4429 = vpack.c.b16 %v4393, %v4392
      %v4430 = vpack.c.b16 %v4395, %v4394
      %v4431 = vpack.c.b16 %v4397, %v4396
      %v4432 = vpack.c.b16 %v4399, %v4398
      %v4433 = vpack.c.b16 %v4401, %v4400
      %v4434 = vpack.c.b16 %v4403, %v4402
      %v4435 = vpack.c.b16 %v4405, %v4404
      %v4436 = vpack.c.b16 %v4407, %v4406
      %v4437 = vpack.c.b16 %v4409, %v4408
      %v4438 = vpack.c.b16 %v4411, %v4410
      %v4439 = vpack.c.b16 %v4413, %v4412
      %v4440 = vpack.c.b16 %v4415, %v4414
      %v4441 = vpack.c.b16 %v4416, %v4416
      %v4443 = vshrl.u32 %v4417, 16
      %v4445 = vshll.u32 %v4417, 16
      %v4447 = vrot.slane %v4445, 1
      %v4448 = vor.u32 %v4443, %v4447
      %v4450 = vshll.u32 %v4418, 16
      %v4452 = vrot.slane %v4450, 1
      %v4453 = vsel %vm841, %v4448, %v4452
      %v4454 = vshrl.u32 %v4418, 16
      %v4456 = vor.u32 %v4454, %v4452
      %v4458 = vshll.u32 %v4419, 16
      %v4460 = vrot.slane %v4458, 1
      %v4461 = vsel %vm841, %v4456, %v4460
      %v4462 = vshrl.u32 %v4419, 16
      %v4464 = vor.u32 %v4462, %v4460
      %v4466 = vshll.u32 %v4420, 16
      %v4468 = vrot.slane %v4466, 1
      %v4469 = vsel %vm841, %v4464, %v4468
      %v4470 = vshrl.u32 %v4420, 16
      %v4472 = vor.u32 %v4470, %v4468
      %v4474 = vshll.u32 %v4421, 16
      %v4476 = vrot.slane %v4474, 1
      %v4477 = vsel %vm841, %v4472, %v4476
      %v4478 = vshrl.u32 %v4421, 16
      %v4480 = vor.u32 %v4478, %v4476
      %v4482 = vshll.u32 %v4422, 16
      %v4484 = vrot.slane %v4482, 1
      %v4485 = vsel %vm841, %v4480, %v4484
      %v4486 = vshrl.u32 %v4422, 16
      %v4488 = vor.u32 %v4486, %v4484
      %v4490 = vshll.u32 %v4423, 16
      %v4492 = vrot.slane %v4490, 1
      %v4493 = vsel %vm841, %v4488, %v4492
      %v4494 = vshrl.u32 %v4423, 16
      %v4496 = vor.u32 %v4494, %v4492
      %v4498 = vshll.u32 %v4424, 16
      %v4500 = vrot.slane %v4498, 1
      %v4501 = vsel %vm841, %v4496, %v4500
      %v4502 = vshrl.u32 %v4424, 16
      %v4504 = vor.u32 %v4502, %v4500
      %v4506 = vshll.u32 %v4425, 16
      %v4508 = vrot.slane %v4506, 1
      %v4509 = vsel %vm841, %v4504, %v4508
      %v4510 = vshrl.u32 %v4425, 16
      %v4512 = vor.u32 %v4510, %v4508
      %v4514 = vshll.u32 %v4426, 16
      %v4516 = vrot.slane %v4514, 1
      %v4517 = vsel %vm841, %v4512, %v4516
      %v4518 = vshrl.u32 %v4426, 16
      %v4520 = vor.u32 %v4518, %v4516
      %v4522 = vshll.u32 %v4427, 16
      %v4524 = vrot.slane %v4522, 1
      %v4525 = vsel %vm841, %v4520, %v4524
      %v4526 = vshrl.u32 %v4427, 16
      %v4528 = vor.u32 %v4526, %v4524
      %v4530 = vshll.u32 %v4428, 16
      %v4532 = vrot.slane %v4530, 1
      %v4533 = vsel %vm841, %v4528, %v4532
      %v4534 = vshrl.u32 %v4428, 16
      %v4536 = vor.u32 %v4534, %v4532
      %v4538 = vshll.u32 %v4429, 16
      %v4540 = vrot.slane %v4538, 1
      %v4541 = vsel %vm841, %v4536, %v4540
      %v4542 = vshrl.u32 %v4429, 16
      %v4544 = vor.u32 %v4542, %v4540
      %v4546 = vshll.u32 %v4430, 16
      %v4548 = vrot.slane %v4546, 1
      %v4549 = vsel %vm841, %v4544, %v4548
      %v4550 = vshrl.u32 %v4430, 16
      %v4552 = vor.u32 %v4550, %v4548
      %v4554 = vshll.u32 %v4431, 16
      %v4556 = vrot.slane %v4554, 1
      %v4557 = vsel %vm841, %v4552, %v4556
      %v4558 = vshrl.u32 %v4431, 16
      %v4560 = vor.u32 %v4558, %v4556
      %v4562 = vshll.u32 %v4432, 16
      %v4564 = vrot.slane %v4562, 1
      %v4565 = vsel %vm841, %v4560, %v4564
      %v4566 = vshrl.u32 %v4432, 16
      %v4568 = vor.u32 %v4566, %v4564
      %v4570 = vshll.u32 %v4433, 16
      %v4572 = vrot.slane %v4570, 1
      %v4573 = vsel %vm841, %v4568, %v4572
      %v4574 = vshrl.u32 %v4433, 16
      %v4576 = vor.u32 %v4574, %v4572
      %v4578 = vshll.u32 %v4434, 16
      %v4580 = vrot.slane %v4578, 1
      %v4581 = vsel %vm841, %v4576, %v4580
      %v4582 = vshrl.u32 %v4434, 16
      %v4584 = vor.u32 %v4582, %v4580
      %v4586 = vshll.u32 %v4435, 16
      %v4588 = vrot.slane %v4586, 1
      %v4589 = vsel %vm841, %v4584, %v4588
      %v4590 = vshrl.u32 %v4435, 16
      %v4592 = vor.u32 %v4590, %v4588
      %v4594 = vshll.u32 %v4436, 16
      %v4596 = vrot.slane %v4594, 1
      %v4597 = vsel %vm841, %v4592, %v4596
      %v4598 = vshrl.u32 %v4436, 16
      %v4600 = vor.u32 %v4598, %v4596
      %v4602 = vshll.u32 %v4437, 16
      %v4604 = vrot.slane %v4602, 1
      %v4605 = vsel %vm841, %v4600, %v4604
      %v4606 = vshrl.u32 %v4437, 16
      %v4608 = vor.u32 %v4606, %v4604
      %v4610 = vshll.u32 %v4438, 16
      %v4612 = vrot.slane %v4610, 1
      %v4613 = vsel %vm841, %v4608, %v4612
      %v4614 = vshrl.u32 %v4438, 16
      %v4616 = vor.u32 %v4614, %v4612
      %v4618 = vshll.u32 %v4439, 16
      %v4620 = vrot.slane %v4618, 1
      %v4621 = vsel %vm841, %v4616, %v4620
      %v4622 = vshrl.u32 %v4439, 16
      %v4624 = vor.u32 %v4622, %v4620
      %v4626 = vshll.u32 %v4440, 16
      %v4628 = vrot.slane %v4626, 1
      %v4629 = vsel %vm841, %v4624, %v4628
      %v4630 = vshrl.u32 %v4440, 16
      %v4632 = vor.u32 %v4630, %v4628
      %v4634 = vshll.u32 %v4441, 16
      %v4636 = vrot.slane %v4634, 1
      %v4637 = vsel %vm841, %v4632, %v4636
      %v4678 = vunpack.c.l.b16 %v4303
      %v4679 = vunpack.c.l.b16 %v4304
      %v4680 = vunpack.c.l.b16 %v4305
      %v4681 = vunpack.c.l.b16 %v4306
      %v4682 = vunpack.c.l.b16 %v4307
      %v4683 = vunpack.c.l.b16 %v4308
      %v4684 = vunpack.c.l.b16 %v4309
      %v4685 = vunpack.c.l.b16 %v4310
      %v4686 = vunpack.c.l.b16 %v4311
      %v4687 = vunpack.c.l.b16 %v4312
      %v4688 = vunpack.c.l.b16 %v4313
      %v4689 = vunpack.c.l.b16 %v4314
      %v4690 = vunpack.c.l.b16 %v4315
      %v4691 = vunpack.c.l.b16 %v4316
      %v4692 = vunpack.c.l.b16 %v4317
      %v4693 = vunpack.c.l.b16 %v4318
      %v4694 = vpack.c.b16 %v4679, %v4678
      %v4695 = vpack.c.b16 %v4681, %v4680
      %v4696 = vpack.c.b16 %v4683, %v4682
      %v4697 = vpack.c.b16 %v4685, %v4684
      %v4698 = vpack.c.b16 %v4687, %v4686
      %v4699 = vpack.c.b16 %v4689, %v4688
      %v4700 = vpack.c.b16 %v4691, %v4690
      %v4701 = vpack.c.b16 %v4693, %v4692
      %4710 = vmatprep.subr.bf16.mxu0 0
      %4711 = vmatpush1.bf16.msra.mxu0 %v4701
      %4712 = vmatprep.subr.bf16.mxu0 0
      %4713 = vmatpush1.bf16.msra.mxu0 %v4700
      %4714 = vmatprep.subr.bf16.mxu0 0
      %4715 = vmatpush1.bf16.msra.mxu0 %v4699
      %4716 = vmatprep.subr.bf16.mxu0 0
      %4717 = vmatpush1.bf16.msra.mxu0 %v4698
      %4718 = vmatprep.subr.bf16.mxu0 0
      %4719 = vmatpush1.bf16.msra.mxu0 %v4697
      %4720 = vmatprep.subr.bf16.mxu0 0
      %4721 = vmatpush1.bf16.msra.mxu0 %v4696
      %4722 = vmatprep.subr.bf16.mxu0 0
      %4723 = vmatpush1.bf16.msra.mxu0 %v4695
      %4724 = vmatprep.subr.bf16.mxu0 0
      %4725 = vmatpush1.bf16.msra.mxu0 %v4694
      %4726 = vmatprep.subr.bf16.mxu0 0
      %4727 = vmatpush2.bf16.msra.mxu0 0
      %4728 = vmatprep.subr.bf16.mxu0 0
      %4729 = vmatpush2.bf16.msra.mxu0 0
      %4730 = vmatprep.subr.bf16.mxu0 0
      %4731 = vmatpush2.bf16.msra.mxu0 0
      %4732 = vmatprep.subr.bf16.mxu0 0
      %4733 = vmatpush2.bf16.msra.mxu0 0
      %4734 = vmatprep.subr.bf16.mxu0 0
      %4735 = vmatpush2.bf16.msra.mxu0 0
      %4736 = vmatprep.subr.bf16.mxu0 0
      %4737 = vmatpush2.bf16.msra.mxu0 0
      %4738 = vmatprep.subr.bf16.mxu0 0
      %4739 = vmatpush2.bf16.msra.mxu0 0
      %4740 = vmatprep.subr.bf16.mxu0 0
      %4741 = vmatpush2.bf16.msra.mxu0 0
      %4742 = vmatprep.mubr.bf16.mxu0 0
      %4743 = vmatmul.mubr.bf16.gmra.mxu0 %v4453
      %v4744 = vpop.f32.mrf.mxu0
      %v4745 = vadd.f32 0.0, %v4744
      %v4746 = vpop.f32.mrf.mxu0
      %v4747 = vpop.f32.mrf.mxu0
      %v4748 = vadd.f32 0.0, %v4747
      %v4749 = vpop.f32.mrf.mxu0
      %4750 = vmatprep.mubr.bf16.mxu0 0
      %4751 = vmatmul.mubr.bf16.gmra.mxu0 %v4461
      %v4752 = vpop.f32.mrf.mxu0
      %v4753 = vadd.f32 0.0, %v4752
      %v4754 = vpop.f32.mrf.mxu0
      %v4755 = vpop.f32.mrf.mxu0
      %v4756 = vadd.f32 0.0, %v4755
      %v4757 = vpop.f32.mrf.mxu0
      %4758 = vmatprep.mubr.bf16.mxu0 0
      %4759 = vmatmul.mubr.bf16.gmra.mxu0 %v4469
      %v4760 = vpop.f32.mrf.mxu0
      %v4761 = vadd.f32 0.0, %v4760
      %v4762 = vpop.f32.mrf.mxu0
      %v4763 = vpop.f32.mrf.mxu0
      %v4764 = vadd.f32 0.0, %v4763
      %v4765 = vpop.f32.mrf.mxu0
      %4766 = vmatprep.mubr.bf16.mxu0 0
      %4767 = vmatmul.mubr.bf16.gmra.mxu0 %v4477
      %v4768 = vpop.f32.mrf.mxu0
      %v4769 = vadd.f32 0.0, %v4768
      %v4770 = vpop.f32.mrf.mxu0
      %v4771 = vpop.f32.mrf.mxu0
      %v4772 = vadd.f32 0.0, %v4771
      %v4773 = vpop.f32.mrf.mxu0
      %4774 = vmatprep.mubr.bf16.mxu0 0
      %4775 = vmatmul.mubr.bf16.gmra.mxu0 %v4485
      %v4776 = vpop.f32.mrf.mxu0
      %v4777 = vadd.f32 0.0, %v4776
      %v4778 = vpop.f32.mrf.mxu0
      %v4779 = vpop.f32.mrf.mxu0
      %v4780 = vadd.f32 0.0, %v4779
      %v4781 = vpop.f32.mrf.mxu0
      %4782 = vmatprep.mubr.bf16.mxu0 0
      %4783 = vmatmul.mubr.bf16.gmra.mxu0 %v4493
      %v4784 = vpop.f32.mrf.mxu0
      %v4785 = vadd.f32 0.0, %v4784
      %v4786 = vpop.f32.mrf.mxu0
      %v4787 = vpop.f32.mrf.mxu0
      %v4788 = vadd.f32 0.0, %v4787
      %v4789 = vpop.f32.mrf.mxu0
      %4790 = vmatprep.mubr.bf16.mxu0 0
      %4791 = vmatmul.mubr.bf16.gmra.mxu0 %v4501
      %v4792 = vpop.f32.mrf.mxu0
      %v4793 = vadd.f32 0.0, %v4792
      %v4794 = vpop.f32.mrf.mxu0
      %v4795 = vpop.f32.mrf.mxu0
      %v4796 = vadd.f32 0.0, %v4795
      %v4797 = vpop.f32.mrf.mxu0
      %4798 = vmatprep.mubr.bf16.mxu0 0
      %4799 = vmatmul.mubr.bf16.gmra.mxu0 %v4509
      %v4800 = vpop.f32.mrf.mxu0
      %v4801 = vadd.f32 0.0, %v4800
      %v4802 = vpop.f32.mrf.mxu0
      %v4803 = vpop.f32.mrf.mxu0
      %v4804 = vadd.f32 0.0, %v4803
      %v4805 = vpop.f32.mrf.mxu0
      %4806 = vmatprep.mubr.bf16.mxu0 0
      %4807 = vmatmul.mubr.bf16.gmra.mxu0 %v4517
      %v4808 = vpop.f32.mrf.mxu0
      %v4809 = vadd.f32 0.0, %v4808
      %v4810 = vpop.f32.mrf.mxu0
      %v4811 = vpop.f32.mrf.mxu0
      %v4812 = vadd.f32 0.0, %v4811
      %v4813 = vpop.f32.mrf.mxu0
      %4814 = vmatprep.mubr.bf16.mxu0 0
      %4815 = vmatmul.mubr.bf16.gmra.mxu0 %v4525
      %v4816 = vpop.f32.mrf.mxu0
      %v4817 = vadd.f32 0.0, %v4816
      %v4818 = vpop.f32.mrf.mxu0
      %v4819 = vpop.f32.mrf.mxu0
      %v4820 = vadd.f32 0.0, %v4819
      %v4821 = vpop.f32.mrf.mxu0
      %4822 = vmatprep.mubr.bf16.mxu0 0
      %4823 = vmatmul.mubr.bf16.gmra.mxu0 %v4533
      %v4824 = vpop.f32.mrf.mxu0
      %v4825 = vadd.f32 0.0, %v4824
      %v4826 = vpop.f32.mrf.mxu0
      %v4827 = vpop.f32.mrf.mxu0
      %v4828 = vadd.f32 0.0, %v4827
      %v4829 = vpop.f32.mrf.mxu0
      %4830 = vmatprep.mubr.bf16.mxu0 0
      %4831 = vmatmul.mubr.bf16.gmra.mxu0 %v4541
      %v4832 = vpop.f32.mrf.mxu0
      %v4833 = vadd.f32 0.0, %v4832
      %v4834 = vpop.f32.mrf.mxu0
      %v4835 = vpop.f32.mrf.mxu0
      %v4836 = vadd.f32 0.0, %v4835
      %v4837 = vpop.f32.mrf.mxu0
      %4838 = vmatprep.mubr.bf16.mxu0 0
      %4839 = vmatmul.mubr.bf16.gmra.mxu0 %v4549
      %v4840 = vpop.f32.mrf.mxu0
      %v4841 = vadd.f32 0.0, %v4840
      %v4842 = vpop.f32.mrf.mxu0
      %v4843 = vpop.f32.mrf.mxu0
      %v4844 = vadd.f32 0.0, %v4843
      %v4845 = vpop.f32.mrf.mxu0
      %4846 = vmatprep.mubr.bf16.mxu0 0
      %4847 = vmatmul.mubr.bf16.gmra.mxu0 %v4557
      %v4848 = vpop.f32.mrf.mxu0
      %v4849 = vadd.f32 0.0, %v4848
      %v4850 = vpop.f32.mrf.mxu0
      %v4851 = vpop.f32.mrf.mxu0
      %v4852 = vadd.f32 0.0, %v4851
      %v4853 = vpop.f32.mrf.mxu0
      %4854 = vmatprep.mubr.bf16.mxu0 0
      %4855 = vmatmul.mubr.bf16.gmra.mxu0 %v4565
      %v4856 = vpop.f32.mrf.mxu0
      %v4857 = vadd.f32 0.0, %v4856
      %v4858 = vpop.f32.mrf.mxu0
      %v4859 = vpop.f32.mrf.mxu0
      %v4860 = vadd.f32 0.0, %v4859
      %v4861 = vpop.f32.mrf.mxu0
      %4862 = vmatprep.mubr.bf16.mxu0 0
      %4863 = vmatmul.mubr.bf16.gmra.mxu0 %v4573
      %v4864 = vpop.f32.mrf.mxu0
      %v4865 = vadd.f32 0.0, %v4864
      %v4866 = vpop.f32.mrf.mxu0
      %v4867 = vpop.f32.mrf.mxu0
      %v4868 = vadd.f32 0.0, %v4867
      %v4869 = vpop.f32.mrf.mxu0
      %4870 = vmatprep.mubr.bf16.mxu0 0
      %4871 = vmatmul.mubr.bf16.gmra.mxu0 %v4581
      %v4872 = vpop.f32.mrf.mxu0
      %v4873 = vadd.f32 0.0, %v4872
      %v4874 = vpop.f32.mrf.mxu0
      %v4875 = vpop.f32.mrf.mxu0
      %v4876 = vadd.f32 0.0, %v4875
      %v4877 = vpop.f32.mrf.mxu0
      %4878 = vmatprep.mubr.bf16.mxu0 0
      %4879 = vmatmul.mubr.bf16.gmra.mxu0 %v4589
      %v4880 = vpop.f32.mrf.mxu0
      %v4881 = vadd.f32 0.0, %v4880
      %v4882 = vpop.f32.mrf.mxu0
      %v4883 = vpop.f32.mrf.mxu0
      %v4884 = vadd.f32 0.0, %v4883
      %v4885 = vpop.f32.mrf.mxu0
      %4886 = vmatprep.mubr.bf16.mxu0 0
      %4887 = vmatmul.mubr.bf16.gmra.mxu0 %v4597
      %v4888 = vpop.f32.mrf.mxu0
      %v4889 = vadd.f32 0.0, %v4888
      %v4890 = vpop.f32.mrf.mxu0
      %v4891 = vpop.f32.mrf.mxu0
      %v4892 = vadd.f32 0.0, %v4891
      %v4893 = vpop.f32.mrf.mxu0
      %4894 = vmatprep.mubr.bf16.mxu0 0
      %4895 = vmatmul.mubr.bf16.gmra.mxu0 %v4605
      %v4896 = vpop.f32.mrf.mxu0
      %v4897 = vadd.f32 0.0, %v4896
      %v4898 = vpop.f32.mrf.mxu0
      %v4899 = vpop.f32.mrf.mxu0
      %v4900 = vadd.f32 0.0, %v4899
      %v4901 = vpop.f32.mrf.mxu0
      %4902 = vmatprep.mubr.bf16.mxu0 0
      %4903 = vmatmul.mubr.bf16.gmra.mxu0 %v4613
      %v4904 = vpop.f32.mrf.mxu0
      %v4905 = vadd.f32 0.0, %v4904
      %v4906 = vpop.f32.mrf.mxu0
      %v4907 = vpop.f32.mrf.mxu0
      %v4908 = vadd.f32 0.0, %v4907
      %v4909 = vpop.f32.mrf.mxu0
      %4910 = vmatprep.mubr.bf16.mxu0 0
      %4911 = vmatmul.mubr.bf16.gmra.mxu0 %v4621
      %v4912 = vpop.f32.mrf.mxu0
      %v4913 = vadd.f32 0.0, %v4912
      %v4914 = vpop.f32.mrf.mxu0
      %v4915 = vpop.f32.mrf.mxu0
      %v4916 = vadd.f32 0.0, %v4915
      %v4917 = vpop.f32.mrf.mxu0
      %4918 = vmatprep.mubr.bf16.mxu0 0
      %4919 = vmatmul.mubr.bf16.gmra.mxu0 %v4629
      %v4920 = vpop.f32.mrf.mxu0
      %v4921 = vadd.f32 0.0, %v4920
      %v4922 = vpop.f32.mrf.mxu0
      %v4923 = vpop.f32.mrf.mxu0
      %v4924 = vadd.f32 0.0, %v4923
      %v4925 = vpop.f32.mrf.mxu0
      %4926 = vmatprep.mubr.bf16.mxu0 0
      %4927 = vmatmul.mubr.bf16.gmra.mxu0 %v4637
      %v4928 = vpop.f32.mrf.mxu0
      %v4929 = vadd.f32 0.0, %v4928
      %v4930 = vpop.f32.mrf.mxu0
      %v4931 = vpop.f32.mrf.mxu0
      %v4932 = vadd.f32 0.0, %v4931
      %v4933 = vpop.f32.mrf.mxu0
      %4934 = vdwg.mxu0
      %v4935 = vadd.f32 %v4205, %v4745
      %v4936 = vadd.f32 %v4206, %v4748
      %v4937 = vadd.f32 %v4207, %v4753
      %v4938 = vadd.f32 %v4208, %v4756
      %v4939 = vadd.f32 %v4209, %v4761
      %v4940 = vadd.f32 %v4210, %v4764
      %v4941 = vadd.f32 %v4211, %v4769
      %v4942 = vadd.f32 %v4212, %v4772
      %v4943 = vadd.f32 %v4213, %v4777
      %v4944 = vadd.f32 %v4214, %v4780
      %v4945 = vadd.f32 %v4215, %v4785
      %v4946 = vadd.f32 %v4216, %v4788
      %v4947 = vadd.f32 %v4217, %v4793
      %v4948 = vadd.f32 %v4218, %v4796
      %v4949 = vadd.f32 %v4219, %v4801
      %v4950 = vadd.f32 %v4220, %v4804
      %v4951 = vadd.f32 %v4221, %v4809
      %v4952 = vadd.f32 %v4222, %v4812
      %v4953 = vadd.f32 %v4223, %v4817
      %v4954 = vadd.f32 %v4224, %v4820
      %v4955 = vadd.f32 %v4225, %v4825
      %v4956 = vadd.f32 %v4226, %v4828
      %v4957 = vadd.f32 %v4227, %v4833
      %v4958 = vadd.f32 %v4228, %v4836
      %v4959 = vadd.f32 %v4229, %v4841
      %v4960 = vadd.f32 %v4230, %v4844
      %v4961 = vadd.f32 %v4231, %v4849
      %v4962 = vadd.f32 %v4232, %v4852
      %v4963 = vadd.f32 %v4233, %v4857
      %v4964 = vadd.f32 %v4234, %v4860
      %v4965 = vadd.f32 %v4235, %v4865
      %v4966 = vadd.f32 %v4236, %v4868
      %v4967 = vadd.f32 %v4237, %v4873
      %v4968 = vadd.f32 %v4238, %v4876
      %v4969 = vadd.f32 %v4239, %v4881
      %v4970 = vadd.f32 %v4240, %v4884
      %v4971 = vadd.f32 %v4241, %v4889
      %v4972 = vadd.f32 %v4242, %v4892
      %v4973 = vadd.f32 %v4243, %v4897
      %v4974 = vadd.f32 %v4244, %v4900
      %v4975 = vadd.f32 %v4245, %v4905
      %v4976 = vadd.f32 %v4246, %v4908
      %v4977 = vadd.f32 %v4247, %v4913
      %v4978 = vadd.f32 %v4248, %v4916
      %v4979 = vadd.f32 %v4249, %v4921
      %v4980 = vadd.f32 %v4250, %v4924
      %v4981 = vadd.f32 %v4251, %v4929
      %v4982 = vadd.f32 %v4252, %v4932
      %v4983 = vld [vmem:[%s630 + $0x18] sm:$0xe]
      %s4984 = scalar_lea.vmem %s1, 512
      %v4985 = vld [vmem:[%s4984] sm:$0xf]
      %v4986 = vld [vmem:[%s4984 + $0x4] sm:$0xf]
      %v4987 = vld [vmem:[%s4984 + $0x8] sm:$0xf]
      %v4988 = vld [vmem:[%s4984 + $0xc] sm:$0xf]
      %v4989 = vld [vmem:[%s4984 + $0x10] sm:$0xf]
      %v4990 = vld [vmem:[%s4984 + $0x14] sm:$0xf]
      %v4991 = vld [vmem:[%s4984 + $0x18] sm:$0xf]
      %v4992 = vld [vmem:[%s4984 + $0x1c] sm:$0xf]
      %v4993 = vld [vmem:[%s4984 + $0x20] sm:$0xf]
      %v4994 = vld [vmem:[%s4984 + $0x24] sm:$0xf]
      %v4995 = vld [vmem:[%s4984 + $0x28] sm:$0xf]
      %v4996 = vld [vmem:[%s4984 + $0x2c] sm:$0xf]
      %v4997 = vld [vmem:[%s4984 + $0x30] sm:$0xf]
      %v4998 = vld [vmem:[%s4984 + $0x34] sm:$0xf]
      %v4999 = vld [vmem:[%s4984 + $0x38] sm:$0xf]
      %v5000 = vld [vmem:[%s4984 + $0x3c] sm:$0xf]
      %v5002 = vunpack.c.l.b16 %v4983
      %v5003 = vpack.c.b16 %v4369, %v5002
      %v5004 = vrot.slane %v5003, 1
      %v5005 = vrot.slane %v4418, 1
      %v5006 = vsel %vm1653, %v5004, %v5005
      %v5007 = vrot.slane %v4419, 1
      %v5008 = vsel %vm1653, %v5005, %v5007
      %v5009 = vrot.slane %v4420, 1
      %v5010 = vsel %vm1653, %v5007, %v5009
      %v5011 = vrot.slane %v4421, 1
      %v5012 = vsel %vm1653, %v5009, %v5011
      %v5013 = vrot.slane %v4422, 1
      %v5014 = vsel %vm1653, %v5011, %v5013
      %v5015 = vrot.slane %v4423, 1
      %v5016 = vsel %vm1653, %v5013, %v5015
      %v5017 = vrot.slane %v4424, 1
      %v5018 = vsel %vm1653, %v5015, %v5017
      %v5019 = vrot.slane %v4425, 1
      %v5020 = vsel %vm1653, %v5017, %v5019
      %v5021 = vrot.slane %v4426, 1
      %v5022 = vsel %vm1653, %v5019, %v5021
      %v5023 = vrot.slane %v4427, 1
      %v5024 = vsel %vm1653, %v5021, %v5023
      %v5025 = vrot.slane %v4428, 1
      %v5026 = vsel %vm1653, %v5023, %v5025
      %v5027 = vrot.slane %v4429, 1
      %v5028 = vsel %vm1653, %v5025, %v5027
      %v5029 = vrot.slane %v4430, 1
      %v5030 = vsel %vm1653, %v5027, %v5029
      %v5031 = vrot.slane %v4431, 1
      %v5032 = vsel %vm1653, %v5029, %v5031
      %v5033 = vrot.slane %v4432, 1
      %v5034 = vsel %vm1653, %v5031, %v5033
      %v5035 = vrot.slane %v4433, 1
      %v5036 = vsel %vm1653, %v5033, %v5035
      %v5037 = vrot.slane %v4434, 1
      %v5038 = vsel %vm1653, %v5035, %v5037
      %v5039 = vrot.slane %v4435, 1
      %v5040 = vsel %vm1653, %v5037, %v5039
      %v5041 = vrot.slane %v4436, 1
      %v5042 = vsel %vm1653, %v5039, %v5041
      %v5043 = vrot.slane %v4437, 1
      %v5044 = vsel %vm1653, %v5041, %v5043
      %v5045 = vrot.slane %v4438, 1
      %v5046 = vsel %vm1653, %v5043, %v5045
      %v5047 = vrot.slane %v4439, 1
      %v5048 = vsel %vm1653, %v5045, %v5047
      %v5049 = vrot.slane %v4440, 1
      %v5050 = vsel %vm1653, %v5047, %v5049
      %v5051 = vrot.slane %v4441, 1
      %v5052 = vsel %vm1653, %v5049, %v5051
      %v5093 = vunpack.c.l.b16 %v4985
      %v5094 = vunpack.c.l.b16 %v4986
      %v5095 = vunpack.c.l.b16 %v4987
      %v5096 = vunpack.c.l.b16 %v4988
      %v5097 = vunpack.c.l.b16 %v4989
      %v5098 = vunpack.c.l.b16 %v4990
      %v5099 = vunpack.c.l.b16 %v4991
      %v5100 = vunpack.c.l.b16 %v4992
      %v5101 = vunpack.c.l.b16 %v4993
      %v5102 = vunpack.c.l.b16 %v4994
      %v5103 = vunpack.c.l.b16 %v4995
      %v5104 = vunpack.c.l.b16 %v4996
      %v5105 = vunpack.c.l.b16 %v4997
      %v5106 = vunpack.c.l.b16 %v4998
      %v5107 = vunpack.c.l.b16 %v4999
      %v5108 = vunpack.c.l.b16 %v5000
      %v5109 = vpack.c.b16 %v5094, %v5093
      %v5110 = vpack.c.b16 %v5096, %v5095
      %v5111 = vpack.c.b16 %v5098, %v5097
      %v5112 = vpack.c.b16 %v5100, %v5099
      %v5113 = vpack.c.b16 %v5102, %v5101
      %v5114 = vpack.c.b16 %v5104, %v5103
      %v5115 = vpack.c.b16 %v5106, %v5105
      %v5116 = vpack.c.b16 %v5108, %v5107
      %5125 = vmatprep.subr.bf16.mxu0 0
      %5126 = vmatpush1.bf16.msra.mxu0 %v5116
      %5127 = vmatprep.subr.bf16.mxu0 0
      %5128 = vmatpush1.bf16.msra.mxu0 %v5115
      %5129 = vmatprep.subr.bf16.mxu0 0
      %5130 = vmatpush1.bf16.msra.mxu0 %v5114
      %5131 = vmatprep.subr.bf16.mxu0 0
      %5132 = vmatpush1.bf16.msra.mxu0 %v5113
      %5133 = vmatprep.subr.bf16.mxu0 0
      %5134 = vmatpush1.bf16.msra.mxu0 %v5112
      %5135 = vmatprep.subr.bf16.mxu0 0
      %5136 = vmatpush1.bf16.msra.mxu0 %v5111
      %5137 = vmatprep.subr.bf16.mxu0 0
      %5138 = vmatpush1.bf16.msra.mxu0 %v5110
      %5139 = vmatprep.subr.bf16.mxu0 0
      %5140 = vmatpush1.bf16.msra.mxu0 %v5109
      %5141 = vmatprep.subr.bf16.mxu0 0
      %5142 = vmatpush2.bf16.msra.mxu0 0
      %5143 = vmatprep.subr.bf16.mxu0 0
      %5144 = vmatpush2.bf16.msra.mxu0 0
      %5145 = vmatprep.subr.bf16.mxu0 0
      %5146 = vmatpush2.bf16.msra.mxu0 0
      %5147 = vmatprep.subr.bf16.mxu0 0
      %5148 = vmatpush2.bf16.msra.mxu0 0
      %5149 = vmatprep.subr.bf16.mxu0 0
      %5150 = vmatpush2.bf16.msra.mxu0 0
      %5151 = vmatprep.subr.bf16.mxu0 0
      %5152 = vmatpush2.bf16.msra.mxu0 0
      %5153 = vmatprep.subr.bf16.mxu0 0
      %5154 = vmatpush2.bf16.msra.mxu0 0
      %5155 = vmatprep.subr.bf16.mxu0 0
      %5156 = vmatpush2.bf16.msra.mxu0 0
      %5157 = vmatprep.mubr.bf16.mxu0 0
      %5158 = vmatmul.mubr.bf16.gmra.mxu0 %v5006
      %v5159 = vpop.f32.mrf.mxu0
      %v5160 = vadd.f32 0.0, %v5159
      %v5161 = vpop.f32.mrf.mxu0
      %v5162 = vpop.f32.mrf.mxu0
      %v5163 = vadd.f32 0.0, %v5162
      %v5164 = vpop.f32.mrf.mxu0
      %5165 = vmatprep.mubr.bf16.mxu0 0
      %5166 = vmatmul.mubr.bf16.gmra.mxu0 %v5008
      %v5167 = vpop.f32.mrf.mxu0
      %v5168 = vadd.f32 0.0, %v5167
      %v5169 = vpop.f32.mrf.mxu0
      %v5170 = vpop.f32.mrf.mxu0
      %v5171 = vadd.f32 0.0, %v5170
      %v5172 = vpop.f32.mrf.mxu0
      %5173 = vmatprep.mubr.bf16.mxu0 0
      %5174 = vmatmul.mubr.bf16.gmra.mxu0 %v5010
      %v5175 = vpop.f32.mrf.mxu0
      %v5176 = vadd.f32 0.0, %v5175
      %v5177 = vpop.f32.mrf.mxu0
      %v5178 = vpop.f32.mrf.mxu0
      %v5179 = vadd.f32 0.0, %v5178
      %v5180 = vpop.f32.mrf.mxu0
      %5181 = vmatprep.mubr.bf16.mxu0 0
      %5182 = vmatmul.mubr.bf16.gmra.mxu0 %v5012
      %v5183 = vpop.f32.mrf.mxu0
      %v5184 = vadd.f32 0.0, %v5183
      %v5185 = vpop.f32.mrf.mxu0
      %v5186 = vpop.f32.mrf.mxu0
      %v5187 = vadd.f32 0.0, %v5186
      %v5188 = vpop.f32.mrf.mxu0
      %5189 = vmatprep.mubr.bf16.mxu0 0
      %5190 = vmatmul.mubr.bf16.gmra.mxu0 %v5014
      %v5191 = vpop.f32.mrf.mxu0
      %v5192 = vadd.f32 0.0, %v5191
      %v5193 = vpop.f32.mrf.mxu0
      %v5194 = vpop.f32.mrf.mxu0
      %v5195 = vadd.f32 0.0, %v5194
      %v5196 = vpop.f32.mrf.mxu0
      %5197 = vmatprep.mubr.bf16.mxu0 0
      %5198 = vmatmul.mubr.bf16.gmra.mxu0 %v5016
      %v5199 = vpop.f32.mrf.mxu0
      %v5200 = vadd.f32 0.0, %v5199
      %v5201 = vpop.f32.mrf.mxu0
      %v5202 = vpop.f32.mrf.mxu0
      %v5203 = vadd.f32 0.0, %v5202
      %v5204 = vpop.f32.mrf.mxu0
      %5205 = vmatprep.mubr.bf16.mxu0 0
      %5206 = vmatmul.mubr.bf16.gmra.mxu0 %v5018
      %v5207 = vpop.f32.mrf.mxu0
      %v5208 = vadd.f32 0.0, %v5207
      %v5209 = vpop.f32.mrf.mxu0
      %v5210 = vpop.f32.mrf.mxu0
      %v5211 = vadd.f32 0.0, %v5210
      %v5212 = vpop.f32.mrf.mxu0
      %5213 = vmatprep.mubr.bf16.mxu0 0
      %5214 = vmatmul.mubr.bf16.gmra.mxu0 %v5020
      %v5215 = vpop.f32.mrf.mxu0
      %v5216 = vadd.f32 0.0, %v5215
      %v5217 = vpop.f32.mrf.mxu0
      %v5218 = vpop.f32.mrf.mxu0
      %v5219 = vadd.f32 0.0, %v5218
      %v5220 = vpop.f32.mrf.mxu0
      %5221 = vmatprep.mubr.bf16.mxu0 0
      %5222 = vmatmul.mubr.bf16.gmra.mxu0 %v5022
      %v5223 = vpop.f32.mrf.mxu0
      %v5224 = vadd.f32 0.0, %v5223
      %v5225 = vpop.f32.mrf.mxu0
      %v5226 = vpop.f32.mrf.mxu0
      %v5227 = vadd.f32 0.0, %v5226
      %v5228 = vpop.f32.mrf.mxu0
      %5229 = vmatprep.mubr.bf16.mxu0 0
      %5230 = vmatmul.mubr.bf16.gmra.mxu0 %v5024
      %v5231 = vpop.f32.mrf.mxu0
      %v5232 = vadd.f32 0.0, %v5231
      %v5233 = vpop.f32.mrf.mxu0
      %v5234 = vpop.f32.mrf.mxu0
      %v5235 = vadd.f32 0.0, %v5234
      %v5236 = vpop.f32.mrf.mxu0
      %5237 = vmatprep.mubr.bf16.mxu0 0
      %5238 = vmatmul.mubr.bf16.gmra.mxu0 %v5026
      %v5239 = vpop.f32.mrf.mxu0
      %v5240 = vadd.f32 0.0, %v5239
      %v5241 = vpop.f32.mrf.mxu0
      %v5242 = vpop.f32.mrf.mxu0
      %v5243 = vadd.f32 0.0, %v5242
      %v5244 = vpop.f32.mrf.mxu0
      %5245 = vmatprep.mubr.bf16.mxu0 0
      %5246 = vmatmul.mubr.bf16.gmra.mxu0 %v5028
      %v5247 = vpop.f32.mrf.mxu0
      %v5248 = vadd.f32 0.0, %v5247
      %v5249 = vpop.f32.mrf.mxu0
      %v5250 = vpop.f32.mrf.mxu0
      %v5251 = vadd.f32 0.0, %v5250
      %v5252 = vpop.f32.mrf.mxu0
      %5253 = vmatprep.mubr.bf16.mxu0 0
      %5254 = vmatmul.mubr.bf16.gmra.mxu0 %v5030
      %v5255 = vpop.f32.mrf.mxu0
      %v5256 = vadd.f32 0.0, %v5255
      %v5257 = vpop.f32.mrf.mxu0
      %v5258 = vpop.f32.mrf.mxu0
      %v5259 = vadd.f32 0.0, %v5258
      %v5260 = vpop.f32.mrf.mxu0
      %5261 = vmatprep.mubr.bf16.mxu0 0
      %5262 = vmatmul.mubr.bf16.gmra.mxu0 %v5032
      %v5263 = vpop.f32.mrf.mxu0
      %v5264 = vadd.f32 0.0, %v5263
      %v5265 = vpop.f32.mrf.mxu0
      %v5266 = vpop.f32.mrf.mxu0
      %v5267 = vadd.f32 0.0, %v5266
      %v5268 = vpop.f32.mrf.mxu0
      %5269 = vmatprep.mubr.bf16.mxu0 0
      %5270 = vmatmul.mubr.bf16.gmra.mxu0 %v5034
      %v5271 = vpop.f32.mrf.mxu0
      %v5272 = vadd.f32 0.0, %v5271
      %v5273 = vpop.f32.mrf.mxu0
      %v5274 = vpop.f32.mrf.mxu0
      %v5275 = vadd.f32 0.0, %v5274
      %v5276 = vpop.f32.mrf.mxu0
      %5277 = vmatprep.mubr.bf16.mxu0 0
      %5278 = vmatmul.mubr.bf16.gmra.mxu0 %v5036
      %v5279 = vpop.f32.mrf.mxu0
      %v5280 = vadd.f32 0.0, %v5279
      %v5281 = vpop.f32.mrf.mxu0
      %v5282 = vpop.f32.mrf.mxu0
      %v5283 = vadd.f32 0.0, %v5282
      %v5284 = vpop.f32.mrf.mxu0
      %5285 = vmatprep.mubr.bf16.mxu0 0
      %5286 = vmatmul.mubr.bf16.gmra.mxu0 %v5038
      %v5287 = vpop.f32.mrf.mxu0
      %v5288 = vadd.f32 0.0, %v5287
      %v5289 = vpop.f32.mrf.mxu0
      %v5290 = vpop.f32.mrf.mxu0
      %v5291 = vadd.f32 0.0, %v5290
      %v5292 = vpop.f32.mrf.mxu0
      %5293 = vmatprep.mubr.bf16.mxu0 0
      %5294 = vmatmul.mubr.bf16.gmra.mxu0 %v5040
      %v5295 = vpop.f32.mrf.mxu0
      %v5296 = vadd.f32 0.0, %v5295
      %v5297 = vpop.f32.mrf.mxu0
      %v5298 = vpop.f32.mrf.mxu0
      %v5299 = vadd.f32 0.0, %v5298
      %v5300 = vpop.f32.mrf.mxu0
      %5301 = vmatprep.mubr.bf16.mxu0 0
      %5302 = vmatmul.mubr.bf16.gmra.mxu0 %v5042
      %v5303 = vpop.f32.mrf.mxu0
      %v5304 = vadd.f32 0.0, %v5303
      %v5305 = vpop.f32.mrf.mxu0
      %v5306 = vpop.f32.mrf.mxu0
      %v5307 = vadd.f32 0.0, %v5306
      %v5308 = vpop.f32.mrf.mxu0
      %5309 = vmatprep.mubr.bf16.mxu0 0
      %5310 = vmatmul.mubr.bf16.gmra.mxu0 %v5044
      %v5311 = vpop.f32.mrf.mxu0
      %v5312 = vadd.f32 0.0, %v5311
      %v5313 = vpop.f32.mrf.mxu0
      %v5314 = vpop.f32.mrf.mxu0
      %v5315 = vadd.f32 0.0, %v5314
      %v5316 = vpop.f32.mrf.mxu0
      %5317 = vmatprep.mubr.bf16.mxu0 0
      %5318 = vmatmul.mubr.bf16.gmra.mxu0 %v5046
      %v5319 = vpop.f32.mrf.mxu0
      %v5320 = vadd.f32 0.0, %v5319
      %v5321 = vpop.f32.mrf.mxu0
      %v5322 = vpop.f32.mrf.mxu0
      %v5323 = vadd.f32 0.0, %v5322
      %v5324 = vpop.f32.mrf.mxu0
      %5325 = vmatprep.mubr.bf16.mxu0 0
      %5326 = vmatmul.mubr.bf16.gmra.mxu0 %v5048
      %v5327 = vpop.f32.mrf.mxu0
      %v5328 = vadd.f32 0.0, %v5327
      %v5329 = vpop.f32.mrf.mxu0
      %v5330 = vpop.f32.mrf.mxu0
      %v5331 = vadd.f32 0.0, %v5330
      %v5332 = vpop.f32.mrf.mxu0
      %5333 = vmatprep.mubr.bf16.mxu0 0
      %5334 = vmatmul.mubr.bf16.gmra.mxu0 %v5050
      %v5335 = vpop.f32.mrf.mxu0
      %v5336 = vadd.f32 0.0, %v5335
      %v5337 = vpop.f32.mrf.mxu0
      %v5338 = vpop.f32.mrf.mxu0
      %v5339 = vadd.f32 0.0, %v5338
      %v5340 = vpop.f32.mrf.mxu0
      %5341 = vmatprep.mubr.bf16.mxu0 0
      %5342 = vmatmul.mubr.bf16.gmra.mxu0 %v5052
      %v5343 = vpop.f32.mrf.mxu0
      %v5344 = vadd.f32 0.0, %v5343
      %v5345 = vpop.f32.mrf.mxu0
      %v5346 = vpop.f32.mrf.mxu0
      %v5347 = vadd.f32 0.0, %v5346
      %v5348 = vpop.f32.mrf.mxu0
      %5349 = vdwg.mxu0
      %v5350 = vadd.f32 %v4935, %v5160
      %v5351 = vadd.f32 %v4936, %v5163
      %v5352 = vadd.f32 %v4937, %v5168
      %v5353 = vadd.f32 %v4938, %v5171
      %v5354 = vadd.f32 %v4939, %v5176
      %v5355 = vadd.f32 %v4940, %v5179
      %v5356 = vadd.f32 %v4941, %v5184
      %v5357 = vadd.f32 %v4942, %v5187
      %v5358 = vadd.f32 %v4943, %v5192
      %v5359 = vadd.f32 %v4944, %v5195
      %v5360 = vadd.f32 %v4945, %v5200
      %v5361 = vadd.f32 %v4946, %v5203
      %v5362 = vadd.f32 %v4947, %v5208
      %v5363 = vadd.f32 %v4948, %v5211
      %v5364 = vadd.f32 %v4949, %v5216
      %v5365 = vadd.f32 %v4950, %v5219
      %v5366 = vadd.f32 %v4951, %v5224
      %v5367 = vadd.f32 %v4952, %v5227
      %v5368 = vadd.f32 %v4953, %v5232
      %v5369 = vadd.f32 %v4954, %v5235
      %v5370 = vadd.f32 %v4955, %v5240
      %v5371 = vadd.f32 %v4956, %v5243
      %v5372 = vadd.f32 %v4957, %v5248
      %v5373 = vadd.f32 %v4958, %v5251
      %v5374 = vadd.f32 %v4959, %v5256
      %v5375 = vadd.f32 %v4960, %v5259
      %v5376 = vadd.f32 %v4961, %v5264
      %v5377 = vadd.f32 %v4962, %v5267
      %v5378 = vadd.f32 %v4963, %v5272
      %v5379 = vadd.f32 %v4964, %v5275
      %v5380 = vadd.f32 %v4965, %v5280
      %v5381 = vadd.f32 %v4966, %v5283
      %v5382 = vadd.f32 %v4967, %v5288
      %v5383 = vadd.f32 %v4968, %v5291
      %v5384 = vadd.f32 %v4969, %v5296
      %v5385 = vadd.f32 %v4970, %v5299
      %v5386 = vadd.f32 %v4971, %v5304
      %v5387 = vadd.f32 %v4972, %v5307
      %v5388 = vadd.f32 %v4973, %v5312
      %v5389 = vadd.f32 %v4974, %v5315
      %v5390 = vadd.f32 %v4975, %v5320
      %v5391 = vadd.f32 %v4976, %v5323
      %v5392 = vadd.f32 %v4977, %v5328
      %v5393 = vadd.f32 %v4978, %v5331
      %v5394 = vadd.f32 %v4979, %v5336
      %v5395 = vadd.f32 %v4980, %v5339
      %v5396 = vadd.f32 %v4981, %v5344
      %v5397 = vadd.f32 %v4982, %v5347
      %v5398 = vld [vmem:[%s2] sm:$0x1]
      %v5400 = vlaneseq
      %v5401 = vshrl.u32 %v5400, 7
      %v5402 = vsub.s32 0, %v5401
      %v5403 = vrot.slane %v5398, %v5402
      %v5405 = vadd.f32 %v5350, %v5403
      %v5406 = vadd.f32 %v5351, %v5403
      %v5407 = vadd.f32 %v5352, %v5403
      %v5408 = vadd.f32 %v5353, %v5403
      %v5409 = vadd.f32 %v5354, %v5403
      %v5410 = vadd.f32 %v5355, %v5403
      %v5411 = vadd.f32 %v5356, %v5403
      %v5412 = vadd.f32 %v5357, %v5403
      %v5413 = vadd.f32 %v5358, %v5403
      %v5414 = vadd.f32 %v5359, %v5403
      %v5415 = vadd.f32 %v5360, %v5403
      %v5416 = vadd.f32 %v5361, %v5403
      %v5417 = vadd.f32 %v5362, %v5403
      %v5418 = vadd.f32 %v5363, %v5403
      %v5419 = vadd.f32 %v5364, %v5403
      %v5420 = vadd.f32 %v5365, %v5403
      %v5421 = vadd.f32 %v5366, %v5403
      %v5422 = vadd.f32 %v5367, %v5403
      %v5423 = vadd.f32 %v5368, %v5403
      %v5424 = vadd.f32 %v5369, %v5403
      %v5425 = vadd.f32 %v5370, %v5403
      %v5426 = vadd.f32 %v5371, %v5403
      %v5427 = vadd.f32 %v5372, %v5403
      %v5428 = vadd.f32 %v5373, %v5403
      %v5429 = vadd.f32 %v5374, %v5403
      %v5430 = vadd.f32 %v5375, %v5403
      %v5431 = vadd.f32 %v5376, %v5403
      %v5432 = vadd.f32 %v5377, %v5403
      %v5433 = vadd.f32 %v5378, %v5403
      %v5434 = vadd.f32 %v5379, %v5403
      %v5435 = vadd.f32 %v5380, %v5403
      %v5436 = vadd.f32 %v5381, %v5403
      %v5437 = vadd.f32 %v5382, %v5403
      %v5438 = vadd.f32 %v5383, %v5403
      %v5439 = vadd.f32 %v5384, %v5403
      %v5440 = vadd.f32 %v5385, %v5403
      %v5441 = vadd.f32 %v5386, %v5403
      %v5442 = vadd.f32 %v5387, %v5403
      %v5443 = vadd.f32 %v5388, %v5403
      %v5444 = vadd.f32 %v5389, %v5403
      %v5445 = vadd.f32 %v5390, %v5403
      %v5446 = vadd.f32 %v5391, %v5403
      %v5447 = vadd.f32 %v5392, %v5403
      %v5448 = vadd.f32 %v5393, %v5403
      %v5449 = vadd.f32 %v5394, %v5403
      %v5450 = vadd.f32 %v5395, %v5403
      %v5451 = vadd.f32 %v5396, %v5403
      %v5452 = vadd.f32 %v5397, %v5403
      %s5453 = smul.u32 %s155, 49
      %s5454 = smul.addr %s5453, 4
      %s5455 = scalar_lea.vmem [#allocation3], %s5454
      %s5456 = scalar_lea.sflag [#allocation5], %s155
      %s5457 = smul.u32 4, 49
      %s5458 = smul.u32 %s5457, 1
      %s5459 = sshll.u32 %s5458, 4
      %5460 = dma.done %s5456, %s5459
      %v5461 = vld [vmem:[%s5455] sm:$0xf]
      %v5462 = vld [vmem:[%s5455 + $0x4] sm:$0xf]
      %v5463 = vld [vmem:[%s5455 + $0x8] sm:$0xf]
      %v5464 = vld [vmem:[%s5455 + $0xc] sm:$0xf]
      %v5465 = vld [vmem:[%s5455 + $0x10] sm:$0xf]
      %v5466 = vld [vmem:[%s5455 + $0x14] sm:$0xf]
      %v5467 = vld [vmem:[%s5455 + $0x18] sm:$0xf]
      %v5468 = vld [vmem:[%s5455 + $0x1c] sm:$0xf]
      %v5469 = vld [vmem:[%s5455 + $0x20] sm:$0xf]
      %v5470 = vld [vmem:[%s5455 + $0x24] sm:$0xf]
      %v5471 = vld [vmem:[%s5455 + $0x28] sm:$0xf]
      %v5472 = vld [vmem:[%s5455 + $0x2c] sm:$0xf]
      %v5473 = vld [vmem:[%s5455 + $0x30] sm:$0xf]
      %v5474 = vld [vmem:[%s5455 + $0x34] sm:$0xf]
      %v5475 = vld [vmem:[%s5455 + $0x38] sm:$0xf]
      %v5476 = vld [vmem:[%s5455 + $0x3c] sm:$0xf]
      %v5477 = vld [vmem:[%s5455 + $0x40] sm:$0xf]
      %v5478 = vld [vmem:[%s5455 + $0x44] sm:$0xf]
      %v5479 = vld [vmem:[%s5455 + $0x48] sm:$0xf]
      %v5480 = vld [vmem:[%s5455 + $0x4c] sm:$0xf]
      %v5481 = vld [vmem:[%s5455 + $0x50] sm:$0xf]
      %v5482 = vld [vmem:[%s5455 + $0x54] sm:$0xf]
      %v5483 = vld [vmem:[%s5455 + $0x58] sm:$0xf]
      %v5484 = vld [vmem:[%s5455 + $0x5c] sm:$0xf]
      %v5485 = vld [vmem:[%s5455 + $0x60] sm:$0xf]
      %v5486 = vld [vmem:[%s5455 + $0x64] sm:$0xf]
      %v5487 = vld [vmem:[%s5455 + $0x68] sm:$0xf]
      %v5488 = vld [vmem:[%s5455 + $0x6c] sm:$0xf]
      %v5489 = vld [vmem:[%s5455 + $0x70] sm:$0xf]
      %v5490 = vld [vmem:[%s5455 + $0x74] sm:$0xf]
      %v5491 = vld [vmem:[%s5455 + $0x78] sm:$0xf]
      %v5492 = vld [vmem:[%s5455 + $0x7c] sm:$0xf]
      %v5493 = vld [vmem:[%s5455 + $0x80] sm:$0xf]
      %v5494 = vld [vmem:[%s5455 + $0x84] sm:$0xf]
      %v5495 = vld [vmem:[%s5455 + $0x88] sm:$0xf]
      %v5496 = vld [vmem:[%s5455 + $0x8c] sm:$0xf]
      %v5497 = vld [vmem:[%s5455 + $0x90] sm:$0xf]
      %v5498 = vld [vmem:[%s5455 + $0x94] sm:$0xf]
      %v5499 = vld [vmem:[%s5455 + $0x98] sm:$0xf]
      %v5500 = vld [vmem:[%s5455 + $0x9c] sm:$0xf]
      %v5501 = vld [vmem:[%s5455 + $0xa0] sm:$0xf]
      %v5502 = vld [vmem:[%s5455 + $0xa4] sm:$0xf]
      %v5503 = vld [vmem:[%s5455 + $0xa8] sm:$0xf]
      %v5504 = vld [vmem:[%s5455 + $0xac] sm:$0xf]
      %v5505 = vld [vmem:[%s5455 + $0xb0] sm:$0xf]
      %v5506 = vld [vmem:[%s5455 + $0xb4] sm:$0xf]
      %v5507 = vld [vmem:[%s5455 + $0xb8] sm:$0xf]
      %v5508 = vld [vmem:[%s5455 + $0xbc] sm:$0xf]
      %v5509 = vld [vmem:[%s5455 + $0xc0] sm:$0x1]
      %v5510 = vunpack.c.l.bf16 %v5461
      %v5511 = vunpack.c.l.bf16 %v5462
      %v5512 = vunpack.c.l.bf16 %v5463
      %v5513 = vunpack.c.l.bf16 %v5464
      %v5514 = vunpack.c.l.bf16 %v5465
      %v5515 = vunpack.c.l.bf16 %v5466
      %v5516 = vunpack.c.l.bf16 %v5467
      %v5517 = vunpack.c.l.bf16 %v5468
      %v5518 = vunpack.c.l.bf16 %v5469
      %v5519 = vunpack.c.l.bf16 %v5470
      %v5520 = vunpack.c.l.bf16 %v5471
      %v5521 = vunpack.c.l.bf16 %v5472
      %v5522 = vunpack.c.l.bf16 %v5473
      %v5523 = vunpack.c.l.bf16 %v5474
      %v5524 = vunpack.c.l.bf16 %v5475
      %v5525 = vunpack.c.l.bf16 %v5476
      %v5526 = vunpack.c.l.bf16 %v5477
      %v5527 = vunpack.c.l.bf16 %v5478
      %v5528 = vunpack.c.l.bf16 %v5479
      %v5529 = vunpack.c.l.bf16 %v5480
      %v5530 = vunpack.c.l.bf16 %v5481
      %v5531 = vunpack.c.l.bf16 %v5482
      %v5532 = vunpack.c.l.bf16 %v5483
      %v5533 = vunpack.c.l.bf16 %v5484
      %v5534 = vunpack.c.l.bf16 %v5485
      %v5535 = vunpack.c.l.bf16 %v5486
      %v5536 = vunpack.c.l.bf16 %v5487
      %v5537 = vunpack.c.l.bf16 %v5488
      %v5538 = vunpack.c.l.bf16 %v5489
      %v5539 = vunpack.c.l.bf16 %v5490
      %v5540 = vunpack.c.l.bf16 %v5491
      %v5541 = vunpack.c.l.bf16 %v5492
      %v5542 = vunpack.c.l.bf16 %v5493
      %v5543 = vunpack.c.l.bf16 %v5494
      %v5544 = vunpack.c.l.bf16 %v5495
      %v5545 = vunpack.c.l.bf16 %v5496
      %v5546 = vunpack.c.l.bf16 %v5497
      %v5547 = vunpack.c.l.bf16 %v5498
      %v5548 = vunpack.c.l.bf16 %v5499
      %v5549 = vunpack.c.l.bf16 %v5500
      %v5550 = vunpack.c.l.bf16 %v5501
      %v5551 = vunpack.c.l.bf16 %v5502
      %v5552 = vunpack.c.l.bf16 %v5503
      %v5553 = vunpack.c.l.bf16 %v5504
      %v5554 = vunpack.c.l.bf16 %v5505
      %v5555 = vunpack.c.l.bf16 %v5506
      %v5556 = vunpack.c.l.bf16 %v5507
      %v5557 = vunpack.c.l.bf16 %v5508
      %v5558 = vunpack.c.l.bf16 %v5509
      %vm5608 = vcmask 1046528
      %v5609 = vrot.slane %v5510, 1
      %v5610 = vrot.slane %v5511, 1
      %v5611 = vsel %vm5608, %v5609, %v5610
      %v5612 = vrot.slane %v5512, 1
      %v5613 = vsel %vm5608, %v5610, %v5612
      %v5614 = vrot.slane %v5513, 1
      %v5615 = vsel %vm5608, %v5612, %v5614
      %v5616 = vrot.slane %v5514, 1
      %v5617 = vsel %vm5608, %v5614, %v5616
      %v5618 = vrot.slane %v5515, 1
      %v5619 = vsel %vm5608, %v5616, %v5618
      %v5620 = vrot.slane %v5516, 1
      %v5621 = vsel %vm5608, %v5618, %v5620
      %v5622 = vrot.slane %v5517, 1
      %v5623 = vsel %vm5608, %v5620, %v5622
      %v5624 = vrot.slane %v5518, 1
      %v5625 = vsel %vm5608, %v5622, %v5624
      %v5626 = vrot.slane %v5519, 1
      %v5627 = vsel %vm5608, %v5624, %v5626
      %v5628 = vrot.slane %v5520, 1
      %v5629 = vsel %vm5608, %v5626, %v5628
      %v5630 = vrot.slane %v5521, 1
      %v5631 = vsel %vm5608, %v5628, %v5630
      %v5632 = vrot.slane %v5522, 1
      %v5633 = vsel %vm5608, %v5630, %v5632
      %v5634 = vrot.slane %v5523, 1
      %v5635 = vsel %vm5608, %v5632, %v5634
      %v5636 = vrot.slane %v5524, 1
      %v5637 = vsel %vm5608, %v5634, %v5636
      %v5638 = vrot.slane %v5525, 1
      %v5639 = vsel %vm5608, %v5636, %v5638
      %v5640 = vrot.slane %v5526, 1
      %v5641 = vsel %vm5608, %v5638, %v5640
      %v5642 = vrot.slane %v5527, 1
      %v5643 = vsel %vm5608, %v5640, %v5642
      %v5644 = vrot.slane %v5528, 1
      %v5645 = vsel %vm5608, %v5642, %v5644
      %v5646 = vrot.slane %v5529, 1
      %v5647 = vsel %vm5608, %v5644, %v5646
      %v5648 = vrot.slane %v5530, 1
      %v5649 = vsel %vm5608, %v5646, %v5648
      %v5650 = vrot.slane %v5531, 1
      %v5651 = vsel %vm5608, %v5648, %v5650
      %v5652 = vrot.slane %v5532, 1
      %v5653 = vsel %vm5608, %v5650, %v5652
      %v5654 = vrot.slane %v5533, 1
      %v5655 = vsel %vm5608, %v5652, %v5654
      %v5656 = vrot.slane %v5534, 1
      %v5657 = vsel %vm5608, %v5654, %v5656
      %v5658 = vrot.slane %v5535, 1
      %v5659 = vsel %vm5608, %v5656, %v5658
      %v5660 = vrot.slane %v5536, 1
      %v5661 = vsel %vm5608, %v5658, %v5660
      %v5662 = vrot.slane %v5537, 1
      %v5663 = vsel %vm5608, %v5660, %v5662
      %v5664 = vrot.slane %v5538, 1
      %v5665 = vsel %vm5608, %v5662, %v5664
      %v5666 = vrot.slane %v5539, 1
      %v5667 = vsel %vm5608, %v5664, %v5666
      %v5668 = vrot.slane %v5540, 1
      %v5669 = vsel %vm5608, %v5666, %v5668
      %v5670 = vrot.slane %v5541, 1
      %v5671 = vsel %vm5608, %v5668, %v5670
      %v5672 = vrot.slane %v5542, 1
      %v5673 = vsel %vm5608, %v5670, %v5672
      %v5674 = vrot.slane %v5543, 1
      %v5675 = vsel %vm5608, %v5672, %v5674
      %v5676 = vrot.slane %v5544, 1
      %v5677 = vsel %vm5608, %v5674, %v5676
      %v5678 = vrot.slane %v5545, 1
      %v5679 = vsel %vm5608, %v5676, %v5678
      %v5680 = vrot.slane %v5546, 1
      %v5681 = vsel %vm5608, %v5678, %v5680
      %v5682 = vrot.slane %v5547, 1
      %v5683 = vsel %vm5608, %v5680, %v5682
      %v5684 = vrot.slane %v5548, 1
      %v5685 = vsel %vm5608, %v5682, %v5684
      %v5686 = vrot.slane %v5549, 1
      %v5687 = vsel %vm5608, %v5684, %v5686
      %v5688 = vrot.slane %v5550, 1
      %v5689 = vsel %vm5608, %v5686, %v5688
      %v5690 = vrot.slane %v5551, 1
      %v5691 = vsel %vm5608, %v5688, %v5690
      %v5692 = vrot.slane %v5552, 1
      %v5693 = vsel %vm5608, %v5690, %v5692
      %v5694 = vrot.slane %v5553, 1
      %v5695 = vsel %vm5608, %v5692, %v5694
      %v5696 = vrot.slane %v5554, 1
      %v5697 = vsel %vm5608, %v5694, %v5696
      %v5698 = vrot.slane %v5555, 1
      %v5699 = vsel %vm5608, %v5696, %v5698
      %v5700 = vrot.slane %v5556, 1
      %v5701 = vsel %vm5608, %v5698, %v5700
      %v5702 = vrot.slane %v5557, 1
      %v5703 = vsel %vm5608, %v5700, %v5702
      %v5704 = vrot.slane %v5558, 1
      %v5705 = vsel %vm5608, %v5702, %v5704
      %v5754 = vadd.f32 %v5405, %v5611
      %v5755 = vadd.f32 %v5406, %v5613
      %v5756 = vadd.f32 %v5407, %v5615
      %v5757 = vadd.f32 %v5408, %v5617
      %v5758 = vadd.f32 %v5409, %v5619
      %v5759 = vadd.f32 %v5410, %v5621
      %v5760 = vadd.f32 %v5411, %v5623
      %v5761 = vadd.f32 %v5412, %v5625
      %v5762 = vadd.f32 %v5413, %v5627
      %v5763 = vadd.f32 %v5414, %v5629
      %v5764 = vadd.f32 %v5415, %v5631
      %v5765 = vadd.f32 %v5416, %v5633
      %v5766 = vadd.f32 %v5417, %v5635
      %v5767 = vadd.f32 %v5418, %v5637
      %v5768 = vadd.f32 %v5419, %v5639
      %v5769 = vadd.f32 %v5420, %v5641
      %v5770 = vadd.f32 %v5421, %v5643
      %v5771 = vadd.f32 %v5422, %v5645
      %v5772 = vadd.f32 %v5423, %v5647
      %v5773 = vadd.f32 %v5424, %v5649
      %v5774 = vadd.f32 %v5425, %v5651
      %v5775 = vadd.f32 %v5426, %v5653
      %v5776 = vadd.f32 %v5427, %v5655
      %v5777 = vadd.f32 %v5428, %v5657
      %v5778 = vadd.f32 %v5429, %v5659
      %v5779 = vadd.f32 %v5430, %v5661
      %v5780 = vadd.f32 %v5431, %v5663
      %v5781 = vadd.f32 %v5432, %v5665
      %v5782 = vadd.f32 %v5433, %v5667
      %v5783 = vadd.f32 %v5434, %v5669
      %v5784 = vadd.f32 %v5435, %v5671
      %v5785 = vadd.f32 %v5436, %v5673
      %v5786 = vadd.f32 %v5437, %v5675
      %v5787 = vadd.f32 %v5438, %v5677
      %v5788 = vadd.f32 %v5439, %v5679
      %v5789 = vadd.f32 %v5440, %v5681
      %v5790 = vadd.f32 %v5441, %v5683
      %v5791 = vadd.f32 %v5442, %v5685
      %v5792 = vadd.f32 %v5443, %v5687
      %v5793 = vadd.f32 %v5444, %v5689
      %v5794 = vadd.f32 %v5445, %v5691
      %v5795 = vadd.f32 %v5446, %v5693
      %v5796 = vadd.f32 %v5447, %v5695
      %v5797 = vadd.f32 %v5448, %v5697
      %v5798 = vadd.f32 %v5449, %v5699
      %v5799 = vadd.f32 %v5450, %v5701
      %v5800 = vadd.f32 %v5451, %v5703
      %v5801 = vadd.f32 %v5452, %v5705
      %5802 = vst [vmem:[%s147] sm:$0xff] %v5754
      %5803 = vst [vmem:[%s147 + $0x8] sm:$0xff] %v5755
      %5804 = vst [vmem:[%s147 + $0x10] sm:$0xff] %v5756
      %5805 = vst [vmem:[%s147 + $0x18] sm:$0xff] %v5757
      %5806 = vst [vmem:[%s147 + $0x20] sm:$0xff] %v5758
      %5807 = vst [vmem:[%s147 + $0x28] sm:$0xff] %v5759
      %5808 = vst [vmem:[%s147 + $0x30] sm:$0xff] %v5760
      %5809 = vst [vmem:[%s147 + $0x38] sm:$0xff] %v5761
      %5810 = vst [vmem:[%s147 + $0x40] sm:$0xff] %v5762
      %5811 = vst [vmem:[%s147 + $0x48] sm:$0xff] %v5763
      %5812 = vst [vmem:[%s147 + $0x50] sm:$0xff] %v5764
      %5813 = vst [vmem:[%s147 + $0x58] sm:$0xff] %v5765
      %5814 = vst [vmem:[%s147 + $0x60] sm:$0xff] %v5766
      %5815 = vst [vmem:[%s147 + $0x68] sm:$0xff] %v5767
      %5816 = vst [vmem:[%s147 + $0x70] sm:$0xff] %v5768
      %5817 = vst [vmem:[%s147 + $0x78] sm:$0xff] %v5769
      %5818 = vst [vmem:[%s147 + $0x80] sm:$0xff] %v5770
      %5819 = vst [vmem:[%s147 + $0x88] sm:$0xff] %v5771
      %5820 = vst [vmem:[%s147 + $0x90] sm:$0xff] %v5772
      %5821 = vst [vmem:[%s147 + $0x98] sm:$0xff] %v5773
      %5822 = vst [vmem:[%s147 + $0xa0] sm:$0xff] %v5774
      %5823 = vst [vmem:[%s147 + $0xa8] sm:$0xff] %v5775
      %5824 = vst [vmem:[%s147 + $0xb0] sm:$0xff] %v5776
      %5825 = vst [vmem:[%s147 + $0xb8] sm:$0xff] %v5777
      %5826 = vst [vmem:[%s147 + $0xc0] sm:$0xff] %v5778
      %5827 = vst [vmem:[%s147 + $0xc8] sm:$0xff] %v5779
      %5828 = vst [vmem:[%s147 + $0xd0] sm:$0xff] %v5780
      %5829 = vst [vmem:[%s147 + $0xd8] sm:$0xff] %v5781
      %5830 = vst [vmem:[%s147 + $0xe0] sm:$0xff] %v5782
      %5831 = vst [vmem:[%s147 + $0xe8] sm:$0xff] %v5783
      %5832 = vst [vmem:[%s147 + $0xf0] sm:$0xff] %v5784
      %5833 = vst [vmem:[%s147 + $0xf8] sm:$0xff] %v5785
      %5834 = vst [vmem:[%s147 + $0x100] sm:$0xff] %v5786
      %5835 = vst [vmem:[%s147 + $0x108] sm:$0xff] %v5787
      %5836 = vst [vmem:[%s147 + $0x110] sm:$0xff] %v5788
      %5837 = vst [vmem:[%s147 + $0x118] sm:$0xff] %v5789
      %5838 = vst [vmem:[%s147 + $0x120] sm:$0xff] %v5790
      %5839 = vst [vmem:[%s147 + $0x128] sm:$0xff] %v5791
      %5840 = vst [vmem:[%s147 + $0x130] sm:$0xff] %v5792
      %5841 = vst [vmem:[%s147 + $0x138] sm:$0xff] %v5793
      %5842 = vst [vmem:[%s147 + $0x140] sm:$0xff] %v5794
      %5843 = vst [vmem:[%s147 + $0x148] sm:$0xff] %v5795
      %5844 = vst [vmem:[%s147 + $0x150] sm:$0xff] %v5796
      %5845 = vst [vmem:[%s147 + $0x158] sm:$0xff] %v5797
      %5846 = vst [vmem:[%s147 + $0x160] sm:$0xff] %v5798
      %5847 = vst [vmem:[%s147 + $0x168] sm:$0xff] %v5799
      %5848 = vst [vmem:[%s147 + $0x170] sm:$0xff] %v5800
      %5849 = vst [vmem:[%s147 + $0x178] sm:$0xff] %v5801
      %s5850 = smul.u32 48, %s20
      %p5851 = scmp.lt.s32.totalorder %s19, 1
      %s5852 = scalar_select %p5851, %s19, 1
      %p5853 = scmp.lt.s32.totalorder %s5850, 47
      %s5854 = scalar_select %p5853, %s5850, 47
      %s5855 = smul.addr %s5852, 48
      %s5856 = sadd.s32 %s5854, %s5855
      %s5857 = smul.addr %s5856, 8
      %s5858 = scalar_lea.vmem %s4, %s5857
      // Predicated region
      $region185: #{resnet_block_forward.3} parent=27 // pred_check
        %p5859 = pneg %p89
      $region186: #{resnet_block_forward.3} parent=27 // pred_check_branch
        %5861 = sbr.rel (%p5859) target = $region188
      $region187: #{resnet_block_forward.3} parent=27 // pred_region
        %s5862 = smul.u32 48, %s20
      $region188: #{resnet_block_forward.3} parent=27 // pred_fallthru
        _
    $region28: #{resnet_block_forward.3} parent=5 // pred_fallthru
      _
    %p5863 = scmp.le.s32.totalorder 2, %s10
    // Predicated region
    $region189: #{resnet_block_forward.3} parent=5 // pred_check
      %p5864 = pneg %p5863
    $region190: #{resnet_block_forward.3} parent=5 // pred_check_branch
      %5866 = sbr.rel (%p5864) target = $region192
    $region191: #{resnet_block_forward.3} parent=5 // pred_region
      %s5867 = ssub.s32 %s10, 2
      // Predicated region
      $region193: #{resnet_block_forward.3} parent=191 // pred_check
        %p5868 = pneg %p95
      $region194: #{resnet_block_forward.3} parent=191 // pred_check_branch
        %5870 = sbr.rel (%p5868) target = $region196
      $region195: #{resnet_block_forward.3} parent=191 // pred_region
        %s5871 = smul.u32 48, %s22
        %p5872 = scmp.lt.s32.totalorder %s21, 1
        %s5873 = scalar_select %p5872, %s21, 1
        %p5874 = scmp.lt.s32.totalorder %s5871, 47
        %s5875 = scalar_select %p5874, %s5871, 47
        %s5876 = smul.addr %s5873, 48
        %s5877 = sadd.s32 %s5875, %s5876
        %s5878 = smul.addr %s5877, 8
        %s5879 = scalar_lea.vmem %s4, %s5878
      $region196: #{resnet_block_forward.3} parent=191 // pred_fallthru
        _
    $region192: #{resnet_block_forward.3} parent=5 // pred_fallthru
      _
  $region6: #{resnet_block_forward.3} parent=0 // loop_footer
    %s14 = sadd.s32 1, %s10
  $region7: #{resnet_block_forward.3} parent=0 // loop_footer_branch
    %9 = sbr.rel target = $region3
  $region8: #{resnet_block_forward.3} parent=0 // loop_exit
    _
  %5880 = vsyncmov [#allocation4]
  %s5881 = vpop.sfrf %5880
  %p5882 = scmp.eq.s32.totalorder %s5881, 0
  %p5883 = pneg %p5882
  %5885 = shalt.err (%p5883)
  %s5886 = scalar_lea.sflag [#allocation4], 1
  %5887 = vsyncmov %s5886
  %s5888 = vpop.sfrf %5887
  %p5889 = scmp.eq.s32.totalorder %s5888, 0
  %p5890 = pneg %p5889
  %5892 = shalt.err (%p5890)
  %5893 = vsyncmov [#allocation5]
  %s5894 = vpop.sfrf %5893
  %p5895 = scmp.eq.s32.totalorder %s5894, 0
  %p5896 = pneg %p5895
  %5898 = shalt.err (%p5896)
  %s5899 = scalar_lea.sflag [#allocation5], 1
  %5900 = vsyncmov %s5899
  %s5901 = vpop.sfrf %5900
  %p5902 = scmp.eq.s32.totalorder %s5901, 0
  %p5903 = pneg %p5902
  %5905 = shalt.err (%p5903)

</llo_original>
